<compile_context>
chip_gen: v7x
topology: tpu7x:2x2x1
jax: 0.10.0
libtpu: 0.0.40
codegen_flags: <defaults>
</compile_context>

<pallas_src>
import jax
import jax.numpy as jnp
from jax import lax
from jax.experimental import pallas as pl
from jax.experimental.pallas import tpu as pltpu

EPS = 1e-5


def _largest_tile(total, cap, multiple):
    """Largest divisor of `total` that is <= cap and a multiple of `multiple`."""
    cap = max(multiple, min(cap, total))
    for t in range(cap - cap % multiple, multiple - 1, -multiple):
        if total % t == 0:
            return t
    return total


# ----------------------------------------------------------------------------
# Kernel 1: 2x2 stride-2 ConvTranspose2d.  k == stride -> no overlap, so it is
# exactly x_flat @ W_flat + b, tiled along M with a parallel grid axis.
# ----------------------------------------------------------------------------
def _upconv_matmul_kernel(x_ref, w_ref, b_ref, o_ref):
    acc = jnp.dot(x_ref[...], w_ref[...], preferred_element_type=jnp.float32)
    o_ref[...] = (acc + b_ref[...]).astype(o_ref.dtype)


def upconv2x2_stride2(x_nhwc, w_t, b, *, m_tile=256):
    N, H, W, Cin = x_nhwc.shape
    Cout = w_t.shape[1]
    M = N * H * W
    TM = _largest_tile(M, m_tile, 8)

    x_flat = x_nhwc.reshape(M, Cin).astype(jnp.bfloat16)
    # [Cin, Cout, kh, kw] -> [Cin, kh, kw, Cout] -> [Cin, 4*Cout]
    w_flat = jnp.transpose(w_t, (0, 2, 3, 1)).reshape(Cin, 4 * Cout).astype(jnp.bfloat16)
    b_flat = jnp.tile(b, 4).reshape(1, 4 * Cout).astype(jnp.float32)

    y_flat = pl.pallas_call(
        _upconv_matmul_kernel,
        out_shape=jax.ShapeDtypeStruct((M, 4 * Cout), jnp.bfloat16),
        grid=(M // TM,),
        in_specs=[
            pl.BlockSpec((TM, Cin), lambda i: (i, 0)),
            pl.BlockSpec((Cin, 4 * Cout), lambda i: (0, 0)),
            pl.BlockSpec((1, 4 * Cout), lambda i: (0, 0)),
        ],
        out_specs=pl.BlockSpec((TM, 4 * Cout), lambda i: (i, 0)),
        compiler_params=pltpu.CompilerParams(dimension_semantics=("parallel",)),
    )(x_flat, w_flat, b_flat)

    # TODO(synk): pixel-shuffle scatter still runs as a host-side XLA transpose.
    y = y_flat.reshape(N, H, W, 2, 2, Cout)
    y = jnp.transpose(y, (0, 1, 3, 2, 4, 5)).reshape(N, 2 * H, 2 * W, Cout)
    return y


# ----------------------------------------------------------------------------
# Kernel 2: fused 3x3 conv (pad=1) + BatchNorm(eval) + ReLU over a *list* of
# channel-partitioned inputs (channel concat fused into the contraction).
# Grid = (N, H/TH) row bands; halo = 2 extra rows via a small second BlockSpec.
# ----------------------------------------------------------------------------
def _make_conv3x3_bn_relu_kernel(n_in):
    def kernel(*refs):
        body_refs = refs[0:n_in]
        halo_refs = refs[n_in:2 * n_in]
        w_refs = refs[2 * n_in:3 * n_in]
        scale_ref = refs[3 * n_in]
        bias_ref = refs[3 * n_in + 1]
        o_ref = refs[3 * n_in + 2]

        _, TH, W, Cout = o_ref.shape
        acc = jnp.zeros((TH * W, Cout), jnp.float32)
        for b_ref, h_ref, w_ref in zip(body_refs, halo_refs, w_refs):
            Cin = b_ref.shape[-1]
            # row band + 2-row bottom halo -> (TH+2, W+2, Cin)
            xb = jnp.concatenate([b_ref[0], h_ref[0]], axis=0)
            # fold the kw taps into the contraction: (TH+2, W, 3*Cin)
            xw = jnp.concatenate(
                [xb[:, 0:W, :], xb[:, 1:W + 1, :], xb[:, 2:W + 2, :]], axis=-1)
            for dy in range(3):
                part = xw[dy:dy + TH].reshape(TH * W, 3 * Cin)
                acc = acc + jnp.dot(part, w_ref[dy],
                                    preferred_element_type=jnp.float32)
        y = acc * scale_ref[...] + bias_ref[...]
        y = jnp.maximum(y, 0.0)
        o_ref[...] = y.reshape(1, TH, W, Cout).astype(o_ref.dtype)

    return kernel


def conv3x3_bn_relu(inputs, weights, conv_b, gamma, beta, mean, var,
                    *, out_dtype=jnp.float32, row_cap=64):
    N, H, W, _ = inputs[0].shape
    Cout = weights[0].shape[0]

    pad_h = H % 2                       # band height must be even for 2-row halos
    He = H + pad_h
    TH = _largest_tile(He, max(2, min(row_cap, He // 2)), 2)
    nH = He // TH
    Wp = W + 2

    padded = [jnp.pad(x.astype(jnp.bfloat16),
                      ((0, 0), (1, 1 + pad_h), (1, 1), (0, 0)))
              for x in inputs]
    # [Cout, Cin, 3, 3] -> per-dy weight with kw folded into K: (3, 3*Cin, Cout)
    w_list = [jnp.transpose(w, (2, 3, 1, 0)).reshape(3, 3 * w.shape[1], Cout)
              .astype(jnp.bfloat16) for w in weights]
    # fold conv bias + BN affine: y = (conv - mean + b) * g/sqrt(v+eps) + beta
    scale = (gamma / jnp.sqrt(var + EPS)).astype(jnp.float32)
    bias_eff = ((conv_b - mean) * scale + beta).astype(jnp.float32)

    body_specs = [pl.BlockSpec((1, TH, Wp, x.shape[-1]),
                               lambda n, h: (n, h, 0, 0)) for x in padded]
    halo_specs = [pl.BlockSpec((1, 2, Wp, x.shape[-1]),
                               lambda n, h: (n, (h + 1) * (TH // 2), 0, 0))
                  for x in padded]
    w_specs = [pl.BlockSpec(w.shape, lambda n, h: (0, 0, 0)) for w in w_list]
    vec_spec = pl.BlockSpec((1, Cout), lambda n, h: (0, 0))

    out = pl.pallas_call(
        _make_conv3x3_bn_relu_kernel(len(inputs)),
        out_shape=jax.ShapeDtypeStruct((N, He, W, Cout), out_dtype),
        grid=(N, nH),
        in_specs=body_specs + halo_specs + w_specs + [vec_spec, vec_spec],
        out_specs=pl.BlockSpec((1, TH, W, Cout), lambda n, h: (n, h, 0, 0)),
        compiler_params=pltpu.CompilerParams(
            dimension_semantics=("parallel", "parallel")),
    )(*padded, *padded, *w_list,
      scale.reshape(1, Cout), bias_eff.reshape(1, Cout))

    return out[:, :H] if pad_h else out


# ----------------------------------------------------------------------------
# Full forward (PyTorch-facing NCHW wrapper)
# ----------------------------------------------------------------------------
def double_upconv2d_forward(params, x1_nchw, x2_nchw):
    # TODO(synk): keep activations NHWC in the surrounding model to drop these
    #             edge transposes.
    x1 = jnp.transpose(x1_nchw, (0, 2, 3, 1))
    x2 = jnp.transpose(x2_nchw, (0, 2, 3, 1)).astype(jnp.bfloat16)

    u = upconv2x2_stride2(x1, params["up_w"], params["up_b"])     # bf16 NHWC

    diffY = x2.shape[1] - u.shape[1]
    diffX = x2.shape[2] - u.shape[2]
    if diffY or diffX:
        u = jnp.pad(u, ((0, 0),
                        (diffY // 2, diffY - diffY // 2),
                        (diffX // 2, diffX - diffX // 2),
                        (0, 0)))

    # torch.cat([x2, x1_up], dim=1) is fused into the first conv: the weight is
    # split along its input-channel axis and the contraction runs per input.
    c2 = x2.shape[-1]
    h = conv3x3_bn_relu(
        [x2, u],
        [params["c1_w"][:, :c2], params["c1_w"][:, c2:]],
        params["c1_b"], params["bn1_g"], params["bn1_b"],
        params["bn1_m"], params["bn1_v"],
        out_dtype=jnp.bfloat16)                     # intermediate stays bf16
    y = conv3x3_bn_relu(
        [h], [params["c2_w"]],
        params["c2_b"], params["bn2_g"], params["bn2_b"],
        params["bn2_m"], params["bn2_v"],
        out_dtype=jnp.float32)
    return jnp.transpose(y, (0, 3, 1, 2))           # back to NCHW


# ----------------------------------------------------------------------------
# Pure-JAX f32 reference (NCHW, matches PyTorch semantics) for correctness
# ----------------------------------------------------------------------------
def reference_forward(params, x1, x2):
    N, Cin, H, W = x1.shape
    y = jnp.einsum("nihw,iokl->nohkwl", x1, params["up_w"])
    Cout_up = params["up_w"].shape[1]
    y = y.reshape(N, Cout_up, 2 * H, 2 * W) + params["up_b"][None, :, None, None]

    diffY = x2.shape[2] - y.shape[2]
    diffX = x2.shape[3] - y.shape[3]
    y = jnp.pad(
        y,
        ((0, 0), (0, 0),
         (diffY // 2, diffY - diffY // 2),
         (diffX // 2, diffX - diffX // 2)),
    )
    x = jnp.concatenate([x2, y], axis=1)

    def conv_bn_relu(x, w, b, g, bb, m, v):
        h = lax.conv_general_dilated(
            x, w, (1, 1), ((1, 1), (1, 1)),
            dimension_numbers=("NCHW", "OIHW", "NCHW"),
            precision=lax.Precision.HIGHEST,
        ) + b[None, :, None, None]
        h = (h - m[None, :, None, None]) / jnp.sqrt(v + EPS)[None, :, None, None]
        h = h * g[None, :, None, None] + bb[None, :, None, None]
        return jnp.maximum(h, 0.0)

    h = conv_bn_relu(x, params["c1_w"], params["c1_b"],
                     params["bn1_g"], params["bn1_b"],
                     params["bn1_m"], params["bn1_v"])
    h = conv_bn_relu(h, params["c2_w"], params["c2_b"],
                     params["bn2_g"], params["bn2_b"],
                     params["bn2_m"], params["bn2_v"])
    return h


# ----------------------------------------------------------------------------
if __name__ == "__main__":
    in_ch, out_ch = 16, 8
    N, H1, W1 = 2, 16, 16            # x1 spatial
    H2, W2 = 2 * H1, 2 * W1          # x2 spatial (no residual pad needed here)

    key = jax.random.PRNGKey(0)
    ks = jax.random.split(key, 16)

    x1 = jax.random.normal(ks[0], (N, in_ch, H1, W1), jnp.float32)
    x2 = jax.random.normal(ks[1], (N, out_ch, H2, W2), jnp.float32)

    cat_ch = in_ch // 2 + out_ch
    params = {
        # ConvTranspose2d(in_ch, in_ch//2, 2, stride=2): weight [Cin, Cout, 2, 2]
        "up_w": 0.1 * jax.random.normal(ks[2], (in_ch, in_ch // 2, 2, 2), jnp.float32),
        "up_b": 0.1 * jax.random.normal(ks[3], (in_ch // 2,), jnp.float32),
        # Conv2d(cat_ch, out_ch, 3, padding=1): weight [Cout, Cin, 3, 3]
        "c1_w": 0.1 * jax.random.normal(ks[4], (out_ch, cat_ch, 3, 3), jnp.float32),
        "c1_b": 0.1 * jax.random.normal(ks[5], (out_ch,), jnp.float32),
        "bn1_g": 1.0 + 0.1 * jax.random.normal(ks[6], (out_ch,), jnp.float32),
        "bn1_b": 0.1 * jax.random.normal(ks[7], (out_ch,), jnp.float32),
        "bn1_m": 0.05 * jax.random.normal(ks[8], (out_ch,), jnp.float32),
        "bn1_v": 1.0 + 0.1 * jnp.abs(jax.random.normal(ks[9], (out_ch,), jnp.float32)),
        # Conv2d(out_ch, out_ch, 3, padding=1)
        "c2_w": 0.1 * jax.random.normal(ks[10], (out_ch, out_ch, 3, 3), jnp.float32),
        "c2_b": 0.1 * jax.random.normal(ks[11], (out_ch,), jnp.float32),
        "bn2_g": 1.0 + 0.1 * jax.random.normal(ks[12], (out_ch,), jnp.float32),
        "bn2_b": 0.1 * jax.random.normal(ks[13], (out_ch,), jnp.float32),
        "bn2_m": 0.05 * jax.random.normal(ks[14], (out_ch,), jnp.float32),
        "bn2_v": 1.0 + 0.1 * jnp.abs(jax.random.normal(ks[15], (out_ch,), jnp.float32)),
    }

    out = jax.block_until_ready(jax.jit(double_upconv2d_forward)(params, x1, x2))
    ref = jax.block_until_ready(reference_forward(params, x1, x2))

    assert out.shape == (N, out_ch, H2, W2), out.shape
    # kernels run bf16 on the MXU with f32 accumulation -> looser tolerance
    # against the f32/HIGHEST reference.
    max_diff = float(jnp.max(jnp.abs(out - ref)))
    assert bool(jnp.allclose(out, ref, rtol=5e-2, atol=8e-2)), (
        "max abs diff " + str(max_diff)
    )
    print("KERNEL_OK")
</pallas_src>

<mosaic_0001>
module attributes {stable_mosaic.version = 11 : i64} {
  func.func @_upconv_matmul_kernel(%arg0: i32, %arg1: memref<256x16xbf16, #tpu.memory_space<vmem>>, %arg2: memref<16x32xbf16, #tpu.memory_space<vmem>>, %arg3: memref<1x32xf32, #tpu.memory_space<vmem>>, %arg4: memref<256x32xbf16, #tpu.memory_space<vmem>>) attributes {dimension_semantics = [#tpu.dimension_semantics<parallel>], iteration_bounds = array<i64: 2>, scalar_prefetch = 0 : i64, scratch_operands = 0 : i64, tpu.core_type = #tpu.core_type<tc>, window_params = [{transform_indices = @transform_0, window_bounds = array<i64: 256, 16>}, {pipeline_mode = #tpu.pipeline_mode<synchronous>, transform_indices = @transform_1, window_bounds = array<i64: 16, 32>}, {pipeline_mode = #tpu.pipeline_mode<synchronous>, transform_indices = @transform_2, window_bounds = array<i64: 1, 32>}, {transform_indices = @transform_3, window_bounds = array<i64: 256, 32>}]} {
    %c0 = arith.constant 0 : index
    %c0_0 = arith.constant 0 : index
    %0 = vector.load %arg1[%c0, %c0_0] : memref<256x16xbf16, #tpu.memory_space<vmem>>, vector<256x16xbf16>
    %c0_1 = arith.constant 0 : index
    %c0_2 = arith.constant 0 : index
    %1 = vector.load %arg2[%c0_1, %c0_2] : memref<16x32xbf16, #tpu.memory_space<vmem>>, vector<16x32xbf16>
    %cst = arith.constant dense<0.000000e+00> : vector<256x32xf32>
    %2 = tpu.matmul %0, %1, %cst {dimension_numbers = #tpu.dot_dimension_numbers<[1], [0], [0], [1], [0, 0, 1, 1], [], []>} : vector<256x16xbf16>, vector<16x32xbf16>, vector<256x32xf32> -> vector<256x32xf32>
    %c0_3 = arith.constant 0 : index
    %c0_4 = arith.constant 0 : index
    %3 = vector.load %arg3[%c0_3, %c0_4] : memref<1x32xf32, #tpu.memory_space<vmem>>, vector<1x32xf32>
    %4 = vector.broadcast %3 : vector<1x32xf32> to vector<256x32xf32>
    %5 = arith.addf %2, %4 : vector<256x32xf32>
    %6 = arith.truncf %5 : vector<256x32xf32> to vector<256x32xbf16>
    %c0_5 = arith.constant 0 : index
    %c0_6 = arith.constant 0 : index
    %7 = vector.load %arg4[%c0_5, %c0_6] : memref<256x32xbf16, #tpu.memory_space<vmem>>, vector<256x32xbf16>
    tpu.vector_store %arg4[%c0_5, %c0_6], %6 {strides = array<i32>} : memref<256x32xbf16, #tpu.memory_space<vmem>>, vector<256x32xbf16>,
    return
  }
  func.func @transform_0(%arg0: i32) -> (i32, i32) {
    %c0_i32 = arith.constant 0 : i32
    %c0_i32_0 = arith.constant 0 : i32
    return %arg0, %c0_i32 : i32, i32
  }
  func.func @transform_1(%arg0: i32) -> (i32, i32) {
    %c0_i32 = arith.constant 0 : i32
    %c0_i32_0 = arith.constant 0 : i32
    %c0_i32_1 = arith.constant 0 : i32
    return %c0_i32, %c0_i32_0 : i32, i32
  }
  func.func @transform_2(%arg0: i32) -> (i32, i32) {
    %c0_i32 = arith.constant 0 : i32
    %c0_i32_0 = arith.constant 0 : i32
    %c0_i32_1 = arith.constant 0 : i32
    return %c0_i32, %c0_i32_0 : i32, i32
  }
  func.func @transform_3(%arg0: i32) -> (i32, i32) {
    %c0_i32 = arith.constant 0 : i32
    %c0_i32_0 = arith.constant 0 : i32
    return %arg0, %c0_i32 : i32, i32
  }
}

module attributes {stable_mosaic.version = 11 : i64} {
  func.func @kernel(%arg0: i32, %arg1: i32, %arg2: memref<1x16x34x8xbf16, #tpu.memory_space<vmem>>, %arg3: memref<1x16x34x8xbf16, #tpu.memory_space<vmem>>, %arg4: memref<1x2x34x8xbf16, #tpu.memory_space<vmem>>, %arg5: memref<1x2x34x8xbf16, #tpu.memory_space<vmem>>, %arg6: memref<3x24x8xbf16, #tpu.memory_space<vmem>>, %arg7: memref<3x24x8xbf16, #tpu.memory_space<vmem>>, %arg8: memref<1x8xf32, #tpu.memory_space<vmem>>, %arg9: memref<1x8xf32, #tpu.memory_space<vmem>>, %arg10: memref<1x16x32x8xbf16, #tpu.memory_space<vmem>>) attributes {dimension_semantics = [#tpu.dimension_semantics<parallel>, #tpu.dimension_semantics<parallel>], iteration_bounds = array<i64: 2, 2>, scalar_prefetch = 0 : i64, scratch_operands = 0 : i64, tpu.core_type = #tpu.core_type<tc>, window_params = [{transform_indices = @transform_0, window_bounds = array<i64: 1, 16, 34, 8>}, {transform_indices = @transform_1, window_bounds = array<i64: 1, 16, 34, 8>}, {transform_indices = @transform_2, window_bounds = array<i64: 1, 2, 34, 8>}, {transform_indices = @transform_3, window_bounds = array<i64: 1, 2, 34, 8>}, {pipeline_mode = #tpu.pipeline_mode<synchronous>, transform_indices = @transform_4, window_bounds = array<i64: 3, 24, 8>}, {pipeline_mode = #tpu.pipeline_mode<synchronous>, transform_indices = @transform_5, window_bounds = array<i64: 3, 24, 8>}, {pipeline_mode = #tpu.pipeline_mode<synchronous>, transform_indices = @transform_6, window_bounds = array<i64: 1, 8>}, {pipeline_mode = #tpu.pipeline_mode<synchronous>, transform_indices = @transform_7, window_bounds = array<i64: 1, 8>}, {transform_indices = @transform_8, window_bounds = array<i64: 1, 16, 32, 8>}]} {
    %cst = arith.constant 0.000000e+00 : f32
    %0 = vector.broadcast %cst : f32 to vector<512x8xf32>
    %c0 = arith.constant 0 : index
    %c0_0 = arith.constant 0 : index
    %c0_1 = arith.constant 0 : index
    %c0_2 = arith.constant 0 : index
    %1 = vector.load %arg2[%c0, %c0_0, %c0_1, %c0_2] : memref<1x16x34x8xbf16, #tpu.memory_space<vmem>>, vector<1x16x34x8xbf16>
    %2 = vector.shape_cast %1 : vector<1x16x34x8xbf16> to vector<16x34x8xbf16>
    %c0_3 = arith.constant 0 : index
    %c0_4 = arith.constant 0 : index
    %c0_5 = arith.constant 0 : index
    %c0_6 = arith.constant 0 : index
    %3 = vector.load %arg4[%c0_3, %c0_4, %c0_5, %c0_6] : memref<1x2x34x8xbf16, #tpu.memory_space<vmem>>, vector<1x2x34x8xbf16>
    %4 = vector.shape_cast %3 : vector<1x2x34x8xbf16> to vector<2x34x8xbf16>
    %5 = tpu.concatenate %2, %4 in 0 : vector<16x34x8xbf16>, vector<2x34x8xbf16> -> vector<18x34x8xbf16>
    %6 = vector.extract_strided_slice %5 {offsets = [0, 0, 0], sizes = [18, 32, 8], strides = [1, 1, 1]} : vector<18x34x8xbf16> to vector<18x32x8xbf16>
    %7 = vector.extract_strided_slice %5 {offsets = [0, 1, 0], sizes = [18, 32, 8], strides = [1, 1, 1]} : vector<18x34x8xbf16> to vector<18x32x8xbf16>
    %8 = vector.extract_strided_slice %5 {offsets = [0, 2, 0], sizes = [18, 32, 8], strides = [1, 1, 1]} : vector<18x34x8xbf16> to vector<18x32x8xbf16>
    %9 = tpu.concatenate %6, %7, %8 in 2 : vector<18x32x8xbf16>, vector<18x32x8xbf16>, vector<18x32x8xbf16> -> vector<18x32x24xbf16>
    %10 = vector.extract_strided_slice %9 {offsets = [0, 0, 0], sizes = [16, 32, 24], strides = [1, 1, 1]} : vector<18x32x24xbf16> to vector<16x32x24xbf16>
    %11 = vector.shape_cast %10 : vector<16x32x24xbf16> to vector<512x24xbf16>
    %c0_7 = arith.constant 0 : index
    %c0_8 = arith.constant 0 : index
    %c0_9 = arith.constant 0 : index
    %12 = vector.load %arg6[%c0_7, %c0_8, %c0_9] : memref<3x24x8xbf16, #tpu.memory_space<vmem>>, vector<1x24x8xbf16>
    %13 = vector.shape_cast %12 : vector<1x24x8xbf16> to vector<24x8xbf16>
    %cst_10 = arith.constant dense<0.000000e+00> : vector<512x8xf32>
    %14 = tpu.matmul %11, %13, %cst_10 {dimension_numbers = #tpu.dot_dimension_numbers<[1], [0], [0], [1], [0, 0, 1, 1], [], []>} : vector<512x24xbf16>, vector<24x8xbf16>, vector<512x8xf32> -> vector<512x8xf32>
    %15 = arith.addf %0, %14 : vector<512x8xf32>
    %16 = vector.extract_strided_slice %9 {offsets = [1, 0, 0], sizes = [16, 32, 24], strides = [1, 1, 1]} : vector<18x32x24xbf16> to vector<16x32x24xbf16>
    %17 = vector.shape_cast %16 : vector<16x32x24xbf16> to vector<512x24xbf16>
    %c1 = arith.constant 1 : index
    %c0_11 = arith.constant 0 : index
    %c0_12 = arith.constant 0 : index
    %18 = vector.load %arg6[%c1, %c0_11, %c0_12] : memref<3x24x8xbf16, #tpu.memory_space<vmem>>, vector<1x24x8xbf16>
    %19 = vector.shape_cast %18 : vector<1x24x8xbf16> to vector<24x8xbf16>
    %cst_13 = arith.constant dense<0.000000e+00> : vector<512x8xf32>
    %20 = tpu.matmul %17, %19, %cst_13 {dimension_numbers = #tpu.dot_dimension_numbers<[1], [0], [0], [1], [0, 0, 1, 1], [], []>} : vector<512x24xbf16>, vector<24x8xbf16>, vector<512x8xf32> -> vector<512x8xf32>
    %21 = arith.addf %15, %20 : vector<512x8xf32>
    %22 = vector.extract_strided_slice %9 {offsets = [2, 0, 0], sizes = [16, 32, 24], strides = [1, 1, 1]} : vector<18x32x24xbf16> to vector<16x32x24xbf16>
    %23 = vector.shape_cast %22 : vector<16x32x24xbf16> to vector<512x24xbf16>
    %c2 = arith.constant 2 : index
    %c0_14 = arith.constant 0 : index
    %c0_15 = arith.constant 0 : index
    %24 = vector.load %arg6[%c2, %c0_14, %c0_15] : memref<3x24x8xbf16, #tpu.memory_space<vmem>>, vector<1x24x8xbf16>
    %25 = vector.shape_cast %24 : vector<1x24x8xbf16> to vector<24x8xbf16>
    %cst_16 = arith.constant dense<0.000000e+00> : vector<512x8xf32>
    %26 = tpu.matmul %23, %25, %cst_16 {dimension_numbers = #tpu.dot_dimension_numbers<[1], [0], [0], [1], [0, 0, 1, 1], [], []>} : vector<512x24xbf16>, vector<24x8xbf16>, vector<512x8xf32> -> vector<512x8xf32>
    %27 = arith.addf %21, %26 : vector<512x8xf32>
    %c0_17 = arith.constant 0 : index
    %c0_18 = arith.constant 0 : index
    %c0_19 = arith.constant 0 : index
    %c0_20 = arith.constant 0 : index
    %28 = vector.load %arg3[%c0_17, %c0_18, %c0_19, %c0_20] : memref<1x16x34x8xbf16, #tpu.memory_space<vmem>>, vector<1x16x34x8xbf16>
    %29 = vector.shape_cast %28 : vector<1x16x34x8xbf16> to vector<16x34x8xbf16>
    %c0_21 = arith.constant 0 : index
    %c0_22 = arith.constant 0 : index
    %c0_23 = arith.constant 0 : index
    %c0_24 = arith.constant 0 : index
    %30 = vector.load %arg5[%c0_21, %c0_22, %c0_23, %c0_24] : memref<1x2x34x8xbf16, #tpu.memory_space<vmem>>, vector<1x2x34x8xbf16>
    %31 = vector.shape_cast %30 : vector<1x2x34x8xbf16> to vector<2x34x8xbf16>
    %32 = tpu.concatenate %29, %31 in 0 : vector<16x34x8xbf16>, vector<2x34x8xbf16> -> vector<18x34x8xbf16>
    %33 = vector.extract_strided_slice %32 {offsets = [0, 0, 0], sizes = [18, 32, 8], strides = [1, 1, 1]} : vector<18x34x8xbf16> to vector<18x32x8xbf16>
    %34 = vector.extract_strided_slice %32 {offsets = [0, 1, 0], sizes = [18, 32, 8], strides = [1, 1, 1]} : vector<18x34x8xbf16> to vector<18x32x8xbf16>
    %35 = vector.extract_strided_slice %32 {offsets = [0, 2, 0], sizes = [18, 32, 8], strides = [1, 1, 1]} : vector<18x34x8xbf16> to vector<18x32x8xbf16>
    %36 = tpu.concatenate %33, %34, %35 in 2 : vector<18x32x8xbf16>, vector<18x32x8xbf16>, vector<18x32x8xbf16> -> vector<18x32x24xbf16>
    %37 = vector.extract_strided_slice %36 {offsets = [0, 0, 0], sizes = [16, 32, 24], strides = [1, 1, 1]} : vector<18x32x24xbf16> to vector<16x32x24xbf16>
    %38 = vector.shape_cast %37 : vector<16x32x24xbf16> to vector<512x24xbf16>
    %c0_25 = arith.constant 0 : index
    %c0_26 = arith.constant 0 : index
    %c0_27 = arith.constant 0 : index
    %39 = vector.load %arg7[%c0_25, %c0_26, %c0_27] : memref<3x24x8xbf16, #tpu.memory_space<vmem>>, vector<1x24x8xbf16>
    %40 = vector.shape_cast %39 : vector<1x24x8xbf16> to vector<24x8xbf16>
    %cst_28 = arith.constant dense<0.000000e+00> : vector<512x8xf32>
    %41 = tpu.matmul %38, %40, %cst_28 {dimension_numbers = #tpu.dot_dimension_numbers<[1], [0], [0], [1], [0, 0, 1, 1], [], []>} : vector<512x24xbf16>, vector<24x8xbf16>, vector<512x8xf32> -> vector<512x8xf32>
    %42 = arith.addf %27, %41 : vector<512x8xf32>
    %43 = vector.extract_strided_slice %36 {offsets = [1, 0, 0], sizes = [16, 32, 24], strides = [1, 1, 1]} : vector<18x32x24xbf16> to vector<16x32x24xbf16>
    %44 = vector.shape_cast %43 : vector<16x32x24xbf16> to vector<512x24xbf16>
    %c1_29 = arith.constant 1 : index
    %c0_30 = arith.constant 0 : index
    %c0_31 = arith.constant 0 : index
    %45 = vector.load %arg7[%c1_29, %c0_30, %c0_31] : memref<3x24x8xbf16, #tpu.memory_space<vmem>>, vector<1x24x8xbf16>
    %46 = vector.shape_cast %45 : vector<1x24x8xbf16> to vector<24x8xbf16>
    %cst_32 = arith.constant dense<0.000000e+00> : vector<512x8xf32>
    %47 = tpu.matmul %44, %46, %cst_32 {dimension_numbers = #tpu.dot_dimension_numbers<[1], [0], [0], [1], [0, 0, 1, 1], [], []>} : vector<512x24xbf16>, vector<24x8xbf16>, vector<512x8xf32> -> vector<512x8xf32>
    %48 = arith.addf %42, %47 : vector<512x8xf32>
    %49 = vector.extract_strided_slice %36 {offsets = [2, 0, 0], sizes = [16, 32, 24], strides = [1, 1, 1]} : vector<18x32x24xbf16> to vector<16x32x24xbf16>
    %50 = vector.shape_cast %49 : vector<16x32x24xbf16> to vector<512x24xbf16>
    %c2_33 = arith.constant 2 : index
    %c0_34 = arith.constant 0 : index
    %c0_35 = arith.constant 0 : index
    %51 = vector.load %arg7[%c2_33, %c0_34, %c0_35] : memref<3x24x8xbf16, #tpu.memory_space<vmem>>, vector<1x24x8xbf16>
    %52 = vector.shape_cast %51 : vector<1x24x8xbf16> to vector<24x8xbf16>
    %cst_36 = arith.constant dense<0.000000e+00> : vector<512x8xf32>
    %53 = tpu.matmul %50, %52, %cst_36 {dimension_numbers = #tpu.dot_dimension_numbers<[1], [0], [0], [1], [0, 0, 1, 1], [], []>} : vector<512x24xbf16>, vector<24x8xbf16>, vector<512x8xf32> -> vector<512x8xf32>
    %54 = arith.addf %48, %53 : vector<512x8xf32>
    %c0_37 = arith.constant 0 : index
    %c0_38 = arith.constant 0 : index
    %55 = vector.load %arg8[%c0_37, %c0_38] : memref<1x8xf32, #tpu.memory_space<vmem>>, vector<1x8xf32>
    %56 = vector.broadcast %55 : vector<1x8xf32> to vector<512x8xf32>
    %57 = arith.mulf %54, %56 : vector<512x8xf32>
    %c0_39 = arith.constant 0 : index
    %c0_40 = arith.constant 0 : index
    %58 = vector.load %arg9[%c0_39, %c0_40] : memref<1x8xf32, #tpu.memory_space<vmem>>, vector<1x8xf32>
    %59 = vector.broadcast %58 : vector<1x8xf32> to vector<512x8xf32>
    %60 = arith.addf %57, %59 : vector<512x8xf32>
    %cst_41 = arith.constant 0.000000e+00 : f32
    %61 = vector.broadcast %cst_41 : f32 to vector<512x8xf32>
    %62 = arith.maximumf %60, %61 : vector<512x8xf32>
    %63 = vector.shape_cast %62 : vector<512x8xf32> to vector<1x16x32x8xf32>
    %64 = arith.truncf %63 : vector<1x16x32x8xf32> to vector<1x16x32x8xbf16>
    %c0_42 = arith.constant 0 : index
    %c0_43 = arith.constant 0 : index
    %c0_44 = arith.constant 0 : index
    %c0_45 = arith.constant 0 : index
    %65 = vector.load %arg10[%c0_42, %c0_43, %c0_44, %c0_45] : memref<1x16x32x8xbf16, #tpu.memory_space<vmem>>, vector<1x16x32x8xbf16>
    tpu.vector_store %arg10[%c0_42, %c0_43, %c0_44, %c0_45], %64 {strides = array<i32>} : memref<1x16x32x8xbf16, #tpu.memory_space<vmem>>, vector<1x16x32x8xbf16>,
    return
  }
  func.func @transform_0(%arg0: i32, %arg1: i32) -> (i32, i32, i32, i32) {
    %c0_i32 = arith.constant 0 : i32
    %c0_i32_0 = arith.constant 0 : i32
    %c0_i32_1 = arith.constant 0 : i32
    return %arg0, %arg1, %c0_i32, %c0_i32_0 : i32, i32, i32, i32
  }
  func.func @transform_1(%arg0: i32, %arg1: i32) -> (i32, i32, i32, i32) {
    %c0_i32 = arith.constant 0 : i32
    %c0_i32_0 = arith.constant 0 : i32
    %c0_i32_1 = arith.constant 0 : i32
    return %arg0, %arg1, %c0_i32, %c0_i32_0 : i32, i32, i32, i32
  }
  func.func @transform_2(%arg0: i32, %arg1: i32) -> (i32, i32, i32, i32) {
    %c1_i32 = arith.constant 1 : i32
    %0 = arith.addi %arg1, %c1_i32 : i32
    %c8_i32 = arith.constant 8 : i32
    %1 = arith.muli %0, %c8_i32 : i32
    %c0_i32 = arith.constant 0 : i32
    %c0_i32_0 = arith.constant 0 : i32
    %c0_i32_1 = arith.constant 0 : i32
    return %arg0, %1, %c0_i32, %c0_i32_0 : i32, i32, i32, i32
  }
  func.func @transform_3(%arg0: i32, %arg1: i32) -> (i32, i32, i32, i32) {
    %c1_i32 = arith.constant 1 : i32
    %0 = arith.addi %arg1, %c1_i32 : i32
    %c8_i32 = arith.constant 8 : i32
    %1 = arith.muli %0, %c8_i32 : i32
    %c0_i32 = arith.constant 0 : i32
    %c0_i32_0 = arith.constant 0 : i32
    %c0_i32_1 = arith.constant 0 : i32
    return %arg0, %1, %c0_i32, %c0_i32_0 : i32, i32, i32, i32
  }
  func.func @transform_4(%arg0: i32, %arg1: i32) -> (i32, i32, i32) {
    %c0_i32 = arith.constant 0 : i32
    %c0_i32_0 = arith.constant 0 : i32
    %c0_i32_1 = arith.constant 0 : i32
    %c0_i32_2 = arith.constant 0 : i32
    return %c0_i32, %c0_i32_0, %c0_i32_1 : i32, i32, i32
  }
  func.func @transform_5(%arg0: i32, %arg1: i32) -> (i32, i32, i32) {
    %c0_i32 = arith.constant 0 : i32
    %c0_i32_0 = arith.constant 0 : i32
    %c0_i32_1 = arith.constant 0 : i32
    %c0_i32_2 = arith.constant 0 : i32
    return %c0_i32, %c0_i32_0, %c0_i32_1 : i32, i32, i32
  }
  func.func @transform_6(%arg0: i32, %arg1: i32) -> (i32, i32) {
    %c0_i32 = arith.constant 0 : i32
    %c0_i32_0 = arith.constant 0 : i32
    %c0_i32_1 = arith.constant 0 : i32
    return %c0_i32, %c0_i32_0 : i32, i32
  }
  func.func @transform_7(%arg0: i32, %arg1: i32) -> (i32, i32) {
    %c0_i32 = arith.constant 0 : i32
    %c0_i32_0 = arith.constant 0 : i32
    %c0_i32_1 = arith.constant 0 : i32
    return %c0_i32, %c0_i32_0 : i32, i32
  }
  func.func @transform_8(%arg0: i32, %arg1: i32) -> (i32, i32, i32, i32) {
    %c0_i32 = arith.constant 0 : i32
    %c0_i32_0 = arith.constant 0 : i32
    %c0_i32_1 = arith.constant 0 : i32
    return %arg0, %arg1, %c0_i32, %c0_i32_0 : i32, i32, i32, i32
  }
}

module attributes {stable_mosaic.version = 11 : i64} {
  func.func @kernel(%arg0: i32, %arg1: i32, %arg2: memref<1x16x34x8xbf16, #tpu.memory_space<vmem>>, %arg3: memref<1x2x34x8xbf16, #tpu.memory_space<vmem>>, %arg4: memref<3x24x8xbf16, #tpu.memory_space<vmem>>, %arg5: memref<1x8xf32, #tpu.memory_space<vmem>>, %arg6: memref<1x8xf32, #tpu.memory_space<vmem>>, %arg7: memref<1x16x32x8xf32, #tpu.memory_space<vmem>>) attributes {dimension_semantics = [#tpu.dimension_semantics<parallel>, #tpu.dimension_semantics<parallel>], iteration_bounds = array<i64: 2, 2>, scalar_prefetch = 0 : i64, scratch_operands = 0 : i64, tpu.core_type = #tpu.core_type<tc>, window_params = [{transform_indices = @transform_0, window_bounds = array<i64: 1, 16, 34, 8>}, {transform_indices = @transform_1, window_bounds = array<i64: 1, 2, 34, 8>}, {pipeline_mode = #tpu.pipeline_mode<synchronous>, transform_indices = @transform_2, window_bounds = array<i64: 3, 24, 8>}, {pipeline_mode = #tpu.pipeline_mode<synchronous>, transform_indices = @transform_3, window_bounds = array<i64: 1, 8>}, {pipeline_mode = #tpu.pipeline_mode<synchronous>, transform_indices = @transform_4, window_bounds = array<i64: 1, 8>}, {transform_indices = @transform_5, window_bounds = array<i64: 1, 16, 32, 8>}]} {
    %cst = arith.constant 0.000000e+00 : f32
    %0 = vector.broadcast %cst : f32 to vector<512x8xf32>
    %c0 = arith.constant 0 : index
    %c0_0 = arith.constant 0 : index
    %c0_1 = arith.constant 0 : index
    %c0_2 = arith.constant 0 : index
    %1 = vector.load %arg2[%c0, %c0_0, %c0_1, %c0_2] : memref<1x16x34x8xbf16, #tpu.memory_space<vmem>>, vector<1x16x34x8xbf16>
    %2 = vector.shape_cast %1 : vector<1x16x34x8xbf16> to vector<16x34x8xbf16>
    %c0_3 = arith.constant 0 : index
    %c0_4 = arith.constant 0 : index
    %c0_5 = arith.constant 0 : index
    %c0_6 = arith.constant 0 : index
    %3 = vector.load %arg3[%c0_3, %c0_4, %c0_5, %c0_6] : memref<1x2x34x8xbf16, #tpu.memory_space<vmem>>, vector<1x2x34x8xbf16>
    %4 = vector.shape_cast %3 : vector<1x2x34x8xbf16> to vector<2x34x8xbf16>
    %5 = tpu.concatenate %2, %4 in 0 : vector<16x34x8xbf16>, vector<2x34x8xbf16> -> vector<18x34x8xbf16>
    %6 = vector.extract_strided_slice %5 {offsets = [0, 0, 0], sizes = [18, 32, 8], strides = [1, 1, 1]} : vector<18x34x8xbf16> to vector<18x32x8xbf16>
    %7 = vector.extract_strided_slice %5 {offsets = [0, 1, 0], sizes = [18, 32, 8], strides = [1, 1, 1]} : vector<18x34x8xbf16> to vector<18x32x8xbf16>
    %8 = vector.extract_strided_slice %5 {offsets = [0, 2, 0], sizes = [18, 32, 8], strides = [1, 1, 1]} : vector<18x34x8xbf16> to vector<18x32x8xbf16>
    %9 = tpu.concatenate %6, %7, %8 in 2 : vector<18x32x8xbf16>, vector<18x32x8xbf16>, vector<18x32x8xbf16> -> vector<18x32x24xbf16>
    %10 = vector.extract_strided_slice %9 {offsets = [0, 0, 0], sizes = [16, 32, 24], strides = [1, 1, 1]} : vector<18x32x24xbf16> to vector<16x32x24xbf16>
    %11 = vector.shape_cast %10 : vector<16x32x24xbf16> to vector<512x24xbf16>
    %c0_7 = arith.constant 0 : index
    %c0_8 = arith.constant 0 : index
    %c0_9 = arith.constant 0 : index
    %12 = vector.load %arg4[%c0_7, %c0_8, %c0_9] : memref<3x24x8xbf16, #tpu.memory_space<vmem>>, vector<1x24x8xbf16>
    %13 = vector.shape_cast %12 : vector<1x24x8xbf16> to vector<24x8xbf16>
    %cst_10 = arith.constant dense<0.000000e+00> : vector<512x8xf32>
    %14 = tpu.matmul %11, %13, %cst_10 {dimension_numbers = #tpu.dot_dimension_numbers<[1], [0], [0], [1], [0, 0, 1, 1], [], []>} : vector<512x24xbf16>, vector<24x8xbf16>, vector<512x8xf32> -> vector<512x8xf32>
    %15 = arith.addf %0, %14 : vector<512x8xf32>
    %16 = vector.extract_strided_slice %9 {offsets = [1, 0, 0], sizes = [16, 32, 24], strides = [1, 1, 1]} : vector<18x32x24xbf16> to vector<16x32x24xbf16>
    %17 = vector.shape_cast %16 : vector<16x32x24xbf16> to vector<512x24xbf16>
    %c1 = arith.constant 1 : index
    %c0_11 = arith.constant 0 : index
    %c0_12 = arith.constant 0 : index
    %18 = vector.load %arg4[%c1, %c0_11, %c0_12] : memref<3x24x8xbf16, #tpu.memory_space<vmem>>, vector<1x24x8xbf16>
    %19 = vector.shape_cast %18 : vector<1x24x8xbf16> to vector<24x8xbf16>
    %cst_13 = arith.constant dense<0.000000e+00> : vector<512x8xf32>
    %20 = tpu.matmul %17, %19, %cst_13 {dimension_numbers = #tpu.dot_dimension_numbers<[1], [0], [0], [1], [0, 0, 1, 1], [], []>} : vector<512x24xbf16>, vector<24x8xbf16>, vector<512x8xf32> -> vector<512x8xf32>
    %21 = arith.addf %15, %20 : vector<512x8xf32>
    %22 = vector.extract_strided_slice %9 {offsets = [2, 0, 0], sizes = [16, 32, 24], strides = [1, 1, 1]} : vector<18x32x24xbf16> to vector<16x32x24xbf16>
    %23 = vector.shape_cast %22 : vector<16x32x24xbf16> to vector<512x24xbf16>
    %c2 = arith.constant 2 : index
    %c0_14 = arith.constant 0 : index
    %c0_15 = arith.constant 0 : index
    %24 = vector.load %arg4[%c2, %c0_14, %c0_15] : memref<3x24x8xbf16, #tpu.memory_space<vmem>>, vector<1x24x8xbf16>
    %25 = vector.shape_cast %24 : vector<1x24x8xbf16> to vector<24x8xbf16>
    %cst_16 = arith.constant dense<0.000000e+00> : vector<512x8xf32>
    %26 = tpu.matmul %23, %25, %cst_16 {dimension_numbers = #tpu.dot_dimension_numbers<[1], [0], [0], [1], [0, 0, 1, 1], [], []>} : vector<512x24xbf16>, vector<24x8xbf16>, vector<512x8xf32> -> vector<512x8xf32>
    %27 = arith.addf %21, %26 : vector<512x8xf32>
    %c0_17 = arith.constant 0 : index
    %c0_18 = arith.constant 0 : index
    %28 = vector.load %arg5[%c0_17, %c0_18] : memref<1x8xf32, #tpu.memory_space<vmem>>, vector<1x8xf32>
    %29 = vector.broadcast %28 : vector<1x8xf32> to vector<512x8xf32>
    %30 = arith.mulf %27, %29 : vector<512x8xf32>
    %c0_19 = arith.constant 0 : index
    %c0_20 = arith.constant 0 : index
    %31 = vector.load %arg6[%c0_19, %c0_20] : memref<1x8xf32, #tpu.memory_space<vmem>>, vector<1x8xf32>
    %32 = vector.broadcast %31 : vector<1x8xf32> to vector<512x8xf32>
    %33 = arith.addf %30, %32 : vector<512x8xf32>
    %cst_21 = arith.constant 0.000000e+00 : f32
    %34 = vector.broadcast %cst_21 : f32 to vector<512x8xf32>
    %35 = arith.maximumf %33, %34 : vector<512x8xf32>
    %36 = vector.shape_cast %35 : vector<512x8xf32> to vector<1x16x32x8xf32>
    %c0_22 = arith.constant 0 : index
    %c0_23 = arith.constant 0 : index
    %c0_24 = arith.constant 0 : index
    %c0_25 = arith.constant 0 : index
    %37 = vector.load %arg7[%c0_22, %c0_23, %c0_24, %c0_25] : memref<1x16x32x8xf32, #tpu.memory_space<vmem>>, vector<1x16x32x8xf32>
    tpu.vector_store %arg7[%c0_22, %c0_23, %c0_24, %c0_25], %36 {strides = array<i32>} : memref<1x16x32x8xf32, #tpu.memory_space<vmem>>, vector<1x16x32x8xf32>,
    return
  }
  func.func @transform_0(%arg0: i32, %arg1: i32) -> (i32, i32, i32, i32) {
    %c0_i32 = arith.constant 0 : i32
    %c0_i32_0 = arith.constant 0 : i32
    %c0_i32_1 = arith.constant 0 : i32
    return %arg0, %arg1, %c0_i32, %c0_i32_0 : i32, i32, i32, i32
  }
  func.func @transform_1(%arg0: i32, %arg1: i32) -> (i32, i32, i32, i32) {
    %c1_i32 = arith.constant 1 : i32
    %0 = arith.addi %arg1, %c1_i32 : i32
    %c8_i32 = arith.constant 8 : i32
    %1 = arith.muli %0, %c8_i32 : i32
    %c0_i32 = arith.constant 0 : i32
    %c0_i32_0 = arith.constant 0 : i32
    %c0_i32_1 = arith.constant 0 : i32
    return %arg0, %1, %c0_i32, %c0_i32_0 : i32, i32, i32, i32
  }
  func.func @transform_2(%arg0: i32, %arg1: i32) -> (i32, i32, i32) {
    %c0_i32 = arith.constant 0 : i32
    %c0_i32_0 = arith.constant 0 : i32
    %c0_i32_1 = arith.constant 0 : i32
    %c0_i32_2 = arith.constant 0 : i32
    return %c0_i32, %c0_i32_0, %c0_i32_1 : i32, i32, i32
  }
  func.func @transform_3(%arg0: i32, %arg1: i32) -> (i32, i32) {
    %c0_i32 = arith.constant 0 : i32
    %c0_i32_0 = arith.constant 0 : i32
    %c0_i32_1 = arith.constant 0 : i32
    return %c0_i32, %c0_i32_0 : i32, i32
  }
  func.func @transform_4(%arg0: i32, %arg1: i32) -> (i32, i32) {
    %c0_i32 = arith.constant 0 : i32
    %c0_i32_0 = arith.constant 0 : i32
    %c0_i32_1 = arith.constant 0 : i32
    return %c0_i32, %c0_i32_0 : i32, i32
  }
  func.func @transform_5(%arg0: i32, %arg1: i32) -> (i32, i32, i32, i32) {
    %c0_i32 = arith.constant 0 : i32
    %c0_i32_0 = arith.constant 0 : i32
    %c0_i32_1 = arith.constant 0 : i32
    return %arg0, %arg1, %c0_i32, %c0_i32_0 : i32, i32, i32, i32
  }
}

</mosaic_0001>

<llo_original>
// kernel: tile.8
$region0: #{tile.8}
  #allocation0 [shape = 's32[1]{0}', space=sflag, size = 0x4, scoped, tag = 'scoped memory for tile.8']
  %s0 = inlined_call_operand.vmem [shape: f32[8], index: 0, kind: input, shape index: {}]
  %s1 = inlined_call_operand.vmem [shape: f32[4,8], index: 1, kind: output, shape index: {}]
  // Predicated region
  $region2: #{tile.8} parent=0 // pred_check
    _
  $region3: #{tile.8} parent=0 // pred_check_branch
    %3 = sbr.rel (0) target = $region5
  $region4: #{tile.8} parent=0 // pred_region
    _
  $region5: #{tile.8} parent=0 // pred_fallthru
    _
  %v4 = vld [vmem:[%s0] ss:$0 sm:$0xff]
  %5 = vst [vmem:[%s1] sm:$0xf] %v4

// kernel: tile.9
$region0: #{tile.9}
  %s0 = inlined_call_operand.vmem [shape: f32[4,8], index: 0, kind: input, shape index: {}]
  %s1 = inlined_call_operand.vmem [shape: f32[1,32], index: 1, kind: output, shape index: {}]
  $region1: #{tile.9} parent=0
    #allocation0 [shape = 'u8[4096]{0}', space=vmem, size = 0x1000, scoped, tag = 'scoped mem for output reshape']
    #allocation1 [shape = 'u8[4096]{0}', space=vmem, size = 0x1000, scoped, tag = 'scoped mem for input reshape']
    %s3 = sshllo.u32 0, 4
    %v4 = vld [vmem:[%s0] sm:%s3]
    %5 = vst [vmem:[#allocation1] sm:%s3] %v4
    %v6 = vld [vmem:[#allocation1] sm:$0x1]
    %vm7 = vcmask 64512
    %8 = vst.msk [vmem:[#allocation0] sm:$0x1] %vm7, %v6
    %s9 = scalar_lea.vmem [#allocation1], 3
    %v10 = vld [vmem:[%s9] sm:$0x1]
    %11 = vrot.lane.b32.xlu0 %v10, 24
    %v12 = vpop.permute.xlu0 %11
    %vm13 = vcmask 261312
    %14 = vst.msk [vmem:[#allocation0] sm:$0x1] %vm13, %v12
    %s15 = scalar_lea.vmem [#allocation1], 2
    %v16 = vld [vmem:[%s15] sm:$0x1]
    %17 = vrot.lane.b32.xlu0 %v16, 16
    %v18 = vpop.permute.xlu0 %17
    %vm19 = vcmask 195712
    %20 = vst.msk [vmem:[#allocation0] sm:$0x1] %vm19, %v18
    %s21 = scalar_lea.vmem [#allocation1], 1
    %v22 = vld [vmem:[%s21] sm:$0x1]
    %23 = vrot.lane.b32.xlu0 %v22, 8
    %v24 = vpop.permute.xlu0 %23
    %vm25 = vcmask 130112
    %26 = vst.msk [vmem:[#allocation0] sm:$0x1] %vm25, %v24
    %s28 = sshllo.u32 0, 1
    %v30 = vld [vmem:[#allocation0] sm:%s28]
    %s31 = sshllo.u32 0, 1
    %32 = vst [vmem:[%s1] sm:%s31] %v30

// kernel: double_upconv2d_forward.3
$region0: #{double_upconv2d_forward.3}
  #allocation0 [shape = 'u32[]', space=smem, size = 0x4, offset = 0x4, fixed_abs, tag = 'smem constant byte address 0x4 - core index']
  #allocation1 [shape = 'u32[144,128]{1,0:T(1,128)}', space=vmem, size = 0x12000, scoped, tag = 'internal scratch']
  %s0 = inlined_call_operand.vmem [shape: bf16[512,16], index: 0, kind: input, shape index: {}]
  %s1 = inlined_call_operand.vmem [shape: bf16[16,32], index: 1, kind: input, shape index: {}]
  %s2 = inlined_call_operand.vmem [shape: f32[1,32], index: 2, kind: input, shape index: {}]
  %s3 = inlined_call_operand.vmem [shape: bf16[512,32], index: 3, kind: output, shape index: {}]
  %s4 = sld [smem:[#allocation0]]
  $region45: #{double_upconv2d_forward.3} parent=0
    _
  %s6 = ssub.s32 1, %s4
  %s7 = scalar_select 0, %s6, %s4
  loop: start=0, step=1, limit=4
  $region2: #{double_upconv2d_forward.3} parent=0 // loop_pre_header
    _
  $region3: #{double_upconv2d_forward.3} parent=0 // loop_header
    %s9 = sphi 0, %s13
    %p10 = scmp.ge.s32.totalorder %s9, 4
    %s19 = sphi 0, %s21
    %s22 = sphi 0, %s19
    %s23 = sphi 0, %s22
    %s39 = sphi 0, %s23
    %s43 = sphi 0, %s43
    %s45 = sphi 0, %s43
    %s46 = sphi 0, %s45
    %s60 = sphi 0, %s46
    %s64 = sphi 0, %s64
    %s66 = sphi 0, %s64
    %s67 = sphi 0, %s66
    %s81 = sphi 0, %s67
    %s87 = sphi 0, %s89
    %s90 = sphi 0, %s87
    %s91 = sphi 0, %s90
    %s107 = sphi 0, %s91
  $region4: #{double_upconv2d_forward.3} parent=0 // loop_header_branch
    %12 = sbr.rel (%p10) target = $region8
  $region5: #{double_upconv2d_forward.3} parent=0 // loop_body
    %s14 = ssub.s32 %s9, 1
    %s15 = ssub.s32 %s9, 2
    %s16 = sadd.s32 %s9, 1
    %s17 = ssub.s32 %s9, %s16
    %p18 = scmp.eq.s32.totalorder %s17, 0
    %s20 = sadd.s32 %s19, 1
    %s21 = scalar_select %p18, %s19, %s20
    %p24 = pneg %p18
    %p25 = scmp.eq.s32.totalorder %s9, 1
    %p26 = por %p24, %p25
    %p27 = scmp.ne.s32.totalorder %s19, %s22
    %p28 = scmp.eq.s32.totalorder %s9, 0
    %p29 = por %p27, %p28
    %p30 = scmp.ne.s32.totalorder %s19, %s22
    %p31 = scmp.eq.s32.totalorder %s14, 1
    %p32 = por %p30, %p31
    %p33 = scmp.ne.s32.totalorder %s22, %s23
    %p34 = scmp.eq.s32.totalorder %s14, 0
    %p35 = por %p33, %p34
    %p36 = scmp.ne.s32.totalorder %s22, %s23
    %p37 = scmp.eq.s32.totalorder %s15, 1
    %p38 = por %p36, %p37
    %p40 = scmp.ne.s32.totalorder %s23, %s39
    %p41 = scmp.eq.s32.totalorder %s15, 0
    %p42 = por %p40, %p41
    %s44 = sadd.s32 %s43, 1
    %p47 = scmp.eq.s32.totalorder %s9, 1
    %p48 = scmp.ne.s32.totalorder %s43, %s45
    %p49 = scmp.eq.s32.totalorder %s9, 0
    %p50 = por %p48, %p49
    %p51 = scmp.ne.s32.totalorder %s43, %s45
    %p52 = scmp.eq.s32.totalorder %s14, 1
    %p53 = por %p51, %p52
    %p54 = scmp.ne.s32.totalorder %s45, %s46
    %p55 = scmp.eq.s32.totalorder %s14, 0
    %p56 = por %p54, %p55
    %p57 = scmp.ne.s32.totalorder %s45, %s46
    %p58 = scmp.eq.s32.totalorder %s15, 1
    %p59 = por %p57, %p58
    %p61 = scmp.ne.s32.totalorder %s46, %s60
    %p62 = scmp.eq.s32.totalorder %s15, 0
    %p63 = por %p61, %p62
    %s65 = sadd.s32 %s64, 1
    %p68 = scmp.eq.s32.totalorder %s9, 1
    %p69 = scmp.ne.s32.totalorder %s64, %s66
    %p70 = scmp.eq.s32.totalorder %s9, 0
    %p71 = por %p69, %p70
    %p72 = scmp.ne.s32.totalorder %s64, %s66
    %p73 = scmp.eq.s32.totalorder %s14, 1
    %p74 = por %p72, %p73
    %p75 = scmp.ne.s32.totalorder %s66, %s67
    %p76 = scmp.eq.s32.totalorder %s14, 0
    %p77 = por %p75, %p76
    %p78 = scmp.ne.s32.totalorder %s66, %s67
    %p79 = scmp.eq.s32.totalorder %s15, 1
    %p80 = por %p78, %p79
    %p82 = scmp.ne.s32.totalorder %s67, %s81
    %p83 = scmp.eq.s32.totalorder %s15, 0
    %p84 = por %p82, %p83
    %s85 = ssub.s32 %s9, %s16
    %p86 = scmp.eq.s32.totalorder %s85, 0
    %s88 = sadd.s32 %s87, 1
    %s89 = scalar_select %p86, %s87, %s88
    %p92 = pneg %p86
    %p93 = scmp.eq.s32.totalorder %s9, 1
    %p94 = por %p92, %p93
    %p95 = scmp.ne.s32.totalorder %s87, %s90
    %p96 = scmp.eq.s32.totalorder %s9, 0
    %p97 = por %p95, %p96
    %p98 = scmp.ne.s32.totalorder %s87, %s90
    %p99 = scmp.eq.s32.totalorder %s14, 1
    %p100 = por %p98, %p99
    %p101 = scmp.ne.s32.totalorder %s90, %s91
    %p102 = scmp.eq.s32.totalorder %s14, 0
    %p103 = por %p101, %p102
    %p104 = scmp.ne.s32.totalorder %s90, %s91
    %p105 = scmp.eq.s32.totalorder %s15, 1
    %p106 = por %p104, %p105
    %p108 = scmp.ne.s32.totalorder %s91, %s107
    %p109 = scmp.eq.s32.totalorder %s15, 0
    %p110 = por %p108, %p109
    %p111 = scmp.le.s32.totalorder 1, %s9
    %p112 = scmp.lt.s32.totalorder %s9, 3
    %p113 = pnand %p111, %p112
    %p114 = pneg %p113
    // Predicated region
    $region9: #{double_upconv2d_forward.3} parent=5 // pred_check
      _
    $region10: #{double_upconv2d_forward.3} parent=5 // pred_check_branch
      %116 = sbr.rel (%p113) target = $region12
    $region11: #{double_upconv2d_forward.3} parent=5 // pred_region
      %s117 = ssub.s32 %s9, 1
      // Predicated region
      $region13: #{double_upconv2d_forward.3} parent=11 // pred_check
        %p118 = pneg %p56
      $region14: #{double_upconv2d_forward.3} parent=11 // pred_check_branch
        %120 = sbr.rel (%p118) target = $region16
      $region15: #{double_upconv2d_forward.3} parent=11 // pred_region
        _
      $region16: #{double_upconv2d_forward.3} parent=11 // pred_fallthru
        _
      // Predicated region
      $region17: #{double_upconv2d_forward.3} parent=11 // pred_check
        %p121 = pneg %p77
      $region18: #{double_upconv2d_forward.3} parent=11 // pred_check_branch
        %123 = sbr.rel (%p121) target = $region20
      $region19: #{double_upconv2d_forward.3} parent=11 // pred_region
        _
      $region20: #{double_upconv2d_forward.3} parent=11 // pred_fallthru
        _
    $region12: #{double_upconv2d_forward.3} parent=5 // pred_fallthru
      _
    %p124 = scmp.lt.s32.totalorder %s9, 2
    // Predicated region
    $region21: #{double_upconv2d_forward.3} parent=5 // pred_check
      %p125 = pneg %p124
    $region22: #{double_upconv2d_forward.3} parent=5 // pred_check_branch
      %127 = sbr.rel (%p125) target = $region24
    $region23: #{double_upconv2d_forward.3} parent=5 // pred_region
      // Predicated region
      $region25: #{double_upconv2d_forward.3} parent=23 // pred_check
        %p128 = pneg %p29
      $region26: #{double_upconv2d_forward.3} parent=23 // pred_check_branch
        %130 = sbr.rel (%p128) target = $region28
      $region27: #{double_upconv2d_forward.3} parent=23 // pred_region
        %s131 = smul.u32 32, %s9
        %p132 = scmp.lt.s32.totalorder %s131, 63
        %s133 = scalar_select %p132, %s131, 63
        %s134 = smul.addr %s133, 4
        %s135 = scalar_lea.vmem %s0, %s134
        %s136 = smul.u32 32, %s9
      $region28: #{double_upconv2d_forward.3} parent=23 // pred_fallthru
        _
    $region24: #{double_upconv2d_forward.3} parent=5 // pred_fallthru
      _
    %p137 = scmp.le.s32.totalorder 1, %s9
    %p138 = scmp.lt.s32.totalorder %s9, 3
    %p139 = pnand %p137, %p138
    %p140 = pneg %p139
    // Predicated region
    $region29: #{double_upconv2d_forward.3} parent=5 // pred_check
      _
    $region30: #{double_upconv2d_forward.3} parent=5 // pred_check_branch
      %142 = sbr.rel (%p139) target = $region32
    $region31: #{double_upconv2d_forward.3} parent=5 // pred_region
      %s143 = ssub.s32 %s9, 1
      %s144 = smul.u32 32, %s14
      %p145 = scmp.lt.s32.totalorder %s144, 63
      %s146 = scalar_select %p145, %s144, 63
      %s147 = smul.addr %s146, 4
      %s148 = scalar_lea.vmem %s0, %s147
      %p149 = pneg %p35
      %p150 = pneg %p32
      %p151 = pneg %p56
      %p152 = pneg %p53
      %p153 = pneg %p77
      %p154 = pneg %p74
      %p155 = pneg %p103
      %p156 = pneg %p100
      %s157 = smul.u32 32, %s14
      %p158 = scmp.lt.s32.totalorder %s157, 63
      %s159 = scalar_select %p158, %s157, 63
      %s160 = smul.addr %s159, 4
      %s161 = scalar_lea.vmem %s3, %s160
      %s162 = smul.u32 32, %s14
      %p163 = scmp.lt.s32.totalorder %s162, 63
      %s164 = scalar_select %p163, %s162, 63
      %s165 = smul.addr %s164, 4
      %s166 = scalar_lea.vmem %s0, %s165
      %s167 = smul.u32 32, %s14
      %s168 = smul.u32 32, %s14
      %p169 = scmp.lt.s32.totalorder %s168, 63
      %s170 = scalar_select %p169, %s168, 63
      %s171 = smul.addr %s170, 4
      %s172 = scalar_lea.vmem %s3, %s171
      %s173 = smul.u32 32, %s14
      %v175 = vld [vmem:[%s166] sm:$0xf]
      %v176 = vld [vmem:[%s166 + $0x4] sm:$0xf]
      %v177 = vld [vmem:[%s166 + $0x8] sm:$0xf]
      %v178 = vld [vmem:[%s166 + $0xc] sm:$0xf]
      %v179 = vld [vmem:[%s166 + $0x10] sm:$0xf]
      %v180 = vld [vmem:[%s166 + $0x14] sm:$0xf]
      %v181 = vld [vmem:[%s166 + $0x18] sm:$0xf]
      %v182 = vld [vmem:[%s166 + $0x1c] sm:$0xf]
      %v183 = vld [vmem:[%s166 + $0x20] sm:$0xf]
      %v184 = vld [vmem:[%s166 + $0x24] sm:$0xf]
      %v185 = vld [vmem:[%s166 + $0x28] sm:$0xf]
      %v186 = vld [vmem:[%s166 + $0x2c] sm:$0xf]
      %v187 = vld [vmem:[%s166 + $0x30] sm:$0xf]
      %v188 = vld [vmem:[%s166 + $0x34] sm:$0xf]
      %v189 = vld [vmem:[%s166 + $0x38] sm:$0xf]
      %v190 = vld [vmem:[%s166 + $0x3c] sm:$0xf]
      %v191 = vld [vmem:[%s166 + $0x40] sm:$0xf]
      %v192 = vld [vmem:[%s166 + $0x44] sm:$0xf]
      %v193 = vld [vmem:[%s166 + $0x48] sm:$0xf]
      %v194 = vld [vmem:[%s166 + $0x4c] sm:$0xf]
      %v195 = vld [vmem:[%s166 + $0x50] sm:$0xf]
      %v196 = vld [vmem:[%s166 + $0x54] sm:$0xf]
      %v197 = vld [vmem:[%s166 + $0x58] sm:$0xf]
      %v198 = vld [vmem:[%s166 + $0x5c] sm:$0xf]
      %v199 = vld [vmem:[%s166 + $0x60] sm:$0xf]
      %v200 = vld [vmem:[%s166 + $0x64] sm:$0xf]
      %v201 = vld [vmem:[%s166 + $0x68] sm:$0xf]
      %v202 = vld [vmem:[%s166 + $0x6c] sm:$0xf]
      %v203 = vld [vmem:[%s166 + $0x70] sm:$0xf]
      %v204 = vld [vmem:[%s166 + $0x74] sm:$0xf]
      %v205 = vld [vmem:[%s166 + $0x78] sm:$0xf]
      %v206 = vld [vmem:[%s166 + $0x7c] sm:$0xf]
      %v207 = vld [vmem:[%s1] sm:$0xf]
      %v208 = vld [vmem:[%s1 + $0x4] sm:$0xf]
      %v209 = vld [vmem:[%s2] sm:$0x1]
      %v211 = vlaneseq
      %v212 = vshrl.u32 %v211, 7
      %v213 = vsub.s32 0, %v212
      %v214 = vrot.slane %v209, %v213
      %v248 = vunpack.c.l.b16 %v175
      %v249 = vunpack.c.l.b16 %v176
      %v250 = vunpack.c.l.b16 %v177
      %v251 = vunpack.c.l.b16 %v178
      %v252 = vunpack.c.l.b16 %v179
      %v253 = vunpack.c.l.b16 %v180
      %v254 = vunpack.c.l.b16 %v181
      %v255 = vunpack.c.l.b16 %v182
      %v256 = vunpack.c.l.b16 %v183
      %v257 = vunpack.c.l.b16 %v184
      %v258 = vunpack.c.l.b16 %v185
      %v259 = vunpack.c.l.b16 %v186
      %v260 = vunpack.c.l.b16 %v187
      %v261 = vunpack.c.l.b16 %v188
      %v262 = vunpack.c.l.b16 %v189
      %v263 = vunpack.c.l.b16 %v190
      %v264 = vunpack.c.l.b16 %v191
      %v265 = vunpack.c.l.b16 %v192
      %v266 = vunpack.c.l.b16 %v193
      %v267 = vunpack.c.l.b16 %v194
      %v268 = vunpack.c.l.b16 %v195
      %v269 = vunpack.c.l.b16 %v196
      %v270 = vunpack.c.l.b16 %v197
      %v271 = vunpack.c.l.b16 %v198
      %v272 = vunpack.c.l.b16 %v199
      %v273 = vunpack.c.l.b16 %v200
      %v274 = vunpack.c.l.b16 %v201
      %v275 = vunpack.c.l.b16 %v202
      %v276 = vunpack.c.l.b16 %v203
      %v277 = vunpack.c.l.b16 %v204
      %v278 = vunpack.c.l.b16 %v205
      %v279 = vunpack.c.l.b16 %v206
      %v280 = vpack.c.b16 %v249, %v248
      %v281 = vpack.c.b16 %v251, %v250
      %v282 = vpack.c.b16 %v253, %v252
      %v283 = vpack.c.b16 %v255, %v254
      %v284 = vpack.c.b16 %v257, %v256
      %v285 = vpack.c.b16 %v259, %v258
      %v286 = vpack.c.b16 %v261, %v260
      %v287 = vpack.c.b16 %v263, %v262
      %v288 = vpack.c.b16 %v265, %v264
      %v289 = vpack.c.b16 %v267, %v266
      %v290 = vpack.c.b16 %v269, %v268
      %v291 = vpack.c.b16 %v271, %v270
      %v292 = vpack.c.b16 %v273, %v272
      %v293 = vpack.c.b16 %v275, %v274
      %v294 = vpack.c.b16 %v277, %v276
      %v295 = vpack.c.b16 %v279, %v278
      %v298 = vunpack.c.l.b16 %v207
      %v299 = vunpack.c.l.b16 %v208
      %v300 = vpack.c.b16 %v299, %v298
      %vm302 = vcmask 130048
      %v304 = vsel %vm302, %v280, 0
      %v307 = vsel %vm302, %v281, 0
      %v310 = vsel %vm302, %v282, 0
      %v313 = vsel %vm302, %v283, 0
      %v316 = vsel %vm302, %v284, 0
      %v319 = vsel %vm302, %v285, 0
      %v322 = vsel %vm302, %v286, 0
      %v325 = vsel %vm302, %v287, 0
      %v328 = vsel %vm302, %v288, 0
      %v331 = vsel %vm302, %v289, 0
      %v334 = vsel %vm302, %v290, 0
      %v337 = vsel %vm302, %v291, 0
      %v340 = vsel %vm302, %v292, 0
      %v343 = vsel %vm302, %v293, 0
      %v346 = vsel %vm302, %v294, 0
      %v349 = vsel %vm302, %v295, 0
      %351 = vmatprep.subr.bf16.mxu0 0
      %352 = vmatpush1.bf16.msra.mxu0 %v300
      %353 = vmatprep.subr.bf16.mxu0 0
      %354 = vmatpush1.bf16.msra.mxu0 0
      %355 = vmatprep.subr.bf16.mxu0 0
      %356 = vmatpush1.bf16.msra.mxu0 0
      %357 = vmatprep.subr.bf16.mxu0 0
      %358 = vmatpush1.bf16.msra.mxu0 0
      %359 = vmatprep.subr.bf16.mxu0 0
      %360 = vmatpush1.bf16.msra.mxu0 0
      %361 = vmatprep.subr.bf16.mxu0 0
      %362 = vmatpush1.bf16.msra.mxu0 0
      %363 = vmatprep.subr.bf16.mxu0 0
      %364 = vmatpush1.bf16.msra.mxu0 0
      %365 = vmatprep.subr.bf16.mxu0 0
      %366 = vmatpush1.bf16.msra.mxu0 0
      %367 = vmatprep.subr.bf16.mxu0 0
      %368 = vmatpush1.bf16.msra.mxu0 0
      %369 = vmatprep.subr.bf16.mxu0 0
      %370 = vmatpush1.bf16.msra.mxu0 0
      %371 = vmatprep.subr.bf16.mxu0 0
      %372 = vmatpush1.bf16.msra.mxu0 0
      %373 = vmatprep.subr.bf16.mxu0 0
      %374 = vmatpush1.bf16.msra.mxu0 0
      %375 = vmatprep.subr.bf16.mxu0 0
      %376 = vmatpush1.bf16.msra.mxu0 0
      %377 = vmatprep.subr.bf16.mxu0 0
      %378 = vmatpush1.bf16.msra.mxu0 0
      %379 = vmatprep.subr.bf16.mxu0 0
      %380 = vmatpush1.bf16.msra.mxu0 0
      %381 = vmatprep.subr.bf16.mxu0 0
      %382 = vmatpush1.bf16.msra.mxu0 0
      %383 = vmatprep.mubr.bf16.mxu0 0
      %384 = vmatmul.mubr.bf16.gmra.mrb[0].mxu0 %v304
      %v385 = vpop.f32.mrb[0].mxu0
      %v386 = vadd.f32 %v214, %v385
      %v387 = vpop.f32.mrb[0].mxu0
      %v388 = vpop.f32.mrb[0].mxu0
      %v389 = vadd.f32 %v214, %v388
      %v390 = vpop.f32.mrb[0].mxu0
      %391 = vmatprep.mubr.bf16.mxu0 0
      %392 = vmatmul.mubr.bf16.gmra.mrb[0].mxu0 %v307
      %v393 = vpop.f32.mrb[0].mxu0
      %v394 = vadd.f32 %v214, %v393
      %v395 = vpop.f32.mrb[0].mxu0
      %v396 = vpop.f32.mrb[0].mxu0
      %v397 = vadd.f32 %v214, %v396
      %v398 = vpop.f32.mrb[0].mxu0
      %399 = vmatprep.mubr.bf16.mxu0 0
      %400 = vmatmul.mubr.bf16.gmra.mrb[0].mxu0 %v310
      %v401 = vpop.f32.mrb[0].mxu0
      %v402 = vadd.f32 %v214, %v401
      %v403 = vpop.f32.mrb[0].mxu0
      %v404 = vpop.f32.mrb[0].mxu0
      %v405 = vadd.f32 %v214, %v404
      %v406 = vpop.f32.mrb[0].mxu0
      %407 = vmatprep.mubr.bf16.mxu0 0
      %408 = vmatmul.mubr.bf16.gmra.mrb[0].mxu0 %v313
      %v409 = vpop.f32.mrb[0].mxu0
      %v410 = vadd.f32 %v214, %v409
      %v411 = vpop.f32.mrb[0].mxu0
      %v412 = vpop.f32.mrb[0].mxu0
      %v413 = vadd.f32 %v214, %v412
      %v414 = vpop.f32.mrb[0].mxu0
      %415 = vmatprep.mubr.bf16.mxu0 0
      %416 = vmatmul.mubr.bf16.gmra.mrb[0].mxu0 %v316
      %v417 = vpop.f32.mrb[0].mxu0
      %v418 = vadd.f32 %v214, %v417
      %v419 = vpop.f32.mrb[0].mxu0
      %v420 = vpop.f32.mrb[0].mxu0
      %v421 = vadd.f32 %v214, %v420
      %v422 = vpop.f32.mrb[0].mxu0
      %423 = vmatprep.mubr.bf16.mxu0 0
      %424 = vmatmul.mubr.bf16.gmra.mrb[0].mxu0 %v319
      %v425 = vpop.f32.mrb[0].mxu0
      %v426 = vadd.f32 %v214, %v425
      %v427 = vpop.f32.mrb[0].mxu0
      %v428 = vpop.f32.mrb[0].mxu0
      %v429 = vadd.f32 %v214, %v428
      %v430 = vpop.f32.mrb[0].mxu0
      %431 = vmatprep.mubr.bf16.mxu0 0
      %432 = vmatmul.mubr.bf16.gmra.mrb[0].mxu0 %v322
      %v433 = vpop.f32.mrb[0].mxu0
      %v434 = vadd.f32 %v214, %v433
      %v435 = vpop.f32.mrb[0].mxu0
      %v436 = vpop.f32.mrb[0].mxu0
      %v437 = vadd.f32 %v214, %v436
      %v438 = vpop.f32.mrb[0].mxu0
      %439 = vmatprep.mubr.bf16.mxu0 0
      %440 = vmatmul.mubr.bf16.gmra.mrb[0].mxu0 %v325
      %v441 = vpop.f32.mrb[0].mxu0
      %v442 = vadd.f32 %v214, %v441
      %v443 = vpop.f32.mrb[0].mxu0
      %v444 = vpop.f32.mrb[0].mxu0
      %v445 = vadd.f32 %v214, %v444
      %v446 = vpop.f32.mrb[0].mxu0
      %447 = vmatprep.mubr.bf16.mxu0 0
      %448 = vmatmul.mubr.bf16.gmra.mrb[0].mxu0 %v328
      %v449 = vpop.f32.mrb[0].mxu0
      %v450 = vadd.f32 %v214, %v449
      %v451 = vpop.f32.mrb[0].mxu0
      %v452 = vpop.f32.mrb[0].mxu0
      %v453 = vadd.f32 %v214, %v452
      %v454 = vpop.f32.mrb[0].mxu0
      %455 = vmatprep.mubr.bf16.mxu0 0
      %456 = vmatmul.mubr.bf16.gmra.mrb[0].mxu0 %v331
      %v457 = vpop.f32.mrb[0].mxu0
      %v458 = vadd.f32 %v214, %v457
      %v459 = vpop.f32.mrb[0].mxu0
      %v460 = vpop.f32.mrb[0].mxu0
      %v461 = vadd.f32 %v214, %v460
      %v462 = vpop.f32.mrb[0].mxu0
      %463 = vmatprep.mubr.bf16.mxu0 0
      %464 = vmatmul.mubr.bf16.gmra.mrb[0].mxu0 %v334
      %v465 = vpop.f32.mrb[0].mxu0
      %v466 = vadd.f32 %v214, %v465
      %v467 = vpop.f32.mrb[0].mxu0
      %v468 = vpop.f32.mrb[0].mxu0
      %v469 = vadd.f32 %v214, %v468
      %v470 = vpop.f32.mrb[0].mxu0
      %471 = vmatprep.mubr.bf16.mxu0 0
      %472 = vmatmul.mubr.bf16.gmra.mrb[0].mxu0 %v337
      %v473 = vpop.f32.mrb[0].mxu0
      %v474 = vadd.f32 %v214, %v473
      %v475 = vpop.f32.mrb[0].mxu0
      %v476 = vpop.f32.mrb[0].mxu0
      %v477 = vadd.f32 %v214, %v476
      %v478 = vpop.f32.mrb[0].mxu0
      %479 = vmatprep.mubr.bf16.mxu0 0
      %480 = vmatmul.mubr.bf16.gmra.mrb[0].mxu0 %v340
      %v481 = vpop.f32.mrb[0].mxu0
      %v482 = vadd.f32 %v214, %v481
      %v483 = vpop.f32.mrb[0].mxu0
      %v484 = vpop.f32.mrb[0].mxu0
      %v485 = vadd.f32 %v214, %v484
      %v486 = vpop.f32.mrb[0].mxu0
      %487 = vmatprep.mubr.bf16.mxu0 0
      %488 = vmatmul.mubr.bf16.gmra.mrb[0].mxu0 %v343
      %v489 = vpop.f32.mrb[0].mxu0
      %v490 = vadd.f32 %v214, %v489
      %v491 = vpop.f32.mrb[0].mxu0
      %v492 = vpop.f32.mrb[0].mxu0
      %v493 = vadd.f32 %v214, %v492
      %v494 = vpop.f32.mrb[0].mxu0
      %495 = vmatprep.mubr.bf16.mxu0 0
      %496 = vmatmul.mubr.bf16.gmra.mrb[0].mxu0 %v346
      %v497 = vpop.f32.mrb[0].mxu0
      %v498 = vadd.f32 %v214, %v497
      %v499 = vpop.f32.mrb[0].mxu0
      %v500 = vpop.f32.mrb[0].mxu0
      %v501 = vadd.f32 %v214, %v500
      %v502 = vpop.f32.mrb[0].mxu0
      %503 = vmatprep.mubr.bf16.mxu0 0
      %504 = vmatmul.mubr.bf16.gmra.mrb[0].mxu0 %v349
      %v505 = vpop.f32.mrb[0].mxu0
      %v506 = vadd.f32 %v214, %v505
      %v507 = vpop.f32.mrb[0].mxu0
      %v508 = vpop.f32.mrb[0].mxu0
      %v509 = vadd.f32 %v214, %v508
      %v510 = vpop.f32.mrb[0].mxu0
      %511 = vdwg.mxu0
      %v512 = vpack.c.bf16 %v389, %v386
      %v513 = vpack.c.bf16 %v397, %v394
      %v514 = vpack.c.bf16 %v405, %v402
      %v515 = vpack.c.bf16 %v413, %v410
      %v516 = vpack.c.bf16 %v421, %v418
      %v517 = vpack.c.bf16 %v429, %v426
      %v518 = vpack.c.bf16 %v437, %v434
      %v519 = vpack.c.bf16 %v445, %v442
      %v520 = vpack.c.bf16 %v453, %v450
      %v521 = vpack.c.bf16 %v461, %v458
      %v522 = vpack.c.bf16 %v469, %v466
      %v523 = vpack.c.bf16 %v477, %v474
      %v524 = vpack.c.bf16 %v485, %v482
      %v525 = vpack.c.bf16 %v493, %v490
      %v526 = vpack.c.bf16 %v501, %v498
      %v527 = vpack.c.bf16 %v509, %v506
      %v544 = vunpack.c.l.b16 %v512
      %v545 = vunpack.c.h.b16 %v512
      %v546 = vunpack.c.l.b16 %v513
      %v547 = vunpack.c.h.b16 %v513
      %v548 = vunpack.c.l.b16 %v514
      %v549 = vunpack.c.h.b16 %v514
      %v550 = vunpack.c.l.b16 %v515
      %v551 = vunpack.c.h.b16 %v515
      %v552 = vunpack.c.l.b16 %v516
      %v553 = vunpack.c.h.b16 %v516
      %v554 = vunpack.c.l.b16 %v517
      %v555 = vunpack.c.h.b16 %v517
      %v556 = vunpack.c.l.b16 %v518
      %v557 = vunpack.c.h.b16 %v518
      %v558 = vunpack.c.l.b16 %v519
      %v559 = vunpack.c.h.b16 %v519
      %v560 = vunpack.c.l.b16 %v520
      %v561 = vunpack.c.h.b16 %v520
      %v562 = vunpack.c.l.b16 %v521
      %v563 = vunpack.c.h.b16 %v521
      %v564 = vunpack.c.l.b16 %v522
      %v565 = vunpack.c.h.b16 %v522
      %v566 = vunpack.c.l.b16 %v523
      %v567 = vunpack.c.h.b16 %v523
      %v568 = vunpack.c.l.b16 %v524
      %v569 = vunpack.c.h.b16 %v524
      %v570 = vunpack.c.l.b16 %v525
      %v571 = vunpack.c.h.b16 %v525
      %v572 = vunpack.c.l.b16 %v526
      %v573 = vunpack.c.h.b16 %v526
      %v574 = vunpack.c.l.b16 %v527
      %v575 = vunpack.c.h.b16 %v527
      %v576 = vpack.c.b16 %v544, %v544
      %v577 = vpack.c.b16 %v545, %v545
      %v578 = vpack.c.b16 %v546, %v546
      %v579 = vpack.c.b16 %v547, %v547
      %v580 = vpack.c.b16 %v548, %v548
      %v581 = vpack.c.b16 %v549, %v549
      %v582 = vpack.c.b16 %v550, %v550
      %v583 = vpack.c.b16 %v551, %v551
      %v584 = vpack.c.b16 %v552, %v552
      %v585 = vpack.c.b16 %v553, %v553
      %v586 = vpack.c.b16 %v554, %v554
      %v587 = vpack.c.b16 %v555, %v555
      %v588 = vpack.c.b16 %v556, %v556
      %v589 = vpack.c.b16 %v557, %v557
      %v590 = vpack.c.b16 %v558, %v558
      %v591 = vpack.c.b16 %v559, %v559
      %v592 = vpack.c.b16 %v560, %v560
      %v593 = vpack.c.b16 %v561, %v561
      %v594 = vpack.c.b16 %v562, %v562
      %v595 = vpack.c.b16 %v563, %v563
      %v596 = vpack.c.b16 %v564, %v564
      %v597 = vpack.c.b16 %v565, %v565
      %v598 = vpack.c.b16 %v566, %v566
      %v599 = vpack.c.b16 %v567, %v567
      %v600 = vpack.c.b16 %v568, %v568
      %v601 = vpack.c.b16 %v569, %v569
      %v602 = vpack.c.b16 %v570, %v570
      %v603 = vpack.c.b16 %v571, %v571
      %v604 = vpack.c.b16 %v572, %v572
      %v605 = vpack.c.b16 %v573, %v573
      %v606 = vpack.c.b16 %v574, %v574
      %v607 = vpack.c.b16 %v575, %v575
      %vm640 = vcmask 257024
      %641 = vst.msk [vmem:[%s172] sm:$0xf] %vm640, %v576
      %642 = vst.msk [vmem:[%s172 + $0x4] sm:$0xf] %vm640, %v577
      %643 = vst.msk [vmem:[%s172 + $0x8] sm:$0xf] %vm640, %v578
      %644 = vst.msk [vmem:[%s172 + $0xc] sm:$0xf] %vm640, %v579
      %645 = vst.msk [vmem:[%s172 + $0x10] sm:$0xf] %vm640, %v580
      %646 = vst.msk [vmem:[%s172 + $0x14] sm:$0xf] %vm640, %v581
      %647 = vst.msk [vmem:[%s172 + $0x18] sm:$0xf] %vm640, %v582
      %648 = vst.msk [vmem:[%s172 + $0x1c] sm:$0xf] %vm640, %v583
      %649 = vst.msk [vmem:[%s172 + $0x20] sm:$0xf] %vm640, %v584
      %650 = vst.msk [vmem:[%s172 + $0x24] sm:$0xf] %vm640, %v585
      %651 = vst.msk [vmem:[%s172 + $0x28] sm:$0xf] %vm640, %v586
      %652 = vst.msk [vmem:[%s172 + $0x2c] sm:$0xf] %vm640, %v587
      %653 = vst.msk [vmem:[%s172 + $0x30] sm:$0xf] %vm640, %v588
      %654 = vst.msk [vmem:[%s172 + $0x34] sm:$0xf] %vm640, %v589
      %655 = vst.msk [vmem:[%s172 + $0x38] sm:$0xf] %vm640, %v590
      %656 = vst.msk [vmem:[%s172 + $0x3c] sm:$0xf] %vm640, %v591
      %657 = vst.msk [vmem:[%s172 + $0x40] sm:$0xf] %vm640, %v592
      %658 = vst.msk [vmem:[%s172 + $0x44] sm:$0xf] %vm640, %v593
      %659 = vst.msk [vmem:[%s172 + $0x48] sm:$0xf] %vm640, %v594
      %660 = vst.msk [vmem:[%s172 + $0x4c] sm:$0xf] %vm640, %v595
      %661 = vst.msk [vmem:[%s172 + $0x50] sm:$0xf] %vm640, %v596
      %662 = vst.msk [vmem:[%s172 + $0x54] sm:$0xf] %vm640, %v597
      %663 = vst.msk [vmem:[%s172 + $0x58] sm:$0xf] %vm640, %v598
      %664 = vst.msk [vmem:[%s172 + $0x5c] sm:$0xf] %vm640, %v599
      %665 = vst.msk [vmem:[%s172 + $0x60] sm:$0xf] %vm640, %v600
      %666 = vst.msk [vmem:[%s172 + $0x64] sm:$0xf] %vm640, %v601
      %667 = vst.msk [vmem:[%s172 + $0x68] sm:$0xf] %vm640, %v602
      %668 = vst.msk [vmem:[%s172 + $0x6c] sm:$0xf] %vm640, %v603
      %669 = vst.msk [vmem:[%s172 + $0x70] sm:$0xf] %vm640, %v604
      %670 = vst.msk [vmem:[%s172 + $0x74] sm:$0xf] %vm640, %v605
      %671 = vst.msk [vmem:[%s172 + $0x78] sm:$0xf] %vm640, %v606
      %672 = vst.msk [vmem:[%s172 + $0x7c] sm:$0xf] %vm640, %v607
      %s673 = smul.u32 32, %s14
      %p674 = scmp.lt.s32.totalorder %s673, 63
      %s675 = scalar_select %p674, %s673, 63
      %s676 = smul.addr %s675, 4
      %s677 = scalar_lea.vmem %s3, %s676
      // Predicated region
      $region33: #{double_upconv2d_forward.3} parent=31 // pred_check
        %p678 = pneg %p100
      $region34: #{double_upconv2d_forward.3} parent=31 // pred_check_branch
        %680 = sbr.rel (%p678) target = $region36
      $region35: #{double_upconv2d_forward.3} parent=31 // pred_region
        %s681 = smul.u32 32, %s14
      $region36: #{double_upconv2d_forward.3} parent=31 // pred_fallthru
        _
    $region32: #{double_upconv2d_forward.3} parent=5 // pred_fallthru
      _
    %p682 = scmp.le.s32.totalorder 2, %s9
    // Predicated region
    $region37: #{double_upconv2d_forward.3} parent=5 // pred_check
      %p683 = pneg %p682
    $region38: #{double_upconv2d_forward.3} parent=5 // pred_check_branch
      %685 = sbr.rel (%p683) target = $region40
    $region39: #{double_upconv2d_forward.3} parent=5 // pred_region
      %s686 = ssub.s32 %s9, 2
      // Predicated region
      $region41: #{double_upconv2d_forward.3} parent=39 // pred_check
        %p687 = pneg %p106
      $region42: #{double_upconv2d_forward.3} parent=39 // pred_check_branch
        %689 = sbr.rel (%p687) target = $region44
      $region43: #{double_upconv2d_forward.3} parent=39 // pred_region
        %s690 = smul.u32 32, %s15
        %p691 = scmp.lt.s32.totalorder %s690, 63
        %s692 = scalar_select %p691, %s690, 63
        %s693 = smul.addr %s692, 4
        %s694 = scalar_lea.vmem %s3, %s693
      $region44: #{double_upconv2d_forward.3} parent=39 // pred_fallthru
        _
    $region40: #{double_upconv2d_forward.3} parent=5 // pred_fallthru
      _
  $region6: #{double_upconv2d_forward.3} parent=0 // loop_footer
    %s13 = sadd.s32 1, %s9
  $region7: #{double_upconv2d_forward.3} parent=0 // loop_footer_branch
    %8 = sbr.rel target = $region3
  $region8: #{double_upconv2d_forward.3} parent=0 // loop_exit
    _

// kernel: double_upconv2d_forward.5
$region0: #{double_upconv2d_forward.5}
  #allocation0 [shape = 'u32[]', space=smem, size = 0x4, offset = 0x4, fixed_abs, tag = 'smem constant byte address 0x4 - core index']
  #allocation1 [shape = 'u32[144,128]{1,0:T(1,128)}', space=vmem, size = 0x12000, scoped, tag = 'internal scratch']
  %s0 = inlined_call_operand.vmem [shape: bf16[2,34,34,8], index: 0, kind: input, shape index: {}, may-alias: {0,1}]
  %s1 = inlined_call_operand.vmem [shape: bf16[2,34,34,8], index: 1, kind: input, shape index: {}, may-alias: {0,1}]
  %s2 = inlined_call_operand.vmem [shape: bf16[3,24,8], index: 2, kind: input, shape index: {}]
  %s3 = inlined_call_operand.vmem [shape: f32[1,8], index: 3, kind: input, shape index: {}]
  %s4 = inlined_call_operand.vmem [shape: f32[1,8], index: 4, kind: input, shape index: {}]
  %s5 = inlined_call_operand.vmem [shape: f32[2,32,32,8], index: 5, kind: output, shape index: {}]
  %s6 = sld [smem:[#allocation0]]
  $region53: #{double_upconv2d_forward.5} parent=0
    _
  %s8 = ssub.s32 1, %s6
  %s9 = scalar_select 0, %s8, %s6
  loop: start=0, step=1, limit=6
  $region2: #{double_upconv2d_forward.5} parent=0 // loop_pre_header
    _
  $region3: #{double_upconv2d_forward.5} parent=0 // loop_header
    %s11 = sphi 0, %s15
    %p12 = scmp.ge.s32.totalorder %s11, 6
    %s18 = sphi 0, %s30
    %s19 = sphi 0, %s26
    %s20 = sphi 0, %s18
    %s21 = sphi 0, %s19
    %s22 = sphi 0, %s20
    %s23 = sphi 0, %s21
    %s35 = sphi 0, %s37
    %s38 = sphi 0, %s35
    %s39 = sphi 0, %s38
    %s55 = sphi 0, %s39
    %s67 = sphi 0, %s69
    %s70 = sphi 0, %s67
    %s71 = sphi 0, %s70
    %s87 = sphi 0, %s71
    %s91 = sphi 0, %s91
    %s93 = sphi 0, %s91
    %s94 = sphi 0, %s93
    %s108 = sphi 0, %s94
    %s112 = sphi 0, %s112
    %s114 = sphi 0, %s112
    %s115 = sphi 0, %s114
    %s129 = sphi 0, %s115
    %s133 = sphi 0, %s133
    %s135 = sphi 0, %s133
    %s136 = sphi 0, %s135
    %s150 = sphi 0, %s136
    %s158 = sphi 0, %s160
    %s161 = sphi 0, %s158
    %s162 = sphi 0, %s161
    %s178 = sphi 0, %s162
  $region4: #{double_upconv2d_forward.5} parent=0 // loop_header_branch
    %14 = sbr.rel (%p12) target = $region8
  $region5: #{double_upconv2d_forward.5} parent=0 // loop_body
    %s16 = ssub.s32 %s11, 1
    %s17 = ssub.s32 %s11, 2
    %s24 = sadd.s32 1, %s19
    %p25 = scmp.ge.s32.totalorder %s24, 2
    %s26 = scalar_select %p25, 0, %s24
    %s27 = sadd.s32 1, %s18
    %s28 = scalar_select %p25, %s27, %s18
    %p29 = scmp.ge.s32.totalorder %s28, 2
    %s30 = scalar_select %p29, 0, %s28
    %s31 = ssub.s32 %s18, %s30
    %s32 = ssub.s32 %s19, %s26
    %s33 = sor.u32 %s31, %s32
    %p34 = scmp.eq.s32.totalorder %s33, 0
    %s36 = sadd.s32 %s35, 1
    %s37 = scalar_select %p34, %s35, %s36
    %p40 = pneg %p34
    %p41 = scmp.eq.s32.totalorder %s11, 3
    %p42 = por %p40, %p41
    %p43 = scmp.ne.s32.totalorder %s35, %s38
    %p44 = scmp.eq.s32.totalorder %s11, 0
    %p45 = por %p43, %p44
    %p46 = scmp.ne.s32.totalorder %s35, %s38
    %p47 = scmp.eq.s32.totalorder %s16, 3
    %p48 = por %p46, %p47
    %p49 = scmp.ne.s32.totalorder %s38, %s39
    %p50 = scmp.eq.s32.totalorder %s16, 0
    %p51 = por %p49, %p50
    %p52 = scmp.ne.s32.totalorder %s38, %s39
    %p53 = scmp.eq.s32.totalorder %s17, 3
    %p54 = por %p52, %p53
    %p56 = scmp.ne.s32.totalorder %s39, %s55
    %p57 = scmp.eq.s32.totalorder %s17, 0
    %p58 = por %p56, %p57
    %s59 = sadd.s32 %s19, 1
    %s60 = smul.u32 %s59, 8
    %s61 = sadd.s32 %s26, 1
    %s62 = smul.u32 %s61, 8
    %s63 = ssub.s32 %s18, %s30
    %s64 = ssub.s32 %s60, %s62
    %s65 = sor.u32 %s63, %s64
    %p66 = scmp.eq.s32.totalorder %s65, 0
    %s68 = sadd.s32 %s67, 1
    %s69 = scalar_select %p66, %s67, %s68
    %p72 = pneg %p66
    %p73 = scmp.eq.s32.totalorder %s11, 3
    %p74 = por %p72, %p73
    %p75 = scmp.ne.s32.totalorder %s67, %s70
    %p76 = scmp.eq.s32.totalorder %s11, 0
    %p77 = por %p75, %p76
    %p78 = scmp.ne.s32.totalorder %s67, %s70
    %p79 = scmp.eq.s32.totalorder %s16, 3
    %p80 = por %p78, %p79
    %p81 = scmp.ne.s32.totalorder %s70, %s71
    %p82 = scmp.eq.s32.totalorder %s16, 0
    %p83 = por %p81, %p82
    %p84 = scmp.ne.s32.totalorder %s70, %s71
    %p85 = scmp.eq.s32.totalorder %s17, 3
    %p86 = por %p84, %p85
    %p88 = scmp.ne.s32.totalorder %s71, %s87
    %p89 = scmp.eq.s32.totalorder %s17, 0
    %p90 = por %p88, %p89
    %s92 = sadd.s32 %s91, 1
    %p95 = scmp.eq.s32.totalorder %s11, 3
    %p96 = scmp.ne.s32.totalorder %s91, %s93
    %p97 = scmp.eq.s32.totalorder %s11, 0
    %p98 = por %p96, %p97
    %p99 = scmp.ne.s32.totalorder %s91, %s93
    %p100 = scmp.eq.s32.totalorder %s16, 3
    %p101 = por %p99, %p100
    %p102 = scmp.ne.s32.totalorder %s93, %s94
    %p103 = scmp.eq.s32.totalorder %s16, 0
    %p104 = por %p102, %p103
    %p105 = scmp.ne.s32.totalorder %s93, %s94
    %p106 = scmp.eq.s32.totalorder %s17, 3
    %p107 = por %p105, %p106
    %p109 = scmp.ne.s32.totalorder %s94, %s108
    %p110 = scmp.eq.s32.totalorder %s17, 0
    %p111 = por %p109, %p110
    %s113 = sadd.s32 %s112, 1
    %p116 = scmp.eq.s32.totalorder %s11, 3
    %p117 = scmp.ne.s32.totalorder %s112, %s114
    %p118 = scmp.eq.s32.totalorder %s11, 0
    %p119 = por %p117, %p118
    %p120 = scmp.ne.s32.totalorder %s112, %s114
    %p121 = scmp.eq.s32.totalorder %s16, 3
    %p122 = por %p120, %p121
    %p123 = scmp.ne.s32.totalorder %s114, %s115
    %p124 = scmp.eq.s32.totalorder %s16, 0
    %p125 = por %p123, %p124
    %p126 = scmp.ne.s32.totalorder %s114, %s115
    %p127 = scmp.eq.s32.totalorder %s17, 3
    %p128 = por %p126, %p127
    %p130 = scmp.ne.s32.totalorder %s115, %s129
    %p131 = scmp.eq.s32.totalorder %s17, 0
    %p132 = por %p130, %p131
    %s134 = sadd.s32 %s133, 1
    %p137 = scmp.eq.s32.totalorder %s11, 3
    %p138 = scmp.ne.s32.totalorder %s133, %s135
    %p139 = scmp.eq.s32.totalorder %s11, 0
    %p140 = por %p138, %p139
    %p141 = scmp.ne.s32.totalorder %s133, %s135
    %p142 = scmp.eq.s32.totalorder %s16, 3
    %p143 = por %p141, %p142
    %p144 = scmp.ne.s32.totalorder %s135, %s136
    %p145 = scmp.eq.s32.totalorder %s16, 0
    %p146 = por %p144, %p145
    %p147 = scmp.ne.s32.totalorder %s135, %s136
    %p148 = scmp.eq.s32.totalorder %s17, 3
    %p149 = por %p147, %p148
    %p151 = scmp.ne.s32.totalorder %s136, %s150
    %p152 = scmp.eq.s32.totalorder %s17, 0
    %p153 = por %p151, %p152
    %s154 = ssub.s32 %s18, %s30
    %s155 = ssub.s32 %s19, %s26
    %s156 = sor.u32 %s154, %s155
    %p157 = scmp.eq.s32.totalorder %s156, 0
    %s159 = sadd.s32 %s158, 1
    %s160 = scalar_select %p157, %s158, %s159
    %p163 = pneg %p157
    %p164 = scmp.eq.s32.totalorder %s11, 3
    %p165 = por %p163, %p164
    %p166 = scmp.ne.s32.totalorder %s158, %s161
    %p167 = scmp.eq.s32.totalorder %s11, 0
    %p168 = por %p166, %p167
    %p169 = scmp.ne.s32.totalorder %s158, %s161
    %p170 = scmp.eq.s32.totalorder %s16, 3
    %p171 = por %p169, %p170
    %p172 = scmp.ne.s32.totalorder %s161, %s162
    %p173 = scmp.eq.s32.totalorder %s16, 0
    %p174 = por %p172, %p173
    %p175 = scmp.ne.s32.totalorder %s161, %s162
    %p176 = scmp.eq.s32.totalorder %s17, 3
    %p177 = por %p175, %p176
    %p179 = scmp.ne.s32.totalorder %s162, %s178
    %p180 = scmp.eq.s32.totalorder %s17, 0
    %p181 = por %p179, %p180
    %p182 = scmp.le.s32.totalorder 1, %s11
    %p183 = scmp.lt.s32.totalorder %s11, 5
    %p184 = pnand %p182, %p183
    %p185 = pneg %p184
    // Predicated region
    $region9: #{double_upconv2d_forward.5} parent=5 // pred_check
      _
    $region10: #{double_upconv2d_forward.5} parent=5 // pred_check_branch
      %187 = sbr.rel (%p184) target = $region12
    $region11: #{double_upconv2d_forward.5} parent=5 // pred_region
      %s188 = ssub.s32 %s11, 1
      // Predicated region
      $region13: #{double_upconv2d_forward.5} parent=11 // pred_check
        %p189 = pneg %p104
      $region14: #{double_upconv2d_forward.5} parent=11 // pred_check_branch
        %191 = sbr.rel (%p189) target = $region16
      $region15: #{double_upconv2d_forward.5} parent=11 // pred_region
        _
      $region16: #{double_upconv2d_forward.5} parent=11 // pred_fallthru
        _
      // Predicated region
      $region17: #{double_upconv2d_forward.5} parent=11 // pred_check
        %p192 = pneg %p125
      $region18: #{double_upconv2d_forward.5} parent=11 // pred_check_branch
        %194 = sbr.rel (%p192) target = $region20
      $region19: #{double_upconv2d_forward.5} parent=11 // pred_region
        _
      $region20: #{double_upconv2d_forward.5} parent=11 // pred_fallthru
        _
      // Predicated region
      $region21: #{double_upconv2d_forward.5} parent=11 // pred_check
        %p195 = pneg %p146
      $region22: #{double_upconv2d_forward.5} parent=11 // pred_check_branch
        %197 = sbr.rel (%p195) target = $region24
      $region23: #{double_upconv2d_forward.5} parent=11 // pred_region
        _
      $region24: #{double_upconv2d_forward.5} parent=11 // pred_fallthru
        _
    $region12: #{double_upconv2d_forward.5} parent=5 // pred_fallthru
      _
    %p198 = scmp.lt.s32.totalorder %s11, 4
    // Predicated region
    $region25: #{double_upconv2d_forward.5} parent=5 // pred_check
      %p199 = pneg %p198
    $region26: #{double_upconv2d_forward.5} parent=5 // pred_check_branch
      %201 = sbr.rel (%p199) target = $region28
    $region27: #{double_upconv2d_forward.5} parent=5 // pred_region
      // Predicated region
      $region29: #{double_upconv2d_forward.5} parent=27 // pred_check
        %p202 = pneg %p45
      $region30: #{double_upconv2d_forward.5} parent=27 // pred_check_branch
        %204 = sbr.rel (%p202) target = $region32
      $region31: #{double_upconv2d_forward.5} parent=27 // pred_region
        %s205 = smul.u32 16, %s19
        %s206 = ssub.s32 34, %s205
        %p207 = scmp.lt.s32.totalorder %s206, 16
        %s208 = scalar_select %p207, %s206, 16
        %s209 = smul.u32 64, %s208
        %s210 = smul.u32 %s209, 5
        %p211 = scmp.lt.s32.totalorder %s18, 1
        %s212 = scalar_select %p211, %s18, 1
        %p213 = scmp.lt.s32.totalorder %s205, 33
        %s214 = scalar_select %p213, %s205, 33
        %s215 = smul.addr %s214, 5
        %s216 = smul.addr %s212, 170
        %s217 = sadd.s32 %s215, %s216
        %s218 = smul.addr %s217, 4
        %s219 = scalar_lea.vmem %s0, %s218
        %s220 = smul.u32 16, %s19
        %s221 = ssub.s32 34, %s220
        %p222 = scmp.lt.s32.totalorder %s221, 16
        %s223 = scalar_select %p222, %s221, 16
        %s224 = smul.u32 64, %s223
        %s225 = smul.u32 %s224, 5
      $region32: #{double_upconv2d_forward.5} parent=27 // pred_fallthru
        _
      // Predicated region
      $region33: #{double_upconv2d_forward.5} parent=27 // pred_check
        %p226 = pneg %p77
      $region34: #{double_upconv2d_forward.5} parent=27 // pred_check_branch
        %228 = sbr.rel (%p226) target = $region36
      $region35: #{double_upconv2d_forward.5} parent=27 // pred_region
        %s229 = sadd.s32 %s19, 1
        %s230 = smul.u32 %s229, 8
        %s231 = smul.u32 2, %s230
        %p232 = scmp.lt.s32.totalorder %s18, 1
        %s233 = scalar_select %p232, %s18, 1
        %p234 = scmp.lt.s32.totalorder %s231, 33
        %s235 = scalar_select %p234, %s231, 33
        %s236 = smul.addr %s235, 5
        %s237 = smul.addr %s233, 170
        %s238 = sadd.s32 %s236, %s237
        %s239 = smul.addr %s238, 4
        %s240 = scalar_lea.vmem %s1, %s239
        %s241 = sadd.s32 %s19, 1
        %s242 = smul.u32 %s241, 8
        %s243 = smul.u32 2, %s242
      $region36: #{double_upconv2d_forward.5} parent=27 // pred_fallthru
        _
    $region28: #{double_upconv2d_forward.5} parent=5 // pred_fallthru
      _
    %p244 = scmp.le.s32.totalorder 1, %s11
    %p245 = scmp.lt.s32.totalorder %s11, 5
    %p246 = pnand %p244, %p245
    %p247 = pneg %p246
    // Predicated region
    $region37: #{double_upconv2d_forward.5} parent=5 // pred_check
      _
    $region38: #{double_upconv2d_forward.5} parent=5 // pred_check_branch
      %249 = sbr.rel (%p246) target = $region40
    $region39: #{double_upconv2d_forward.5} parent=5 // pred_region
      %s250 = ssub.s32 %s11, 1
      %s251 = smul.u32 16, %s21
      %s252 = ssub.s32 34, %s251
      %p253 = scmp.lt.s32.totalorder %s252, 16
      %s254 = scalar_select %p253, %s252, 16
      %s255 = smul.u32 64, %s254
      %s256 = smul.u32 %s255, 5
      %p257 = scmp.lt.s32.totalorder %s20, 1
      %s258 = scalar_select %p257, %s20, 1
      %p259 = scmp.lt.s32.totalorder %s251, 33
      %s260 = scalar_select %p259, %s251, 33
      %s261 = smul.addr %s260, 5
      %s262 = smul.addr %s258, 170
      %s263 = sadd.s32 %s261, %s262
      %s264 = smul.addr %s263, 4
      %s265 = scalar_lea.vmem %s0, %s264
      %p266 = pneg %p51
      %p267 = pneg %p48
      %s268 = sadd.s32 %s21, 1
      %s269 = smul.u32 %s268, 8
      %s270 = smul.u32 2, %s269
      %p271 = scmp.lt.s32.totalorder %s20, 1
      %s272 = scalar_select %p271, %s20, 1
      %p273 = scmp.lt.s32.totalorder %s270, 33
      %s274 = scalar_select %p273, %s270, 33
      %s275 = smul.addr %s274, 5
      %s276 = smul.addr %s272, 170
      %s277 = sadd.s32 %s275, %s276
      %s278 = smul.addr %s277, 4
      %s279 = scalar_lea.vmem %s1, %s278
      %p280 = pneg %p83
      %p281 = pneg %p80
      %p282 = pneg %p104
      %p283 = pneg %p101
      %p284 = pneg %p125
      %p285 = pneg %p122
      %p286 = pneg %p146
      %p287 = pneg %p143
      %p288 = pneg %p174
      %p289 = pneg %p171
      %s290 = smul.u32 16, %s21
      %p291 = scmp.lt.s32.totalorder %s20, 1
      %s292 = scalar_select %p291, %s20, 1
      %p293 = scmp.lt.s32.totalorder %s290, 31
      %s294 = scalar_select %p293, %s290, 31
      %s295 = smul.addr %s294, 4
      %s296 = smul.addr %s292, 128
      %s297 = sadd.s32 %s295, %s296
      %s298 = smul.addr %s297, 8
      %s299 = scalar_lea.vmem %s5, %s298
      %s300 = smul.u32 16, %s21
      %s301 = ssub.s32 34, %s300
      %p302 = scmp.lt.s32.totalorder %s301, 16
      %s303 = scalar_select %p302, %s301, 16
      %s304 = smul.u32 64, %s303
      %s305 = smul.u32 %s304, 5
      %p306 = scmp.lt.s32.totalorder %s20, 1
      %s307 = scalar_select %p306, %s20, 1
      %p308 = scmp.lt.s32.totalorder %s300, 33
      %s309 = scalar_select %p308, %s300, 33
      %s310 = smul.addr %s309, 5
      %s311 = smul.addr %s307, 170
      %s312 = sadd.s32 %s310, %s311
      %s313 = smul.addr %s312, 4
      %s314 = scalar_lea.vmem %s0, %s313
      %s315 = smul.u32 16, %s21
      %s316 = ssub.s32 34, %s315
      %p317 = scmp.lt.s32.totalorder %s316, 16
      %s318 = scalar_select %p317, %s316, 16
      %s319 = smul.u32 64, %s318
      %s320 = smul.u32 %s319, 5
      %s321 = sadd.s32 %s21, 1
      %s322 = smul.u32 %s321, 8
      %s323 = smul.u32 2, %s322
      %p324 = scmp.lt.s32.totalorder %s20, 1
      %s325 = scalar_select %p324, %s20, 1
      %p326 = scmp.lt.s32.totalorder %s323, 33
      %s327 = scalar_select %p326, %s323, 33
      %s328 = smul.addr %s327, 5
      %s329 = smul.addr %s325, 170
      %s330 = sadd.s32 %s328, %s329
      %s331 = smul.addr %s330, 4
      %s332 = scalar_lea.vmem %s1, %s331
      %s333 = sadd.s32 %s21, 1
      %s334 = smul.u32 %s333, 8
      %s335 = smul.u32 2, %s334
      %s336 = smul.u32 16, %s21
      %p337 = scmp.lt.s32.totalorder %s20, 1
      %s338 = scalar_select %p337, %s20, 1
      %p339 = scmp.lt.s32.totalorder %s336, 31
      %s340 = scalar_select %p339, %s336, 31
      %s341 = smul.addr %s340, 4
      %s342 = smul.addr %s338, 128
      %s343 = sadd.s32 %s341, %s342
      %s344 = smul.addr %s343, 8
      %s345 = scalar_lea.vmem %s5, %s344
      %s346 = smul.u32 16, %s21
      %v348 = vld [vmem:[%s314] sm:$0xf]
      %v349 = vld [vmem:[%s314 + $0x4] sm:$0xf]
      %v350 = vld [vmem:[%s314 + $0x8] sm:$0xf]
      %v351 = vld [vmem:[%s314 + $0xc] sm:$0xf]
      %v352 = vld [vmem:[%s314 + $0x10] sm:$0x1]
      %v353 = vld [vmem:[%s314 + $0x14] sm:$0xf]
      %v354 = vld [vmem:[%s314 + $0x18] sm:$0xf]
      %v355 = vld [vmem:[%s314 + $0x1c] sm:$0xf]
      %v356 = vld [vmem:[%s314 + $0x20] sm:$0xf]
      %v357 = vld [vmem:[%s314 + $0x24] sm:$0x1]
      %v358 = vld [vmem:[%s314 + $0x28] sm:$0xf]
      %v359 = vld [vmem:[%s314 + $0x2c] sm:$0xf]
      %v360 = vld [vmem:[%s314 + $0x30] sm:$0xf]
      %v361 = vld [vmem:[%s314 + $0x34] sm:$0xf]
      %v362 = vld [vmem:[%s314 + $0x38] sm:$0x1]
      %v363 = vld [vmem:[%s314 + $0x3c] sm:$0xf]
      %v364 = vld [vmem:[%s314 + $0x40] sm:$0xf]
      %v365 = vld [vmem:[%s314 + $0x44] sm:$0xf]
      %v366 = vld [vmem:[%s314 + $0x48] sm:$0xf]
      %v367 = vld [vmem:[%s314 + $0x4c] sm:$0x1]
      %v368 = vld [vmem:[%s314 + $0x50] sm:$0xf]
      %v369 = vld [vmem:[%s314 + $0x54] sm:$0xf]
      %v370 = vld [vmem:[%s314 + $0x58] sm:$0xf]
      %v371 = vld [vmem:[%s314 + $0x5c] sm:$0xf]
      %v372 = vld [vmem:[%s314 + $0x60] sm:$0x1]
      %v373 = vld [vmem:[%s314 + $0x64] sm:$0xf]
      %v374 = vld [vmem:[%s314 + $0x68] sm:$0xf]
      %v375 = vld [vmem:[%s314 + $0x6c] sm:$0xf]
      %v376 = vld [vmem:[%s314 + $0x70] sm:$0xf]
      %v377 = vld [vmem:[%s314 + $0x74] sm:$0x1]
      %v378 = vld [vmem:[%s314 + $0x78] sm:$0xf]
      %v379 = vld [vmem:[%s314 + $0x7c] sm:$0xf]
      %v380 = vld [vmem:[%s314 + $0x80] sm:$0xf]
      %v381 = vld [vmem:[%s314 + $0x84] sm:$0xf]
      %v382 = vld [vmem:[%s314 + $0x88] sm:$0x1]
      %v383 = vld [vmem:[%s314 + $0x8c] sm:$0xf]
      %v384 = vld [vmem:[%s314 + $0x90] sm:$0xf]
      %v385 = vld [vmem:[%s314 + $0x94] sm:$0xf]
      %v386 = vld [vmem:[%s314 + $0x98] sm:$0xf]
      %v387 = vld [vmem:[%s314 + $0x9c] sm:$0x1]
      %v388 = vld [vmem:[%s314 + $0xa0] sm:$0xf]
      %v389 = vld [vmem:[%s314 + $0xa4] sm:$0xf]
      %v390 = vld [vmem:[%s314 + $0xa8] sm:$0xf]
      %v391 = vld [vmem:[%s314 + $0xac] sm:$0xf]
      %v392 = vld [vmem:[%s314 + $0xb0] sm:$0x1]
      %v393 = vld [vmem:[%s314 + $0xb4] sm:$0xf]
      %v394 = vld [vmem:[%s314 + $0xb8] sm:$0xf]
      %v395 = vld [vmem:[%s314 + $0xbc] sm:$0xf]
      %v396 = vld [vmem:[%s314 + $0xc0] sm:$0xf]
      %v397 = vld [vmem:[%s314 + $0xc4] sm:$0x1]
      %v398 = vld [vmem:[%s314 + $0xc8] sm:$0xf]
      %v399 = vld [vmem:[%s314 + $0xcc] sm:$0xf]
      %v400 = vld [vmem:[%s314 + $0xd0] sm:$0xf]
      %v401 = vld [vmem:[%s314 + $0xd4] sm:$0xf]
      %v402 = vld [vmem:[%s314 + $0xd8] sm:$0x1]
      %v403 = vld [vmem:[%s314 + $0xdc] sm:$0xf]
      %v404 = vld [vmem:[%s314 + $0xe0] sm:$0xf]
      %v405 = vld [vmem:[%s314 + $0xe4] sm:$0xf]
      %v406 = vld [vmem:[%s314 + $0xe8] sm:$0xf]
      %v407 = vld [vmem:[%s314 + $0xec] sm:$0x1]
      %v408 = vld [vmem:[%s314 + $0xf0] sm:$0xf]
      %v409 = vld [vmem:[%s314 + $0xf4] sm:$0xf]
      %v410 = vld [vmem:[%s314 + $0xf8] sm:$0xf]
      %v411 = vld [vmem:[%s314 + $0xfc] sm:$0xf]
      %v412 = vld [vmem:[%s314 + $0x100] sm:$0x1]
      %v413 = vld [vmem:[%s314 + $0x104] sm:$0xf]
      %v414 = vld [vmem:[%s314 + $0x108] sm:$0xf]
      %v415 = vld [vmem:[%s314 + $0x10c] sm:$0xf]
      %v416 = vld [vmem:[%s314 + $0x110] sm:$0xf]
      %v417 = vld [vmem:[%s314 + $0x114] sm:$0x1]
      %v418 = vld [vmem:[%s314 + $0x118] sm:$0xf]
      %v419 = vld [vmem:[%s314 + $0x11c] sm:$0xf]
      %v420 = vld [vmem:[%s314 + $0x120] sm:$0xf]
      %v421 = vld [vmem:[%s314 + $0x124] sm:$0xf]
      %v422 = vld [vmem:[%s314 + $0x128] sm:$0x1]
      %v423 = vld [vmem:[%s314 + $0x12c] sm:$0xf]
      %v424 = vld [vmem:[%s314 + $0x130] sm:$0xf]
      %v425 = vld [vmem:[%s314 + $0x134] sm:$0xf]
      %v426 = vld [vmem:[%s314 + $0x138] sm:$0xf]
      %v427 = vld [vmem:[%s314 + $0x13c] sm:$0x1]
      %v428 = vld [vmem:[%s332] sm:$0xf]
      %v429 = vld [vmem:[%s332 + $0x4] sm:$0xf]
      %v430 = vld [vmem:[%s332 + $0x8] sm:$0xf]
      %v431 = vld [vmem:[%s332 + $0xc] sm:$0xf]
      %v432 = vld [vmem:[%s332 + $0x10] sm:$0x1]
      %v433 = vld [vmem:[%s332 + $0x14] sm:$0xf]
      %v434 = vld [vmem:[%s332 + $0x18] sm:$0xf]
      %v435 = vld [vmem:[%s332 + $0x1c] sm:$0xf]
      %v436 = vld [vmem:[%s332 + $0x20] sm:$0xf]
      %v437 = vld [vmem:[%s332 + $0x24] sm:$0x1]
      %v510 = vunpack.c.l.b16 %v348
      %v511 = vunpack.c.l.b16 %v349
      %v512 = vunpack.c.l.b16 %v350
      %v513 = vunpack.c.l.b16 %v351
      %v514 = vunpack.c.l.b16 %v353
      %v515 = vunpack.c.l.b16 %v354
      %v516 = vunpack.c.l.b16 %v355
      %v517 = vunpack.c.l.b16 %v356
      %v518 = vunpack.c.l.b16 %v358
      %v519 = vunpack.c.l.b16 %v359
      %v520 = vunpack.c.l.b16 %v360
      %v521 = vunpack.c.l.b16 %v361
      %v522 = vunpack.c.l.b16 %v363
      %v523 = vunpack.c.l.b16 %v364
      %v524 = vunpack.c.l.b16 %v365
      %v525 = vunpack.c.l.b16 %v366
      %v526 = vunpack.c.l.b16 %v368
      %v527 = vunpack.c.l.b16 %v369
      %v528 = vunpack.c.l.b16 %v370
      %v529 = vunpack.c.l.b16 %v371
      %v530 = vunpack.c.l.b16 %v373
      %v531 = vunpack.c.l.b16 %v374
      %v532 = vunpack.c.l.b16 %v375
      %v533 = vunpack.c.l.b16 %v376
      %v534 = vunpack.c.l.b16 %v378
      %v535 = vunpack.c.l.b16 %v379
      %v536 = vunpack.c.l.b16 %v380
      %v537 = vunpack.c.l.b16 %v381
      %v538 = vunpack.c.l.b16 %v383
      %v539 = vunpack.c.l.b16 %v384
      %v540 = vunpack.c.l.b16 %v385
      %v541 = vunpack.c.l.b16 %v386
      %v542 = vunpack.c.l.b16 %v388
      %v543 = vunpack.c.l.b16 %v389
      %v544 = vunpack.c.l.b16 %v390
      %v545 = vunpack.c.l.b16 %v391
      %v546 = vunpack.c.l.b16 %v393
      %v547 = vunpack.c.l.b16 %v394
      %v548 = vunpack.c.l.b16 %v395
      %v549 = vunpack.c.l.b16 %v396
      %v550 = vunpack.c.l.b16 %v398
      %v551 = vunpack.c.l.b16 %v399
      %v552 = vunpack.c.l.b16 %v400
      %v553 = vunpack.c.l.b16 %v401
      %v554 = vunpack.c.l.b16 %v403
      %v555 = vunpack.c.l.b16 %v404
      %v556 = vunpack.c.l.b16 %v405
      %v557 = vunpack.c.l.b16 %v406
      %v558 = vunpack.c.l.b16 %v408
      %v559 = vunpack.c.l.b16 %v409
      %v560 = vunpack.c.l.b16 %v410
      %v561 = vunpack.c.l.b16 %v411
      %v562 = vunpack.c.l.b16 %v413
      %v563 = vunpack.c.l.b16 %v414
      %v564 = vunpack.c.l.b16 %v415
      %v565 = vunpack.c.l.b16 %v416
      %v566 = vunpack.c.l.b16 %v418
      %v567 = vunpack.c.l.b16 %v419
      %v568 = vunpack.c.l.b16 %v420
      %v569 = vunpack.c.l.b16 %v421
      %v570 = vunpack.c.l.b16 %v423
      %v571 = vunpack.c.l.b16 %v424
      %v572 = vunpack.c.l.b16 %v425
      %v573 = vunpack.c.l.b16 %v426
      %v574 = vunpack.c.l.b16 %v428
      %v575 = vunpack.c.l.b16 %v429
      %v576 = vunpack.c.l.b16 %v430
      %v577 = vunpack.c.l.b16 %v431
      %v578 = vunpack.c.l.b16 %v433
      %v579 = vunpack.c.l.b16 %v434
      %v580 = vunpack.c.l.b16 %v435
      %v581 = vunpack.c.l.b16 %v436
      %v582 = vpack.c.b16 %v511, %v510
      %v583 = vpack.c.b16 %v513, %v512
      %v584 = vpack.c.b16 %v515, %v514
      %v585 = vpack.c.b16 %v517, %v516
      %v586 = vpack.c.b16 %v519, %v518
      %v587 = vpack.c.b16 %v521, %v520
      %v588 = vpack.c.b16 %v523, %v522
      %v589 = vpack.c.b16 %v525, %v524
      %v590 = vpack.c.b16 %v527, %v526
      %v591 = vpack.c.b16 %v529, %v528
      %v592 = vpack.c.b16 %v531, %v530
      %v593 = vpack.c.b16 %v533, %v532
      %v594 = vpack.c.b16 %v535, %v534
      %v595 = vpack.c.b16 %v537, %v536
      %v596 = vpack.c.b16 %v539, %v538
      %v597 = vpack.c.b16 %v541, %v540
      %v598 = vpack.c.b16 %v543, %v542
      %v599 = vpack.c.b16 %v545, %v544
      %v600 = vpack.c.b16 %v547, %v546
      %v601 = vpack.c.b16 %v549, %v548
      %v602 = vpack.c.b16 %v551, %v550
      %v603 = vpack.c.b16 %v553, %v552
      %v604 = vpack.c.b16 %v555, %v554
      %v605 = vpack.c.b16 %v557, %v556
      %v606 = vpack.c.b16 %v559, %v558
      %v607 = vpack.c.b16 %v561, %v560
      %v608 = vpack.c.b16 %v563, %v562
      %v609 = vpack.c.b16 %v565, %v564
      %v610 = vpack.c.b16 %v567, %v566
      %v611 = vpack.c.b16 %v569, %v568
      %v612 = vpack.c.b16 %v571, %v570
      %v613 = vpack.c.b16 %v573, %v572
      %v614 = vpack.c.b16 %v575, %v574
      %v615 = vpack.c.b16 %v577, %v576
      %v616 = vpack.c.b16 %v579, %v578
      %v617 = vpack.c.b16 %v581, %v580
      %v636 = vunpack.c.l.b16 %v352
      %v637 = vunpack.c.l.b16 %v357
      %v638 = vunpack.c.l.b16 %v362
      %v639 = vunpack.c.l.b16 %v367
      %v640 = vunpack.c.l.b16 %v372
      %v641 = vunpack.c.l.b16 %v377
      %v642 = vunpack.c.l.b16 %v382
      %v643 = vunpack.c.l.b16 %v387
      %v644 = vunpack.c.l.b16 %v392
      %v645 = vunpack.c.l.b16 %v397
      %v646 = vunpack.c.l.b16 %v402
      %v647 = vunpack.c.l.b16 %v407
      %v648 = vunpack.c.l.b16 %v412
      %v649 = vunpack.c.l.b16 %v417
      %v650 = vunpack.c.l.b16 %v422
      %v651 = vunpack.c.l.b16 %v427
      %v652 = vunpack.c.l.b16 %v432
      %v653 = vunpack.c.l.b16 %v437
      %v654 = vpack.c.b16 %v636, %v636
      %v655 = vpack.c.b16 %v637, %v637
      %v656 = vpack.c.b16 %v638, %v638
      %v657 = vpack.c.b16 %v639, %v639
      %v658 = vpack.c.b16 %v640, %v640
      %v659 = vpack.c.b16 %v641, %v641
      %v660 = vpack.c.b16 %v642, %v642
      %v661 = vpack.c.b16 %v643, %v643
      %v662 = vpack.c.b16 %v644, %v644
      %v663 = vpack.c.b16 %v645, %v645
      %v664 = vpack.c.b16 %v646, %v646
      %v665 = vpack.c.b16 %v647, %v647
      %v666 = vpack.c.b16 %v648, %v648
      %v667 = vpack.c.b16 %v649, %v649
      %v668 = vpack.c.b16 %v650, %v650
      %v669 = vpack.c.b16 %v651, %v651
      %v670 = vpack.c.b16 %v652, %v652
      %v671 = vpack.c.b16 %v653, %v653
      %vm672 = vsmask.f32 7424
      %v674 = vshrl.u32 %v582, 16
      %v676 = vshll.u32 %v582, 16
      %v678 = vrot.slane %v676, 1
      %v679 = vor.u32 %v674, %v678
      %v681 = vshll.u32 %v583, 16
      %v683 = vrot.slane %v681, 1
      %v684 = vsel %vm672, %v679, %v683
      %v685 = vshrl.u32 %v583, 16
      %v687 = vor.u32 %v685, %v683
      %v689 = vshll.u32 %v654, 16
      %v691 = vrot.slane %v689, 1
      %v692 = vsel %vm672, %v687, %v691
      %v694 = vshrl.u32 %v584, 16
      %v696 = vshll.u32 %v584, 16
      %v698 = vrot.slane %v696, 1
      %v699 = vor.u32 %v694, %v698
      %v701 = vshll.u32 %v585, 16
      %v703 = vrot.slane %v701, 1
      %v704 = vsel %vm672, %v699, %v703
      %v705 = vshrl.u32 %v585, 16
      %v707 = vor.u32 %v705, %v703
      %v709 = vshll.u32 %v655, 16
      %v711 = vrot.slane %v709, 1
      %v712 = vsel %vm672, %v707, %v711
      %v714 = vshrl.u32 %v586, 16
      %v716 = vshll.u32 %v586, 16
      %v718 = vrot.slane %v716, 1
      %v719 = vor.u32 %v714, %v718
      %v721 = vshll.u32 %v587, 16
      %v723 = vrot.slane %v721, 1
      %v724 = vsel %vm672, %v719, %v723
      %v725 = vshrl.u32 %v587, 16
      %v727 = vor.u32 %v725, %v723
      %v729 = vshll.u32 %v656, 16
      %v731 = vrot.slane %v729, 1
      %v732 = vsel %vm672, %v727, %v731
      %v734 = vshrl.u32 %v588, 16
      %v736 = vshll.u32 %v588, 16
      %v738 = vrot.slane %v736, 1
      %v739 = vor.u32 %v734, %v738
      %v741 = vshll.u32 %v589, 16
      %v743 = vrot.slane %v741, 1
      %v744 = vsel %vm672, %v739, %v743
      %v745 = vshrl.u32 %v589, 16
      %v747 = vor.u32 %v745, %v743
      %v749 = vshll.u32 %v657, 16
      %v751 = vrot.slane %v749, 1
      %v752 = vsel %vm672, %v747, %v751
      %v754 = vshrl.u32 %v590, 16
      %v756 = vshll.u32 %v590, 16
      %v758 = vrot.slane %v756, 1
      %v759 = vor.u32 %v754, %v758
      %v761 = vshll.u32 %v591, 16
      %v763 = vrot.slane %v761, 1
      %v764 = vsel %vm672, %v759, %v763
      %v765 = vshrl.u32 %v591, 16
      %v767 = vor.u32 %v765, %v763
      %v769 = vshll.u32 %v658, 16
      %v771 = vrot.slane %v769, 1
      %v772 = vsel %vm672, %v767, %v771
      %v774 = vshrl.u32 %v592, 16
      %v776 = vshll.u32 %v592, 16
      %v778 = vrot.slane %v776, 1
      %v779 = vor.u32 %v774, %v778
      %v781 = vshll.u32 %v593, 16
      %v783 = vrot.slane %v781, 1
      %v784 = vsel %vm672, %v779, %v783
      %v785 = vshrl.u32 %v593, 16
      %v787 = vor.u32 %v785, %v783
      %v789 = vshll.u32 %v659, 16
      %v791 = vrot.slane %v789, 1
      %v792 = vsel %vm672, %v787, %v791
      %v794 = vshrl.u32 %v594, 16
      %v796 = vshll.u32 %v594, 16
      %v798 = vrot.slane %v796, 1
      %v799 = vor.u32 %v794, %v798
      %v801 = vshll.u32 %v595, 16
      %v803 = vrot.slane %v801, 1
      %v804 = vsel %vm672, %v799, %v803
      %v805 = vshrl.u32 %v595, 16
      %v807 = vor.u32 %v805, %v803
      %v809 = vshll.u32 %v660, 16
      %v811 = vrot.slane %v809, 1
      %v812 = vsel %vm672, %v807, %v811
      %v814 = vshrl.u32 %v596, 16
      %v816 = vshll.u32 %v596, 16
      %v818 = vrot.slane %v816, 1
      %v819 = vor.u32 %v814, %v818
      %v821 = vshll.u32 %v597, 16
      %v823 = vrot.slane %v821, 1
      %v824 = vsel %vm672, %v819, %v823
      %v825 = vshrl.u32 %v597, 16
      %v827 = vor.u32 %v825, %v823
      %v829 = vshll.u32 %v661, 16
      %v831 = vrot.slane %v829, 1
      %v832 = vsel %vm672, %v827, %v831
      %v834 = vshrl.u32 %v598, 16
      %v836 = vshll.u32 %v598, 16
      %v838 = vrot.slane %v836, 1
      %v839 = vor.u32 %v834, %v838
      %v841 = vshll.u32 %v599, 16
      %v843 = vrot.slane %v841, 1
      %v844 = vsel %vm672, %v839, %v843
      %v845 = vshrl.u32 %v599, 16
      %v847 = vor.u32 %v845, %v843
      %v849 = vshll.u32 %v662, 16
      %v851 = vrot.slane %v849, 1
      %v852 = vsel %vm672, %v847, %v851
      %v854 = vshrl.u32 %v600, 16
      %v856 = vshll.u32 %v600, 16
      %v858 = vrot.slane %v856, 1
      %v859 = vor.u32 %v854, %v858
      %v861 = vshll.u32 %v601, 16
      %v863 = vrot.slane %v861, 1
      %v864 = vsel %vm672, %v859, %v863
      %v865 = vshrl.u32 %v601, 16
      %v867 = vor.u32 %v865, %v863
      %v869 = vshll.u32 %v663, 16
      %v871 = vrot.slane %v869, 1
      %v872 = vsel %vm672, %v867, %v871
      %v874 = vshrl.u32 %v602, 16
      %v876 = vshll.u32 %v602, 16
      %v878 = vrot.slane %v876, 1
      %v879 = vor.u32 %v874, %v878
      %v881 = vshll.u32 %v603, 16
      %v883 = vrot.slane %v881, 1
      %v884 = vsel %vm672, %v879, %v883
      %v885 = vshrl.u32 %v603, 16
      %v887 = vor.u32 %v885, %v883
      %v889 = vshll.u32 %v664, 16
      %v891 = vrot.slane %v889, 1
      %v892 = vsel %vm672, %v887, %v891
      %v894 = vshrl.u32 %v604, 16
      %v896 = vshll.u32 %v604, 16
      %v898 = vrot.slane %v896, 1
      %v899 = vor.u32 %v894, %v898
      %v901 = vshll.u32 %v605, 16
      %v903 = vrot.slane %v901, 1
      %v904 = vsel %vm672, %v899, %v903
      %v905 = vshrl.u32 %v605, 16
      %v907 = vor.u32 %v905, %v903
      %v909 = vshll.u32 %v665, 16
      %v911 = vrot.slane %v909, 1
      %v912 = vsel %vm672, %v907, %v911
      %v914 = vshrl.u32 %v606, 16
      %v916 = vshll.u32 %v606, 16
      %v918 = vrot.slane %v916, 1
      %v919 = vor.u32 %v914, %v918
      %v921 = vshll.u32 %v607, 16
      %v923 = vrot.slane %v921, 1
      %v924 = vsel %vm672, %v919, %v923
      %v925 = vshrl.u32 %v607, 16
      %v927 = vor.u32 %v925, %v923
      %v929 = vshll.u32 %v666, 16
      %v931 = vrot.slane %v929, 1
      %v932 = vsel %vm672, %v927, %v931
      %v934 = vshrl.u32 %v608, 16
      %v936 = vshll.u32 %v608, 16
      %v938 = vrot.slane %v936, 1
      %v939 = vor.u32 %v934, %v938
      %v941 = vshll.u32 %v609, 16
      %v943 = vrot.slane %v941, 1
      %v944 = vsel %vm672, %v939, %v943
      %v945 = vshrl.u32 %v609, 16
      %v947 = vor.u32 %v945, %v943
      %v949 = vshll.u32 %v667, 16
      %v951 = vrot.slane %v949, 1
      %v952 = vsel %vm672, %v947, %v951
      %v954 = vshrl.u32 %v610, 16
      %v956 = vshll.u32 %v610, 16
      %v958 = vrot.slane %v956, 1
      %v959 = vor.u32 %v954, %v958
      %v961 = vshll.u32 %v611, 16
      %v963 = vrot.slane %v961, 1
      %v964 = vsel %vm672, %v959, %v963
      %v965 = vshrl.u32 %v611, 16
      %v967 = vor.u32 %v965, %v963
      %v969 = vshll.u32 %v668, 16
      %v971 = vrot.slane %v969, 1
      %v972 = vsel %vm672, %v967, %v971
      %v974 = vshrl.u32 %v612, 16
      %v976 = vshll.u32 %v612, 16
      %v978 = vrot.slane %v976, 1
      %v979 = vor.u32 %v974, %v978
      %v981 = vshll.u32 %v613, 16
      %v983 = vrot.slane %v981, 1
      %v984 = vsel %vm672, %v979, %v983
      %v985 = vshrl.u32 %v613, 16
      %v987 = vor.u32 %v985, %v983
      %v989 = vshll.u32 %v669, 16
      %v991 = vrot.slane %v989, 1
      %v992 = vsel %vm672, %v987, %v991
      %v994 = vshrl.u32 %v614, 16
      %v996 = vshll.u32 %v614, 16
      %v998 = vrot.slane %v996, 1
      %v999 = vor.u32 %v994, %v998
      %v1001 = vshll.u32 %v615, 16
      %v1003 = vrot.slane %v1001, 1
      %v1004 = vsel %vm672, %v999, %v1003
      %v1005 = vshrl.u32 %v615, 16
      %v1007 = vor.u32 %v1005, %v1003
      %v1009 = vshll.u32 %v670, 16
      %v1011 = vrot.slane %v1009, 1
      %v1012 = vsel %vm672, %v1007, %v1011
      %v1014 = vshrl.u32 %v616, 16
      %v1016 = vshll.u32 %v616, 16
      %v1018 = vrot.slane %v1016, 1
      %v1019 = vor.u32 %v1014, %v1018
      %v1021 = vshll.u32 %v617, 16
      %v1023 = vrot.slane %v1021, 1
      %v1024 = vsel %vm672, %v1019, %v1023
      %v1025 = vshrl.u32 %v617, 16
      %v1027 = vor.u32 %v1025, %v1023
      %v1029 = vshll.u32 %v671, 16
      %v1031 = vrot.slane %v1029, 1
      %v1032 = vsel %vm672, %v1027, %v1031
      %1033 = vrot.lane.b32.xlu0 %v684, 8
      %v1034 = vpop.permute.xlu0 %1033
      %1035 = vrot.lane.b32.xlu0 %v692, 8
      %v1036 = vpop.permute.xlu0 %1035
      %1037 = vrot.lane.b32.xlu0 %v704, 8
      %v1038 = vpop.permute.xlu0 %1037
      %1039 = vrot.lane.b32.xlu0 %v712, 8
      %v1040 = vpop.permute.xlu0 %1039
      %1041 = vrot.lane.b32.xlu0 %v724, 8
      %v1042 = vpop.permute.xlu0 %1041
      %1043 = vrot.lane.b32.xlu0 %v732, 8
      %v1044 = vpop.permute.xlu0 %1043
      %1045 = vrot.lane.b32.xlu0 %v744, 8
      %v1046 = vpop.permute.xlu0 %1045
      %1047 = vrot.lane.b32.xlu0 %v752, 8
      %v1048 = vpop.permute.xlu0 %1047
      %1049 = vrot.lane.b32.xlu0 %v764, 8
      %v1050 = vpop.permute.xlu0 %1049
      %1051 = vrot.lane.b32.xlu0 %v772, 8
      %v1052 = vpop.permute.xlu0 %1051
      %1053 = vrot.lane.b32.xlu0 %v784, 8
      %v1054 = vpop.permute.xlu0 %1053
      %1055 = vrot.lane.b32.xlu0 %v792, 8
      %v1056 = vpop.permute.xlu0 %1055
      %1057 = vrot.lane.b32.xlu0 %v804, 8
      %v1058 = vpop.permute.xlu0 %1057
      %1059 = vrot.lane.b32.xlu0 %v812, 8
      %v1060 = vpop.permute.xlu0 %1059
      %1061 = vrot.lane.b32.xlu0 %v824, 8
      %v1062 = vpop.permute.xlu0 %1061
      %1063 = vrot.lane.b32.xlu0 %v832, 8
      %v1064 = vpop.permute.xlu0 %1063
      %1065 = vrot.lane.b32.xlu0 %v844, 8
      %v1066 = vpop.permute.xlu0 %1065
      %1067 = vrot.lane.b32.xlu0 %v852, 8
      %v1068 = vpop.permute.xlu0 %1067
      %1069 = vrot.lane.b32.xlu0 %v864, 8
      %v1070 = vpop.permute.xlu0 %1069
      %1071 = vrot.lane.b32.xlu0 %v872, 8
      %v1072 = vpop.permute.xlu0 %1071
      %1073 = vrot.lane.b32.xlu0 %v884, 8
      %v1074 = vpop.permute.xlu0 %1073
      %1075 = vrot.lane.b32.xlu0 %v892, 8
      %v1076 = vpop.permute.xlu0 %1075
      %1077 = vrot.lane.b32.xlu0 %v904, 8
      %v1078 = vpop.permute.xlu0 %1077
      %1079 = vrot.lane.b32.xlu0 %v912, 8
      %v1080 = vpop.permute.xlu0 %1079
      %1081 = vrot.lane.b32.xlu0 %v924, 8
      %v1082 = vpop.permute.xlu0 %1081
      %1083 = vrot.lane.b32.xlu0 %v932, 8
      %v1084 = vpop.permute.xlu0 %1083
      %1085 = vrot.lane.b32.xlu0 %v944, 8
      %v1086 = vpop.permute.xlu0 %1085
      %1087 = vrot.lane.b32.xlu0 %v952, 8
      %v1088 = vpop.permute.xlu0 %1087
      %1089 = vrot.lane.b32.xlu0 %v964, 8
      %v1090 = vpop.permute.xlu0 %1089
      %1091 = vrot.lane.b32.xlu0 %v972, 8
      %v1092 = vpop.permute.xlu0 %1091
      %1093 = vrot.lane.b32.xlu0 %v984, 8
      %v1094 = vpop.permute.xlu0 %1093
      %1095 = vrot.lane.b32.xlu0 %v992, 8
      %v1096 = vpop.permute.xlu0 %1095
      %1097 = vrot.lane.b32.xlu0 %v1004, 8
      %v1098 = vpop.permute.xlu0 %1097
      %1099 = vrot.lane.b32.xlu0 %v1012, 8
      %v1100 = vpop.permute.xlu0 %1099
      %1101 = vrot.lane.b32.xlu0 %v1024, 8
      %v1102 = vpop.permute.xlu0 %1101
      %1103 = vrot.lane.b32.xlu0 %v1032, 8
      %v1104 = vpop.permute.xlu0 %1103
      %vm1105 = vcmask 1046528
      %v1106 = vrot.slane %v582, 1
      %v1107 = vrot.slane %v583, 1
      %v1108 = vsel %vm1105, %v1106, %v1107
      %v1109 = vrot.slane %v654, 1
      %v1110 = vsel %vm1105, %v1107, %v1109
      %v1111 = vrot.slane %v584, 1
      %v1112 = vrot.slane %v585, 1
      %v1113 = vsel %vm1105, %v1111, %v1112
      %v1114 = vrot.slane %v655, 1
      %v1115 = vsel %vm1105, %v1112, %v1114
      %v1116 = vrot.slane %v586, 1
      %v1117 = vrot.slane %v587, 1
      %v1118 = vsel %vm1105, %v1116, %v1117
      %v1119 = vrot.slane %v656, 1
      %v1120 = vsel %vm1105, %v1117, %v1119
      %v1121 = vrot.slane %v588, 1
      %v1122 = vrot.slane %v589, 1
      %v1123 = vsel %vm1105, %v1121, %v1122
      %v1124 = vrot.slane %v657, 1
      %v1125 = vsel %vm1105, %v1122, %v1124
      %v1126 = vrot.slane %v590, 1
      %v1127 = vrot.slane %v591, 1
      %v1128 = vsel %vm1105, %v1126, %v1127
      %v1129 = vrot.slane %v658, 1
      %v1130 = vsel %vm1105, %v1127, %v1129
      %v1131 = vrot.slane %v592, 1
      %v1132 = vrot.slane %v593, 1
      %v1133 = vsel %vm1105, %v1131, %v1132
      %v1134 = vrot.slane %v659, 1
      %v1135 = vsel %vm1105, %v1132, %v1134
      %v1136 = vrot.slane %v594, 1
      %v1137 = vrot.slane %v595, 1
      %v1138 = vsel %vm1105, %v1136, %v1137
      %v1139 = vrot.slane %v660, 1
      %v1140 = vsel %vm1105, %v1137, %v1139
      %v1141 = vrot.slane %v596, 1
      %v1142 = vrot.slane %v597, 1
      %v1143 = vsel %vm1105, %v1141, %v1142
      %v1144 = vrot.slane %v661, 1
      %v1145 = vsel %vm1105, %v1142, %v1144
      %v1146 = vrot.slane %v598, 1
      %v1147 = vrot.slane %v599, 1
      %v1148 = vsel %vm1105, %v1146, %v1147
      %v1149 = vrot.slane %v662, 1
      %v1150 = vsel %vm1105, %v1147, %v1149
      %v1151 = vrot.slane %v600, 1
      %v1152 = vrot.slane %v601, 1
      %v1153 = vsel %vm1105, %v1151, %v1152
      %v1154 = vrot.slane %v663, 1
      %v1155 = vsel %vm1105, %v1152, %v1154
      %v1156 = vrot.slane %v602, 1
      %v1157 = vrot.slane %v603, 1
      %v1158 = vsel %vm1105, %v1156, %v1157
      %v1159 = vrot.slane %v664, 1
      %v1160 = vsel %vm1105, %v1157, %v1159
      %v1161 = vrot.slane %v604, 1
      %v1162 = vrot.slane %v605, 1
      %v1163 = vsel %vm1105, %v1161, %v1162
      %v1164 = vrot.slane %v665, 1
      %v1165 = vsel %vm1105, %v1162, %v1164
      %v1166 = vrot.slane %v606, 1
      %v1167 = vrot.slane %v607, 1
      %v1168 = vsel %vm1105, %v1166, %v1167
      %v1169 = vrot.slane %v666, 1
      %v1170 = vsel %vm1105, %v1167, %v1169
      %v1171 = vrot.slane %v608, 1
      %v1172 = vrot.slane %v609, 1
      %v1173 = vsel %vm1105, %v1171, %v1172
      %v1174 = vrot.slane %v667, 1
      %v1175 = vsel %vm1105, %v1172, %v1174
      %v1176 = vrot.slane %v610, 1
      %v1177 = vrot.slane %v611, 1
      %v1178 = vsel %vm1105, %v1176, %v1177
      %v1179 = vrot.slane %v668, 1
      %v1180 = vsel %vm1105, %v1177, %v1179
      %v1181 = vrot.slane %v612, 1
      %v1182 = vrot.slane %v613, 1
      %v1183 = vsel %vm1105, %v1181, %v1182
      %v1184 = vrot.slane %v669, 1
      %v1185 = vsel %vm1105, %v1182, %v1184
      %v1186 = vrot.slane %v614, 1
      %v1187 = vrot.slane %v615, 1
      %v1188 = vsel %vm1105, %v1186, %v1187
      %v1189 = vrot.slane %v670, 1
      %v1190 = vsel %vm1105, %v1187, %v1189
      %v1191 = vrot.slane %v616, 1
      %v1192 = vrot.slane %v617, 1
      %v1193 = vsel %vm1105, %v1191, %v1192
      %v1194 = vrot.slane %v671, 1
      %v1195 = vsel %vm1105, %v1192, %v1194
      %1196 = vrot.lane.b32.xlu0 %v1108, 16
      %v1197 = vpop.permute.xlu0 %1196
      %1198 = vrot.lane.b32.xlu0 %v1110, 16
      %v1199 = vpop.permute.xlu0 %1198
      %1200 = vrot.lane.b32.xlu0 %v1113, 16
      %v1201 = vpop.permute.xlu0 %1200
      %1202 = vrot.lane.b32.xlu0 %v1115, 16
      %v1203 = vpop.permute.xlu0 %1202
      %1204 = vrot.lane.b32.xlu0 %v1118, 16
      %v1205 = vpop.permute.xlu0 %1204
      %1206 = vrot.lane.b32.xlu0 %v1120, 16
      %v1207 = vpop.permute.xlu0 %1206
      %1208 = vrot.lane.b32.xlu0 %v1123, 16
      %v1209 = vpop.permute.xlu0 %1208
      %1210 = vrot.lane.b32.xlu0 %v1125, 16
      %v1211 = vpop.permute.xlu0 %1210
      %1212 = vrot.lane.b32.xlu0 %v1128, 16
      %v1213 = vpop.permute.xlu0 %1212
      %1214 = vrot.lane.b32.xlu0 %v1130, 16
      %v1215 = vpop.permute.xlu0 %1214
      %1216 = vrot.lane.b32.xlu0 %v1133, 16
      %v1217 = vpop.permute.xlu0 %1216
      %1218 = vrot.lane.b32.xlu0 %v1135, 16
      %v1219 = vpop.permute.xlu0 %1218
      %1220 = vrot.lane.b32.xlu0 %v1138, 16
      %v1221 = vpop.permute.xlu0 %1220
      %1222 = vrot.lane.b32.xlu0 %v1140, 16
      %v1223 = vpop.permute.xlu0 %1222
      %1224 = vrot.lane.b32.xlu0 %v1143, 16
      %v1225 = vpop.permute.xlu0 %1224
      %1226 = vrot.lane.b32.xlu0 %v1145, 16
      %v1227 = vpop.permute.xlu0 %1226
      %1228 = vrot.lane.b32.xlu0 %v1148, 16
      %v1229 = vpop.permute.xlu0 %1228
      %1230 = vrot.lane.b32.xlu0 %v1150, 16
      %v1231 = vpop.permute.xlu0 %1230
      %1232 = vrot.lane.b32.xlu0 %v1153, 16
      %v1233 = vpop.permute.xlu0 %1232
      %1234 = vrot.lane.b32.xlu0 %v1155, 16
      %v1235 = vpop.permute.xlu0 %1234
      %1236 = vrot.lane.b32.xlu0 %v1158, 16
      %v1237 = vpop.permute.xlu0 %1236
      %1238 = vrot.lane.b32.xlu0 %v1160, 16
      %v1239 = vpop.permute.xlu0 %1238
      %1240 = vrot.lane.b32.xlu0 %v1163, 16
      %v1241 = vpop.permute.xlu0 %1240
      %1242 = vrot.lane.b32.xlu0 %v1165, 16
      %v1243 = vpop.permute.xlu0 %1242
      %1244 = vrot.lane.b32.xlu0 %v1168, 16
      %v1245 = vpop.permute.xlu0 %1244
      %1246 = vrot.lane.b32.xlu0 %v1170, 16
      %v1247 = vpop.permute.xlu0 %1246
      %1248 = vrot.lane.b32.xlu0 %v1173, 16
      %v1249 = vpop.permute.xlu0 %1248
      %1250 = vrot.lane.b32.xlu0 %v1175, 16
      %v1251 = vpop.permute.xlu0 %1250
      %1252 = vrot.lane.b32.xlu0 %v1178, 16
      %v1253 = vpop.permute.xlu0 %1252
      %1254 = vrot.lane.b32.xlu0 %v1180, 16
      %v1255 = vpop.permute.xlu0 %1254
      %1256 = vrot.lane.b32.xlu0 %v1183, 16
      %v1257 = vpop.permute.xlu0 %1256
      %1258 = vrot.lane.b32.xlu0 %v1185, 16
      %v1259 = vpop.permute.xlu0 %1258
      %1260 = vrot.lane.b32.xlu0 %v1188, 16
      %v1261 = vpop.permute.xlu0 %1260
      %1262 = vrot.lane.b32.xlu0 %v1190, 16
      %v1263 = vpop.permute.xlu0 %1262
      %1264 = vrot.lane.b32.xlu0 %v1193, 16
      %v1265 = vpop.permute.xlu0 %1264
      %1266 = vrot.lane.b32.xlu0 %v1195, 16
      %v1267 = vpop.permute.xlu0 %1266
      %vm1268 = vcmask 64512
      %v1270 = vsel %vm1268, %v582, %v1034
      %v1272 = vsel %vm1268, %v583, %v1036
      %v1274 = vsel %vm1268, %v584, %v1038
      %v1276 = vsel %vm1268, %v585, %v1040
      %v1278 = vsel %vm1268, %v586, %v1042
      %v1280 = vsel %vm1268, %v587, %v1044
      %v1282 = vsel %vm1268, %v588, %v1046
      %v1284 = vsel %vm1268, %v589, %v1048
      %v1286 = vsel %vm1268, %v590, %v1050
      %v1288 = vsel %vm1268, %v591, %v1052
      %v1290 = vsel %vm1268, %v592, %v1054
      %v1292 = vsel %vm1268, %v593, %v1056
      %v1294 = vsel %vm1268, %v594, %v1058
      %v1296 = vsel %vm1268, %v595, %v1060
      %v1298 = vsel %vm1268, %v596, %v1062
      %v1300 = vsel %vm1268, %v597, %v1064
      %v1302 = vsel %vm1268, %v598, %v1066
      %v1304 = vsel %vm1268, %v599, %v1068
      %v1306 = vsel %vm1268, %v600, %v1070
      %v1308 = vsel %vm1268, %v601, %v1072
      %v1310 = vsel %vm1268, %v602, %v1074
      %v1312 = vsel %vm1268, %v603, %v1076
      %v1314 = vsel %vm1268, %v604, %v1078
      %v1316 = vsel %vm1268, %v605, %v1080
      %v1318 = vsel %vm1268, %v606, %v1082
      %v1320 = vsel %vm1268, %v607, %v1084
      %v1322 = vsel %vm1268, %v608, %v1086
      %v1324 = vsel %vm1268, %v609, %v1088
      %v1326 = vsel %vm1268, %v610, %v1090
      %v1328 = vsel %vm1268, %v611, %v1092
      %v1330 = vsel %vm1268, %v612, %v1094
      %v1332 = vsel %vm1268, %v613, %v1096
      %v1334 = vsel %vm1268, %v614, %v1098
      %v1336 = vsel %vm1268, %v615, %v1100
      %v1338 = vsel %vm1268, %v616, %v1102
      %v1340 = vsel %vm1268, %v617, %v1104
      %vm1341 = vcmask 130048
      %v1343 = vsel %vm1341, %v1270, %v1197
      %v1345 = vsel %vm1341, %v1272, %v1199
      %v1347 = vsel %vm1341, %v1274, %v1201
      %v1349 = vsel %vm1341, %v1276, %v1203
      %v1351 = vsel %vm1341, %v1278, %v1205
      %v1353 = vsel %vm1341, %v1280, %v1207
      %v1355 = vsel %vm1341, %v1282, %v1209
      %v1357 = vsel %vm1341, %v1284, %v1211
      %v1359 = vsel %vm1341, %v1286, %v1213
      %v1361 = vsel %vm1341, %v1288, %v1215
      %v1363 = vsel %vm1341, %v1290, %v1217
      %v1365 = vsel %vm1341, %v1292, %v1219
      %v1367 = vsel %vm1341, %v1294, %v1221
      %v1369 = vsel %vm1341, %v1296, %v1223
      %v1371 = vsel %vm1341, %v1298, %v1225
      %v1373 = vsel %vm1341, %v1300, %v1227
      %v1375 = vsel %vm1341, %v1302, %v1229
      %v1377 = vsel %vm1341, %v1304, %v1231
      %v1379 = vsel %vm1341, %v1306, %v1233
      %v1381 = vsel %vm1341, %v1308, %v1235
      %v1383 = vsel %vm1341, %v1310, %v1237
      %v1385 = vsel %vm1341, %v1312, %v1239
      %v1387 = vsel %vm1341, %v1314, %v1241
      %v1389 = vsel %vm1341, %v1316, %v1243
      %v1391 = vsel %vm1341, %v1318, %v1245
      %v1393 = vsel %vm1341, %v1320, %v1247
      %v1395 = vsel %vm1341, %v1322, %v1249
      %v1397 = vsel %vm1341, %v1324, %v1251
      %v1399 = vsel %vm1341, %v1326, %v1253
      %v1401 = vsel %vm1341, %v1328, %v1255
      %v1403 = vsel %vm1341, %v1330, %v1257
      %v1405 = vsel %vm1341, %v1332, %v1259
      %v1407 = vsel %vm1341, %v1334, %v1261
      %v1409 = vsel %vm1341, %v1336, %v1263
      %v1411 = vsel %vm1341, %v1338, %v1265
      %v1413 = vsel %vm1341, %v1340, %v1267
      %v1414 = vld [vmem:[%s2] sm:$0xf]
      %v1415 = vld [vmem:[%s2 + $0x4] sm:$0xf]
      %v1416 = vld [vmem:[%s2 + $0x8] sm:$0xf]
      %s1417 = scalar_lea.vmem %s2, 12
      %v1418 = vld [vmem:[%s1417] sm:$0xf]
      %v1419 = vld [vmem:[%s1417 + $0x4] sm:$0xf]
      %v1420 = vld [vmem:[%s1417 + $0x8] sm:$0xf]
      %v1424 = vunpack.c.l.b16 %v1418
      %v1425 = vunpack.c.l.b16 %v1419
      %v1426 = vunpack.c.l.b16 %v1420
      %v1427 = vpack.c.b16 %v1425, %v1424
      %v1428 = vpack.c.b16 %v1426, %v1426
      %vm1430 = vcmask 195584
      %v1431 = vsel %vm1430, %v1347, 0
      %v1433 = vsel %vm1430, %v1349, 0
      %v1435 = vsel %vm1430, %v1351, 0
      %v1437 = vsel %vm1430, %v1353, 0
      %v1439 = vsel %vm1430, %v1355, 0
      %v1441 = vsel %vm1430, %v1357, 0
      %v1443 = vsel %vm1430, %v1359, 0
      %v1445 = vsel %vm1430, %v1361, 0
      %v1447 = vsel %vm1430, %v1363, 0
      %v1449 = vsel %vm1430, %v1365, 0
      %v1451 = vsel %vm1430, %v1367, 0
      %v1453 = vsel %vm1430, %v1369, 0
      %v1455 = vsel %vm1430, %v1371, 0
      %v1457 = vsel %vm1430, %v1373, 0
      %v1459 = vsel %vm1430, %v1375, 0
      %v1461 = vsel %vm1430, %v1377, 0
      %v1463 = vsel %vm1430, %v1379, 0
      %v1465 = vsel %vm1430, %v1381, 0
      %v1467 = vsel %vm1430, %v1383, 0
      %v1469 = vsel %vm1430, %v1385, 0
      %v1471 = vsel %vm1430, %v1387, 0
      %v1473 = vsel %vm1430, %v1389, 0
      %v1475 = vsel %vm1430, %v1391, 0
      %v1477 = vsel %vm1430, %v1393, 0
      %v1479 = vsel %vm1430, %v1395, 0
      %v1481 = vsel %vm1430, %v1397, 0
      %v1483 = vsel %vm1430, %v1399, 0
      %v1485 = vsel %vm1430, %v1401, 0
      %v1487 = vsel %vm1430, %v1403, 0
      %v1489 = vsel %vm1430, %v1405, 0
      %v1491 = vsel %vm1430, %v1407, 0
      %v1493 = vsel %vm1430, %v1409, 0
      %vm1495 = vcmask 1043456
      %v1497 = vsel %vm1495, %v1428, 0
      %1499 = vmatprep.subr.bf16.mxu0 0
      %1500 = vmatpush1.bf16.msra.mxu0 %v1427
      %1501 = vmatprep.subr.bf16.mxu0 0
      %1502 = vmatpush1.bf16.msra.mxu0 %v1497
      %1503 = vmatprep.subr.bf16.mxu0 0
      %1504 = vmatpush1.bf16.msra.mxu0 0
      %1505 = vmatprep.subr.bf16.mxu0 0
      %1506 = vmatpush1.bf16.msra.mxu0 0
      %1507 = vmatprep.subr.bf16.mxu0 0
      %1508 = vmatpush1.bf16.msra.mxu0 0
      %1509 = vmatprep.subr.bf16.mxu0 0
      %1510 = vmatpush1.bf16.msra.mxu0 0
      %1511 = vmatprep.subr.bf16.mxu0 0
      %1512 = vmatpush1.bf16.msra.mxu0 0
      %1513 = vmatprep.subr.bf16.mxu0 0
      %1514 = vmatpush1.bf16.msra.mxu0 0
      %1515 = vmatprep.subr.bf16.mxu0 0
      %1516 = vmatpush1.bf16.msra.mxu0 0
      %1517 = vmatprep.subr.bf16.mxu0 0
      %1518 = vmatpush1.bf16.msra.mxu0 0
      %1519 = vmatprep.subr.bf16.mxu0 0
      %1520 = vmatpush1.bf16.msra.mxu0 0
      %1521 = vmatprep.subr.bf16.mxu0 0
      %1522 = vmatpush1.bf16.msra.mxu0 0
      %1523 = vmatprep.subr.bf16.mxu0 0
      %1524 = vmatpush1.bf16.msra.mxu0 0
      %1525 = vmatprep.subr.bf16.mxu0 0
      %1526 = vmatpush1.bf16.msra.mxu0 0
      %1527 = vmatprep.subr.bf16.mxu0 0
      %1528 = vmatpush1.bf16.msra.mxu0 0
      %1529 = vmatprep.subr.bf16.mxu0 0
      %1530 = vmatpush1.bf16.msra.mxu0 0
      %1531 = vmatprep.mubr.bf16.mxu0 0
      %1532 = vmatmul.mubr.bf16.gmra.mrb[0].mxu0 %v1431
      %v1533 = vpop.f32.mrb[0].mxu0
      %v1534 = vadd.f32 0.0, %v1533
      %v1535 = vpop.f32.mrb[0].mxu0
      %v1536 = vpop.f32.mrb[0].mxu0
      %v1537 = vadd.f32 0.0, %v1536
      %v1538 = vpop.f32.mrb[0].mxu0
      %1539 = vmatprep.mubr.bf16.mxu0 0
      %1540 = vmatmul.mubr.bf16.gmra.mrb[0].mxu0 %v1433
      %v1541 = vpop.f32.mrb[0].mxu0
      %v1542 = vadd.f32 0.0, %v1541
      %v1543 = vpop.f32.mrb[0].mxu0
      %v1544 = vpop.f32.mrb[0].mxu0
      %v1545 = vadd.f32 0.0, %v1544
      %v1546 = vpop.f32.mrb[0].mxu0
      %1547 = vmatprep.mubr.bf16.mxu0 0
      %1548 = vmatmul.mubr.bf16.gmra.mrb[0].mxu0 %v1435
      %v1549 = vpop.f32.mrb[0].mxu0
      %v1550 = vadd.f32 0.0, %v1549
      %v1551 = vpop.f32.mrb[0].mxu0
      %v1552 = vpop.f32.mrb[0].mxu0
      %v1553 = vadd.f32 0.0, %v1552
      %v1554 = vpop.f32.mrb[0].mxu0
      %1555 = vmatprep.mubr.bf16.mxu0 0
      %1556 = vmatmul.mubr.bf16.gmra.mrb[0].mxu0 %v1437
      %v1557 = vpop.f32.mrb[0].mxu0
      %v1558 = vadd.f32 0.0, %v1557
      %v1559 = vpop.f32.mrb[0].mxu0
      %v1560 = vpop.f32.mrb[0].mxu0
      %v1561 = vadd.f32 0.0, %v1560
      %v1562 = vpop.f32.mrb[0].mxu0
      %1563 = vmatprep.mubr.bf16.mxu0 0
      %1564 = vmatmul.mubr.bf16.gmra.mrb[0].mxu0 %v1439
      %v1565 = vpop.f32.mrb[0].mxu0
      %v1566 = vadd.f32 0.0, %v1565
      %v1567 = vpop.f32.mrb[0].mxu0
      %v1568 = vpop.f32.mrb[0].mxu0
      %v1569 = vadd.f32 0.0, %v1568
      %v1570 = vpop.f32.mrb[0].mxu0
      %1571 = vmatprep.mubr.bf16.mxu0 0
      %1572 = vmatmul.mubr.bf16.gmra.mrb[0].mxu0 %v1441
      %v1573 = vpop.f32.mrb[0].mxu0
      %v1574 = vadd.f32 0.0, %v1573
      %v1575 = vpop.f32.mrb[0].mxu0
      %v1576 = vpop.f32.mrb[0].mxu0
      %v1577 = vadd.f32 0.0, %v1576
      %v1578 = vpop.f32.mrb[0].mxu0
      %1579 = vmatprep.mubr.bf16.mxu0 0
      %1580 = vmatmul.mubr.bf16.gmra.mrb[0].mxu0 %v1443
      %v1581 = vpop.f32.mrb[0].mxu0
      %v1582 = vadd.f32 0.0, %v1581
      %v1583 = vpop.f32.mrb[0].mxu0
      %v1584 = vpop.f32.mrb[0].mxu0
      %v1585 = vadd.f32 0.0, %v1584
      %v1586 = vpop.f32.mrb[0].mxu0
      %1587 = vmatprep.mubr.bf16.mxu0 0
      %1588 = vmatmul.mubr.bf16.gmra.mrb[0].mxu0 %v1445
      %v1589 = vpop.f32.mrb[0].mxu0
      %v1590 = vadd.f32 0.0, %v1589
      %v1591 = vpop.f32.mrb[0].mxu0
      %v1592 = vpop.f32.mrb[0].mxu0
      %v1593 = vadd.f32 0.0, %v1592
      %v1594 = vpop.f32.mrb[0].mxu0
      %1595 = vmatprep.mubr.bf16.mxu0 0
      %1596 = vmatmul.mubr.bf16.gmra.mrb[0].mxu0 %v1447
      %v1597 = vpop.f32.mrb[0].mxu0
      %v1598 = vadd.f32 0.0, %v1597
      %v1599 = vpop.f32.mrb[0].mxu0
      %v1600 = vpop.f32.mrb[0].mxu0
      %v1601 = vadd.f32 0.0, %v1600
      %v1602 = vpop.f32.mrb[0].mxu0
      %1603 = vmatprep.mubr.bf16.mxu0 0
      %1604 = vmatmul.mubr.bf16.gmra.mrb[0].mxu0 %v1449
      %v1605 = vpop.f32.mrb[0].mxu0
      %v1606 = vadd.f32 0.0, %v1605
      %v1607 = vpop.f32.mrb[0].mxu0
      %v1608 = vpop.f32.mrb[0].mxu0
      %v1609 = vadd.f32 0.0, %v1608
      %v1610 = vpop.f32.mrb[0].mxu0
      %1611 = vmatprep.mubr.bf16.mxu0 0
      %1612 = vmatmul.mubr.bf16.gmra.mrb[0].mxu0 %v1451
      %v1613 = vpop.f32.mrb[0].mxu0
      %v1614 = vadd.f32 0.0, %v1613
      %v1615 = vpop.f32.mrb[0].mxu0
      %v1616 = vpop.f32.mrb[0].mxu0
      %v1617 = vadd.f32 0.0, %v1616
      %v1618 = vpop.f32.mrb[0].mxu0
      %1619 = vmatprep.mubr.bf16.mxu0 0
      %1620 = vmatmul.mubr.bf16.gmra.mrb[0].mxu0 %v1453
      %v1621 = vpop.f32.mrb[0].mxu0
      %v1622 = vadd.f32 0.0, %v1621
      %v1623 = vpop.f32.mrb[0].mxu0
      %v1624 = vpop.f32.mrb[0].mxu0
      %v1625 = vadd.f32 0.0, %v1624
      %v1626 = vpop.f32.mrb[0].mxu0
      %1627 = vmatprep.mubr.bf16.mxu0 0
      %1628 = vmatmul.mubr.bf16.gmra.mrb[0].mxu0 %v1455
      %v1629 = vpop.f32.mrb[0].mxu0
      %v1630 = vadd.f32 0.0, %v1629
      %v1631 = vpop.f32.mrb[0].mxu0
      %v1632 = vpop.f32.mrb[0].mxu0
      %v1633 = vadd.f32 0.0, %v1632
      %v1634 = vpop.f32.mrb[0].mxu0
      %1635 = vmatprep.mubr.bf16.mxu0 0
      %1636 = vmatmul.mubr.bf16.gmra.mrb[0].mxu0 %v1457
      %v1637 = vpop.f32.mrb[0].mxu0
      %v1638 = vadd.f32 0.0, %v1637
      %v1639 = vpop.f32.mrb[0].mxu0
      %v1640 = vpop.f32.mrb[0].mxu0
      %v1641 = vadd.f32 0.0, %v1640
      %v1642 = vpop.f32.mrb[0].mxu0
      %1643 = vmatprep.mubr.bf16.mxu0 0
      %1644 = vmatmul.mubr.bf16.gmra.mrb[0].mxu0 %v1459
      %v1645 = vpop.f32.mrb[0].mxu0
      %v1646 = vadd.f32 0.0, %v1645
      %v1647 = vpop.f32.mrb[0].mxu0
      %v1648 = vpop.f32.mrb[0].mxu0
      %v1649 = vadd.f32 0.0, %v1648
      %v1650 = vpop.f32.mrb[0].mxu0
      %1651 = vmatprep.mubr.bf16.mxu0 0
      %1652 = vmatmul.mubr.bf16.gmra.mrb[0].mxu0 %v1461
      %v1653 = vpop.f32.mrb[0].mxu0
      %v1654 = vadd.f32 0.0, %v1653
      %v1655 = vpop.f32.mrb[0].mxu0
      %v1656 = vpop.f32.mrb[0].mxu0
      %v1657 = vadd.f32 0.0, %v1656
      %v1658 = vpop.f32.mrb[0].mxu0
      %1659 = vmatprep.mubr.bf16.mxu0 0
      %1660 = vmatmul.mubr.bf16.gmra.mrb[0].mxu0 %v1463
      %v1661 = vpop.f32.mrb[0].mxu0
      %v1662 = vadd.f32 0.0, %v1661
      %v1663 = vpop.f32.mrb[0].mxu0
      %v1664 = vpop.f32.mrb[0].mxu0
      %v1665 = vadd.f32 0.0, %v1664
      %v1666 = vpop.f32.mrb[0].mxu0
      %1667 = vmatprep.mubr.bf16.mxu0 0
      %1668 = vmatmul.mubr.bf16.gmra.mrb[0].mxu0 %v1465
      %v1669 = vpop.f32.mrb[0].mxu0
      %v1670 = vadd.f32 0.0, %v1669
      %v1671 = vpop.f32.mrb[0].mxu0
      %v1672 = vpop.f32.mrb[0].mxu0
      %v1673 = vadd.f32 0.0, %v1672
      %v1674 = vpop.f32.mrb[0].mxu0
      %1675 = vmatprep.mubr.bf16.mxu0 0
      %1676 = vmatmul.mubr.bf16.gmra.mrb[0].mxu0 %v1467
      %v1677 = vpop.f32.mrb[0].mxu0
      %v1678 = vadd.f32 0.0, %v1677
      %v1679 = vpop.f32.mrb[0].mxu0
      %v1680 = vpop.f32.mrb[0].mxu0
      %v1681 = vadd.f32 0.0, %v1680
      %v1682 = vpop.f32.mrb[0].mxu0
      %1683 = vmatprep.mubr.bf16.mxu0 0
      %1684 = vmatmul.mubr.bf16.gmra.mrb[0].mxu0 %v1469
      %v1685 = vpop.f32.mrb[0].mxu0
      %v1686 = vadd.f32 0.0, %v1685
      %v1687 = vpop.f32.mrb[0].mxu0
      %v1688 = vpop.f32.mrb[0].mxu0
      %v1689 = vadd.f32 0.0, %v1688
      %v1690 = vpop.f32.mrb[0].mxu0
      %1691 = vmatprep.mubr.bf16.mxu0 0
      %1692 = vmatmul.mubr.bf16.gmra.mrb[0].mxu0 %v1471
      %v1693 = vpop.f32.mrb[0].mxu0
      %v1694 = vadd.f32 0.0, %v1693
      %v1695 = vpop.f32.mrb[0].mxu0
      %v1696 = vpop.f32.mrb[0].mxu0
      %v1697 = vadd.f32 0.0, %v1696
      %v1698 = vpop.f32.mrb[0].mxu0
      %1699 = vmatprep.mubr.bf16.mxu0 0
      %1700 = vmatmul.mubr.bf16.gmra.mrb[0].mxu0 %v1473
      %v1701 = vpop.f32.mrb[0].mxu0
      %v1702 = vadd.f32 0.0, %v1701
      %v1703 = vpop.f32.mrb[0].mxu0
      %v1704 = vpop.f32.mrb[0].mxu0
      %v1705 = vadd.f32 0.0, %v1704
      %v1706 = vpop.f32.mrb[0].mxu0
      %1707 = vmatprep.mubr.bf16.mxu0 0
      %1708 = vmatmul.mubr.bf16.gmra.mrb[0].mxu0 %v1475
      %v1709 = vpop.f32.mrb[0].mxu0
      %v1710 = vadd.f32 0.0, %v1709
      %v1711 = vpop.f32.mrb[0].mxu0
      %v1712 = vpop.f32.mrb[0].mxu0
      %v1713 = vadd.f32 0.0, %v1712
      %v1714 = vpop.f32.mrb[0].mxu0
      %1715 = vmatprep.mubr.bf16.mxu0 0
      %1716 = vmatmul.mubr.bf16.gmra.mrb[0].mxu0 %v1477
      %v1717 = vpop.f32.mrb[0].mxu0
      %v1718 = vadd.f32 0.0, %v1717
      %v1719 = vpop.f32.mrb[0].mxu0
      %v1720 = vpop.f32.mrb[0].mxu0
      %v1721 = vadd.f32 0.0, %v1720
      %v1722 = vpop.f32.mrb[0].mxu0
      %1723 = vmatprep.mubr.bf16.mxu0 0
      %1724 = vmatmul.mubr.bf16.gmra.mrb[0].mxu0 %v1479
      %v1725 = vpop.f32.mrb[0].mxu0
      %v1726 = vadd.f32 0.0, %v1725
      %v1727 = vpop.f32.mrb[0].mxu0
      %v1728 = vpop.f32.mrb[0].mxu0
      %v1729 = vadd.f32 0.0, %v1728
      %v1730 = vpop.f32.mrb[0].mxu0
      %1731 = vmatprep.mubr.bf16.mxu0 0
      %1732 = vmatmul.mubr.bf16.gmra.mrb[0].mxu0 %v1481
      %v1733 = vpop.f32.mrb[0].mxu0
      %v1734 = vadd.f32 0.0, %v1733
      %v1735 = vpop.f32.mrb[0].mxu0
      %v1736 = vpop.f32.mrb[0].mxu0
      %v1737 = vadd.f32 0.0, %v1736
      %v1738 = vpop.f32.mrb[0].mxu0
      %1739 = vmatprep.mubr.bf16.mxu0 0
      %1740 = vmatmul.mubr.bf16.gmra.mrb[0].mxu0 %v1483
      %v1741 = vpop.f32.mrb[0].mxu0
      %v1742 = vadd.f32 0.0, %v1741
      %v1743 = vpop.f32.mrb[0].mxu0
      %v1744 = vpop.f32.mrb[0].mxu0
      %v1745 = vadd.f32 0.0, %v1744
      %v1746 = vpop.f32.mrb[0].mxu0
      %1747 = vmatprep.mubr.bf16.mxu0 0
      %1748 = vmatmul.mubr.bf16.gmra.mrb[0].mxu0 %v1485
      %v1749 = vpop.f32.mrb[0].mxu0
      %v1750 = vadd.f32 0.0, %v1749
      %v1751 = vpop.f32.mrb[0].mxu0
      %v1752 = vpop.f32.mrb[0].mxu0
      %v1753 = vadd.f32 0.0, %v1752
      %v1754 = vpop.f32.mrb[0].mxu0
      %1755 = vmatprep.mubr.bf16.mxu0 0
      %1756 = vmatmul.mubr.bf16.gmra.mrb[0].mxu0 %v1487
      %v1757 = vpop.f32.mrb[0].mxu0
      %v1758 = vadd.f32 0.0, %v1757
      %v1759 = vpop.f32.mrb[0].mxu0
      %v1760 = vpop.f32.mrb[0].mxu0
      %v1761 = vadd.f32 0.0, %v1760
      %v1762 = vpop.f32.mrb[0].mxu0
      %1763 = vmatprep.mubr.bf16.mxu0 0
      %1764 = vmatmul.mubr.bf16.gmra.mrb[0].mxu0 %v1489
      %v1765 = vpop.f32.mrb[0].mxu0
      %v1766 = vadd.f32 0.0, %v1765
      %v1767 = vpop.f32.mrb[0].mxu0
      %v1768 = vpop.f32.mrb[0].mxu0
      %v1769 = vadd.f32 0.0, %v1768
      %v1770 = vpop.f32.mrb[0].mxu0
      %1771 = vmatprep.mubr.bf16.mxu0 0
      %1772 = vmatmul.mubr.bf16.gmra.mrb[0].mxu0 %v1491
      %v1773 = vpop.f32.mrb[0].mxu0
      %v1774 = vadd.f32 0.0, %v1773
      %v1775 = vpop.f32.mrb[0].mxu0
      %v1776 = vpop.f32.mrb[0].mxu0
      %v1777 = vadd.f32 0.0, %v1776
      %v1778 = vpop.f32.mrb[0].mxu0
      %1779 = vmatprep.mubr.bf16.mxu0 0
      %1780 = vmatmul.mubr.bf16.gmra.mrb[0].mxu0 %v1493
      %v1781 = vpop.f32.mrb[0].mxu0
      %v1782 = vadd.f32 0.0, %v1781
      %v1783 = vpop.f32.mrb[0].mxu0
      %v1784 = vpop.f32.mrb[0].mxu0
      %v1785 = vadd.f32 0.0, %v1784
      %v1786 = vpop.f32.mrb[0].mxu0
      %1787 = vdwg.mxu0
      %v1791 = vunpack.c.l.b16 %v1414
      %v1792 = vunpack.c.l.b16 %v1415
      %v1793 = vunpack.c.l.b16 %v1416
      %v1794 = vpack.c.b16 %v1792, %v1791
      %v1795 = vpack.c.b16 %v1793, %v1793
      %v1797 = vsel %vm1430, %v1343, 0
      %v1799 = vsel %vm1430, %v1345, 0
      %v1802 = vsel %vm1495, %v1795, 0
      %1804 = vmatprep.subr.bf16.mxu0 0
      %1805 = vmatpush1.bf16.msra.mxu0 %v1794
      %1806 = vmatprep.subr.bf16.mxu0 0
      %1807 = vmatpush1.bf16.msra.mxu0 %v1802
      %1808 = vmatprep.subr.bf16.mxu0 0
      %1809 = vmatpush1.bf16.msra.mxu0 0
      %1810 = vmatprep.subr.bf16.mxu0 0
      %1811 = vmatpush1.bf16.msra.mxu0 0
      %1812 = vmatprep.subr.bf16.mxu0 0
      %1813 = vmatpush1.bf16.msra.mxu0 0
      %1814 = vmatprep.subr.bf16.mxu0 0
      %1815 = vmatpush1.bf16.msra.mxu0 0
      %1816 = vmatprep.subr.bf16.mxu0 0
      %1817 = vmatpush1.bf16.msra.mxu0 0
      %1818 = vmatprep.subr.bf16.mxu0 0
      %1819 = vmatpush1.bf16.msra.mxu0 0
      %1820 = vmatprep.subr.bf16.mxu0 0
      %1821 = vmatpush1.bf16.msra.mxu0 0
      %1822 = vmatprep.subr.bf16.mxu0 0
      %1823 = vmatpush1.bf16.msra.mxu0 0
      %1824 = vmatprep.subr.bf16.mxu0 0
      %1825 = vmatpush1.bf16.msra.mxu0 0
      %1826 = vmatprep.subr.bf16.mxu0 0
      %1827 = vmatpush1.bf16.msra.mxu0 0
      %1828 = vmatprep.subr.bf16.mxu0 0
      %1829 = vmatpush1.bf16.msra.mxu0 0
      %1830 = vmatprep.subr.bf16.mxu0 0
      %1831 = vmatpush1.bf16.msra.mxu0 0
      %1832 = vmatprep.subr.bf16.mxu0 0
      %1833 = vmatpush1.bf16.msra.mxu0 0
      %1834 = vmatprep.subr.bf16.mxu0 0
      %1835 = vmatpush1.bf16.msra.mxu0 0
      %1836 = vmatprep.mubr.bf16.mxu0 0
      %1837 = vmatmul.mubr.bf16.gmra.mrb[0].mxu0 %v1797
      %v1838 = vpop.f32.mrb[0].mxu0
      %v1839 = vadd.f32 %v1534, %v1838
      %v1840 = vpop.f32.mrb[0].mxu0
      %v1841 = vpop.f32.mrb[0].mxu0
      %v1842 = vadd.f32 %v1537, %v1841
      %v1843 = vpop.f32.mrb[0].mxu0
      %1844 = vmatprep.mubr.bf16.mxu0 0
      %1845 = vmatmul.mubr.bf16.gmra.mrb[0].mxu0 %v1799
      %v1846 = vpop.f32.mrb[0].mxu0
      %v1847 = vadd.f32 %v1542, %v1846
      %v1848 = vpop.f32.mrb[0].mxu0
      %v1849 = vpop.f32.mrb[0].mxu0
      %v1850 = vadd.f32 %v1545, %v1849
      %v1851 = vpop.f32.mrb[0].mxu0
      %1852 = vmatprep.mubr.bf16.mxu0 0
      %1853 = vmatmul.mubr.bf16.gmra.mrb[0].mxu0 %v1431
      %v1854 = vpop.f32.mrb[0].mxu0
      %v1855 = vadd.f32 %v1550, %v1854
      %v1856 = vpop.f32.mrb[0].mxu0
      %v1857 = vpop.f32.mrb[0].mxu0
      %v1858 = vadd.f32 %v1553, %v1857
      %v1859 = vpop.f32.mrb[0].mxu0
      %1860 = vmatprep.mubr.bf16.mxu0 0
      %1861 = vmatmul.mubr.bf16.gmra.mrb[0].mxu0 %v1433
      %v1862 = vpop.f32.mrb[0].mxu0
      %v1863 = vadd.f32 %v1558, %v1862
      %v1864 = vpop.f32.mrb[0].mxu0
      %v1865 = vpop.f32.mrb[0].mxu0
      %v1866 = vadd.f32 %v1561, %v1865
      %v1867 = vpop.f32.mrb[0].mxu0
      %1868 = vmatprep.mubr.bf16.mxu0 0
      %1869 = vmatmul.mubr.bf16.gmra.mrb[0].mxu0 %v1435
      %v1870 = vpop.f32.mrb[0].mxu0
      %v1871 = vadd.f32 %v1566, %v1870
      %v1872 = vpop.f32.mrb[0].mxu0
      %v1873 = vpop.f32.mrb[0].mxu0
      %v1874 = vadd.f32 %v1569, %v1873
      %v1875 = vpop.f32.mrb[0].mxu0
      %1876 = vmatprep.mubr.bf16.mxu0 0
      %1877 = vmatmul.mubr.bf16.gmra.mrb[0].mxu0 %v1437
      %v1878 = vpop.f32.mrb[0].mxu0
      %v1879 = vadd.f32 %v1574, %v1878
      %v1880 = vpop.f32.mrb[0].mxu0
      %v1881 = vpop.f32.mrb[0].mxu0
      %v1882 = vadd.f32 %v1577, %v1881
      %v1883 = vpop.f32.mrb[0].mxu0
      %1884 = vmatprep.mubr.bf16.mxu0 0
      %1885 = vmatmul.mubr.bf16.gmra.mrb[0].mxu0 %v1439
      %v1886 = vpop.f32.mrb[0].mxu0
      %v1887 = vadd.f32 %v1582, %v1886
      %v1888 = vpop.f32.mrb[0].mxu0
      %v1889 = vpop.f32.mrb[0].mxu0
      %v1890 = vadd.f32 %v1585, %v1889
      %v1891 = vpop.f32.mrb[0].mxu0
      %1892 = vmatprep.mubr.bf16.mxu0 0
      %1893 = vmatmul.mubr.bf16.gmra.mrb[0].mxu0 %v1441
      %v1894 = vpop.f32.mrb[0].mxu0
      %v1895 = vadd.f32 %v1590, %v1894
      %v1896 = vpop.f32.mrb[0].mxu0
      %v1897 = vpop.f32.mrb[0].mxu0
      %v1898 = vadd.f32 %v1593, %v1897
      %v1899 = vpop.f32.mrb[0].mxu0
      %1900 = vmatprep.mubr.bf16.mxu0 0
      %1901 = vmatmul.mubr.bf16.gmra.mrb[0].mxu0 %v1443
      %v1902 = vpop.f32.mrb[0].mxu0
      %v1903 = vadd.f32 %v1598, %v1902
      %v1904 = vpop.f32.mrb[0].mxu0
      %v1905 = vpop.f32.mrb[0].mxu0
      %v1906 = vadd.f32 %v1601, %v1905
      %v1907 = vpop.f32.mrb[0].mxu0
      %1908 = vmatprep.mubr.bf16.mxu0 0
      %1909 = vmatmul.mubr.bf16.gmra.mrb[0].mxu0 %v1445
      %v1910 = vpop.f32.mrb[0].mxu0
      %v1911 = vadd.f32 %v1606, %v1910
      %v1912 = vpop.f32.mrb[0].mxu0
      %v1913 = vpop.f32.mrb[0].mxu0
      %v1914 = vadd.f32 %v1609, %v1913
      %v1915 = vpop.f32.mrb[0].mxu0
      %1916 = vmatprep.mubr.bf16.mxu0 0
      %1917 = vmatmul.mubr.bf16.gmra.mrb[0].mxu0 %v1447
      %v1918 = vpop.f32.mrb[0].mxu0
      %v1919 = vadd.f32 %v1614, %v1918
      %v1920 = vpop.f32.mrb[0].mxu0
      %v1921 = vpop.f32.mrb[0].mxu0
      %v1922 = vadd.f32 %v1617, %v1921
      %v1923 = vpop.f32.mrb[0].mxu0
      %1924 = vmatprep.mubr.bf16.mxu0 0
      %1925 = vmatmul.mubr.bf16.gmra.mrb[0].mxu0 %v1449
      %v1926 = vpop.f32.mrb[0].mxu0
      %v1927 = vadd.f32 %v1622, %v1926
      %v1928 = vpop.f32.mrb[0].mxu0
      %v1929 = vpop.f32.mrb[0].mxu0
      %v1930 = vadd.f32 %v1625, %v1929
      %v1931 = vpop.f32.mrb[0].mxu0
      %1932 = vmatprep.mubr.bf16.mxu0 0
      %1933 = vmatmul.mubr.bf16.gmra.mrb[0].mxu0 %v1451
      %v1934 = vpop.f32.mrb[0].mxu0
      %v1935 = vadd.f32 %v1630, %v1934
      %v1936 = vpop.f32.mrb[0].mxu0
      %v1937 = vpop.f32.mrb[0].mxu0
      %v1938 = vadd.f32 %v1633, %v1937
      %v1939 = vpop.f32.mrb[0].mxu0
      %1940 = vmatprep.mubr.bf16.mxu0 0
      %1941 = vmatmul.mubr.bf16.gmra.mrb[0].mxu0 %v1453
      %v1942 = vpop.f32.mrb[0].mxu0
      %v1943 = vadd.f32 %v1638, %v1942
      %v1944 = vpop.f32.mrb[0].mxu0
      %v1945 = vpop.f32.mrb[0].mxu0
      %v1946 = vadd.f32 %v1641, %v1945
      %v1947 = vpop.f32.mrb[0].mxu0
      %1948 = vmatprep.mubr.bf16.mxu0 0
      %1949 = vmatmul.mubr.bf16.gmra.mrb[0].mxu0 %v1455
      %v1950 = vpop.f32.mrb[0].mxu0
      %v1951 = vadd.f32 %v1646, %v1950
      %v1952 = vpop.f32.mrb[0].mxu0
      %v1953 = vpop.f32.mrb[0].mxu0
      %v1954 = vadd.f32 %v1649, %v1953
      %v1955 = vpop.f32.mrb[0].mxu0
      %1956 = vmatprep.mubr.bf16.mxu0 0
      %1957 = vmatmul.mubr.bf16.gmra.mrb[0].mxu0 %v1457
      %v1958 = vpop.f32.mrb[0].mxu0
      %v1959 = vadd.f32 %v1654, %v1958
      %v1960 = vpop.f32.mrb[0].mxu0
      %v1961 = vpop.f32.mrb[0].mxu0
      %v1962 = vadd.f32 %v1657, %v1961
      %v1963 = vpop.f32.mrb[0].mxu0
      %1964 = vmatprep.mubr.bf16.mxu0 0
      %1965 = vmatmul.mubr.bf16.gmra.mrb[0].mxu0 %v1459
      %v1966 = vpop.f32.mrb[0].mxu0
      %v1967 = vadd.f32 %v1662, %v1966
      %v1968 = vpop.f32.mrb[0].mxu0
      %v1969 = vpop.f32.mrb[0].mxu0
      %v1970 = vadd.f32 %v1665, %v1969
      %v1971 = vpop.f32.mrb[0].mxu0
      %1972 = vmatprep.mubr.bf16.mxu0 0
      %1973 = vmatmul.mubr.bf16.gmra.mrb[0].mxu0 %v1461
      %v1974 = vpop.f32.mrb[0].mxu0
      %v1975 = vadd.f32 %v1670, %v1974
      %v1976 = vpop.f32.mrb[0].mxu0
      %v1977 = vpop.f32.mrb[0].mxu0
      %v1978 = vadd.f32 %v1673, %v1977
      %v1979 = vpop.f32.mrb[0].mxu0
      %1980 = vmatprep.mubr.bf16.mxu0 0
      %1981 = vmatmul.mubr.bf16.gmra.mrb[0].mxu0 %v1463
      %v1982 = vpop.f32.mrb[0].mxu0
      %v1983 = vadd.f32 %v1678, %v1982
      %v1984 = vpop.f32.mrb[0].mxu0
      %v1985 = vpop.f32.mrb[0].mxu0
      %v1986 = vadd.f32 %v1681, %v1985
      %v1987 = vpop.f32.mrb[0].mxu0
      %1988 = vmatprep.mubr.bf16.mxu0 0
      %1989 = vmatmul.mubr.bf16.gmra.mrb[0].mxu0 %v1465
      %v1990 = vpop.f32.mrb[0].mxu0
      %v1991 = vadd.f32 %v1686, %v1990
      %v1992 = vpop.f32.mrb[0].mxu0
      %v1993 = vpop.f32.mrb[0].mxu0
      %v1994 = vadd.f32 %v1689, %v1993
      %v1995 = vpop.f32.mrb[0].mxu0
      %1996 = vmatprep.mubr.bf16.mxu0 0
      %1997 = vmatmul.mubr.bf16.gmra.mrb[0].mxu0 %v1467
      %v1998 = vpop.f32.mrb[0].mxu0
      %v1999 = vadd.f32 %v1694, %v1998
      %v2000 = vpop.f32.mrb[0].mxu0
      %v2001 = vpop.f32.mrb[0].mxu0
      %v2002 = vadd.f32 %v1697, %v2001
      %v2003 = vpop.f32.mrb[0].mxu0
      %2004 = vmatprep.mubr.bf16.mxu0 0
      %2005 = vmatmul.mubr.bf16.gmra.mrb[0].mxu0 %v1469
      %v2006 = vpop.f32.mrb[0].mxu0
      %v2007 = vadd.f32 %v1702, %v2006
      %v2008 = vpop.f32.mrb[0].mxu0
      %v2009 = vpop.f32.mrb[0].mxu0
      %v2010 = vadd.f32 %v1705, %v2009
      %v2011 = vpop.f32.mrb[0].mxu0
      %2012 = vmatprep.mubr.bf16.mxu0 0
      %2013 = vmatmul.mubr.bf16.gmra.mrb[0].mxu0 %v1471
      %v2014 = vpop.f32.mrb[0].mxu0
      %v2015 = vadd.f32 %v1710, %v2014
      %v2016 = vpop.f32.mrb[0].mxu0
      %v2017 = vpop.f32.mrb[0].mxu0
      %v2018 = vadd.f32 %v1713, %v2017
      %v2019 = vpop.f32.mrb[0].mxu0
      %2020 = vmatprep.mubr.bf16.mxu0 0
      %2021 = vmatmul.mubr.bf16.gmra.mrb[0].mxu0 %v1473
      %v2022 = vpop.f32.mrb[0].mxu0
      %v2023 = vadd.f32 %v1718, %v2022
      %v2024 = vpop.f32.mrb[0].mxu0
      %v2025 = vpop.f32.mrb[0].mxu0
      %v2026 = vadd.f32 %v1721, %v2025
      %v2027 = vpop.f32.mrb[0].mxu0
      %2028 = vmatprep.mubr.bf16.mxu0 0
      %2029 = vmatmul.mubr.bf16.gmra.mrb[0].mxu0 %v1475
      %v2030 = vpop.f32.mrb[0].mxu0
      %v2031 = vadd.f32 %v1726, %v2030
      %v2032 = vpop.f32.mrb[0].mxu0
      %v2033 = vpop.f32.mrb[0].mxu0
      %v2034 = vadd.f32 %v1729, %v2033
      %v2035 = vpop.f32.mrb[0].mxu0
      %2036 = vmatprep.mubr.bf16.mxu0 0
      %2037 = vmatmul.mubr.bf16.gmra.mrb[0].mxu0 %v1477
      %v2038 = vpop.f32.mrb[0].mxu0
      %v2039 = vadd.f32 %v1734, %v2038
      %v2040 = vpop.f32.mrb[0].mxu0
      %v2041 = vpop.f32.mrb[0].mxu0
      %v2042 = vadd.f32 %v1737, %v2041
      %v2043 = vpop.f32.mrb[0].mxu0
      %2044 = vmatprep.mubr.bf16.mxu0 0
      %2045 = vmatmul.mubr.bf16.gmra.mrb[0].mxu0 %v1479
      %v2046 = vpop.f32.mrb[0].mxu0
      %v2047 = vadd.f32 %v1742, %v2046
      %v2048 = vpop.f32.mrb[0].mxu0
      %v2049 = vpop.f32.mrb[0].mxu0
      %v2050 = vadd.f32 %v1745, %v2049
      %v2051 = vpop.f32.mrb[0].mxu0
      %2052 = vmatprep.mubr.bf16.mxu0 0
      %2053 = vmatmul.mubr.bf16.gmra.mrb[0].mxu0 %v1481
      %v2054 = vpop.f32.mrb[0].mxu0
      %v2055 = vadd.f32 %v1750, %v2054
      %v2056 = vpop.f32.mrb[0].mxu0
      %v2057 = vpop.f32.mrb[0].mxu0
      %v2058 = vadd.f32 %v1753, %v2057
      %v2059 = vpop.f32.mrb[0].mxu0
      %2060 = vmatprep.mubr.bf16.mxu0 0
      %2061 = vmatmul.mubr.bf16.gmra.mrb[0].mxu0 %v1483
      %v2062 = vpop.f32.mrb[0].mxu0
      %v2063 = vadd.f32 %v1758, %v2062
      %v2064 = vpop.f32.mrb[0].mxu0
      %v2065 = vpop.f32.mrb[0].mxu0
      %v2066 = vadd.f32 %v1761, %v2065
      %v2067 = vpop.f32.mrb[0].mxu0
      %2068 = vmatprep.mubr.bf16.mxu0 0
      %2069 = vmatmul.mubr.bf16.gmra.mrb[0].mxu0 %v1485
      %v2070 = vpop.f32.mrb[0].mxu0
      %v2071 = vadd.f32 %v1766, %v2070
      %v2072 = vpop.f32.mrb[0].mxu0
      %v2073 = vpop.f32.mrb[0].mxu0
      %v2074 = vadd.f32 %v1769, %v2073
      %v2075 = vpop.f32.mrb[0].mxu0
      %2076 = vmatprep.mubr.bf16.mxu0 0
      %2077 = vmatmul.mubr.bf16.gmra.mrb[0].mxu0 %v1487
      %v2078 = vpop.f32.mrb[0].mxu0
      %v2079 = vadd.f32 %v1774, %v2078
      %v2080 = vpop.f32.mrb[0].mxu0
      %v2081 = vpop.f32.mrb[0].mxu0
      %v2082 = vadd.f32 %v1777, %v2081
      %v2083 = vpop.f32.mrb[0].mxu0
      %2084 = vmatprep.mubr.bf16.mxu0 0
      %2085 = vmatmul.mubr.bf16.gmra.mrb[0].mxu0 %v1489
      %v2086 = vpop.f32.mrb[0].mxu0
      %v2087 = vadd.f32 %v1782, %v2086
      %v2088 = vpop.f32.mrb[0].mxu0
      %v2089 = vpop.f32.mrb[0].mxu0
      %v2090 = vadd.f32 %v1785, %v2089
      %v2091 = vpop.f32.mrb[0].mxu0
      %2092 = vdwg.mxu0
      %s2093 = scalar_lea.vmem %s2, 24
      %v2094 = vld [vmem:[%s2093] sm:$0xf]
      %v2095 = vld [vmem:[%s2093 + $0x4] sm:$0xf]
      %v2096 = vld [vmem:[%s2093 + $0x8] sm:$0xf]
      %v2100 = vunpack.c.l.b16 %v2094
      %v2101 = vunpack.c.l.b16 %v2095
      %v2102 = vunpack.c.l.b16 %v2096
      %v2103 = vpack.c.b16 %v2101, %v2100
      %v2104 = vpack.c.b16 %v2102, %v2102
      %v2106 = vsel %vm1430, %v1411, 0
      %v2108 = vsel %vm1430, %v1413, 0
      %v2111 = vsel %vm1495, %v2104, 0
      %2113 = vmatprep.subr.bf16.mxu0 0
      %2114 = vmatpush1.bf16.msra.mxu0 %v2103
      %2115 = vmatprep.subr.bf16.mxu0 0
      %2116 = vmatpush1.bf16.msra.mxu0 %v2111
      %2117 = vmatprep.subr.bf16.mxu0 0
      %2118 = vmatpush1.bf16.msra.mxu0 0
      %2119 = vmatprep.subr.bf16.mxu0 0
      %2120 = vmatpush1.bf16.msra.mxu0 0
      %2121 = vmatprep.subr.bf16.mxu0 0
      %2122 = vmatpush1.bf16.msra.mxu0 0
      %2123 = vmatprep.subr.bf16.mxu0 0
      %2124 = vmatpush1.bf16.msra.mxu0 0
      %2125 = vmatprep.subr.bf16.mxu0 0
      %2126 = vmatpush1.bf16.msra.mxu0 0
      %2127 = vmatprep.subr.bf16.mxu0 0
      %2128 = vmatpush1.bf16.msra.mxu0 0
      %2129 = vmatprep.subr.bf16.mxu0 0
      %2130 = vmatpush1.bf16.msra.mxu0 0
      %2131 = vmatprep.subr.bf16.mxu0 0
      %2132 = vmatpush1.bf16.msra.mxu0 0
      %2133 = vmatprep.subr.bf16.mxu0 0
      %2134 = vmatpush1.bf16.msra.mxu0 0
      %2135 = vmatprep.subr.bf16.mxu0 0
      %2136 = vmatpush1.bf16.msra.mxu0 0
      %2137 = vmatprep.subr.bf16.mxu0 0
      %2138 = vmatpush1.bf16.msra.mxu0 0
      %2139 = vmatprep.subr.bf16.mxu0 0
      %2140 = vmatpush1.bf16.msra.mxu0 0
      %2141 = vmatprep.subr.bf16.mxu0 0
      %2142 = vmatpush1.bf16.msra.mxu0 0
      %2143 = vmatprep.subr.bf16.mxu0 0
      %2144 = vmatpush1.bf16.msra.mxu0 0
      %2145 = vmatprep.mubr.bf16.mxu0 0
      %2146 = vmatmul.mubr.bf16.gmra.mrb[0].mxu0 %v1435
      %v2147 = vpop.f32.mrb[0].mxu0
      %v2148 = vadd.f32 0.0, %v2147
      %v2149 = vpop.f32.mrb[0].mxu0
      %v2150 = vpop.f32.mrb[0].mxu0
      %v2151 = vadd.f32 0.0, %v2150
      %v2152 = vpop.f32.mrb[0].mxu0
      %2153 = vmatprep.mubr.bf16.mxu0 0
      %2154 = vmatmul.mubr.bf16.gmra.mrb[0].mxu0 %v1437
      %v2155 = vpop.f32.mrb[0].mxu0
      %v2156 = vadd.f32 0.0, %v2155
      %v2157 = vpop.f32.mrb[0].mxu0
      %v2158 = vpop.f32.mrb[0].mxu0
      %v2159 = vadd.f32 0.0, %v2158
      %v2160 = vpop.f32.mrb[0].mxu0
      %2161 = vmatprep.mubr.bf16.mxu0 0
      %2162 = vmatmul.mubr.bf16.gmra.mrb[0].mxu0 %v1439
      %v2163 = vpop.f32.mrb[0].mxu0
      %v2164 = vadd.f32 0.0, %v2163
      %v2165 = vpop.f32.mrb[0].mxu0
      %v2166 = vpop.f32.mrb[0].mxu0
      %v2167 = vadd.f32 0.0, %v2166
      %v2168 = vpop.f32.mrb[0].mxu0
      %2169 = vmatprep.mubr.bf16.mxu0 0
      %2170 = vmatmul.mubr.bf16.gmra.mrb[0].mxu0 %v1441
      %v2171 = vpop.f32.mrb[0].mxu0
      %v2172 = vadd.f32 0.0, %v2171
      %v2173 = vpop.f32.mrb[0].mxu0
      %v2174 = vpop.f32.mrb[0].mxu0
      %v2175 = vadd.f32 0.0, %v2174
      %v2176 = vpop.f32.mrb[0].mxu0
      %2177 = vmatprep.mubr.bf16.mxu0 0
      %2178 = vmatmul.mubr.bf16.gmra.mrb[0].mxu0 %v1443
      %v2179 = vpop.f32.mrb[0].mxu0
      %v2180 = vadd.f32 0.0, %v2179
      %v2181 = vpop.f32.mrb[0].mxu0
      %v2182 = vpop.f32.mrb[0].mxu0
      %v2183 = vadd.f32 0.0, %v2182
      %v2184 = vpop.f32.mrb[0].mxu0
      %2185 = vmatprep.mubr.bf16.mxu0 0
      %2186 = vmatmul.mubr.bf16.gmra.mrb[0].mxu0 %v1445
      %v2187 = vpop.f32.mrb[0].mxu0
      %v2188 = vadd.f32 0.0, %v2187
      %v2189 = vpop.f32.mrb[0].mxu0
      %v2190 = vpop.f32.mrb[0].mxu0
      %v2191 = vadd.f32 0.0, %v2190
      %v2192 = vpop.f32.mrb[0].mxu0
      %2193 = vmatprep.mubr.bf16.mxu0 0
      %2194 = vmatmul.mubr.bf16.gmra.mrb[0].mxu0 %v1447
      %v2195 = vpop.f32.mrb[0].mxu0
      %v2196 = vadd.f32 0.0, %v2195
      %v2197 = vpop.f32.mrb[0].mxu0
      %v2198 = vpop.f32.mrb[0].mxu0
      %v2199 = vadd.f32 0.0, %v2198
      %v2200 = vpop.f32.mrb[0].mxu0
      %2201 = vmatprep.mubr.bf16.mxu0 0
      %2202 = vmatmul.mubr.bf16.gmra.mrb[0].mxu0 %v1449
      %v2203 = vpop.f32.mrb[0].mxu0
      %v2204 = vadd.f32 0.0, %v2203
      %v2205 = vpop.f32.mrb[0].mxu0
      %v2206 = vpop.f32.mrb[0].mxu0
      %v2207 = vadd.f32 0.0, %v2206
      %v2208 = vpop.f32.mrb[0].mxu0
      %2209 = vmatprep.mubr.bf16.mxu0 0
      %2210 = vmatmul.mubr.bf16.gmra.mrb[0].mxu0 %v1451
      %v2211 = vpop.f32.mrb[0].mxu0
      %v2212 = vadd.f32 0.0, %v2211
      %v2213 = vpop.f32.mrb[0].mxu0
      %v2214 = vpop.f32.mrb[0].mxu0
      %v2215 = vadd.f32 0.0, %v2214
      %v2216 = vpop.f32.mrb[0].mxu0
      %2217 = vmatprep.mubr.bf16.mxu0 0
      %2218 = vmatmul.mubr.bf16.gmra.mrb[0].mxu0 %v1453
      %v2219 = vpop.f32.mrb[0].mxu0
      %v2220 = vadd.f32 0.0, %v2219
      %v2221 = vpop.f32.mrb[0].mxu0
      %v2222 = vpop.f32.mrb[0].mxu0
      %v2223 = vadd.f32 0.0, %v2222
      %v2224 = vpop.f32.mrb[0].mxu0
      %2225 = vmatprep.mubr.bf16.mxu0 0
      %2226 = vmatmul.mubr.bf16.gmra.mrb[0].mxu0 %v1455
      %v2227 = vpop.f32.mrb[0].mxu0
      %v2228 = vadd.f32 0.0, %v2227
      %v2229 = vpop.f32.mrb[0].mxu0
      %v2230 = vpop.f32.mrb[0].mxu0
      %v2231 = vadd.f32 0.0, %v2230
      %v2232 = vpop.f32.mrb[0].mxu0
      %2233 = vmatprep.mubr.bf16.mxu0 0
      %2234 = vmatmul.mubr.bf16.gmra.mrb[0].mxu0 %v1457
      %v2235 = vpop.f32.mrb[0].mxu0
      %v2236 = vadd.f32 0.0, %v2235
      %v2237 = vpop.f32.mrb[0].mxu0
      %v2238 = vpop.f32.mrb[0].mxu0
      %v2239 = vadd.f32 0.0, %v2238
      %v2240 = vpop.f32.mrb[0].mxu0
      %2241 = vmatprep.mubr.bf16.mxu0 0
      %2242 = vmatmul.mubr.bf16.gmra.mrb[0].mxu0 %v1459
      %v2243 = vpop.f32.mrb[0].mxu0
      %v2244 = vadd.f32 0.0, %v2243
      %v2245 = vpop.f32.mrb[0].mxu0
      %v2246 = vpop.f32.mrb[0].mxu0
      %v2247 = vadd.f32 0.0, %v2246
      %v2248 = vpop.f32.mrb[0].mxu0
      %2249 = vmatprep.mubr.bf16.mxu0 0
      %2250 = vmatmul.mubr.bf16.gmra.mrb[0].mxu0 %v1461
      %v2251 = vpop.f32.mrb[0].mxu0
      %v2252 = vadd.f32 0.0, %v2251
      %v2253 = vpop.f32.mrb[0].mxu0
      %v2254 = vpop.f32.mrb[0].mxu0
      %v2255 = vadd.f32 0.0, %v2254
      %v2256 = vpop.f32.mrb[0].mxu0
      %2257 = vmatprep.mubr.bf16.mxu0 0
      %2258 = vmatmul.mubr.bf16.gmra.mrb[0].mxu0 %v1463
      %v2259 = vpop.f32.mrb[0].mxu0
      %v2260 = vadd.f32 0.0, %v2259
      %v2261 = vpop.f32.mrb[0].mxu0
      %v2262 = vpop.f32.mrb[0].mxu0
      %v2263 = vadd.f32 0.0, %v2262
      %v2264 = vpop.f32.mrb[0].mxu0
      %2265 = vmatprep.mubr.bf16.mxu0 0
      %2266 = vmatmul.mubr.bf16.gmra.mrb[0].mxu0 %v1465
      %v2267 = vpop.f32.mrb[0].mxu0
      %v2268 = vadd.f32 0.0, %v2267
      %v2269 = vpop.f32.mrb[0].mxu0
      %v2270 = vpop.f32.mrb[0].mxu0
      %v2271 = vadd.f32 0.0, %v2270
      %v2272 = vpop.f32.mrb[0].mxu0
      %2273 = vmatprep.mubr.bf16.mxu0 0
      %2274 = vmatmul.mubr.bf16.gmra.mrb[0].mxu0 %v1467
      %v2275 = vpop.f32.mrb[0].mxu0
      %v2276 = vadd.f32 0.0, %v2275
      %v2277 = vpop.f32.mrb[0].mxu0
      %v2278 = vpop.f32.mrb[0].mxu0
      %v2279 = vadd.f32 0.0, %v2278
      %v2280 = vpop.f32.mrb[0].mxu0
      %2281 = vmatprep.mubr.bf16.mxu0 0
      %2282 = vmatmul.mubr.bf16.gmra.mrb[0].mxu0 %v1469
      %v2283 = vpop.f32.mrb[0].mxu0
      %v2284 = vadd.f32 0.0, %v2283
      %v2285 = vpop.f32.mrb[0].mxu0
      %v2286 = vpop.f32.mrb[0].mxu0
      %v2287 = vadd.f32 0.0, %v2286
      %v2288 = vpop.f32.mrb[0].mxu0
      %2289 = vmatprep.mubr.bf16.mxu0 0
      %2290 = vmatmul.mubr.bf16.gmra.mrb[0].mxu0 %v1471
      %v2291 = vpop.f32.mrb[0].mxu0
      %v2292 = vadd.f32 0.0, %v2291
      %v2293 = vpop.f32.mrb[0].mxu0
      %v2294 = vpop.f32.mrb[0].mxu0
      %v2295 = vadd.f32 0.0, %v2294
      %v2296 = vpop.f32.mrb[0].mxu0
      %2297 = vmatprep.mubr.bf16.mxu0 0
      %2298 = vmatmul.mubr.bf16.gmra.mrb[0].mxu0 %v1473
      %v2299 = vpop.f32.mrb[0].mxu0
      %v2300 = vadd.f32 0.0, %v2299
      %v2301 = vpop.f32.mrb[0].mxu0
      %v2302 = vpop.f32.mrb[0].mxu0
      %v2303 = vadd.f32 0.0, %v2302
      %v2304 = vpop.f32.mrb[0].mxu0
      %2305 = vmatprep.mubr.bf16.mxu0 0
      %2306 = vmatmul.mubr.bf16.gmra.mrb[0].mxu0 %v1475
      %v2307 = vpop.f32.mrb[0].mxu0
      %v2308 = vadd.f32 0.0, %v2307
      %v2309 = vpop.f32.mrb[0].mxu0
      %v2310 = vpop.f32.mrb[0].mxu0
      %v2311 = vadd.f32 0.0, %v2310
      %v2312 = vpop.f32.mrb[0].mxu0
      %2313 = vmatprep.mubr.bf16.mxu0 0
      %2314 = vmatmul.mubr.bf16.gmra.mrb[0].mxu0 %v1477
      %v2315 = vpop.f32.mrb[0].mxu0
      %v2316 = vadd.f32 0.0, %v2315
      %v2317 = vpop.f32.mrb[0].mxu0
      %v2318 = vpop.f32.mrb[0].mxu0
      %v2319 = vadd.f32 0.0, %v2318
      %v2320 = vpop.f32.mrb[0].mxu0
      %2321 = vmatprep.mubr.bf16.mxu0 0
      %2322 = vmatmul.mubr.bf16.gmra.mrb[0].mxu0 %v1479
      %v2323 = vpop.f32.mrb[0].mxu0
      %v2324 = vadd.f32 0.0, %v2323
      %v2325 = vpop.f32.mrb[0].mxu0
      %v2326 = vpop.f32.mrb[0].mxu0
      %v2327 = vadd.f32 0.0, %v2326
      %v2328 = vpop.f32.mrb[0].mxu0
      %2329 = vmatprep.mubr.bf16.mxu0 0
      %2330 = vmatmul.mubr.bf16.gmra.mrb[0].mxu0 %v1481
      %v2331 = vpop.f32.mrb[0].mxu0
      %v2332 = vadd.f32 0.0, %v2331
      %v2333 = vpop.f32.mrb[0].mxu0
      %v2334 = vpop.f32.mrb[0].mxu0
      %v2335 = vadd.f32 0.0, %v2334
      %v2336 = vpop.f32.mrb[0].mxu0
      %2337 = vmatprep.mubr.bf16.mxu0 0
      %2338 = vmatmul.mubr.bf16.gmra.mrb[0].mxu0 %v1483
      %v2339 = vpop.f32.mrb[0].mxu0
      %v2340 = vadd.f32 0.0, %v2339
      %v2341 = vpop.f32.mrb[0].mxu0
      %v2342 = vpop.f32.mrb[0].mxu0
      %v2343 = vadd.f32 0.0, %v2342
      %v2344 = vpop.f32.mrb[0].mxu0
      %2345 = vmatprep.mubr.bf16.mxu0 0
      %2346 = vmatmul.mubr.bf16.gmra.mrb[0].mxu0 %v1485
      %v2347 = vpop.f32.mrb[0].mxu0
      %v2348 = vadd.f32 0.0, %v2347
      %v2349 = vpop.f32.mrb[0].mxu0
      %v2350 = vpop.f32.mrb[0].mxu0
      %v2351 = vadd.f32 0.0, %v2350
      %v2352 = vpop.f32.mrb[0].mxu0
      %2353 = vmatprep.mubr.bf16.mxu0 0
      %2354 = vmatmul.mubr.bf16.gmra.mrb[0].mxu0 %v1487
      %v2355 = vpop.f32.mrb[0].mxu0
      %v2356 = vadd.f32 0.0, %v2355
      %v2357 = vpop.f32.mrb[0].mxu0
      %v2358 = vpop.f32.mrb[0].mxu0
      %v2359 = vadd.f32 0.0, %v2358
      %v2360 = vpop.f32.mrb[0].mxu0
      %2361 = vmatprep.mubr.bf16.mxu0 0
      %2362 = vmatmul.mubr.bf16.gmra.mrb[0].mxu0 %v1489
      %v2363 = vpop.f32.mrb[0].mxu0
      %v2364 = vadd.f32 0.0, %v2363
      %v2365 = vpop.f32.mrb[0].mxu0
      %v2366 = vpop.f32.mrb[0].mxu0
      %v2367 = vadd.f32 0.0, %v2366
      %v2368 = vpop.f32.mrb[0].mxu0
      %2369 = vmatprep.mubr.bf16.mxu0 0
      %2370 = vmatmul.mubr.bf16.gmra.mrb[0].mxu0 %v1491
      %v2371 = vpop.f32.mrb[0].mxu0
      %v2372 = vadd.f32 0.0, %v2371
      %v2373 = vpop.f32.mrb[0].mxu0
      %v2374 = vpop.f32.mrb[0].mxu0
      %v2375 = vadd.f32 0.0, %v2374
      %v2376 = vpop.f32.mrb[0].mxu0
      %2377 = vmatprep.mubr.bf16.mxu0 0
      %2378 = vmatmul.mubr.bf16.gmra.mrb[0].mxu0 %v1493
      %v2379 = vpop.f32.mrb[0].mxu0
      %v2380 = vadd.f32 0.0, %v2379
      %v2381 = vpop.f32.mrb[0].mxu0
      %v2382 = vpop.f32.mrb[0].mxu0
      %v2383 = vadd.f32 0.0, %v2382
      %v2384 = vpop.f32.mrb[0].mxu0
      %2385 = vmatprep.mubr.bf16.mxu0 0
      %2386 = vmatmul.mubr.bf16.gmra.mrb[0].mxu0 %v2106
      %v2387 = vpop.f32.mrb[0].mxu0
      %v2388 = vadd.f32 0.0, %v2387
      %v2389 = vpop.f32.mrb[0].mxu0
      %v2390 = vpop.f32.mrb[0].mxu0
      %v2391 = vadd.f32 0.0, %v2390
      %v2392 = vpop.f32.mrb[0].mxu0
      %2393 = vmatprep.mubr.bf16.mxu0 0
      %2394 = vmatmul.mubr.bf16.gmra.mrb[0].mxu0 %v2108
      %v2395 = vpop.f32.mrb[0].mxu0
      %v2396 = vadd.f32 0.0, %v2395
      %v2397 = vpop.f32.mrb[0].mxu0
      %v2398 = vpop.f32.mrb[0].mxu0
      %v2399 = vadd.f32 0.0, %v2398
      %v2400 = vpop.f32.mrb[0].mxu0
      %2401 = vdwg.mxu0
      %v2402 = vadd.f32 %v1839, %v2148
      %v2403 = vadd.f32 %v1842, %v2151
      %v2404 = vadd.f32 %v1847, %v2156
      %v2405 = vadd.f32 %v1850, %v2159
      %v2406 = vadd.f32 %v1855, %v2164
      %v2407 = vadd.f32 %v1858, %v2167
      %v2408 = vadd.f32 %v1863, %v2172
      %v2409 = vadd.f32 %v1866, %v2175
      %v2410 = vadd.f32 %v1871, %v2180
      %v2411 = vadd.f32 %v1874, %v2183
      %v2412 = vadd.f32 %v1879, %v2188
      %v2413 = vadd.f32 %v1882, %v2191
      %v2414 = vadd.f32 %v1887, %v2196
      %v2415 = vadd.f32 %v1890, %v2199
      %v2416 = vadd.f32 %v1895, %v2204
      %v2417 = vadd.f32 %v1898, %v2207
      %v2418 = vadd.f32 %v1903, %v2212
      %v2419 = vadd.f32 %v1906, %v2215
      %v2420 = vadd.f32 %v1911, %v2220
      %v2421 = vadd.f32 %v1914, %v2223
      %v2422 = vadd.f32 %v1919, %v2228
      %v2423 = vadd.f32 %v1922, %v2231
      %v2424 = vadd.f32 %v1927, %v2236
      %v2425 = vadd.f32 %v1930, %v2239
      %v2426 = vadd.f32 %v1935, %v2244
      %v2427 = vadd.f32 %v1938, %v2247
      %v2428 = vadd.f32 %v1943, %v2252
      %v2429 = vadd.f32 %v1946, %v2255
      %v2430 = vadd.f32 %v1951, %v2260
      %v2431 = vadd.f32 %v1954, %v2263
      %v2432 = vadd.f32 %v1959, %v2268
      %v2433 = vadd.f32 %v1962, %v2271
      %v2434 = vadd.f32 %v1967, %v2276
      %v2435 = vadd.f32 %v1970, %v2279
      %v2436 = vadd.f32 %v1975, %v2284
      %v2437 = vadd.f32 %v1978, %v2287
      %v2438 = vadd.f32 %v1983, %v2292
      %v2439 = vadd.f32 %v1986, %v2295
      %v2440 = vadd.f32 %v1991, %v2300
      %v2441 = vadd.f32 %v1994, %v2303
      %v2442 = vadd.f32 %v1999, %v2308
      %v2443 = vadd.f32 %v2002, %v2311
      %v2444 = vadd.f32 %v2007, %v2316
      %v2445 = vadd.f32 %v2010, %v2319
      %v2446 = vadd.f32 %v2015, %v2324
      %v2447 = vadd.f32 %v2018, %v2327
      %v2448 = vadd.f32 %v2023, %v2332
      %v2449 = vadd.f32 %v2026, %v2335
      %v2450 = vadd.f32 %v2031, %v2340
      %v2451 = vadd.f32 %v2034, %v2343
      %v2452 = vadd.f32 %v2039, %v2348
      %v2453 = vadd.f32 %v2042, %v2351
      %v2454 = vadd.f32 %v2047, %v2356
      %v2455 = vadd.f32 %v2050, %v2359
      %v2456 = vadd.f32 %v2055, %v2364
      %v2457 = vadd.f32 %v2058, %v2367
      %v2458 = vadd.f32 %v2063, %v2372
      %v2459 = vadd.f32 %v2066, %v2375
      %v2460 = vadd.f32 %v2071, %v2380
      %v2461 = vadd.f32 %v2074, %v2383
      %v2462 = vadd.f32 %v2079, %v2388
      %v2463 = vadd.f32 %v2082, %v2391
      %v2464 = vadd.f32 %v2087, %v2396
      %v2465 = vadd.f32 %v2090, %v2399
      %v2466 = vld [vmem:[%s3] sm:$0x1]
      %v2468 = vlaneseq
      %v2469 = vshrl.u32 %v2468, 7
      %v2470 = vsub.s32 0, %v2469
      %v2471 = vrot.slane %v2466, %v2470
      %v2473 = vmul.f32 %v2402, %v2471
      %v2474 = vmul.f32 %v2403, %v2471
      %v2475 = vmul.f32 %v2404, %v2471
      %v2476 = vmul.f32 %v2405, %v2471
      %v2477 = vmul.f32 %v2406, %v2471
      %v2478 = vmul.f32 %v2407, %v2471
      %v2479 = vmul.f32 %v2408, %v2471
      %v2480 = vmul.f32 %v2409, %v2471
      %v2481 = vmul.f32 %v2410, %v2471
      %v2482 = vmul.f32 %v2411, %v2471
      %v2483 = vmul.f32 %v2412, %v2471
      %v2484 = vmul.f32 %v2413, %v2471
      %v2485 = vmul.f32 %v2414, %v2471
      %v2486 = vmul.f32 %v2415, %v2471
      %v2487 = vmul.f32 %v2416, %v2471
      %v2488 = vmul.f32 %v2417, %v2471
      %v2489 = vmul.f32 %v2418, %v2471
      %v2490 = vmul.f32 %v2419, %v2471
      %v2491 = vmul.f32 %v2420, %v2471
      %v2492 = vmul.f32 %v2421, %v2471
      %v2493 = vmul.f32 %v2422, %v2471
      %v2494 = vmul.f32 %v2423, %v2471
      %v2495 = vmul.f32 %v2424, %v2471
      %v2496 = vmul.f32 %v2425, %v2471
      %v2497 = vmul.f32 %v2426, %v2471
      %v2498 = vmul.f32 %v2427, %v2471
      %v2499 = vmul.f32 %v2428, %v2471
      %v2500 = vmul.f32 %v2429, %v2471
      %v2501 = vmul.f32 %v2430, %v2471
      %v2502 = vmul.f32 %v2431, %v2471
      %v2503 = vmul.f32 %v2432, %v2471
      %v2504 = vmul.f32 %v2433, %v2471
      %v2505 = vmul.f32 %v2434, %v2471
      %v2506 = vmul.f32 %v2435, %v2471
      %v2507 = vmul.f32 %v2436, %v2471
      %v2508 = vmul.f32 %v2437, %v2471
      %v2509 = vmul.f32 %v2438, %v2471
      %v2510 = vmul.f32 %v2439, %v2471
      %v2511 = vmul.f32 %v2440, %v2471
      %v2512 = vmul.f32 %v2441, %v2471
      %v2513 = vmul.f32 %v2442, %v2471
      %v2514 = vmul.f32 %v2443, %v2471
      %v2515 = vmul.f32 %v2444, %v2471
      %v2516 = vmul.f32 %v2445, %v2471
      %v2517 = vmul.f32 %v2446, %v2471
      %v2518 = vmul.f32 %v2447, %v2471
      %v2519 = vmul.f32 %v2448, %v2471
      %v2520 = vmul.f32 %v2449, %v2471
      %v2521 = vmul.f32 %v2450, %v2471
      %v2522 = vmul.f32 %v2451, %v2471
      %v2523 = vmul.f32 %v2452, %v2471
      %v2524 = vmul.f32 %v2453, %v2471
      %v2525 = vmul.f32 %v2454, %v2471
      %v2526 = vmul.f32 %v2455, %v2471
      %v2527 = vmul.f32 %v2456, %v2471
      %v2528 = vmul.f32 %v2457, %v2471
      %v2529 = vmul.f32 %v2458, %v2471
      %v2530 = vmul.f32 %v2459, %v2471
      %v2531 = vmul.f32 %v2460, %v2471
      %v2532 = vmul.f32 %v2461, %v2471
      %v2533 = vmul.f32 %v2462, %v2471
      %v2534 = vmul.f32 %v2463, %v2471
      %v2535 = vmul.f32 %v2464, %v2471
      %v2536 = vmul.f32 %v2465, %v2471
      %v2537 = vld [vmem:[%s4] sm:$0x1]
      %v2539 = vlaneseq
      %v2540 = vshrl.u32 %v2539, 7
      %v2541 = vsub.s32 0, %v2540
      %v2542 = vrot.slane %v2537, %v2541
      %v2544 = vadd.f32 %v2473, %v2542
      %v2545 = vadd.f32 %v2474, %v2542
      %v2546 = vadd.f32 %v2475, %v2542
      %v2547 = vadd.f32 %v2476, %v2542
      %v2548 = vadd.f32 %v2477, %v2542
      %v2549 = vadd.f32 %v2478, %v2542
      %v2550 = vadd.f32 %v2479, %v2542
      %v2551 = vadd.f32 %v2480, %v2542
      %v2552 = vadd.f32 %v2481, %v2542
      %v2553 = vadd.f32 %v2482, %v2542
      %v2554 = vadd.f32 %v2483, %v2542
      %v2555 = vadd.f32 %v2484, %v2542
      %v2556 = vadd.f32 %v2485, %v2542
      %v2557 = vadd.f32 %v2486, %v2542
      %v2558 = vadd.f32 %v2487, %v2542
      %v2559 = vadd.f32 %v2488, %v2542
      %v2560 = vadd.f32 %v2489, %v2542
      %v2561 = vadd.f32 %v2490, %v2542
      %v2562 = vadd.f32 %v2491, %v2542
      %v2563 = vadd.f32 %v2492, %v2542
      %v2564 = vadd.f32 %v2493, %v2542
      %v2565 = vadd.f32 %v2494, %v2542
      %v2566 = vadd.f32 %v2495, %v2542
      %v2567 = vadd.f32 %v2496, %v2542
      %v2568 = vadd.f32 %v2497, %v2542
      %v2569 = vadd.f32 %v2498, %v2542
      %v2570 = vadd.f32 %v2499, %v2542
      %v2571 = vadd.f32 %v2500, %v2542
      %v2572 = vadd.f32 %v2501, %v2542
      %v2573 = vadd.f32 %v2502, %v2542
      %v2574 = vadd.f32 %v2503, %v2542
      %v2575 = vadd.f32 %v2504, %v2542
      %v2576 = vadd.f32 %v2505, %v2542
      %v2577 = vadd.f32 %v2506, %v2542
      %v2578 = vadd.f32 %v2507, %v2542
      %v2579 = vadd.f32 %v2508, %v2542
      %v2580 = vadd.f32 %v2509, %v2542
      %v2581 = vadd.f32 %v2510, %v2542
      %v2582 = vadd.f32 %v2511, %v2542
      %v2583 = vadd.f32 %v2512, %v2542
      %v2584 = vadd.f32 %v2513, %v2542
      %v2585 = vadd.f32 %v2514, %v2542
      %v2586 = vadd.f32 %v2515, %v2542
      %v2587 = vadd.f32 %v2516, %v2542
      %v2588 = vadd.f32 %v2517, %v2542
      %v2589 = vadd.f32 %v2518, %v2542
      %v2590 = vadd.f32 %v2519, %v2542
      %v2591 = vadd.f32 %v2520, %v2542
      %v2592 = vadd.f32 %v2521, %v2542
      %v2593 = vadd.f32 %v2522, %v2542
      %v2594 = vadd.f32 %v2523, %v2542
      %v2595 = vadd.f32 %v2524, %v2542
      %v2596 = vadd.f32 %v2525, %v2542
      %v2597 = vadd.f32 %v2526, %v2542
      %v2598 = vadd.f32 %v2527, %v2542
      %v2599 = vadd.f32 %v2528, %v2542
      %v2600 = vadd.f32 %v2529, %v2542
      %v2601 = vadd.f32 %v2530, %v2542
      %v2602 = vadd.f32 %v2531, %v2542
      %v2603 = vadd.f32 %v2532, %v2542
      %v2604 = vadd.f32 %v2533, %v2542
      %v2605 = vadd.f32 %v2534, %v2542
      %v2606 = vadd.f32 %v2535, %v2542
      %v2607 = vadd.f32 %v2536, %v2542
      %v2608 = vmax.f32 %v2544, 0.0
      %v2609 = vmax.f32 %v2545, 0.0
      %v2610 = vmax.f32 %v2546, 0.0
      %v2611 = vmax.f32 %v2547, 0.0
      %v2612 = vmax.f32 %v2548, 0.0
      %v2613 = vmax.f32 %v2549, 0.0
      %v2614 = vmax.f32 %v2550, 0.0
      %v2615 = vmax.f32 %v2551, 0.0
      %v2616 = vmax.f32 %v2552, 0.0
      %v2617 = vmax.f32 %v2553, 0.0
      %v2618 = vmax.f32 %v2554, 0.0
      %v2619 = vmax.f32 %v2555, 0.0
      %v2620 = vmax.f32 %v2556, 0.0
      %v2621 = vmax.f32 %v2557, 0.0
      %v2622 = vmax.f32 %v2558, 0.0
      %v2623 = vmax.f32 %v2559, 0.0
      %v2624 = vmax.f32 %v2560, 0.0
      %v2625 = vmax.f32 %v2561, 0.0
      %v2626 = vmax.f32 %v2562, 0.0
      %v2627 = vmax.f32 %v2563, 0.0
      %v2628 = vmax.f32 %v2564, 0.0
      %v2629 = vmax.f32 %v2565, 0.0
      %v2630 = vmax.f32 %v2566, 0.0
      %v2631 = vmax.f32 %v2567, 0.0
      %v2632 = vmax.f32 %v2568, 0.0
      %v2633 = vmax.f32 %v2569, 0.0
      %v2634 = vmax.f32 %v2570, 0.0
      %v2635 = vmax.f32 %v2571, 0.0
      %v2636 = vmax.f32 %v2572, 0.0
      %v2637 = vmax.f32 %v2573, 0.0
      %v2638 = vmax.f32 %v2574, 0.0
      %v2639 = vmax.f32 %v2575, 0.0
      %v2640 = vmax.f32 %v2576, 0.0
      %v2641 = vmax.f32 %v2577, 0.0
      %v2642 = vmax.f32 %v2578, 0.0
      %v2643 = vmax.f32 %v2579, 0.0
      %v2644 = vmax.f32 %v2580, 0.0
      %v2645 = vmax.f32 %v2581, 0.0
      %v2646 = vmax.f32 %v2582, 0.0
      %v2647 = vmax.f32 %v2583, 0.0
      %v2648 = vmax.f32 %v2584, 0.0
      %v2649 = vmax.f32 %v2585, 0.0
      %v2650 = vmax.f32 %v2586, 0.0
      %v2651 = vmax.f32 %v2587, 0.0
      %v2652 = vmax.f32 %v2588, 0.0
      %v2653 = vmax.f32 %v2589, 0.0
      %v2654 = vmax.f32 %v2590, 0.0
      %v2655 = vmax.f32 %v2591, 0.0
      %v2656 = vmax.f32 %v2592, 0.0
      %v2657 = vmax.f32 %v2593, 0.0
      %v2658 = vmax.f32 %v2594, 0.0
      %v2659 = vmax.f32 %v2595, 0.0
      %v2660 = vmax.f32 %v2596, 0.0
      %v2661 = vmax.f32 %v2597, 0.0
      %v2662 = vmax.f32 %v2598, 0.0
      %v2663 = vmax.f32 %v2599, 0.0
      %v2664 = vmax.f32 %v2600, 0.0
      %v2665 = vmax.f32 %v2601, 0.0
      %v2666 = vmax.f32 %v2602, 0.0
      %v2667 = vmax.f32 %v2603, 0.0
      %v2668 = vmax.f32 %v2604, 0.0
      %v2669 = vmax.f32 %v2605, 0.0
      %v2670 = vmax.f32 %v2606, 0.0
      %v2671 = vmax.f32 %v2607, 0.0
      %2672 = vst.msk [vmem:[%s345] sm:$0xff] %vm1268, %v2608
      %2673 = vst.msk [vmem:[%s345 + $0x8] sm:$0xff] %vm1268, %v2609
      %2674 = vst.msk [vmem:[%s345 + $0x10] sm:$0xff] %vm1268, %v2610
      %2675 = vst.msk [vmem:[%s345 + $0x18] sm:$0xff] %vm1268, %v2611
      %2676 = vst.msk [vmem:[%s345 + $0x20] sm:$0xff] %vm1268, %v2612
      %2677 = vst.msk [vmem:[%s345 + $0x28] sm:$0xff] %vm1268, %v2613
      %2678 = vst.msk [vmem:[%s345 + $0x30] sm:$0xff] %vm1268, %v2614
      %2679 = vst.msk [vmem:[%s345 + $0x38] sm:$0xff] %vm1268, %v2615
      %2680 = vst.msk [vmem:[%s345 + $0x40] sm:$0xff] %vm1268, %v2616
      %2681 = vst.msk [vmem:[%s345 + $0x48] sm:$0xff] %vm1268, %v2617
      %2682 = vst.msk [vmem:[%s345 + $0x50] sm:$0xff] %vm1268, %v2618
      %2683 = vst.msk [vmem:[%s345 + $0x58] sm:$0xff] %vm1268, %v2619
      %2684 = vst.msk [vmem:[%s345 + $0x60] sm:$0xff] %vm1268, %v2620
      %2685 = vst.msk [vmem:[%s345 + $0x68] sm:$0xff] %vm1268, %v2621
      %2686 = vst.msk [vmem:[%s345 + $0x70] sm:$0xff] %vm1268, %v2622
      %2687 = vst.msk [vmem:[%s345 + $0x78] sm:$0xff] %vm1268, %v2623
      %2688 = vst.msk [vmem:[%s345 + $0x80] sm:$0xff] %vm1268, %v2624
      %2689 = vst.msk [vmem:[%s345 + $0x88] sm:$0xff] %vm1268, %v2625
      %2690 = vst.msk [vmem:[%s345 + $0x90] sm:$0xff] %vm1268, %v2626
      %2691 = vst.msk [vmem:[%s345 + $0x98] sm:$0xff] %vm1268, %v2627
      %2692 = vst.msk [vmem:[%s345 + $0xa0] sm:$0xff] %vm1268, %v2628
      %2693 = vst.msk [vmem:[%s345 + $0xa8] sm:$0xff] %vm1268, %v2629
      %2694 = vst.msk [vmem:[%s345 + $0xb0] sm:$0xff] %vm1268, %v2630
      %2695 = vst.msk [vmem:[%s345 + $0xb8] sm:$0xff] %vm1268, %v2631
      %2696 = vst.msk [vmem:[%s345 + $0xc0] sm:$0xff] %vm1268, %v2632
      %2697 = vst.msk [vmem:[%s345 + $0xc8] sm:$0xff] %vm1268, %v2633
      %2698 = vst.msk [vmem:[%s345 + $0xd0] sm:$0xff] %vm1268, %v2634
      %2699 = vst.msk [vmem:[%s345 + $0xd8] sm:$0xff] %vm1268, %v2635
      %2700 = vst.msk [vmem:[%s345 + $0xe0] sm:$0xff] %vm1268, %v2636
      %2701 = vst.msk [vmem:[%s345 + $0xe8] sm:$0xff] %vm1268, %v2637
      %2702 = vst.msk [vmem:[%s345 + $0xf0] sm:$0xff] %vm1268, %v2638
      %2703 = vst.msk [vmem:[%s345 + $0xf8] sm:$0xff] %vm1268, %v2639
      %2704 = vst.msk [vmem:[%s345 + $0x100] sm:$0xff] %vm1268, %v2640
      %2705 = vst.msk [vmem:[%s345 + $0x108] sm:$0xff] %vm1268, %v2641
      %2706 = vst.msk [vmem:[%s345 + $0x110] sm:$0xff] %vm1268, %v2642
      %2707 = vst.msk [vmem:[%s345 + $0x118] sm:$0xff] %vm1268, %v2643
      %2708 = vst.msk [vmem:[%s345 + $0x120] sm:$0xff] %vm1268, %v2644
      %2709 = vst.msk [vmem:[%s345 + $0x128] sm:$0xff] %vm1268, %v2645
      %2710 = vst.msk [vmem:[%s345 + $0x130] sm:$0xff] %vm1268, %v2646
      %2711 = vst.msk [vmem:[%s345 + $0x138] sm:$0xff] %vm1268, %v2647
      %2712 = vst.msk [vmem:[%s345 + $0x140] sm:$0xff] %vm1268, %v2648
      %2713 = vst.msk [vmem:[%s345 + $0x148] sm:$0xff] %vm1268, %v2649
      %2714 = vst.msk [vmem:[%s345 + $0x150] sm:$0xff] %vm1268, %v2650
      %2715 = vst.msk [vmem:[%s345 + $0x158] sm:$0xff] %vm1268, %v2651
      %2716 = vst.msk [vmem:[%s345 + $0x160] sm:$0xff] %vm1268, %v2652
      %2717 = vst.msk [vmem:[%s345 + $0x168] sm:$0xff] %vm1268, %v2653
      %2718 = vst.msk [vmem:[%s345 + $0x170] sm:$0xff] %vm1268, %v2654
      %2719 = vst.msk [vmem:[%s345 + $0x178] sm:$0xff] %vm1268, %v2655
      %2720 = vst.msk [vmem:[%s345 + $0x180] sm:$0xff] %vm1268, %v2656
      %2721 = vst.msk [vmem:[%s345 + $0x188] sm:$0xff] %vm1268, %v2657
      %2722 = vst.msk [vmem:[%s345 + $0x190] sm:$0xff] %vm1268, %v2658
      %2723 = vst.msk [vmem:[%s345 + $0x198] sm:$0xff] %vm1268, %v2659
      %2724 = vst.msk [vmem:[%s345 + $0x1a0] sm:$0xff] %vm1268, %v2660
      %2725 = vst.msk [vmem:[%s345 + $0x1a8] sm:$0xff] %vm1268, %v2661
      %2726 = vst.msk [vmem:[%s345 + $0x1b0] sm:$0xff] %vm1268, %v2662
      %2727 = vst.msk [vmem:[%s345 + $0x1b8] sm:$0xff] %vm1268, %v2663
      %2728 = vst.msk [vmem:[%s345 + $0x1c0] sm:$0xff] %vm1268, %v2664
      %2729 = vst.msk [vmem:[%s345 + $0x1c8] sm:$0xff] %vm1268, %v2665
      %2730 = vst.msk [vmem:[%s345 + $0x1d0] sm:$0xff] %vm1268, %v2666
      %2731 = vst.msk [vmem:[%s345 + $0x1d8] sm:$0xff] %vm1268, %v2667
      %2732 = vst.msk [vmem:[%s345 + $0x1e0] sm:$0xff] %vm1268, %v2668
      %2733 = vst.msk [vmem:[%s345 + $0x1e8] sm:$0xff] %vm1268, %v2669
      %2734 = vst.msk [vmem:[%s345 + $0x1f0] sm:$0xff] %vm1268, %v2670
      %2735 = vst.msk [vmem:[%s345 + $0x1f8] sm:$0xff] %vm1268, %v2671
      %s2736 = smul.u32 16, %s21
      %p2737 = scmp.lt.s32.totalorder %s20, 1
      %s2738 = scalar_select %p2737, %s20, 1
      %p2739 = scmp.lt.s32.totalorder %s2736, 31
      %s2740 = scalar_select %p2739, %s2736, 31
      %s2741 = smul.addr %s2740, 4
      %s2742 = smul.addr %s2738, 128
      %s2743 = sadd.s32 %s2741, %s2742
      %s2744 = smul.addr %s2743, 8
      %s2745 = scalar_lea.vmem %s5, %s2744
      // Predicated region
      $region41: #{double_upconv2d_forward.5} parent=39 // pred_check
        %p2746 = pneg %p171
      $region42: #{double_upconv2d_forward.5} parent=39 // pred_check_branch
        %2748 = sbr.rel (%p2746) target = $region44
      $region43: #{double_upconv2d_forward.5} parent=39 // pred_region
        %s2749 = smul.u32 16, %s21
      $region44: #{double_upconv2d_forward.5} parent=39 // pred_fallthru
        _
    $region40: #{double_upconv2d_forward.5} parent=5 // pred_fallthru
      _
    %p2750 = scmp.le.s32.totalorder 2, %s11
    // Predicated region
    $region45: #{double_upconv2d_forward.5} parent=5 // pred_check
      %p2751 = pneg %p2750
    $region46: #{double_upconv2d_forward.5} parent=5 // pred_check_branch
      %2753 = sbr.rel (%p2751) target = $region48
    $region47: #{double_upconv2d_forward.5} parent=5 // pred_region
      %s2754 = ssub.s32 %s11, 2
      // Predicated region
      $region49: #{double_upconv2d_forward.5} parent=47 // pred_check
        %p2755 = pneg %p177
      $region50: #{double_upconv2d_forward.5} parent=47 // pred_check_branch
        %2757 = sbr.rel (%p2755) target = $region52
      $region51: #{double_upconv2d_forward.5} parent=47 // pred_region
        %s2758 = smul.u32 16, %s23
        %p2759 = scmp.lt.s32.totalorder %s22, 1
        %s2760 = scalar_select %p2759, %s22, 1
        %p2761 = scmp.lt.s32.totalorder %s2758, 31
        %s2762 = scalar_select %p2761, %s2758, 31
        %s2763 = smul.addr %s2762, 4
        %s2764 = smul.addr %s2760, 128
        %s2765 = sadd.s32 %s2763, %s2764
        %s2766 = smul.addr %s2765, 8
        %s2767 = scalar_lea.vmem %s5, %s2766
      $region52: #{double_upconv2d_forward.5} parent=47 // pred_fallthru
        _
    $region48: #{double_upconv2d_forward.5} parent=5 // pred_fallthru
      _
  $region6: #{double_upconv2d_forward.5} parent=0 // loop_footer
    %s15 = sadd.s32 1, %s11
  $region7: #{double_upconv2d_forward.5} parent=0 // loop_footer_branch
    %10 = sbr.rel target = $region3
  $region8: #{double_upconv2d_forward.5} parent=0 // loop_exit
    _

// kernel: double_upconv2d_forward.4
$region0: #{double_upconv2d_forward.4}
  #allocation0 [shape = 'u32[]', space=smem, size = 0x4, offset = 0x4, fixed_abs, tag = 'smem constant byte address 0x4 - core index']
  #allocation1 [shape = 'u32[144,128]{1,0:T(1,128)}', space=vmem, size = 0x12000, scoped, tag = 'internal scratch']
  %s0 = inlined_call_operand.vmem [shape: bf16[2,34,34,8], index: 0, kind: input, shape index: {}, may-alias: {0,2}]
  %s1 = inlined_call_operand.vmem [shape: bf16[2,34,34,8], index: 1, kind: input, shape index: {}, may-alias: {1,3}]
  %s2 = inlined_call_operand.vmem [shape: bf16[2,34,34,8], index: 2, kind: input, shape index: {}, may-alias: {0,2}]
  %s3 = inlined_call_operand.vmem [shape: bf16[2,34,34,8], index: 3, kind: input, shape index: {}, may-alias: {1,3}]
  %s4 = inlined_call_operand.vmem [shape: bf16[3,24,8], index: 4, kind: input, shape index: {}]
  %s5 = inlined_call_operand.vmem [shape: bf16[3,24,8], index: 5, kind: input, shape index: {}]
  %s6 = inlined_call_operand.vmem [shape: f32[1,8], index: 6, kind: input, shape index: {}]
  %s7 = inlined_call_operand.vmem [shape: f32[1,8], index: 7, kind: input, shape index: {}]
  %s8 = inlined_call_operand.vmem [shape: bf16[2,32,32,8], index: 8, kind: output, shape index: {}]
  %s9 = sld [smem:[#allocation0]]
  $region65: #{double_upconv2d_forward.4} parent=0
    _
  %s11 = ssub.s32 1, %s9
  %s12 = scalar_select 0, %s11, %s9
  loop: start=0, step=1, limit=6
  $region2: #{double_upconv2d_forward.4} parent=0 // loop_pre_header
    _
  $region3: #{double_upconv2d_forward.4} parent=0 // loop_header
    %s14 = sphi 0, %s18
    %p15 = scmp.ge.s32.totalorder %s14, 6
    %s21 = sphi 0, %s33
    %s22 = sphi 0, %s29
    %s23 = sphi 0, %s21
    %s24 = sphi 0, %s22
    %s25 = sphi 0, %s23
    %s26 = sphi 0, %s24
    %s38 = sphi 0, %s40
    %s41 = sphi 0, %s38
    %s42 = sphi 0, %s41
    %s58 = sphi 0, %s42
    %s66 = sphi 0, %s68
    %s69 = sphi 0, %s66
    %s70 = sphi 0, %s69
    %s86 = sphi 0, %s70
    %s98 = sphi 0, %s100
    %s101 = sphi 0, %s98
    %s102 = sphi 0, %s101
    %s118 = sphi 0, %s102
    %s130 = sphi 0, %s132
    %s133 = sphi 0, %s130
    %s134 = sphi 0, %s133
    %s150 = sphi 0, %s134
    %s154 = sphi 0, %s154
    %s156 = sphi 0, %s154
    %s157 = sphi 0, %s156
    %s171 = sphi 0, %s157
    %s175 = sphi 0, %s175
    %s177 = sphi 0, %s175
    %s178 = sphi 0, %s177
    %s192 = sphi 0, %s178
    %s196 = sphi 0, %s196
    %s198 = sphi 0, %s196
    %s199 = sphi 0, %s198
    %s213 = sphi 0, %s199
    %s217 = sphi 0, %s217
    %s219 = sphi 0, %s217
    %s220 = sphi 0, %s219
    %s234 = sphi 0, %s220
    %s242 = sphi 0, %s244
    %s245 = sphi 0, %s242
    %s246 = sphi 0, %s245
    %s262 = sphi 0, %s246
  $region4: #{double_upconv2d_forward.4} parent=0 // loop_header_branch
    %17 = sbr.rel (%p15) target = $region8
  $region5: #{double_upconv2d_forward.4} parent=0 // loop_body
    %s19 = ssub.s32 %s14, 1
    %s20 = ssub.s32 %s14, 2
    %s27 = sadd.s32 1, %s22
    %p28 = scmp.ge.s32.totalorder %s27, 2
    %s29 = scalar_select %p28, 0, %s27
    %s30 = sadd.s32 1, %s21
    %s31 = scalar_select %p28, %s30, %s21
    %p32 = scmp.ge.s32.totalorder %s31, 2
    %s33 = scalar_select %p32, 0, %s31
    %s34 = ssub.s32 %s21, %s33
    %s35 = ssub.s32 %s22, %s29
    %s36 = sor.u32 %s34, %s35
    %p37 = scmp.eq.s32.totalorder %s36, 0
    %s39 = sadd.s32 %s38, 1
    %s40 = scalar_select %p37, %s38, %s39
    %p43 = pneg %p37
    %p44 = scmp.eq.s32.totalorder %s14, 3
    %p45 = por %p43, %p44
    %p46 = scmp.ne.s32.totalorder %s38, %s41
    %p47 = scmp.eq.s32.totalorder %s14, 0
    %p48 = por %p46, %p47
    %p49 = scmp.ne.s32.totalorder %s38, %s41
    %p50 = scmp.eq.s32.totalorder %s19, 3
    %p51 = por %p49, %p50
    %p52 = scmp.ne.s32.totalorder %s41, %s42
    %p53 = scmp.eq.s32.totalorder %s19, 0
    %p54 = por %p52, %p53
    %p55 = scmp.ne.s32.totalorder %s41, %s42
    %p56 = scmp.eq.s32.totalorder %s20, 3
    %p57 = por %p55, %p56
    %p59 = scmp.ne.s32.totalorder %s42, %s58
    %p60 = scmp.eq.s32.totalorder %s20, 0
    %p61 = por %p59, %p60
    %s62 = ssub.s32 %s21, %s33
    %s63 = ssub.s32 %s22, %s29
    %s64 = sor.u32 %s62, %s63
    %p65 = scmp.eq.s32.totalorder %s64, 0
    %s67 = sadd.s32 %s66, 1
    %s68 = scalar_select %p65, %s66, %s67
    %p71 = pneg %p65
    %p72 = scmp.eq.s32.totalorder %s14, 3
    %p73 = por %p71, %p72
    %p74 = scmp.ne.s32.totalorder %s66, %s69
    %p75 = scmp.eq.s32.totalorder %s14, 0
    %p76 = por %p74, %p75
    %p77 = scmp.ne.s32.totalorder %s66, %s69
    %p78 = scmp.eq.s32.totalorder %s19, 3
    %p79 = por %p77, %p78
    %p80 = scmp.ne.s32.totalorder %s69, %s70
    %p81 = scmp.eq.s32.totalorder %s19, 0
    %p82 = por %p80, %p81
    %p83 = scmp.ne.s32.totalorder %s69, %s70
    %p84 = scmp.eq.s32.totalorder %s20, 3
    %p85 = por %p83, %p84
    %p87 = scmp.ne.s32.totalorder %s70, %s86
    %p88 = scmp.eq.s32.totalorder %s20, 0
    %p89 = por %p87, %p88
    %s90 = sadd.s32 %s22, 1
    %s91 = smul.u32 %s90, 8
    %s92 = sadd.s32 %s29, 1
    %s93 = smul.u32 %s92, 8
    %s94 = ssub.s32 %s21, %s33
    %s95 = ssub.s32 %s91, %s93
    %s96 = sor.u32 %s94, %s95
    %p97 = scmp.eq.s32.totalorder %s96, 0
    %s99 = sadd.s32 %s98, 1
    %s100 = scalar_select %p97, %s98, %s99
    %p103 = pneg %p97
    %p104 = scmp.eq.s32.totalorder %s14, 3
    %p105 = por %p103, %p104
    %p106 = scmp.ne.s32.totalorder %s98, %s101
    %p107 = scmp.eq.s32.totalorder %s14, 0
    %p108 = por %p106, %p107
    %p109 = scmp.ne.s32.totalorder %s98, %s101
    %p110 = scmp.eq.s32.totalorder %s19, 3
    %p111 = por %p109, %p110
    %p112 = scmp.ne.s32.totalorder %s101, %s102
    %p113 = scmp.eq.s32.totalorder %s19, 0
    %p114 = por %p112, %p113
    %p115 = scmp.ne.s32.totalorder %s101, %s102
    %p116 = scmp.eq.s32.totalorder %s20, 3
    %p117 = por %p115, %p116
    %p119 = scmp.ne.s32.totalorder %s102, %s118
    %p120 = scmp.eq.s32.totalorder %s20, 0
    %p121 = por %p119, %p120
    %s122 = sadd.s32 %s22, 1
    %s123 = smul.u32 %s122, 8
    %s124 = sadd.s32 %s29, 1
    %s125 = smul.u32 %s124, 8
    %s126 = ssub.s32 %s21, %s33
    %s127 = ssub.s32 %s123, %s125
    %s128 = sor.u32 %s126, %s127
    %p129 = scmp.eq.s32.totalorder %s128, 0
    %s131 = sadd.s32 %s130, 1
    %s132 = scalar_select %p129, %s130, %s131
    %p135 = pneg %p129
    %p136 = scmp.eq.s32.totalorder %s14, 3
    %p137 = por %p135, %p136
    %p138 = scmp.ne.s32.totalorder %s130, %s133
    %p139 = scmp.eq.s32.totalorder %s14, 0
    %p140 = por %p138, %p139
    %p141 = scmp.ne.s32.totalorder %s130, %s133
    %p142 = scmp.eq.s32.totalorder %s19, 3
    %p143 = por %p141, %p142
    %p144 = scmp.ne.s32.totalorder %s133, %s134
    %p145 = scmp.eq.s32.totalorder %s19, 0
    %p146 = por %p144, %p145
    %p147 = scmp.ne.s32.totalorder %s133, %s134
    %p148 = scmp.eq.s32.totalorder %s20, 3
    %p149 = por %p147, %p148
    %p151 = scmp.ne.s32.totalorder %s134, %s150
    %p152 = scmp.eq.s32.totalorder %s20, 0
    %p153 = por %p151, %p152
    %s155 = sadd.s32 %s154, 1
    %p158 = scmp.eq.s32.totalorder %s14, 3
    %p159 = scmp.ne.s32.totalorder %s154, %s156
    %p160 = scmp.eq.s32.totalorder %s14, 0
    %p161 = por %p159, %p160
    %p162 = scmp.ne.s32.totalorder %s154, %s156
    %p163 = scmp.eq.s32.totalorder %s19, 3
    %p164 = por %p162, %p163
    %p165 = scmp.ne.s32.totalorder %s156, %s157
    %p166 = scmp.eq.s32.totalorder %s19, 0
    %p167 = por %p165, %p166
    %p168 = scmp.ne.s32.totalorder %s156, %s157
    %p169 = scmp.eq.s32.totalorder %s20, 3
    %p170 = por %p168, %p169
    %p172 = scmp.ne.s32.totalorder %s157, %s171
    %p173 = scmp.eq.s32.totalorder %s20, 0
    %p174 = por %p172, %p173
    %s176 = sadd.s32 %s175, 1
    %p179 = scmp.eq.s32.totalorder %s14, 3
    %p180 = scmp.ne.s32.totalorder %s175, %s177
    %p181 = scmp.eq.s32.totalorder %s14, 0
    %p182 = por %p180, %p181
    %p183 = scmp.ne.s32.totalorder %s175, %s177
    %p184 = scmp.eq.s32.totalorder %s19, 3
    %p185 = por %p183, %p184
    %p186 = scmp.ne.s32.totalorder %s177, %s178
    %p187 = scmp.eq.s32.totalorder %s19, 0
    %p188 = por %p186, %p187
    %p189 = scmp.ne.s32.totalorder %s177, %s178
    %p190 = scmp.eq.s32.totalorder %s20, 3
    %p191 = por %p189, %p190
    %p193 = scmp.ne.s32.totalorder %s178, %s192
    %p194 = scmp.eq.s32.totalorder %s20, 0
    %p195 = por %p193, %p194
    %s197 = sadd.s32 %s196, 1
    %p200 = scmp.eq.s32.totalorder %s14, 3
    %p201 = scmp.ne.s32.totalorder %s196, %s198
    %p202 = scmp.eq.s32.totalorder %s14, 0
    %p203 = por %p201, %p202
    %p204 = scmp.ne.s32.totalorder %s196, %s198
    %p205 = scmp.eq.s32.totalorder %s19, 3
    %p206 = por %p204, %p205
    %p207 = scmp.ne.s32.totalorder %s198, %s199
    %p208 = scmp.eq.s32.totalorder %s19, 0
    %p209 = por %p207, %p208
    %p210 = scmp.ne.s32.totalorder %s198, %s199
    %p211 = scmp.eq.s32.totalorder %s20, 3
    %p212 = por %p210, %p211
    %p214 = scmp.ne.s32.totalorder %s199, %s213
    %p215 = scmp.eq.s32.totalorder %s20, 0
    %p216 = por %p214, %p215
    %s218 = sadd.s32 %s217, 1
    %p221 = scmp.eq.s32.totalorder %s14, 3
    %p222 = scmp.ne.s32.totalorder %s217, %s219
    %p223 = scmp.eq.s32.totalorder %s14, 0
    %p224 = por %p222, %p223
    %p225 = scmp.ne.s32.totalorder %s217, %s219
    %p226 = scmp.eq.s32.totalorder %s19, 3
    %p227 = por %p225, %p226
    %p228 = scmp.ne.s32.totalorder %s219, %s220
    %p229 = scmp.eq.s32.totalorder %s19, 0
    %p230 = por %p228, %p229
    %p231 = scmp.ne.s32.totalorder %s219, %s220
    %p232 = scmp.eq.s32.totalorder %s20, 3
    %p233 = por %p231, %p232
    %p235 = scmp.ne.s32.totalorder %s220, %s234
    %p236 = scmp.eq.s32.totalorder %s20, 0
    %p237 = por %p235, %p236
    %s238 = ssub.s32 %s21, %s33
    %s239 = ssub.s32 %s22, %s29
    %s240 = sor.u32 %s238, %s239
    %p241 = scmp.eq.s32.totalorder %s240, 0
    %s243 = sadd.s32 %s242, 1
    %s244 = scalar_select %p241, %s242, %s243
    %p247 = pneg %p241
    %p248 = scmp.eq.s32.totalorder %s14, 3
    %p249 = por %p247, %p248
    %p250 = scmp.ne.s32.totalorder %s242, %s245
    %p251 = scmp.eq.s32.totalorder %s14, 0
    %p252 = por %p250, %p251
    %p253 = scmp.ne.s32.totalorder %s242, %s245
    %p254 = scmp.eq.s32.totalorder %s19, 3
    %p255 = por %p253, %p254
    %p256 = scmp.ne.s32.totalorder %s245, %s246
    %p257 = scmp.eq.s32.totalorder %s19, 0
    %p258 = por %p256, %p257
    %p259 = scmp.ne.s32.totalorder %s245, %s246
    %p260 = scmp.eq.s32.totalorder %s20, 3
    %p261 = por %p259, %p260
    %p263 = scmp.ne.s32.totalorder %s246, %s262
    %p264 = scmp.eq.s32.totalorder %s20, 0
    %p265 = por %p263, %p264
    %p266 = scmp.le.s32.totalorder 1, %s14
    %p267 = scmp.lt.s32.totalorder %s14, 5
    %p268 = pnand %p266, %p267
    %p269 = pneg %p268
    // Predicated region
    $region9: #{double_upconv2d_forward.4} parent=5 // pred_check
      _
    $region10: #{double_upconv2d_forward.4} parent=5 // pred_check_branch
      %271 = sbr.rel (%p268) target = $region12
    $region11: #{double_upconv2d_forward.4} parent=5 // pred_region
      %s272 = ssub.s32 %s14, 1
      // Predicated region
      $region13: #{double_upconv2d_forward.4} parent=11 // pred_check
        %p273 = pneg %p167
      $region14: #{double_upconv2d_forward.4} parent=11 // pred_check_branch
        %275 = sbr.rel (%p273) target = $region16
      $region15: #{double_upconv2d_forward.4} parent=11 // pred_region
        _
      $region16: #{double_upconv2d_forward.4} parent=11 // pred_fallthru
        _
      // Predicated region
      $region17: #{double_upconv2d_forward.4} parent=11 // pred_check
        %p276 = pneg %p188
      $region18: #{double_upconv2d_forward.4} parent=11 // pred_check_branch
        %278 = sbr.rel (%p276) target = $region20
      $region19: #{double_upconv2d_forward.4} parent=11 // pred_region
        _
      $region20: #{double_upconv2d_forward.4} parent=11 // pred_fallthru
        _
      // Predicated region
      $region21: #{double_upconv2d_forward.4} parent=11 // pred_check
        %p279 = pneg %p209
      $region22: #{double_upconv2d_forward.4} parent=11 // pred_check_branch
        %281 = sbr.rel (%p279) target = $region24
      $region23: #{double_upconv2d_forward.4} parent=11 // pred_region
        _
      $region24: #{double_upconv2d_forward.4} parent=11 // pred_fallthru
        _
      // Predicated region
      $region25: #{double_upconv2d_forward.4} parent=11 // pred_check
        %p282 = pneg %p230
      $region26: #{double_upconv2d_forward.4} parent=11 // pred_check_branch
        %284 = sbr.rel (%p282) target = $region28
      $region27: #{double_upconv2d_forward.4} parent=11 // pred_region
        _
      $region28: #{double_upconv2d_forward.4} parent=11 // pred_fallthru
        _
    $region12: #{double_upconv2d_forward.4} parent=5 // pred_fallthru
      _
    %p285 = scmp.lt.s32.totalorder %s14, 4
    // Predicated region
    $region29: #{double_upconv2d_forward.4} parent=5 // pred_check
      %p286 = pneg %p285
    $region30: #{double_upconv2d_forward.4} parent=5 // pred_check_branch
      %288 = sbr.rel (%p286) target = $region32
    $region31: #{double_upconv2d_forward.4} parent=5 // pred_region
      // Predicated region
      $region33: #{double_upconv2d_forward.4} parent=31 // pred_check
        %p289 = pneg %p48
      $region34: #{double_upconv2d_forward.4} parent=31 // pred_check_branch
        %291 = sbr.rel (%p289) target = $region36
      $region35: #{double_upconv2d_forward.4} parent=31 // pred_region
        %s292 = smul.u32 16, %s22
        %s293 = ssub.s32 34, %s292
        %p294 = scmp.lt.s32.totalorder %s293, 16
        %s295 = scalar_select %p294, %s293, 16
        %s296 = smul.u32 64, %s295
        %s297 = smul.u32 %s296, 5
        %p298 = scmp.lt.s32.totalorder %s21, 1
        %s299 = scalar_select %p298, %s21, 1
        %p300 = scmp.lt.s32.totalorder %s292, 33
        %s301 = scalar_select %p300, %s292, 33
        %s302 = smul.addr %s301, 5
        %s303 = smul.addr %s299, 170
        %s304 = sadd.s32 %s302, %s303
        %s305 = smul.addr %s304, 4
        %s306 = scalar_lea.vmem %s0, %s305
        %s307 = smul.u32 16, %s22
        %s308 = ssub.s32 34, %s307
        %p309 = scmp.lt.s32.totalorder %s308, 16
        %s310 = scalar_select %p309, %s308, 16
        %s311 = smul.u32 64, %s310
        %s312 = smul.u32 %s311, 5
      $region36: #{double_upconv2d_forward.4} parent=31 // pred_fallthru
        _
      // Predicated region
      $region37: #{double_upconv2d_forward.4} parent=31 // pred_check
        %p313 = pneg %p76
      $region38: #{double_upconv2d_forward.4} parent=31 // pred_check_branch
        %315 = sbr.rel (%p313) target = $region40
      $region39: #{double_upconv2d_forward.4} parent=31 // pred_region
        %s316 = smul.u32 16, %s22
        %s317 = ssub.s32 34, %s316
        %p318 = scmp.lt.s32.totalorder %s317, 16
        %s319 = scalar_select %p318, %s317, 16
        %s320 = smul.u32 64, %s319
        %s321 = smul.u32 %s320, 5
        %p322 = scmp.lt.s32.totalorder %s21, 1
        %s323 = scalar_select %p322, %s21, 1
        %p324 = scmp.lt.s32.totalorder %s316, 33
        %s325 = scalar_select %p324, %s316, 33
        %s326 = smul.addr %s325, 5
        %s327 = smul.addr %s323, 170
        %s328 = sadd.s32 %s326, %s327
        %s329 = smul.addr %s328, 4
        %s330 = scalar_lea.vmem %s1, %s329
        %s331 = smul.u32 16, %s22
        %s332 = ssub.s32 34, %s331
        %p333 = scmp.lt.s32.totalorder %s332, 16
        %s334 = scalar_select %p333, %s332, 16
        %s335 = smul.u32 64, %s334
        %s336 = smul.u32 %s335, 5
      $region40: #{double_upconv2d_forward.4} parent=31 // pred_fallthru
        _
      // Predicated region
      $region41: #{double_upconv2d_forward.4} parent=31 // pred_check
        %p337 = pneg %p108
      $region42: #{double_upconv2d_forward.4} parent=31 // pred_check_branch
        %339 = sbr.rel (%p337) target = $region44
      $region43: #{double_upconv2d_forward.4} parent=31 // pred_region
        %s340 = sadd.s32 %s22, 1
        %s341 = smul.u32 %s340, 8
        %s342 = smul.u32 2, %s341
        %p343 = scmp.lt.s32.totalorder %s21, 1
        %s344 = scalar_select %p343, %s21, 1
        %p345 = scmp.lt.s32.totalorder %s342, 33
        %s346 = scalar_select %p345, %s342, 33
        %s347 = smul.addr %s346, 5
        %s348 = smul.addr %s344, 170
        %s349 = sadd.s32 %s347, %s348
        %s350 = smul.addr %s349, 4
        %s351 = scalar_lea.vmem %s2, %s350
        %s352 = sadd.s32 %s22, 1
        %s353 = smul.u32 %s352, 8
        %s354 = smul.u32 2, %s353
      $region44: #{double_upconv2d_forward.4} parent=31 // pred_fallthru
        _
      // Predicated region
      $region45: #{double_upconv2d_forward.4} parent=31 // pred_check
        %p355 = pneg %p140
      $region46: #{double_upconv2d_forward.4} parent=31 // pred_check_branch
        %357 = sbr.rel (%p355) target = $region48
      $region47: #{double_upconv2d_forward.4} parent=31 // pred_region
        %s358 = sadd.s32 %s22, 1
        %s359 = smul.u32 %s358, 8
        %s360 = smul.u32 2, %s359
        %p361 = scmp.lt.s32.totalorder %s21, 1
        %s362 = scalar_select %p361, %s21, 1
        %p363 = scmp.lt.s32.totalorder %s360, 33
        %s364 = scalar_select %p363, %s360, 33
        %s365 = smul.addr %s364, 5
        %s366 = smul.addr %s362, 170
        %s367 = sadd.s32 %s365, %s366
        %s368 = smul.addr %s367, 4
        %s369 = scalar_lea.vmem %s3, %s368
        %s370 = sadd.s32 %s22, 1
        %s371 = smul.u32 %s370, 8
        %s372 = smul.u32 2, %s371
      $region48: #{double_upconv2d_forward.4} parent=31 // pred_fallthru
        _
    $region32: #{double_upconv2d_forward.4} parent=5 // pred_fallthru
      _
    %p373 = scmp.le.s32.totalorder 1, %s14
    %p374 = scmp.lt.s32.totalorder %s14, 5
    %p375 = pnand %p373, %p374
    %p376 = pneg %p375
    // Predicated region
    $region49: #{double_upconv2d_forward.4} parent=5 // pred_check
      _
    $region50: #{double_upconv2d_forward.4} parent=5 // pred_check_branch
      %378 = sbr.rel (%p375) target = $region52
    $region51: #{double_upconv2d_forward.4} parent=5 // pred_region
      %s379 = ssub.s32 %s14, 1
      %s380 = smul.u32 16, %s24
      %s381 = ssub.s32 34, %s380
      %p382 = scmp.lt.s32.totalorder %s381, 16
      %s383 = scalar_select %p382, %s381, 16
      %s384 = smul.u32 64, %s383
      %s385 = smul.u32 %s384, 5
      %p386 = scmp.lt.s32.totalorder %s23, 1
      %s387 = scalar_select %p386, %s23, 1
      %p388 = scmp.lt.s32.totalorder %s380, 33
      %s389 = scalar_select %p388, %s380, 33
      %s390 = smul.addr %s389, 5
      %s391 = smul.addr %s387, 170
      %s392 = sadd.s32 %s390, %s391
      %s393 = smul.addr %s392, 4
      %s394 = scalar_lea.vmem %s0, %s393
      %p395 = pneg %p54
      %p396 = pneg %p51
      %s397 = smul.u32 16, %s24
      %s398 = ssub.s32 34, %s397
      %p399 = scmp.lt.s32.totalorder %s398, 16
      %s400 = scalar_select %p399, %s398, 16
      %s401 = smul.u32 64, %s400
      %s402 = smul.u32 %s401, 5
      %p403 = scmp.lt.s32.totalorder %s23, 1
      %s404 = scalar_select %p403, %s23, 1
      %p405 = scmp.lt.s32.totalorder %s397, 33
      %s406 = scalar_select %p405, %s397, 33
      %s407 = smul.addr %s406, 5
      %s408 = smul.addr %s404, 170
      %s409 = sadd.s32 %s407, %s408
      %s410 = smul.addr %s409, 4
      %s411 = scalar_lea.vmem %s1, %s410
      %p412 = pneg %p82
      %p413 = pneg %p79
      %s414 = sadd.s32 %s24, 1
      %s415 = smul.u32 %s414, 8
      %s416 = smul.u32 2, %s415
      %p417 = scmp.lt.s32.totalorder %s23, 1
      %s418 = scalar_select %p417, %s23, 1
      %p419 = scmp.lt.s32.totalorder %s416, 33
      %s420 = scalar_select %p419, %s416, 33
      %s421 = smul.addr %s420, 5
      %s422 = smul.addr %s418, 170
      %s423 = sadd.s32 %s421, %s422
      %s424 = smul.addr %s423, 4
      %s425 = scalar_lea.vmem %s2, %s424
      %p426 = pneg %p114
      %p427 = pneg %p111
      %s428 = sadd.s32 %s24, 1
      %s429 = smul.u32 %s428, 8
      %s430 = smul.u32 2, %s429
      %p431 = scmp.lt.s32.totalorder %s23, 1
      %s432 = scalar_select %p431, %s23, 1
      %p433 = scmp.lt.s32.totalorder %s430, 33
      %s434 = scalar_select %p433, %s430, 33
      %s435 = smul.addr %s434, 5
      %s436 = smul.addr %s432, 170
      %s437 = sadd.s32 %s435, %s436
      %s438 = smul.addr %s437, 4
      %s439 = scalar_lea.vmem %s3, %s438
      %p440 = pneg %p146
      %p441 = pneg %p143
      %p442 = pneg %p167
      %p443 = pneg %p164
      %p444 = pneg %p188
      %p445 = pneg %p185
      %p446 = pneg %p209
      %p447 = pneg %p206
      %p448 = pneg %p230
      %p449 = pneg %p227
      %p450 = pneg %p258
      %p451 = pneg %p255
      %s452 = smul.u32 16, %s24
      %p453 = scmp.lt.s32.totalorder %s23, 1
      %s454 = scalar_select %p453, %s23, 1
      %p455 = scmp.lt.s32.totalorder %s452, 31
      %s456 = scalar_select %p455, %s452, 31
      %s457 = smul.addr %s456, 4
      %s458 = smul.addr %s454, 128
      %s459 = sadd.s32 %s457, %s458
      %s460 = smul.addr %s459, 4
      %s461 = scalar_lea.vmem %s8, %s460
      %s462 = smul.u32 16, %s24
      %s463 = ssub.s32 34, %s462
      %p464 = scmp.lt.s32.totalorder %s463, 16
      %s465 = scalar_select %p464, %s463, 16
      %s466 = smul.u32 64, %s465
      %s467 = smul.u32 %s466, 5
      %p468 = scmp.lt.s32.totalorder %s23, 1
      %s469 = scalar_select %p468, %s23, 1
      %p470 = scmp.lt.s32.totalorder %s462, 33
      %s471 = scalar_select %p470, %s462, 33
      %s472 = smul.addr %s471, 5
      %s473 = smul.addr %s469, 170
      %s474 = sadd.s32 %s472, %s473
      %s475 = smul.addr %s474, 4
      %s476 = scalar_lea.vmem %s0, %s475
      %s477 = smul.u32 16, %s24
      %s478 = ssub.s32 34, %s477
      %p479 = scmp.lt.s32.totalorder %s478, 16
      %s480 = scalar_select %p479, %s478, 16
      %s481 = smul.u32 64, %s480
      %s482 = smul.u32 %s481, 5
      %s483 = smul.u32 16, %s24
      %s484 = ssub.s32 34, %s483
      %p485 = scmp.lt.s32.totalorder %s484, 16
      %s486 = scalar_select %p485, %s484, 16
      %s487 = smul.u32 64, %s486
      %s488 = smul.u32 %s487, 5
      %p489 = scmp.lt.s32.totalorder %s23, 1
      %s490 = scalar_select %p489, %s23, 1
      %p491 = scmp.lt.s32.totalorder %s483, 33
      %s492 = scalar_select %p491, %s483, 33
      %s493 = smul.addr %s492, 5
      %s494 = smul.addr %s490, 170
      %s495 = sadd.s32 %s493, %s494
      %s496 = smul.addr %s495, 4
      %s497 = scalar_lea.vmem %s1, %s496
      %s498 = smul.u32 16, %s24
      %s499 = ssub.s32 34, %s498
      %p500 = scmp.lt.s32.totalorder %s499, 16
      %s501 = scalar_select %p500, %s499, 16
      %s502 = smul.u32 64, %s501
      %s503 = smul.u32 %s502, 5
      %s504 = sadd.s32 %s24, 1
      %s505 = smul.u32 %s504, 8
      %s506 = smul.u32 2, %s505
      %p507 = scmp.lt.s32.totalorder %s23, 1
      %s508 = scalar_select %p507, %s23, 1
      %p509 = scmp.lt.s32.totalorder %s506, 33
      %s510 = scalar_select %p509, %s506, 33
      %s511 = smul.addr %s510, 5
      %s512 = smul.addr %s508, 170
      %s513 = sadd.s32 %s511, %s512
      %s514 = smul.addr %s513, 4
      %s515 = scalar_lea.vmem %s2, %s514
      %s516 = sadd.s32 %s24, 1
      %s517 = smul.u32 %s516, 8
      %s518 = smul.u32 2, %s517
      %s519 = sadd.s32 %s24, 1
      %s520 = smul.u32 %s519, 8
      %s521 = smul.u32 2, %s520
      %p522 = scmp.lt.s32.totalorder %s23, 1
      %s523 = scalar_select %p522, %s23, 1
      %p524 = scmp.lt.s32.totalorder %s521, 33
      %s525 = scalar_select %p524, %s521, 33
      %s526 = smul.addr %s525, 5
      %s527 = smul.addr %s523, 170
      %s528 = sadd.s32 %s526, %s527
      %s529 = smul.addr %s528, 4
      %s530 = scalar_lea.vmem %s3, %s529
      %s531 = sadd.s32 %s24, 1
      %s532 = smul.u32 %s531, 8
      %s533 = smul.u32 2, %s532
      %s534 = smul.u32 16, %s24
      %p535 = scmp.lt.s32.totalorder %s23, 1
      %s536 = scalar_select %p535, %s23, 1
      %p537 = scmp.lt.s32.totalorder %s534, 31
      %s538 = scalar_select %p537, %s534, 31
      %s539 = smul.addr %s538, 4
      %s540 = smul.addr %s536, 128
      %s541 = sadd.s32 %s539, %s540
      %s542 = smul.addr %s541, 4
      %s543 = scalar_lea.vmem %s8, %s542
      %s544 = smul.u32 16, %s24
      %v546 = vld [vmem:[%s476] sm:$0xf]
      %v547 = vld [vmem:[%s476 + $0x4] sm:$0xf]
      %v548 = vld [vmem:[%s476 + $0x8] sm:$0xf]
      %v549 = vld [vmem:[%s476 + $0xc] sm:$0xf]
      %v550 = vld [vmem:[%s476 + $0x10] sm:$0x1]
      %v551 = vld [vmem:[%s476 + $0x14] sm:$0xf]
      %v552 = vld [vmem:[%s476 + $0x18] sm:$0xf]
      %v553 = vld [vmem:[%s476 + $0x1c] sm:$0xf]
      %v554 = vld [vmem:[%s476 + $0x20] sm:$0xf]
      %v555 = vld [vmem:[%s476 + $0x24] sm:$0x1]
      %v556 = vld [vmem:[%s476 + $0x28] sm:$0xf]
      %v557 = vld [vmem:[%s476 + $0x2c] sm:$0xf]
      %v558 = vld [vmem:[%s476 + $0x30] sm:$0xf]
      %v559 = vld [vmem:[%s476 + $0x34] sm:$0xf]
      %v560 = vld [vmem:[%s476 + $0x38] sm:$0x1]
      %v561 = vld [vmem:[%s476 + $0x3c] sm:$0xf]
      %v562 = vld [vmem:[%s476 + $0x40] sm:$0xf]
      %v563 = vld [vmem:[%s476 + $0x44] sm:$0xf]
      %v564 = vld [vmem:[%s476 + $0x48] sm:$0xf]
      %v565 = vld [vmem:[%s476 + $0x4c] sm:$0x1]
      %v566 = vld [vmem:[%s476 + $0x50] sm:$0xf]
      %v567 = vld [vmem:[%s476 + $0x54] sm:$0xf]
      %v568 = vld [vmem:[%s476 + $0x58] sm:$0xf]
      %v569 = vld [vmem:[%s476 + $0x5c] sm:$0xf]
      %v570 = vld [vmem:[%s476 + $0x60] sm:$0x1]
      %v571 = vld [vmem:[%s476 + $0x64] sm:$0xf]
      %v572 = vld [vmem:[%s476 + $0x68] sm:$0xf]
      %v573 = vld [vmem:[%s476 + $0x6c] sm:$0xf]
      %v574 = vld [vmem:[%s476 + $0x70] sm:$0xf]
      %v575 = vld [vmem:[%s476 + $0x74] sm:$0x1]
      %v576 = vld [vmem:[%s476 + $0x78] sm:$0xf]
      %v577 = vld [vmem:[%s476 + $0x7c] sm:$0xf]
      %v578 = vld [vmem:[%s476 + $0x80] sm:$0xf]
      %v579 = vld [vmem:[%s476 + $0x84] sm:$0xf]
      %v580 = vld [vmem:[%s476 + $0x88] sm:$0x1]
      %v581 = vld [vmem:[%s476 + $0x8c] sm:$0xf]
      %v582 = vld [vmem:[%s476 + $0x90] sm:$0xf]
      %v583 = vld [vmem:[%s476 + $0x94] sm:$0xf]
      %v584 = vld [vmem:[%s476 + $0x98] sm:$0xf]
      %v585 = vld [vmem:[%s476 + $0x9c] sm:$0x1]
      %v586 = vld [vmem:[%s476 + $0xa0] sm:$0xf]
      %v587 = vld [vmem:[%s476 + $0xa4] sm:$0xf]
      %v588 = vld [vmem:[%s476 + $0xa8] sm:$0xf]
      %v589 = vld [vmem:[%s476 + $0xac] sm:$0xf]
      %v590 = vld [vmem:[%s476 + $0xb0] sm:$0x1]
      %v591 = vld [vmem:[%s476 + $0xb4] sm:$0xf]
      %v592 = vld [vmem:[%s476 + $0xb8] sm:$0xf]
      %v593 = vld [vmem:[%s476 + $0xbc] sm:$0xf]
      %v594 = vld [vmem:[%s476 + $0xc0] sm:$0xf]
      %v595 = vld [vmem:[%s476 + $0xc4] sm:$0x1]
      %v596 = vld [vmem:[%s476 + $0xc8] sm:$0xf]
      %v597 = vld [vmem:[%s476 + $0xcc] sm:$0xf]
      %v598 = vld [vmem:[%s476 + $0xd0] sm:$0xf]
      %v599 = vld [vmem:[%s476 + $0xd4] sm:$0xf]
      %v600 = vld [vmem:[%s476 + $0xd8] sm:$0x1]
      %v601 = vld [vmem:[%s476 + $0xdc] sm:$0xf]
      %v602 = vld [vmem:[%s476 + $0xe0] sm:$0xf]
      %v603 = vld [vmem:[%s476 + $0xe4] sm:$0xf]
      %v604 = vld [vmem:[%s476 + $0xe8] sm:$0xf]
      %v605 = vld [vmem:[%s476 + $0xec] sm:$0x1]
      %v606 = vld [vmem:[%s476 + $0xf0] sm:$0xf]
      %v607 = vld [vmem:[%s476 + $0xf4] sm:$0xf]
      %v608 = vld [vmem:[%s476 + $0xf8] sm:$0xf]
      %v609 = vld [vmem:[%s476 + $0xfc] sm:$0xf]
      %v610 = vld [vmem:[%s476 + $0x100] sm:$0x1]
      %v611 = vld [vmem:[%s476 + $0x104] sm:$0xf]
      %v612 = vld [vmem:[%s476 + $0x108] sm:$0xf]
      %v613 = vld [vmem:[%s476 + $0x10c] sm:$0xf]
      %v614 = vld [vmem:[%s476 + $0x110] sm:$0xf]
      %v615 = vld [vmem:[%s476 + $0x114] sm:$0x1]
      %v616 = vld [vmem:[%s476 + $0x118] sm:$0xf]
      %v617 = vld [vmem:[%s476 + $0x11c] sm:$0xf]
      %v618 = vld [vmem:[%s476 + $0x120] sm:$0xf]
      %v619 = vld [vmem:[%s476 + $0x124] sm:$0xf]
      %v620 = vld [vmem:[%s476 + $0x128] sm:$0x1]
      %v621 = vld [vmem:[%s476 + $0x12c] sm:$0xf]
      %v622 = vld [vmem:[%s476 + $0x130] sm:$0xf]
      %v623 = vld [vmem:[%s476 + $0x134] sm:$0xf]
      %v624 = vld [vmem:[%s476 + $0x138] sm:$0xf]
      %v625 = vld [vmem:[%s476 + $0x13c] sm:$0x1]
      %v626 = vld [vmem:[%s515] sm:$0xf]
      %v627 = vld [vmem:[%s515 + $0x4] sm:$0xf]
      %v628 = vld [vmem:[%s515 + $0x8] sm:$0xf]
      %v629 = vld [vmem:[%s515 + $0xc] sm:$0xf]
      %v630 = vld [vmem:[%s515 + $0x10] sm:$0x1]
      %v631 = vld [vmem:[%s515 + $0x14] sm:$0xf]
      %v632 = vld [vmem:[%s515 + $0x18] sm:$0xf]
      %v633 = vld [vmem:[%s515 + $0x1c] sm:$0xf]
      %v634 = vld [vmem:[%s515 + $0x20] sm:$0xf]
      %v635 = vld [vmem:[%s515 + $0x24] sm:$0x1]
      %v708 = vunpack.c.l.b16 %v546
      %v709 = vunpack.c.l.b16 %v547
      %v710 = vunpack.c.l.b16 %v548
      %v711 = vunpack.c.l.b16 %v549
      %v712 = vunpack.c.l.b16 %v551
      %v713 = vunpack.c.l.b16 %v552
      %v714 = vunpack.c.l.b16 %v553
      %v715 = vunpack.c.l.b16 %v554
      %v716 = vunpack.c.l.b16 %v556
      %v717 = vunpack.c.l.b16 %v557
      %v718 = vunpack.c.l.b16 %v558
      %v719 = vunpack.c.l.b16 %v559
      %v720 = vunpack.c.l.b16 %v561
      %v721 = vunpack.c.l.b16 %v562
      %v722 = vunpack.c.l.b16 %v563
      %v723 = vunpack.c.l.b16 %v564
      %v724 = vunpack.c.l.b16 %v566
      %v725 = vunpack.c.l.b16 %v567
      %v726 = vunpack.c.l.b16 %v568
      %v727 = vunpack.c.l.b16 %v569
      %v728 = vunpack.c.l.b16 %v571
      %v729 = vunpack.c.l.b16 %v572
      %v730 = vunpack.c.l.b16 %v573
      %v731 = vunpack.c.l.b16 %v574
      %v732 = vunpack.c.l.b16 %v576
      %v733 = vunpack.c.l.b16 %v577
      %v734 = vunpack.c.l.b16 %v578
      %v735 = vunpack.c.l.b16 %v579
      %v736 = vunpack.c.l.b16 %v581
      %v737 = vunpack.c.l.b16 %v582
      %v738 = vunpack.c.l.b16 %v583
      %v739 = vunpack.c.l.b16 %v584
      %v740 = vunpack.c.l.b16 %v586
      %v741 = vunpack.c.l.b16 %v587
      %v742 = vunpack.c.l.b16 %v588
      %v743 = vunpack.c.l.b16 %v589
      %v744 = vunpack.c.l.b16 %v591
      %v745 = vunpack.c.l.b16 %v592
      %v746 = vunpack.c.l.b16 %v593
      %v747 = vunpack.c.l.b16 %v594
      %v748 = vunpack.c.l.b16 %v596
      %v749 = vunpack.c.l.b16 %v597
      %v750 = vunpack.c.l.b16 %v598
      %v751 = vunpack.c.l.b16 %v599
      %v752 = vunpack.c.l.b16 %v601
      %v753 = vunpack.c.l.b16 %v602
      %v754 = vunpack.c.l.b16 %v603
      %v755 = vunpack.c.l.b16 %v604
      %v756 = vunpack.c.l.b16 %v606
      %v757 = vunpack.c.l.b16 %v607
      %v758 = vunpack.c.l.b16 %v608
      %v759 = vunpack.c.l.b16 %v609
      %v760 = vunpack.c.l.b16 %v611
      %v761 = vunpack.c.l.b16 %v612
      %v762 = vunpack.c.l.b16 %v613
      %v763 = vunpack.c.l.b16 %v614
      %v764 = vunpack.c.l.b16 %v616
      %v765 = vunpack.c.l.b16 %v617
      %v766 = vunpack.c.l.b16 %v618
      %v767 = vunpack.c.l.b16 %v619
      %v768 = vunpack.c.l.b16 %v621
      %v769 = vunpack.c.l.b16 %v622
      %v770 = vunpack.c.l.b16 %v623
      %v771 = vunpack.c.l.b16 %v624
      %v772 = vunpack.c.l.b16 %v626
      %v773 = vunpack.c.l.b16 %v627
      %v774 = vunpack.c.l.b16 %v628
      %v775 = vunpack.c.l.b16 %v629
      %v776 = vunpack.c.l.b16 %v631
      %v777 = vunpack.c.l.b16 %v632
      %v778 = vunpack.c.l.b16 %v633
      %v779 = vunpack.c.l.b16 %v634
      %v780 = vpack.c.b16 %v709, %v708
      %v781 = vpack.c.b16 %v711, %v710
      %v782 = vpack.c.b16 %v713, %v712
      %v783 = vpack.c.b16 %v715, %v714
      %v784 = vpack.c.b16 %v717, %v716
      %v785 = vpack.c.b16 %v719, %v718
      %v786 = vpack.c.b16 %v721, %v720
      %v787 = vpack.c.b16 %v723, %v722
      %v788 = vpack.c.b16 %v725, %v724
      %v789 = vpack.c.b16 %v727, %v726
      %v790 = vpack.c.b16 %v729, %v728
      %v791 = vpack.c.b16 %v731, %v730
      %v792 = vpack.c.b16 %v733, %v732
      %v793 = vpack.c.b16 %v735, %v734
      %v794 = vpack.c.b16 %v737, %v736
      %v795 = vpack.c.b16 %v739, %v738
      %v796 = vpack.c.b16 %v741, %v740
      %v797 = vpack.c.b16 %v743, %v742
      %v798 = vpack.c.b16 %v745, %v744
      %v799 = vpack.c.b16 %v747, %v746
      %v800 = vpack.c.b16 %v749, %v748
      %v801 = vpack.c.b16 %v751, %v750
      %v802 = vpack.c.b16 %v753, %v752
      %v803 = vpack.c.b16 %v755, %v754
      %v804 = vpack.c.b16 %v757, %v756
      %v805 = vpack.c.b16 %v759, %v758
      %v806 = vpack.c.b16 %v761, %v760
      %v807 = vpack.c.b16 %v763, %v762
      %v808 = vpack.c.b16 %v765, %v764
      %v809 = vpack.c.b16 %v767, %v766
      %v810 = vpack.c.b16 %v769, %v768
      %v811 = vpack.c.b16 %v771, %v770
      %v812 = vpack.c.b16 %v773, %v772
      %v813 = vpack.c.b16 %v775, %v774
      %v814 = vpack.c.b16 %v777, %v776
      %v815 = vpack.c.b16 %v779, %v778
      %v834 = vunpack.c.l.b16 %v550
      %v835 = vunpack.c.l.b16 %v555
      %v836 = vunpack.c.l.b16 %v560
      %v837 = vunpack.c.l.b16 %v565
      %v838 = vunpack.c.l.b16 %v570
      %v839 = vunpack.c.l.b16 %v575
      %v840 = vunpack.c.l.b16 %v580
      %v841 = vunpack.c.l.b16 %v585
      %v842 = vunpack.c.l.b16 %v590
      %v843 = vunpack.c.l.b16 %v595
      %v844 = vunpack.c.l.b16 %v600
      %v845 = vunpack.c.l.b16 %v605
      %v846 = vunpack.c.l.b16 %v610
      %v847 = vunpack.c.l.b16 %v615
      %v848 = vunpack.c.l.b16 %v620
      %v849 = vunpack.c.l.b16 %v625
      %v850 = vunpack.c.l.b16 %v630
      %v851 = vunpack.c.l.b16 %v635
      %v852 = vpack.c.b16 %v834, %v834
      %v853 = vpack.c.b16 %v835, %v835
      %v854 = vpack.c.b16 %v836, %v836
      %v855 = vpack.c.b16 %v837, %v837
      %v856 = vpack.c.b16 %v838, %v838
      %v857 = vpack.c.b16 %v839, %v839
      %v858 = vpack.c.b16 %v840, %v840
      %v859 = vpack.c.b16 %v841, %v841
      %v860 = vpack.c.b16 %v842, %v842
      %v861 = vpack.c.b16 %v843, %v843
      %v862 = vpack.c.b16 %v844, %v844
      %v863 = vpack.c.b16 %v845, %v845
      %v864 = vpack.c.b16 %v846, %v846
      %v865 = vpack.c.b16 %v847, %v847
      %v866 = vpack.c.b16 %v848, %v848
      %v867 = vpack.c.b16 %v849, %v849
      %v868 = vpack.c.b16 %v850, %v850
      %v869 = vpack.c.b16 %v851, %v851
      %vm870 = vsmask.f32 7424
      %v872 = vshrl.u32 %v780, 16
      %v874 = vshll.u32 %v780, 16
      %v876 = vrot.slane %v874, 1
      %v877 = vor.u32 %v872, %v876
      %v879 = vshll.u32 %v781, 16
      %v881 = vrot.slane %v879, 1
      %v882 = vsel %vm870, %v877, %v881
      %v883 = vshrl.u32 %v781, 16
      %v885 = vor.u32 %v883, %v881
      %v887 = vshll.u32 %v852, 16
      %v889 = vrot.slane %v887, 1
      %v890 = vsel %vm870, %v885, %v889
      %v892 = vshrl.u32 %v782, 16
      %v894 = vshll.u32 %v782, 16
      %v896 = vrot.slane %v894, 1
      %v897 = vor.u32 %v892, %v896
      %v899 = vshll.u32 %v783, 16
      %v901 = vrot.slane %v899, 1
      %v902 = vsel %vm870, %v897, %v901
      %v903 = vshrl.u32 %v783, 16
      %v905 = vor.u32 %v903, %v901
      %v907 = vshll.u32 %v853, 16
      %v909 = vrot.slane %v907, 1
      %v910 = vsel %vm870, %v905, %v909
      %v912 = vshrl.u32 %v784, 16
      %v914 = vshll.u32 %v784, 16
      %v916 = vrot.slane %v914, 1
      %v917 = vor.u32 %v912, %v916
      %v919 = vshll.u32 %v785, 16
      %v921 = vrot.slane %v919, 1
      %v922 = vsel %vm870, %v917, %v921
      %v923 = vshrl.u32 %v785, 16
      %v925 = vor.u32 %v923, %v921
      %v927 = vshll.u32 %v854, 16
      %v929 = vrot.slane %v927, 1
      %v930 = vsel %vm870, %v925, %v929
      %v932 = vshrl.u32 %v786, 16
      %v934 = vshll.u32 %v786, 16
      %v936 = vrot.slane %v934, 1
      %v937 = vor.u32 %v932, %v936
      %v939 = vshll.u32 %v787, 16
      %v941 = vrot.slane %v939, 1
      %v942 = vsel %vm870, %v937, %v941
      %v943 = vshrl.u32 %v787, 16
      %v945 = vor.u32 %v943, %v941
      %v947 = vshll.u32 %v855, 16
      %v949 = vrot.slane %v947, 1
      %v950 = vsel %vm870, %v945, %v949
      %v952 = vshrl.u32 %v788, 16
      %v954 = vshll.u32 %v788, 16
      %v956 = vrot.slane %v954, 1
      %v957 = vor.u32 %v952, %v956
      %v959 = vshll.u32 %v789, 16
      %v961 = vrot.slane %v959, 1
      %v962 = vsel %vm870, %v957, %v961
      %v963 = vshrl.u32 %v789, 16
      %v965 = vor.u32 %v963, %v961
      %v967 = vshll.u32 %v856, 16
      %v969 = vrot.slane %v967, 1
      %v970 = vsel %vm870, %v965, %v969
      %v972 = vshrl.u32 %v790, 16
      %v974 = vshll.u32 %v790, 16
      %v976 = vrot.slane %v974, 1
      %v977 = vor.u32 %v972, %v976
      %v979 = vshll.u32 %v791, 16
      %v981 = vrot.slane %v979, 1
      %v982 = vsel %vm870, %v977, %v981
      %v983 = vshrl.u32 %v791, 16
      %v985 = vor.u32 %v983, %v981
      %v987 = vshll.u32 %v857, 16
      %v989 = vrot.slane %v987, 1
      %v990 = vsel %vm870, %v985, %v989
      %v992 = vshrl.u32 %v792, 16
      %v994 = vshll.u32 %v792, 16
      %v996 = vrot.slane %v994, 1
      %v997 = vor.u32 %v992, %v996
      %v999 = vshll.u32 %v793, 16
      %v1001 = vrot.slane %v999, 1
      %v1002 = vsel %vm870, %v997, %v1001
      %v1003 = vshrl.u32 %v793, 16
      %v1005 = vor.u32 %v1003, %v1001
      %v1007 = vshll.u32 %v858, 16
      %v1009 = vrot.slane %v1007, 1
      %v1010 = vsel %vm870, %v1005, %v1009
      %v1012 = vshrl.u32 %v794, 16
      %v1014 = vshll.u32 %v794, 16
      %v1016 = vrot.slane %v1014, 1
      %v1017 = vor.u32 %v1012, %v1016
      %v1019 = vshll.u32 %v795, 16
      %v1021 = vrot.slane %v1019, 1
      %v1022 = vsel %vm870, %v1017, %v1021
      %v1023 = vshrl.u32 %v795, 16
      %v1025 = vor.u32 %v1023, %v1021
      %v1027 = vshll.u32 %v859, 16
      %v1029 = vrot.slane %v1027, 1
      %v1030 = vsel %vm870, %v1025, %v1029
      %v1032 = vshrl.u32 %v796, 16
      %v1034 = vshll.u32 %v796, 16
      %v1036 = vrot.slane %v1034, 1
      %v1037 = vor.u32 %v1032, %v1036
      %v1039 = vshll.u32 %v797, 16
      %v1041 = vrot.slane %v1039, 1
      %v1042 = vsel %vm870, %v1037, %v1041
      %v1043 = vshrl.u32 %v797, 16
      %v1045 = vor.u32 %v1043, %v1041
      %v1047 = vshll.u32 %v860, 16
      %v1049 = vrot.slane %v1047, 1
      %v1050 = vsel %vm870, %v1045, %v1049
      %v1052 = vshrl.u32 %v798, 16
      %v1054 = vshll.u32 %v798, 16
      %v1056 = vrot.slane %v1054, 1
      %v1057 = vor.u32 %v1052, %v1056
      %v1059 = vshll.u32 %v799, 16
      %v1061 = vrot.slane %v1059, 1
      %v1062 = vsel %vm870, %v1057, %v1061
      %v1063 = vshrl.u32 %v799, 16
      %v1065 = vor.u32 %v1063, %v1061
      %v1067 = vshll.u32 %v861, 16
      %v1069 = vrot.slane %v1067, 1
      %v1070 = vsel %vm870, %v1065, %v1069
      %v1072 = vshrl.u32 %v800, 16
      %v1074 = vshll.u32 %v800, 16
      %v1076 = vrot.slane %v1074, 1
      %v1077 = vor.u32 %v1072, %v1076
      %v1079 = vshll.u32 %v801, 16
      %v1081 = vrot.slane %v1079, 1
      %v1082 = vsel %vm870, %v1077, %v1081
      %v1083 = vshrl.u32 %v801, 16
      %v1085 = vor.u32 %v1083, %v1081
      %v1087 = vshll.u32 %v862, 16
      %v1089 = vrot.slane %v1087, 1
      %v1090 = vsel %vm870, %v1085, %v1089
      %v1092 = vshrl.u32 %v802, 16
      %v1094 = vshll.u32 %v802, 16
      %v1096 = vrot.slane %v1094, 1
      %v1097 = vor.u32 %v1092, %v1096
      %v1099 = vshll.u32 %v803, 16
      %v1101 = vrot.slane %v1099, 1
      %v1102 = vsel %vm870, %v1097, %v1101
      %v1103 = vshrl.u32 %v803, 16
      %v1105 = vor.u32 %v1103, %v1101
      %v1107 = vshll.u32 %v863, 16
      %v1109 = vrot.slane %v1107, 1
      %v1110 = vsel %vm870, %v1105, %v1109
      %v1112 = vshrl.u32 %v804, 16
      %v1114 = vshll.u32 %v804, 16
      %v1116 = vrot.slane %v1114, 1
      %v1117 = vor.u32 %v1112, %v1116
      %v1119 = vshll.u32 %v805, 16
      %v1121 = vrot.slane %v1119, 1
      %v1122 = vsel %vm870, %v1117, %v1121
      %v1123 = vshrl.u32 %v805, 16
      %v1125 = vor.u32 %v1123, %v1121
      %v1127 = vshll.u32 %v864, 16
      %v1129 = vrot.slane %v1127, 1
      %v1130 = vsel %vm870, %v1125, %v1129
      %v1132 = vshrl.u32 %v806, 16
      %v1134 = vshll.u32 %v806, 16
      %v1136 = vrot.slane %v1134, 1
      %v1137 = vor.u32 %v1132, %v1136
      %v1139 = vshll.u32 %v807, 16
      %v1141 = vrot.slane %v1139, 1
      %v1142 = vsel %vm870, %v1137, %v1141
      %v1143 = vshrl.u32 %v807, 16
      %v1145 = vor.u32 %v1143, %v1141
      %v1147 = vshll.u32 %v865, 16
      %v1149 = vrot.slane %v1147, 1
      %v1150 = vsel %vm870, %v1145, %v1149
      %v1152 = vshrl.u32 %v808, 16
      %v1154 = vshll.u32 %v808, 16
      %v1156 = vrot.slane %v1154, 1
      %v1157 = vor.u32 %v1152, %v1156
      %v1159 = vshll.u32 %v809, 16
      %v1161 = vrot.slane %v1159, 1
      %v1162 = vsel %vm870, %v1157, %v1161
      %v1163 = vshrl.u32 %v809, 16
      %v1165 = vor.u32 %v1163, %v1161
      %v1167 = vshll.u32 %v866, 16
      %v1169 = vrot.slane %v1167, 1
      %v1170 = vsel %vm870, %v1165, %v1169
      %v1172 = vshrl.u32 %v810, 16
      %v1174 = vshll.u32 %v810, 16
      %v1176 = vrot.slane %v1174, 1
      %v1177 = vor.u32 %v1172, %v1176
      %v1179 = vshll.u32 %v811, 16
      %v1181 = vrot.slane %v1179, 1
      %v1182 = vsel %vm870, %v1177, %v1181
      %v1183 = vshrl.u32 %v811, 16
      %v1185 = vor.u32 %v1183, %v1181
      %v1187 = vshll.u32 %v867, 16
      %v1189 = vrot.slane %v1187, 1
      %v1190 = vsel %vm870, %v1185, %v1189
      %v1192 = vshrl.u32 %v812, 16
      %v1194 = vshll.u32 %v812, 16
      %v1196 = vrot.slane %v1194, 1
      %v1197 = vor.u32 %v1192, %v1196
      %v1199 = vshll.u32 %v813, 16
      %v1201 = vrot.slane %v1199, 1
      %v1202 = vsel %vm870, %v1197, %v1201
      %v1203 = vshrl.u32 %v813, 16
      %v1205 = vor.u32 %v1203, %v1201
      %v1207 = vshll.u32 %v868, 16
      %v1209 = vrot.slane %v1207, 1
      %v1210 = vsel %vm870, %v1205, %v1209
      %v1212 = vshrl.u32 %v814, 16
      %v1214 = vshll.u32 %v814, 16
      %v1216 = vrot.slane %v1214, 1
      %v1217 = vor.u32 %v1212, %v1216
      %v1219 = vshll.u32 %v815, 16
      %v1221 = vrot.slane %v1219, 1
      %v1222 = vsel %vm870, %v1217, %v1221
      %v1223 = vshrl.u32 %v815, 16
      %v1225 = vor.u32 %v1223, %v1221
      %v1227 = vshll.u32 %v869, 16
      %v1229 = vrot.slane %v1227, 1
      %v1230 = vsel %vm870, %v1225, %v1229
      %1231 = vrot.lane.b32.xlu0 %v882, 8
      %v1232 = vpop.permute.xlu0 %1231
      %1233 = vrot.lane.b32.xlu0 %v890, 8
      %v1234 = vpop.permute.xlu0 %1233
      %1235 = vrot.lane.b32.xlu0 %v902, 8
      %v1236 = vpop.permute.xlu0 %1235
      %1237 = vrot.lane.b32.xlu0 %v910, 8
      %v1238 = vpop.permute.xlu0 %1237
      %1239 = vrot.lane.b32.xlu0 %v922, 8
      %v1240 = vpop.permute.xlu0 %1239
      %1241 = vrot.lane.b32.xlu0 %v930, 8
      %v1242 = vpop.permute.xlu0 %1241
      %1243 = vrot.lane.b32.xlu0 %v942, 8
      %v1244 = vpop.permute.xlu0 %1243
      %1245 = vrot.lane.b32.xlu0 %v950, 8
      %v1246 = vpop.permute.xlu0 %1245
      %1247 = vrot.lane.b32.xlu0 %v962, 8
      %v1248 = vpop.permute.xlu0 %1247
      %1249 = vrot.lane.b32.xlu0 %v970, 8
      %v1250 = vpop.permute.xlu0 %1249
      %1251 = vrot.lane.b32.xlu0 %v982, 8
      %v1252 = vpop.permute.xlu0 %1251
      %1253 = vrot.lane.b32.xlu0 %v990, 8
      %v1254 = vpop.permute.xlu0 %1253
      %1255 = vrot.lane.b32.xlu0 %v1002, 8
      %v1256 = vpop.permute.xlu0 %1255
      %1257 = vrot.lane.b32.xlu0 %v1010, 8
      %v1258 = vpop.permute.xlu0 %1257
      %1259 = vrot.lane.b32.xlu0 %v1022, 8
      %v1260 = vpop.permute.xlu0 %1259
      %1261 = vrot.lane.b32.xlu0 %v1030, 8
      %v1262 = vpop.permute.xlu0 %1261
      %1263 = vrot.lane.b32.xlu0 %v1042, 8
      %v1264 = vpop.permute.xlu0 %1263
      %1265 = vrot.lane.b32.xlu0 %v1050, 8
      %v1266 = vpop.permute.xlu0 %1265
      %1267 = vrot.lane.b32.xlu0 %v1062, 8
      %v1268 = vpop.permute.xlu0 %1267
      %1269 = vrot.lane.b32.xlu0 %v1070, 8
      %v1270 = vpop.permute.xlu0 %1269
      %1271 = vrot.lane.b32.xlu0 %v1082, 8
      %v1272 = vpop.permute.xlu0 %1271
      %1273 = vrot.lane.b32.xlu0 %v1090, 8
      %v1274 = vpop.permute.xlu0 %1273
      %1275 = vrot.lane.b32.xlu0 %v1102, 8
      %v1276 = vpop.permute.xlu0 %1275
      %1277 = vrot.lane.b32.xlu0 %v1110, 8
      %v1278 = vpop.permute.xlu0 %1277
      %1279 = vrot.lane.b32.xlu0 %v1122, 8
      %v1280 = vpop.permute.xlu0 %1279
      %1281 = vrot.lane.b32.xlu0 %v1130, 8
      %v1282 = vpop.permute.xlu0 %1281
      %1283 = vrot.lane.b32.xlu0 %v1142, 8
      %v1284 = vpop.permute.xlu0 %1283
      %1285 = vrot.lane.b32.xlu0 %v1150, 8
      %v1286 = vpop.permute.xlu0 %1285
      %1287 = vrot.lane.b32.xlu0 %v1162, 8
      %v1288 = vpop.permute.xlu0 %1287
      %1289 = vrot.lane.b32.xlu0 %v1170, 8
      %v1290 = vpop.permute.xlu0 %1289
      %1291 = vrot.lane.b32.xlu0 %v1182, 8
      %v1292 = vpop.permute.xlu0 %1291
      %1293 = vrot.lane.b32.xlu0 %v1190, 8
      %v1294 = vpop.permute.xlu0 %1293
      %1295 = vrot.lane.b32.xlu0 %v1202, 8
      %v1296 = vpop.permute.xlu0 %1295
      %1297 = vrot.lane.b32.xlu0 %v1210, 8
      %v1298 = vpop.permute.xlu0 %1297
      %1299 = vrot.lane.b32.xlu0 %v1222, 8
      %v1300 = vpop.permute.xlu0 %1299
      %1301 = vrot.lane.b32.xlu0 %v1230, 8
      %v1302 = vpop.permute.xlu0 %1301
      %vm1303 = vcmask 1046528
      %v1304 = vrot.slane %v780, 1
      %v1305 = vrot.slane %v781, 1
      %v1306 = vsel %vm1303, %v1304, %v1305
      %v1307 = vrot.slane %v852, 1
      %v1308 = vsel %vm1303, %v1305, %v1307
      %v1309 = vrot.slane %v782, 1
      %v1310 = vrot.slane %v783, 1
      %v1311 = vsel %vm1303, %v1309, %v1310
      %v1312 = vrot.slane %v853, 1
      %v1313 = vsel %vm1303, %v1310, %v1312
      %v1314 = vrot.slane %v784, 1
      %v1315 = vrot.slane %v785, 1
      %v1316 = vsel %vm1303, %v1314, %v1315
      %v1317 = vrot.slane %v854, 1
      %v1318 = vsel %vm1303, %v1315, %v1317
      %v1319 = vrot.slane %v786, 1
      %v1320 = vrot.slane %v787, 1
      %v1321 = vsel %vm1303, %v1319, %v1320
      %v1322 = vrot.slane %v855, 1
      %v1323 = vsel %vm1303, %v1320, %v1322
      %v1324 = vrot.slane %v788, 1
      %v1325 = vrot.slane %v789, 1
      %v1326 = vsel %vm1303, %v1324, %v1325
      %v1327 = vrot.slane %v856, 1
      %v1328 = vsel %vm1303, %v1325, %v1327
      %v1329 = vrot.slane %v790, 1
      %v1330 = vrot.slane %v791, 1
      %v1331 = vsel %vm1303, %v1329, %v1330
      %v1332 = vrot.slane %v857, 1
      %v1333 = vsel %vm1303, %v1330, %v1332
      %v1334 = vrot.slane %v792, 1
      %v1335 = vrot.slane %v793, 1
      %v1336 = vsel %vm1303, %v1334, %v1335
      %v1337 = vrot.slane %v858, 1
      %v1338 = vsel %vm1303, %v1335, %v1337
      %v1339 = vrot.slane %v794, 1
      %v1340 = vrot.slane %v795, 1
      %v1341 = vsel %vm1303, %v1339, %v1340
      %v1342 = vrot.slane %v859, 1
      %v1343 = vsel %vm1303, %v1340, %v1342
      %v1344 = vrot.slane %v796, 1
      %v1345 = vrot.slane %v797, 1
      %v1346 = vsel %vm1303, %v1344, %v1345
      %v1347 = vrot.slane %v860, 1
      %v1348 = vsel %vm1303, %v1345, %v1347
      %v1349 = vrot.slane %v798, 1
      %v1350 = vrot.slane %v799, 1
      %v1351 = vsel %vm1303, %v1349, %v1350
      %v1352 = vrot.slane %v861, 1
      %v1353 = vsel %vm1303, %v1350, %v1352
      %v1354 = vrot.slane %v800, 1
      %v1355 = vrot.slane %v801, 1
      %v1356 = vsel %vm1303, %v1354, %v1355
      %v1357 = vrot.slane %v862, 1
      %v1358 = vsel %vm1303, %v1355, %v1357
      %v1359 = vrot.slane %v802, 1
      %v1360 = vrot.slane %v803, 1
      %v1361 = vsel %vm1303, %v1359, %v1360
      %v1362 = vrot.slane %v863, 1
      %v1363 = vsel %vm1303, %v1360, %v1362
      %v1364 = vrot.slane %v804, 1
      %v1365 = vrot.slane %v805, 1
      %v1366 = vsel %vm1303, %v1364, %v1365
      %v1367 = vrot.slane %v864, 1
      %v1368 = vsel %vm1303, %v1365, %v1367
      %v1369 = vrot.slane %v806, 1
      %v1370 = vrot.slane %v807, 1
      %v1371 = vsel %vm1303, %v1369, %v1370
      %v1372 = vrot.slane %v865, 1
      %v1373 = vsel %vm1303, %v1370, %v1372
      %v1374 = vrot.slane %v808, 1
      %v1375 = vrot.slane %v809, 1
      %v1376 = vsel %vm1303, %v1374, %v1375
      %v1377 = vrot.slane %v866, 1
      %v1378 = vsel %vm1303, %v1375, %v1377
      %v1379 = vrot.slane %v810, 1
      %v1380 = vrot.slane %v811, 1
      %v1381 = vsel %vm1303, %v1379, %v1380
      %v1382 = vrot.slane %v867, 1
      %v1383 = vsel %vm1303, %v1380, %v1382
      %v1384 = vrot.slane %v812, 1
      %v1385 = vrot.slane %v813, 1
      %v1386 = vsel %vm1303, %v1384, %v1385
      %v1387 = vrot.slane %v868, 1
      %v1388 = vsel %vm1303, %v1385, %v1387
      %v1389 = vrot.slane %v814, 1
      %v1390 = vrot.slane %v815, 1
      %v1391 = vsel %vm1303, %v1389, %v1390
      %v1392 = vrot.slane %v869, 1
      %v1393 = vsel %vm1303, %v1390, %v1392
      %1394 = vrot.lane.b32.xlu0 %v1306, 16
      %v1395 = vpop.permute.xlu0 %1394
      %1396 = vrot.lane.b32.xlu0 %v1308, 16
      %v1397 = vpop.permute.xlu0 %1396
      %1398 = vrot.lane.b32.xlu0 %v1311, 16
      %v1399 = vpop.permute.xlu0 %1398
      %1400 = vrot.lane.b32.xlu0 %v1313, 16
      %v1401 = vpop.permute.xlu0 %1400
      %1402 = vrot.lane.b32.xlu0 %v1316, 16
      %v1403 = vpop.permute.xlu0 %1402
      %1404 = vrot.lane.b32.xlu0 %v1318, 16
      %v1405 = vpop.permute.xlu0 %1404
      %1406 = vrot.lane.b32.xlu0 %v1321, 16
      %v1407 = vpop.permute.xlu0 %1406
      %1408 = vrot.lane.b32.xlu0 %v1323, 16
      %v1409 = vpop.permute.xlu0 %1408
      %1410 = vrot.lane.b32.xlu0 %v1326, 16
      %v1411 = vpop.permute.xlu0 %1410
      %1412 = vrot.lane.b32.xlu0 %v1328, 16
      %v1413 = vpop.permute.xlu0 %1412
      %1414 = vrot.lane.b32.xlu0 %v1331, 16
      %v1415 = vpop.permute.xlu0 %1414
      %1416 = vrot.lane.b32.xlu0 %v1333, 16
      %v1417 = vpop.permute.xlu0 %1416
      %1418 = vrot.lane.b32.xlu0 %v1336, 16
      %v1419 = vpop.permute.xlu0 %1418
      %1420 = vrot.lane.b32.xlu0 %v1338, 16
      %v1421 = vpop.permute.xlu0 %1420
      %1422 = vrot.lane.b32.xlu0 %v1341, 16
      %v1423 = vpop.permute.xlu0 %1422
      %1424 = vrot.lane.b32.xlu0 %v1343, 16
      %v1425 = vpop.permute.xlu0 %1424
      %1426 = vrot.lane.b32.xlu0 %v1346, 16
      %v1427 = vpop.permute.xlu0 %1426
      %1428 = vrot.lane.b32.xlu0 %v1348, 16
      %v1429 = vpop.permute.xlu0 %1428
      %1430 = vrot.lane.b32.xlu0 %v1351, 16
      %v1431 = vpop.permute.xlu0 %1430
      %1432 = vrot.lane.b32.xlu0 %v1353, 16
      %v1433 = vpop.permute.xlu0 %1432
      %1434 = vrot.lane.b32.xlu0 %v1356, 16
      %v1435 = vpop.permute.xlu0 %1434
      %1436 = vrot.lane.b32.xlu0 %v1358, 16
      %v1437 = vpop.permute.xlu0 %1436
      %1438 = vrot.lane.b32.xlu0 %v1361, 16
      %v1439 = vpop.permute.xlu0 %1438
      %1440 = vrot.lane.b32.xlu0 %v1363, 16
      %v1441 = vpop.permute.xlu0 %1440
      %1442 = vrot.lane.b32.xlu0 %v1366, 16
      %v1443 = vpop.permute.xlu0 %1442
      %1444 = vrot.lane.b32.xlu0 %v1368, 16
      %v1445 = vpop.permute.xlu0 %1444
      %1446 = vrot.lane.b32.xlu0 %v1371, 16
      %v1447 = vpop.permute.xlu0 %1446
      %1448 = vrot.lane.b32.xlu0 %v1373, 16
      %v1449 = vpop.permute.xlu0 %1448
      %1450 = vrot.lane.b32.xlu0 %v1376, 16
      %v1451 = vpop.permute.xlu0 %1450
      %1452 = vrot.lane.b32.xlu0 %v1378, 16
      %v1453 = vpop.permute.xlu0 %1452
      %1454 = vrot.lane.b32.xlu0 %v1381, 16
      %v1455 = vpop.permute.xlu0 %1454
      %1456 = vrot.lane.b32.xlu0 %v1383, 16
      %v1457 = vpop.permute.xlu0 %1456
      %1458 = vrot.lane.b32.xlu0 %v1386, 16
      %v1459 = vpop.permute.xlu0 %1458
      %1460 = vrot.lane.b32.xlu0 %v1388, 16
      %v1461 = vpop.permute.xlu0 %1460
      %1462 = vrot.lane.b32.xlu0 %v1391, 16
      %v1463 = vpop.permute.xlu0 %1462
      %1464 = vrot.lane.b32.xlu0 %v1393, 16
      %v1465 = vpop.permute.xlu0 %1464
      %vm1466 = vcmask 64512
      %v1468 = vsel %vm1466, %v780, %v1232
      %v1470 = vsel %vm1466, %v781, %v1234
      %v1472 = vsel %vm1466, %v782, %v1236
      %v1474 = vsel %vm1466, %v783, %v1238
      %v1476 = vsel %vm1466, %v784, %v1240
      %v1478 = vsel %vm1466, %v785, %v1242
      %v1480 = vsel %vm1466, %v786, %v1244
      %v1482 = vsel %vm1466, %v787, %v1246
      %v1484 = vsel %vm1466, %v788, %v1248
      %v1486 = vsel %vm1466, %v789, %v1250
      %v1488 = vsel %vm1466, %v790, %v1252
      %v1490 = vsel %vm1466, %v791, %v1254
      %v1492 = vsel %vm1466, %v792, %v1256
      %v1494 = vsel %vm1466, %v793, %v1258
      %v1496 = vsel %vm1466, %v794, %v1260
      %v1498 = vsel %vm1466, %v795, %v1262
      %v1500 = vsel %vm1466, %v796, %v1264
      %v1502 = vsel %vm1466, %v797, %v1266
      %v1504 = vsel %vm1466, %v798, %v1268
      %v1506 = vsel %vm1466, %v799, %v1270
      %v1508 = vsel %vm1466, %v800, %v1272
      %v1510 = vsel %vm1466, %v801, %v1274
      %v1512 = vsel %vm1466, %v802, %v1276
      %v1514 = vsel %vm1466, %v803, %v1278
      %v1516 = vsel %vm1466, %v804, %v1280
      %v1518 = vsel %vm1466, %v805, %v1282
      %v1520 = vsel %vm1466, %v806, %v1284
      %v1522 = vsel %vm1466, %v807, %v1286
      %v1524 = vsel %vm1466, %v808, %v1288
      %v1526 = vsel %vm1466, %v809, %v1290
      %v1528 = vsel %vm1466, %v810, %v1292
      %v1530 = vsel %vm1466, %v811, %v1294
      %v1532 = vsel %vm1466, %v812, %v1296
      %v1534 = vsel %vm1466, %v813, %v1298
      %v1536 = vsel %vm1466, %v814, %v1300
      %v1538 = vsel %vm1466, %v815, %v1302
      %vm1539 = vcmask 130048
      %v1541 = vsel %vm1539, %v1468, %v1395
      %v1543 = vsel %vm1539, %v1470, %v1397
      %v1545 = vsel %vm1539, %v1472, %v1399
      %v1547 = vsel %vm1539, %v1474, %v1401
      %v1549 = vsel %vm1539, %v1476, %v1403
      %v1551 = vsel %vm1539, %v1478, %v1405
      %v1553 = vsel %vm1539, %v1480, %v1407
      %v1555 = vsel %vm1539, %v1482, %v1409
      %v1557 = vsel %vm1539, %v1484, %v1411
      %v1559 = vsel %vm1539, %v1486, %v1413
      %v1561 = vsel %vm1539, %v1488, %v1415
      %v1563 = vsel %vm1539, %v1490, %v1417
      %v1565 = vsel %vm1539, %v1492, %v1419
      %v1567 = vsel %vm1539, %v1494, %v1421
      %v1569 = vsel %vm1539, %v1496, %v1423
      %v1571 = vsel %vm1539, %v1498, %v1425
      %v1573 = vsel %vm1539, %v1500, %v1427
      %v1575 = vsel %vm1539, %v1502, %v1429
      %v1577 = vsel %vm1539, %v1504, %v1431
      %v1579 = vsel %vm1539, %v1506, %v1433
      %v1581 = vsel %vm1539, %v1508, %v1435
      %v1583 = vsel %vm1539, %v1510, %v1437
      %v1585 = vsel %vm1539, %v1512, %v1439
      %v1587 = vsel %vm1539, %v1514, %v1441
      %v1589 = vsel %vm1539, %v1516, %v1443
      %v1591 = vsel %vm1539, %v1518, %v1445
      %v1593 = vsel %vm1539, %v1520, %v1447
      %v1595 = vsel %vm1539, %v1522, %v1449
      %v1597 = vsel %vm1539, %v1524, %v1451
      %v1599 = vsel %vm1539, %v1526, %v1453
      %v1601 = vsel %vm1539, %v1528, %v1455
      %v1603 = vsel %vm1539, %v1530, %v1457
      %v1605 = vsel %vm1539, %v1532, %v1459
      %v1607 = vsel %vm1539, %v1534, %v1461
      %v1609 = vsel %vm1539, %v1536, %v1463
      %v1611 = vsel %vm1539, %v1538, %v1465
      %v1612 = vld [vmem:[%s4] sm:$0xf]
      %v1613 = vld [vmem:[%s4 + $0x4] sm:$0xf]
      %v1614 = vld [vmem:[%s4 + $0x8] sm:$0xf]
      %s1615 = scalar_lea.vmem %s4, 12
      %v1616 = vld [vmem:[%s1615] sm:$0xf]
      %v1617 = vld [vmem:[%s1615 + $0x4] sm:$0xf]
      %v1618 = vld [vmem:[%s1615 + $0x8] sm:$0xf]
      %v1622 = vunpack.c.l.b16 %v1616
      %v1623 = vunpack.c.l.b16 %v1617
      %v1624 = vunpack.c.l.b16 %v1618
      %v1625 = vpack.c.b16 %v1623, %v1622
      %v1626 = vpack.c.b16 %v1624, %v1624
      %vm1628 = vcmask 195584
      %v1629 = vsel %vm1628, %v1545, 0
      %v1631 = vsel %vm1628, %v1547, 0
      %v1633 = vsel %vm1628, %v1549, 0
      %v1635 = vsel %vm1628, %v1551, 0
      %v1637 = vsel %vm1628, %v1553, 0
      %v1639 = vsel %vm1628, %v1555, 0
      %v1641 = vsel %vm1628, %v1557, 0
      %v1643 = vsel %vm1628, %v1559, 0
      %v1645 = vsel %vm1628, %v1561, 0
      %v1647 = vsel %vm1628, %v1563, 0
      %v1649 = vsel %vm1628, %v1565, 0
      %v1651 = vsel %vm1628, %v1567, 0
      %v1653 = vsel %vm1628, %v1569, 0
      %v1655 = vsel %vm1628, %v1571, 0
      %v1657 = vsel %vm1628, %v1573, 0
      %v1659 = vsel %vm1628, %v1575, 0
      %v1661 = vsel %vm1628, %v1577, 0
      %v1663 = vsel %vm1628, %v1579, 0
      %v1665 = vsel %vm1628, %v1581, 0
      %v1667 = vsel %vm1628, %v1583, 0
      %v1669 = vsel %vm1628, %v1585, 0
      %v1671 = vsel %vm1628, %v1587, 0
      %v1673 = vsel %vm1628, %v1589, 0
      %v1675 = vsel %vm1628, %v1591, 0
      %v1677 = vsel %vm1628, %v1593, 0
      %v1679 = vsel %vm1628, %v1595, 0
      %v1681 = vsel %vm1628, %v1597, 0
      %v1683 = vsel %vm1628, %v1599, 0
      %v1685 = vsel %vm1628, %v1601, 0
      %v1687 = vsel %vm1628, %v1603, 0
      %v1689 = vsel %vm1628, %v1605, 0
      %v1691 = vsel %vm1628, %v1607, 0
      %vm1693 = vcmask 1043456
      %v1695 = vsel %vm1693, %v1626, 0
      %1697 = vmatprep.subr.bf16.mxu0 0
      %1698 = vmatpush1.bf16.msra.mxu0 %v1625
      %1699 = vmatprep.subr.bf16.mxu0 0
      %1700 = vmatpush1.bf16.msra.mxu0 %v1695
      %1701 = vmatprep.subr.bf16.mxu0 0
      %1702 = vmatpush1.bf16.msra.mxu0 0
      %1703 = vmatprep.subr.bf16.mxu0 0
      %1704 = vmatpush1.bf16.msra.mxu0 0
      %1705 = vmatprep.subr.bf16.mxu0 0
      %1706 = vmatpush1.bf16.msra.mxu0 0
      %1707 = vmatprep.subr.bf16.mxu0 0
      %1708 = vmatpush1.bf16.msra.mxu0 0
      %1709 = vmatprep.subr.bf16.mxu0 0
      %1710 = vmatpush1.bf16.msra.mxu0 0
      %1711 = vmatprep.subr.bf16.mxu0 0
      %1712 = vmatpush1.bf16.msra.mxu0 0
      %1713 = vmatprep.subr.bf16.mxu0 0
      %1714 = vmatpush1.bf16.msra.mxu0 0
      %1715 = vmatprep.subr.bf16.mxu0 0
      %1716 = vmatpush1.bf16.msra.mxu0 0
      %1717 = vmatprep.subr.bf16.mxu0 0
      %1718 = vmatpush1.bf16.msra.mxu0 0
      %1719 = vmatprep.subr.bf16.mxu0 0
      %1720 = vmatpush1.bf16.msra.mxu0 0
      %1721 = vmatprep.subr.bf16.mxu0 0
      %1722 = vmatpush1.bf16.msra.mxu0 0
      %1723 = vmatprep.subr.bf16.mxu0 0
      %1724 = vmatpush1.bf16.msra.mxu0 0
      %1725 = vmatprep.subr.bf16.mxu0 0
      %1726 = vmatpush1.bf16.msra.mxu0 0
      %1727 = vmatprep.subr.bf16.mxu0 0
      %1728 = vmatpush1.bf16.msra.mxu0 0
      %1729 = vmatprep.mubr.bf16.mxu0 0
      %1730 = vmatmul.mubr.bf16.gmra.mrb[0].mxu0 %v1629
      %v1731 = vpop.f32.mrb[0].mxu0
      %v1732 = vadd.f32 0.0, %v1731
      %v1733 = vpop.f32.mrb[0].mxu0
      %v1734 = vpop.f32.mrb[0].mxu0
      %v1735 = vadd.f32 0.0, %v1734
      %v1736 = vpop.f32.mrb[0].mxu0
      %1737 = vmatprep.mubr.bf16.mxu0 0
      %1738 = vmatmul.mubr.bf16.gmra.mrb[0].mxu0 %v1631
      %v1739 = vpop.f32.mrb[0].mxu0
      %v1740 = vadd.f32 0.0, %v1739
      %v1741 = vpop.f32.mrb[0].mxu0
      %v1742 = vpop.f32.mrb[0].mxu0
      %v1743 = vadd.f32 0.0, %v1742
      %v1744 = vpop.f32.mrb[0].mxu0
      %1745 = vmatprep.mubr.bf16.mxu0 0
      %1746 = vmatmul.mubr.bf16.gmra.mrb[0].mxu0 %v1633
      %v1747 = vpop.f32.mrb[0].mxu0
      %v1748 = vadd.f32 0.0, %v1747
      %v1749 = vpop.f32.mrb[0].mxu0
      %v1750 = vpop.f32.mrb[0].mxu0
      %v1751 = vadd.f32 0.0, %v1750
      %v1752 = vpop.f32.mrb[0].mxu0
      %1753 = vmatprep.mubr.bf16.mxu0 0
      %1754 = vmatmul.mubr.bf16.gmra.mrb[0].mxu0 %v1635
      %v1755 = vpop.f32.mrb[0].mxu0
      %v1756 = vadd.f32 0.0, %v1755
      %v1757 = vpop.f32.mrb[0].mxu0
      %v1758 = vpop.f32.mrb[0].mxu0
      %v1759 = vadd.f32 0.0, %v1758
      %v1760 = vpop.f32.mrb[0].mxu0
      %1761 = vmatprep.mubr.bf16.mxu0 0
      %1762 = vmatmul.mubr.bf16.gmra.mrb[0].mxu0 %v1637
      %v1763 = vpop.f32.mrb[0].mxu0
      %v1764 = vadd.f32 0.0, %v1763
      %v1765 = vpop.f32.mrb[0].mxu0
      %v1766 = vpop.f32.mrb[0].mxu0
      %v1767 = vadd.f32 0.0, %v1766
      %v1768 = vpop.f32.mrb[0].mxu0
      %1769 = vmatprep.mubr.bf16.mxu0 0
      %1770 = vmatmul.mubr.bf16.gmra.mrb[0].mxu0 %v1639
      %v1771 = vpop.f32.mrb[0].mxu0
      %v1772 = vadd.f32 0.0, %v1771
      %v1773 = vpop.f32.mrb[0].mxu0
      %v1774 = vpop.f32.mrb[0].mxu0
      %v1775 = vadd.f32 0.0, %v1774
      %v1776 = vpop.f32.mrb[0].mxu0
      %1777 = vmatprep.mubr.bf16.mxu0 0
      %1778 = vmatmul.mubr.bf16.gmra.mrb[0].mxu0 %v1641
      %v1779 = vpop.f32.mrb[0].mxu0
      %v1780 = vadd.f32 0.0, %v1779
      %v1781 = vpop.f32.mrb[0].mxu0
      %v1782 = vpop.f32.mrb[0].mxu0
      %v1783 = vadd.f32 0.0, %v1782
      %v1784 = vpop.f32.mrb[0].mxu0
      %1785 = vmatprep.mubr.bf16.mxu0 0
      %1786 = vmatmul.mubr.bf16.gmra.mrb[0].mxu0 %v1643
      %v1787 = vpop.f32.mrb[0].mxu0
      %v1788 = vadd.f32 0.0, %v1787
      %v1789 = vpop.f32.mrb[0].mxu0
      %v1790 = vpop.f32.mrb[0].mxu0
      %v1791 = vadd.f32 0.0, %v1790
      %v1792 = vpop.f32.mrb[0].mxu0
      %1793 = vmatprep.mubr.bf16.mxu0 0
      %1794 = vmatmul.mubr.bf16.gmra.mrb[0].mxu0 %v1645
      %v1795 = vpop.f32.mrb[0].mxu0
      %v1796 = vadd.f32 0.0, %v1795
      %v1797 = vpop.f32.mrb[0].mxu0
      %v1798 = vpop.f32.mrb[0].mxu0
      %v1799 = vadd.f32 0.0, %v1798
      %v1800 = vpop.f32.mrb[0].mxu0
      %1801 = vmatprep.mubr.bf16.mxu0 0
      %1802 = vmatmul.mubr.bf16.gmra.mrb[0].mxu0 %v1647
      %v1803 = vpop.f32.mrb[0].mxu0
      %v1804 = vadd.f32 0.0, %v1803
      %v1805 = vpop.f32.mrb[0].mxu0
      %v1806 = vpop.f32.mrb[0].mxu0
      %v1807 = vadd.f32 0.0, %v1806
      %v1808 = vpop.f32.mrb[0].mxu0
      %1809 = vmatprep.mubr.bf16.mxu0 0
      %1810 = vmatmul.mubr.bf16.gmra.mrb[0].mxu0 %v1649
      %v1811 = vpop.f32.mrb[0].mxu0
      %v1812 = vadd.f32 0.0, %v1811
      %v1813 = vpop.f32.mrb[0].mxu0
      %v1814 = vpop.f32.mrb[0].mxu0
      %v1815 = vadd.f32 0.0, %v1814
      %v1816 = vpop.f32.mrb[0].mxu0
      %1817 = vmatprep.mubr.bf16.mxu0 0
      %1818 = vmatmul.mubr.bf16.gmra.mrb[0].mxu0 %v1651
      %v1819 = vpop.f32.mrb[0].mxu0
      %v1820 = vadd.f32 0.0, %v1819
      %v1821 = vpop.f32.mrb[0].mxu0
      %v1822 = vpop.f32.mrb[0].mxu0
      %v1823 = vadd.f32 0.0, %v1822
      %v1824 = vpop.f32.mrb[0].mxu0
      %1825 = vmatprep.mubr.bf16.mxu0 0
      %1826 = vmatmul.mubr.bf16.gmra.mrb[0].mxu0 %v1653
      %v1827 = vpop.f32.mrb[0].mxu0
      %v1828 = vadd.f32 0.0, %v1827
      %v1829 = vpop.f32.mrb[0].mxu0
      %v1830 = vpop.f32.mrb[0].mxu0
      %v1831 = vadd.f32 0.0, %v1830
      %v1832 = vpop.f32.mrb[0].mxu0
      %1833 = vmatprep.mubr.bf16.mxu0 0
      %1834 = vmatmul.mubr.bf16.gmra.mrb[0].mxu0 %v1655
      %v1835 = vpop.f32.mrb[0].mxu0
      %v1836 = vadd.f32 0.0, %v1835
      %v1837 = vpop.f32.mrb[0].mxu0
      %v1838 = vpop.f32.mrb[0].mxu0
      %v1839 = vadd.f32 0.0, %v1838
      %v1840 = vpop.f32.mrb[0].mxu0
      %1841 = vmatprep.mubr.bf16.mxu0 0
      %1842 = vmatmul.mubr.bf16.gmra.mrb[0].mxu0 %v1657
      %v1843 = vpop.f32.mrb[0].mxu0
      %v1844 = vadd.f32 0.0, %v1843
      %v1845 = vpop.f32.mrb[0].mxu0
      %v1846 = vpop.f32.mrb[0].mxu0
      %v1847 = vadd.f32 0.0, %v1846
      %v1848 = vpop.f32.mrb[0].mxu0
      %1849 = vmatprep.mubr.bf16.mxu0 0
      %1850 = vmatmul.mubr.bf16.gmra.mrb[0].mxu0 %v1659
      %v1851 = vpop.f32.mrb[0].mxu0
      %v1852 = vadd.f32 0.0, %v1851
      %v1853 = vpop.f32.mrb[0].mxu0
      %v1854 = vpop.f32.mrb[0].mxu0
      %v1855 = vadd.f32 0.0, %v1854
      %v1856 = vpop.f32.mrb[0].mxu0
      %1857 = vmatprep.mubr.bf16.mxu0 0
      %1858 = vmatmul.mubr.bf16.gmra.mrb[0].mxu0 %v1661
      %v1859 = vpop.f32.mrb[0].mxu0
      %v1860 = vadd.f32 0.0, %v1859
      %v1861 = vpop.f32.mrb[0].mxu0
      %v1862 = vpop.f32.mrb[0].mxu0
      %v1863 = vadd.f32 0.0, %v1862
      %v1864 = vpop.f32.mrb[0].mxu0
      %1865 = vmatprep.mubr.bf16.mxu0 0
      %1866 = vmatmul.mubr.bf16.gmra.mrb[0].mxu0 %v1663
      %v1867 = vpop.f32.mrb[0].mxu0
      %v1868 = vadd.f32 0.0, %v1867
      %v1869 = vpop.f32.mrb[0].mxu0
      %v1870 = vpop.f32.mrb[0].mxu0
      %v1871 = vadd.f32 0.0, %v1870
      %v1872 = vpop.f32.mrb[0].mxu0
      %1873 = vmatprep.mubr.bf16.mxu0 0
      %1874 = vmatmul.mubr.bf16.gmra.mrb[0].mxu0 %v1665
      %v1875 = vpop.f32.mrb[0].mxu0
      %v1876 = vadd.f32 0.0, %v1875
      %v1877 = vpop.f32.mrb[0].mxu0
      %v1878 = vpop.f32.mrb[0].mxu0
      %v1879 = vadd.f32 0.0, %v1878
      %v1880 = vpop.f32.mrb[0].mxu0
      %1881 = vmatprep.mubr.bf16.mxu0 0
      %1882 = vmatmul.mubr.bf16.gmra.mrb[0].mxu0 %v1667
      %v1883 = vpop.f32.mrb[0].mxu0
      %v1884 = vadd.f32 0.0, %v1883
      %v1885 = vpop.f32.mrb[0].mxu0
      %v1886 = vpop.f32.mrb[0].mxu0
      %v1887 = vadd.f32 0.0, %v1886
      %v1888 = vpop.f32.mrb[0].mxu0
      %1889 = vmatprep.mubr.bf16.mxu0 0
      %1890 = vmatmul.mubr.bf16.gmra.mrb[0].mxu0 %v1669
      %v1891 = vpop.f32.mrb[0].mxu0
      %v1892 = vadd.f32 0.0, %v1891
      %v1893 = vpop.f32.mrb[0].mxu0
      %v1894 = vpop.f32.mrb[0].mxu0
      %v1895 = vadd.f32 0.0, %v1894
      %v1896 = vpop.f32.mrb[0].mxu0
      %1897 = vmatprep.mubr.bf16.mxu0 0
      %1898 = vmatmul.mubr.bf16.gmra.mrb[0].mxu0 %v1671
      %v1899 = vpop.f32.mrb[0].mxu0
      %v1900 = vadd.f32 0.0, %v1899
      %v1901 = vpop.f32.mrb[0].mxu0
      %v1902 = vpop.f32.mrb[0].mxu0
      %v1903 = vadd.f32 0.0, %v1902
      %v1904 = vpop.f32.mrb[0].mxu0
      %1905 = vmatprep.mubr.bf16.mxu0 0
      %1906 = vmatmul.mubr.bf16.gmra.mrb[0].mxu0 %v1673
      %v1907 = vpop.f32.mrb[0].mxu0
      %v1908 = vadd.f32 0.0, %v1907
      %v1909 = vpop.f32.mrb[0].mxu0
      %v1910 = vpop.f32.mrb[0].mxu0
      %v1911 = vadd.f32 0.0, %v1910
      %v1912 = vpop.f32.mrb[0].mxu0
      %1913 = vmatprep.mubr.bf16.mxu0 0
      %1914 = vmatmul.mubr.bf16.gmra.mrb[0].mxu0 %v1675
      %v1915 = vpop.f32.mrb[0].mxu0
      %v1916 = vadd.f32 0.0, %v1915
      %v1917 = vpop.f32.mrb[0].mxu0
      %v1918 = vpop.f32.mrb[0].mxu0
      %v1919 = vadd.f32 0.0, %v1918
      %v1920 = vpop.f32.mrb[0].mxu0
      %1921 = vmatprep.mubr.bf16.mxu0 0
      %1922 = vmatmul.mubr.bf16.gmra.mrb[0].mxu0 %v1677
      %v1923 = vpop.f32.mrb[0].mxu0
      %v1924 = vadd.f32 0.0, %v1923
      %v1925 = vpop.f32.mrb[0].mxu0
      %v1926 = vpop.f32.mrb[0].mxu0
      %v1927 = vadd.f32 0.0, %v1926
      %v1928 = vpop.f32.mrb[0].mxu0
      %1929 = vmatprep.mubr.bf16.mxu0 0
      %1930 = vmatmul.mubr.bf16.gmra.mrb[0].mxu0 %v1679
      %v1931 = vpop.f32.mrb[0].mxu0
      %v1932 = vadd.f32 0.0, %v1931
      %v1933 = vpop.f32.mrb[0].mxu0
      %v1934 = vpop.f32.mrb[0].mxu0
      %v1935 = vadd.f32 0.0, %v1934
      %v1936 = vpop.f32.mrb[0].mxu0
      %1937 = vmatprep.mubr.bf16.mxu0 0
      %1938 = vmatmul.mubr.bf16.gmra.mrb[0].mxu0 %v1681
      %v1939 = vpop.f32.mrb[0].mxu0
      %v1940 = vadd.f32 0.0, %v1939
      %v1941 = vpop.f32.mrb[0].mxu0
      %v1942 = vpop.f32.mrb[0].mxu0
      %v1943 = vadd.f32 0.0, %v1942
      %v1944 = vpop.f32.mrb[0].mxu0
      %1945 = vmatprep.mubr.bf16.mxu0 0
      %1946 = vmatmul.mubr.bf16.gmra.mrb[0].mxu0 %v1683
      %v1947 = vpop.f32.mrb[0].mxu0
      %v1948 = vadd.f32 0.0, %v1947
      %v1949 = vpop.f32.mrb[0].mxu0
      %v1950 = vpop.f32.mrb[0].mxu0
      %v1951 = vadd.f32 0.0, %v1950
      %v1952 = vpop.f32.mrb[0].mxu0
      %1953 = vmatprep.mubr.bf16.mxu0 0
      %1954 = vmatmul.mubr.bf16.gmra.mrb[0].mxu0 %v1685
      %v1955 = vpop.f32.mrb[0].mxu0
      %v1956 = vadd.f32 0.0, %v1955
      %v1957 = vpop.f32.mrb[0].mxu0
      %v1958 = vpop.f32.mrb[0].mxu0
      %v1959 = vadd.f32 0.0, %v1958
      %v1960 = vpop.f32.mrb[0].mxu0
      %1961 = vmatprep.mubr.bf16.mxu0 0
      %1962 = vmatmul.mubr.bf16.gmra.mrb[0].mxu0 %v1687
      %v1963 = vpop.f32.mrb[0].mxu0
      %v1964 = vadd.f32 0.0, %v1963
      %v1965 = vpop.f32.mrb[0].mxu0
      %v1966 = vpop.f32.mrb[0].mxu0
      %v1967 = vadd.f32 0.0, %v1966
      %v1968 = vpop.f32.mrb[0].mxu0
      %1969 = vmatprep.mubr.bf16.mxu0 0
      %1970 = vmatmul.mubr.bf16.gmra.mrb[0].mxu0 %v1689
      %v1971 = vpop.f32.mrb[0].mxu0
      %v1972 = vadd.f32 0.0, %v1971
      %v1973 = vpop.f32.mrb[0].mxu0
      %v1974 = vpop.f32.mrb[0].mxu0
      %v1975 = vadd.f32 0.0, %v1974
      %v1976 = vpop.f32.mrb[0].mxu0
      %1977 = vmatprep.mubr.bf16.mxu0 0
      %1978 = vmatmul.mubr.bf16.gmra.mrb[0].mxu0 %v1691
      %v1979 = vpop.f32.mrb[0].mxu0
      %v1980 = vadd.f32 0.0, %v1979
      %v1981 = vpop.f32.mrb[0].mxu0
      %v1982 = vpop.f32.mrb[0].mxu0
      %v1983 = vadd.f32 0.0, %v1982
      %v1984 = vpop.f32.mrb[0].mxu0
      %1985 = vdwg.mxu0
      %v1989 = vunpack.c.l.b16 %v1612
      %v1990 = vunpack.c.l.b16 %v1613
      %v1991 = vunpack.c.l.b16 %v1614
      %v1992 = vpack.c.b16 %v1990, %v1989
      %v1993 = vpack.c.b16 %v1991, %v1991
      %v1995 = vsel %vm1628, %v1541, 0
      %v1997 = vsel %vm1628, %v1543, 0
      %v2000 = vsel %vm1693, %v1993, 0
      %2002 = vmatprep.subr.bf16.mxu0 0
      %2003 = vmatpush1.bf16.msra.mxu0 %v1992
      %2004 = vmatprep.subr.bf16.mxu0 0
      %2005 = vmatpush1.bf16.msra.mxu0 %v2000
      %2006 = vmatprep.subr.bf16.mxu0 0
      %2007 = vmatpush1.bf16.msra.mxu0 0
      %2008 = vmatprep.subr.bf16.mxu0 0
      %2009 = vmatpush1.bf16.msra.mxu0 0
      %2010 = vmatprep.subr.bf16.mxu0 0
      %2011 = vmatpush1.bf16.msra.mxu0 0
      %2012 = vmatprep.subr.bf16.mxu0 0
      %2013 = vmatpush1.bf16.msra.mxu0 0
      %2014 = vmatprep.subr.bf16.mxu0 0
      %2015 = vmatpush1.bf16.msra.mxu0 0
      %2016 = vmatprep.subr.bf16.mxu0 0
      %2017 = vmatpush1.bf16.msra.mxu0 0
      %2018 = vmatprep.subr.bf16.mxu0 0
      %2019 = vmatpush1.bf16.msra.mxu0 0
      %2020 = vmatprep.subr.bf16.mxu0 0
      %2021 = vmatpush1.bf16.msra.mxu0 0
      %2022 = vmatprep.subr.bf16.mxu0 0
      %2023 = vmatpush1.bf16.msra.mxu0 0
      %2024 = vmatprep.subr.bf16.mxu0 0
      %2025 = vmatpush1.bf16.msra.mxu0 0
      %2026 = vmatprep.subr.bf16.mxu0 0
      %2027 = vmatpush1.bf16.msra.mxu0 0
      %2028 = vmatprep.subr.bf16.mxu0 0
      %2029 = vmatpush1.bf16.msra.mxu0 0
      %2030 = vmatprep.subr.bf16.mxu0 0
      %2031 = vmatpush1.bf16.msra.mxu0 0
      %2032 = vmatprep.subr.bf16.mxu0 0
      %2033 = vmatpush1.bf16.msra.mxu0 0
      %2034 = vmatprep.mubr.bf16.mxu0 0
      %2035 = vmatmul.mubr.bf16.gmra.mrb[0].mxu0 %v1995
      %v2036 = vpop.f32.mrb[0].mxu0
      %v2037 = vadd.f32 %v1732, %v2036
      %v2038 = vpop.f32.mrb[0].mxu0
      %v2039 = vpop.f32.mrb[0].mxu0
      %v2040 = vadd.f32 %v1735, %v2039
      %v2041 = vpop.f32.mrb[0].mxu0
      %2042 = vmatprep.mubr.bf16.mxu0 0
      %2043 = vmatmul.mubr.bf16.gmra.mrb[0].mxu0 %v1997
      %v2044 = vpop.f32.mrb[0].mxu0
      %v2045 = vadd.f32 %v1740, %v2044
      %v2046 = vpop.f32.mrb[0].mxu0
      %v2047 = vpop.f32.mrb[0].mxu0
      %v2048 = vadd.f32 %v1743, %v2047
      %v2049 = vpop.f32.mrb[0].mxu0
      %2050 = vmatprep.mubr.bf16.mxu0 0
      %2051 = vmatmul.mubr.bf16.gmra.mrb[0].mxu0 %v1629
      %v2052 = vpop.f32.mrb[0].mxu0
      %v2053 = vadd.f32 %v1748, %v2052
      %v2054 = vpop.f32.mrb[0].mxu0
      %v2055 = vpop.f32.mrb[0].mxu0
      %v2056 = vadd.f32 %v1751, %v2055
      %v2057 = vpop.f32.mrb[0].mxu0
      %2058 = vmatprep.mubr.bf16.mxu0 0
      %2059 = vmatmul.mubr.bf16.gmra.mrb[0].mxu0 %v1631
      %v2060 = vpop.f32.mrb[0].mxu0
      %v2061 = vadd.f32 %v1756, %v2060
      %v2062 = vpop.f32.mrb[0].mxu0
      %v2063 = vpop.f32.mrb[0].mxu0
      %v2064 = vadd.f32 %v1759, %v2063
      %v2065 = vpop.f32.mrb[0].mxu0
      %2066 = vmatprep.mubr.bf16.mxu0 0
      %2067 = vmatmul.mubr.bf16.gmra.mrb[0].mxu0 %v1633
      %v2068 = vpop.f32.mrb[0].mxu0
      %v2069 = vadd.f32 %v1764, %v2068
      %v2070 = vpop.f32.mrb[0].mxu0
      %v2071 = vpop.f32.mrb[0].mxu0
      %v2072 = vadd.f32 %v1767, %v2071
      %v2073 = vpop.f32.mrb[0].mxu0
      %2074 = vmatprep.mubr.bf16.mxu0 0
      %2075 = vmatmul.mubr.bf16.gmra.mrb[0].mxu0 %v1635
      %v2076 = vpop.f32.mrb[0].mxu0
      %v2077 = vadd.f32 %v1772, %v2076
      %v2078 = vpop.f32.mrb[0].mxu0
      %v2079 = vpop.f32.mrb[0].mxu0
      %v2080 = vadd.f32 %v1775, %v2079
      %v2081 = vpop.f32.mrb[0].mxu0
      %2082 = vmatprep.mubr.bf16.mxu0 0
      %2083 = vmatmul.mubr.bf16.gmra.mrb[0].mxu0 %v1637
      %v2084 = vpop.f32.mrb[0].mxu0
      %v2085 = vadd.f32 %v1780, %v2084
      %v2086 = vpop.f32.mrb[0].mxu0
      %v2087 = vpop.f32.mrb[0].mxu0
      %v2088 = vadd.f32 %v1783, %v2087
      %v2089 = vpop.f32.mrb[0].mxu0
      %2090 = vmatprep.mubr.bf16.mxu0 0
      %2091 = vmatmul.mubr.bf16.gmra.mrb[0].mxu0 %v1639
      %v2092 = vpop.f32.mrb[0].mxu0
      %v2093 = vadd.f32 %v1788, %v2092
      %v2094 = vpop.f32.mrb[0].mxu0
      %v2095 = vpop.f32.mrb[0].mxu0
      %v2096 = vadd.f32 %v1791, %v2095
      %v2097 = vpop.f32.mrb[0].mxu0
      %2098 = vmatprep.mubr.bf16.mxu0 0
      %2099 = vmatmul.mubr.bf16.gmra.mrb[0].mxu0 %v1641
      %v2100 = vpop.f32.mrb[0].mxu0
      %v2101 = vadd.f32 %v1796, %v2100
      %v2102 = vpop.f32.mrb[0].mxu0
      %v2103 = vpop.f32.mrb[0].mxu0
      %v2104 = vadd.f32 %v1799, %v2103
      %v2105 = vpop.f32.mrb[0].mxu0
      %2106 = vmatprep.mubr.bf16.mxu0 0
      %2107 = vmatmul.mubr.bf16.gmra.mrb[0].mxu0 %v1643
      %v2108 = vpop.f32.mrb[0].mxu0
      %v2109 = vadd.f32 %v1804, %v2108
      %v2110 = vpop.f32.mrb[0].mxu0
      %v2111 = vpop.f32.mrb[0].mxu0
      %v2112 = vadd.f32 %v1807, %v2111
      %v2113 = vpop.f32.mrb[0].mxu0
      %2114 = vmatprep.mubr.bf16.mxu0 0
      %2115 = vmatmul.mubr.bf16.gmra.mrb[0].mxu0 %v1645
      %v2116 = vpop.f32.mrb[0].mxu0
      %v2117 = vadd.f32 %v1812, %v2116
      %v2118 = vpop.f32.mrb[0].mxu0
      %v2119 = vpop.f32.mrb[0].mxu0
      %v2120 = vadd.f32 %v1815, %v2119
      %v2121 = vpop.f32.mrb[0].mxu0
      %2122 = vmatprep.mubr.bf16.mxu0 0
      %2123 = vmatmul.mubr.bf16.gmra.mrb[0].mxu0 %v1647
      %v2124 = vpop.f32.mrb[0].mxu0
      %v2125 = vadd.f32 %v1820, %v2124
      %v2126 = vpop.f32.mrb[0].mxu0
      %v2127 = vpop.f32.mrb[0].mxu0
      %v2128 = vadd.f32 %v1823, %v2127
      %v2129 = vpop.f32.mrb[0].mxu0
      %2130 = vmatprep.mubr.bf16.mxu0 0
      %2131 = vmatmul.mubr.bf16.gmra.mrb[0].mxu0 %v1649
      %v2132 = vpop.f32.mrb[0].mxu0
      %v2133 = vadd.f32 %v1828, %v2132
      %v2134 = vpop.f32.mrb[0].mxu0
      %v2135 = vpop.f32.mrb[0].mxu0
      %v2136 = vadd.f32 %v1831, %v2135
      %v2137 = vpop.f32.mrb[0].mxu0
      %2138 = vmatprep.mubr.bf16.mxu0 0
      %2139 = vmatmul.mubr.bf16.gmra.mrb[0].mxu0 %v1651
      %v2140 = vpop.f32.mrb[0].mxu0
      %v2141 = vadd.f32 %v1836, %v2140
      %v2142 = vpop.f32.mrb[0].mxu0
      %v2143 = vpop.f32.mrb[0].mxu0
      %v2144 = vadd.f32 %v1839, %v2143
      %v2145 = vpop.f32.mrb[0].mxu0
      %2146 = vmatprep.mubr.bf16.mxu0 0
      %2147 = vmatmul.mubr.bf16.gmra.mrb[0].mxu0 %v1653
      %v2148 = vpop.f32.mrb[0].mxu0
      %v2149 = vadd.f32 %v1844, %v2148
      %v2150 = vpop.f32.mrb[0].mxu0
      %v2151 = vpop.f32.mrb[0].mxu0
      %v2152 = vadd.f32 %v1847, %v2151
      %v2153 = vpop.f32.mrb[0].mxu0
      %2154 = vmatprep.mubr.bf16.mxu0 0
      %2155 = vmatmul.mubr.bf16.gmra.mrb[0].mxu0 %v1655
      %v2156 = vpop.f32.mrb[0].mxu0
      %v2157 = vadd.f32 %v1852, %v2156
      %v2158 = vpop.f32.mrb[0].mxu0
      %v2159 = vpop.f32.mrb[0].mxu0
      %v2160 = vadd.f32 %v1855, %v2159
      %v2161 = vpop.f32.mrb[0].mxu0
      %2162 = vmatprep.mubr.bf16.mxu0 0
      %2163 = vmatmul.mubr.bf16.gmra.mrb[0].mxu0 %v1657
      %v2164 = vpop.f32.mrb[0].mxu0
      %v2165 = vadd.f32 %v1860, %v2164
      %v2166 = vpop.f32.mrb[0].mxu0
      %v2167 = vpop.f32.mrb[0].mxu0
      %v2168 = vadd.f32 %v1863, %v2167
      %v2169 = vpop.f32.mrb[0].mxu0
      %2170 = vmatprep.mubr.bf16.mxu0 0
      %2171 = vmatmul.mubr.bf16.gmra.mrb[0].mxu0 %v1659
      %v2172 = vpop.f32.mrb[0].mxu0
      %v2173 = vadd.f32 %v1868, %v2172
      %v2174 = vpop.f32.mrb[0].mxu0
      %v2175 = vpop.f32.mrb[0].mxu0
      %v2176 = vadd.f32 %v1871, %v2175
      %v2177 = vpop.f32.mrb[0].mxu0
      %2178 = vmatprep.mubr.bf16.mxu0 0
      %2179 = vmatmul.mubr.bf16.gmra.mrb[0].mxu0 %v1661
      %v2180 = vpop.f32.mrb[0].mxu0
      %v2181 = vadd.f32 %v1876, %v2180
      %v2182 = vpop.f32.mrb[0].mxu0
      %v2183 = vpop.f32.mrb[0].mxu0
      %v2184 = vadd.f32 %v1879, %v2183
      %v2185 = vpop.f32.mrb[0].mxu0
      %2186 = vmatprep.mubr.bf16.mxu0 0
      %2187 = vmatmul.mubr.bf16.gmra.mrb[0].mxu0 %v1663
      %v2188 = vpop.f32.mrb[0].mxu0
      %v2189 = vadd.f32 %v1884, %v2188
      %v2190 = vpop.f32.mrb[0].mxu0
      %v2191 = vpop.f32.mrb[0].mxu0
      %v2192 = vadd.f32 %v1887, %v2191
      %v2193 = vpop.f32.mrb[0].mxu0
      %2194 = vmatprep.mubr.bf16.mxu0 0
      %2195 = vmatmul.mubr.bf16.gmra.mrb[0].mxu0 %v1665
      %v2196 = vpop.f32.mrb[0].mxu0
      %v2197 = vadd.f32 %v1892, %v2196
      %v2198 = vpop.f32.mrb[0].mxu0
      %v2199 = vpop.f32.mrb[0].mxu0
      %v2200 = vadd.f32 %v1895, %v2199
      %v2201 = vpop.f32.mrb[0].mxu0
      %2202 = vmatprep.mubr.bf16.mxu0 0
      %2203 = vmatmul.mubr.bf16.gmra.mrb[0].mxu0 %v1667
      %v2204 = vpop.f32.mrb[0].mxu0
      %v2205 = vadd.f32 %v1900, %v2204
      %v2206 = vpop.f32.mrb[0].mxu0
      %v2207 = vpop.f32.mrb[0].mxu0
      %v2208 = vadd.f32 %v1903, %v2207
      %v2209 = vpop.f32.mrb[0].mxu0
      %2210 = vmatprep.mubr.bf16.mxu0 0
      %2211 = vmatmul.mubr.bf16.gmra.mrb[0].mxu0 %v1669
      %v2212 = vpop.f32.mrb[0].mxu0
      %v2213 = vadd.f32 %v1908, %v2212
      %v2214 = vpop.f32.mrb[0].mxu0
      %v2215 = vpop.f32.mrb[0].mxu0
      %v2216 = vadd.f32 %v1911, %v2215
      %v2217 = vpop.f32.mrb[0].mxu0
      %2218 = vmatprep.mubr.bf16.mxu0 0
      %2219 = vmatmul.mubr.bf16.gmra.mrb[0].mxu0 %v1671
      %v2220 = vpop.f32.mrb[0].mxu0
      %v2221 = vadd.f32 %v1916, %v2220
      %v2222 = vpop.f32.mrb[0].mxu0
      %v2223 = vpop.f32.mrb[0].mxu0
      %v2224 = vadd.f32 %v1919, %v2223
      %v2225 = vpop.f32.mrb[0].mxu0
      %2226 = vmatprep.mubr.bf16.mxu0 0
      %2227 = vmatmul.mubr.bf16.gmra.mrb[0].mxu0 %v1673
      %v2228 = vpop.f32.mrb[0].mxu0
      %v2229 = vadd.f32 %v1924, %v2228
      %v2230 = vpop.f32.mrb[0].mxu0
      %v2231 = vpop.f32.mrb[0].mxu0
      %v2232 = vadd.f32 %v1927, %v2231
      %v2233 = vpop.f32.mrb[0].mxu0
      %2234 = vmatprep.mubr.bf16.mxu0 0
      %2235 = vmatmul.mubr.bf16.gmra.mrb[0].mxu0 %v1675
      %v2236 = vpop.f32.mrb[0].mxu0
      %v2237 = vadd.f32 %v1932, %v2236
      %v2238 = vpop.f32.mrb[0].mxu0
      %v2239 = vpop.f32.mrb[0].mxu0
      %v2240 = vadd.f32 %v1935, %v2239
      %v2241 = vpop.f32.mrb[0].mxu0
      %2242 = vmatprep.mubr.bf16.mxu0 0
      %2243 = vmatmul.mubr.bf16.gmra.mrb[0].mxu0 %v1677
      %v2244 = vpop.f32.mrb[0].mxu0
      %v2245 = vadd.f32 %v1940, %v2244
      %v2246 = vpop.f32.mrb[0].mxu0
      %v2247 = vpop.f32.mrb[0].mxu0
      %v2248 = vadd.f32 %v1943, %v2247
      %v2249 = vpop.f32.mrb[0].mxu0
      %2250 = vmatprep.mubr.bf16.mxu0 0
      %2251 = vmatmul.mubr.bf16.gmra.mrb[0].mxu0 %v1679
      %v2252 = vpop.f32.mrb[0].mxu0
      %v2253 = vadd.f32 %v1948, %v2252
      %v2254 = vpop.f32.mrb[0].mxu0
      %v2255 = vpop.f32.mrb[0].mxu0
      %v2256 = vadd.f32 %v1951, %v2255
      %v2257 = vpop.f32.mrb[0].mxu0
      %2258 = vmatprep.mubr.bf16.mxu0 0
      %2259 = vmatmul.mubr.bf16.gmra.mrb[0].mxu0 %v1681
      %v2260 = vpop.f32.mrb[0].mxu0
      %v2261 = vadd.f32 %v1956, %v2260
      %v2262 = vpop.f32.mrb[0].mxu0
      %v2263 = vpop.f32.mrb[0].mxu0
      %v2264 = vadd.f32 %v1959, %v2263
      %v2265 = vpop.f32.mrb[0].mxu0
      %2266 = vmatprep.mubr.bf16.mxu0 0
      %2267 = vmatmul.mubr.bf16.gmra.mrb[0].mxu0 %v1683
      %v2268 = vpop.f32.mrb[0].mxu0
      %v2269 = vadd.f32 %v1964, %v2268
      %v2270 = vpop.f32.mrb[0].mxu0
      %v2271 = vpop.f32.mrb[0].mxu0
      %v2272 = vadd.f32 %v1967, %v2271
      %v2273 = vpop.f32.mrb[0].mxu0
      %2274 = vmatprep.mubr.bf16.mxu0 0
      %2275 = vmatmul.mubr.bf16.gmra.mrb[0].mxu0 %v1685
      %v2276 = vpop.f32.mrb[0].mxu0
      %v2277 = vadd.f32 %v1972, %v2276
      %v2278 = vpop.f32.mrb[0].mxu0
      %v2279 = vpop.f32.mrb[0].mxu0
      %v2280 = vadd.f32 %v1975, %v2279
      %v2281 = vpop.f32.mrb[0].mxu0
      %2282 = vmatprep.mubr.bf16.mxu0 0
      %2283 = vmatmul.mubr.bf16.gmra.mrb[0].mxu0 %v1687
      %v2284 = vpop.f32.mrb[0].mxu0
      %v2285 = vadd.f32 %v1980, %v2284
      %v2286 = vpop.f32.mrb[0].mxu0
      %v2287 = vpop.f32.mrb[0].mxu0
      %v2288 = vadd.f32 %v1983, %v2287
      %v2289 = vpop.f32.mrb[0].mxu0
      %2290 = vdwg.mxu0
      %s2291 = scalar_lea.vmem %s4, 24
      %v2292 = vld [vmem:[%s2291] sm:$0xf]
      %v2293 = vld [vmem:[%s2291 + $0x4] sm:$0xf]
      %v2294 = vld [vmem:[%s2291 + $0x8] sm:$0xf]
      %v2298 = vunpack.c.l.b16 %v2292
      %v2299 = vunpack.c.l.b16 %v2293
      %v2300 = vunpack.c.l.b16 %v2294
      %v2301 = vpack.c.b16 %v2299, %v2298
      %v2302 = vpack.c.b16 %v2300, %v2300
      %v2304 = vsel %vm1628, %v1609, 0
      %v2306 = vsel %vm1628, %v1611, 0
      %v2309 = vsel %vm1693, %v2302, 0
      %2311 = vmatprep.subr.bf16.mxu0 0
      %2312 = vmatpush1.bf16.msra.mxu0 %v2301
      %2313 = vmatprep.subr.bf16.mxu0 0
      %2314 = vmatpush1.bf16.msra.mxu0 %v2309
      %2315 = vmatprep.subr.bf16.mxu0 0
      %2316 = vmatpush1.bf16.msra.mxu0 0
      %2317 = vmatprep.subr.bf16.mxu0 0
      %2318 = vmatpush1.bf16.msra.mxu0 0
      %2319 = vmatprep.subr.bf16.mxu0 0
      %2320 = vmatpush1.bf16.msra.mxu0 0
      %2321 = vmatprep.subr.bf16.mxu0 0
      %2322 = vmatpush1.bf16.msra.mxu0 0
      %2323 = vmatprep.subr.bf16.mxu0 0
      %2324 = vmatpush1.bf16.msra.mxu0 0
      %2325 = vmatprep.subr.bf16.mxu0 0
      %2326 = vmatpush1.bf16.msra.mxu0 0
      %2327 = vmatprep.subr.bf16.mxu0 0
      %2328 = vmatpush1.bf16.msra.mxu0 0
      %2329 = vmatprep.subr.bf16.mxu0 0
      %2330 = vmatpush1.bf16.msra.mxu0 0
      %2331 = vmatprep.subr.bf16.mxu0 0
      %2332 = vmatpush1.bf16.msra.mxu0 0
      %2333 = vmatprep.subr.bf16.mxu0 0
      %2334 = vmatpush1.bf16.msra.mxu0 0
      %2335 = vmatprep.subr.bf16.mxu0 0
      %2336 = vmatpush1.bf16.msra.mxu0 0
      %2337 = vmatprep.subr.bf16.mxu0 0
      %2338 = vmatpush1.bf16.msra.mxu0 0
      %2339 = vmatprep.subr.bf16.mxu0 0
      %2340 = vmatpush1.bf16.msra.mxu0 0
      %2341 = vmatprep.subr.bf16.mxu0 0
      %2342 = vmatpush1.bf16.msra.mxu0 0
      %2343 = vmatprep.mubr.bf16.mxu0 0
      %2344 = vmatmul.mubr.bf16.gmra.mrb[0].mxu0 %v1633
      %v2345 = vpop.f32.mrb[0].mxu0
      %v2346 = vadd.f32 0.0, %v2345
      %v2347 = vpop.f32.mrb[0].mxu0
      %v2348 = vpop.f32.mrb[0].mxu0
      %v2349 = vadd.f32 0.0, %v2348
      %v2350 = vpop.f32.mrb[0].mxu0
      %2351 = vmatprep.mubr.bf16.mxu0 0
      %2352 = vmatmul.mubr.bf16.gmra.mrb[0].mxu0 %v1635
      %v2353 = vpop.f32.mrb[0].mxu0
      %v2354 = vadd.f32 0.0, %v2353
      %v2355 = vpop.f32.mrb[0].mxu0
      %v2356 = vpop.f32.mrb[0].mxu0
      %v2357 = vadd.f32 0.0, %v2356
      %v2358 = vpop.f32.mrb[0].mxu0
      %2359 = vmatprep.mubr.bf16.mxu0 0
      %2360 = vmatmul.mubr.bf16.gmra.mrb[0].mxu0 %v1637
      %v2361 = vpop.f32.mrb[0].mxu0
      %v2362 = vadd.f32 0.0, %v2361
      %v2363 = vpop.f32.mrb[0].mxu0
      %v2364 = vpop.f32.mrb[0].mxu0
      %v2365 = vadd.f32 0.0, %v2364
      %v2366 = vpop.f32.mrb[0].mxu0
      %2367 = vmatprep.mubr.bf16.mxu0 0
      %2368 = vmatmul.mubr.bf16.gmra.mrb[0].mxu0 %v1639
      %v2369 = vpop.f32.mrb[0].mxu0
      %v2370 = vadd.f32 0.0, %v2369
      %v2371 = vpop.f32.mrb[0].mxu0
      %v2372 = vpop.f32.mrb[0].mxu0
      %v2373 = vadd.f32 0.0, %v2372
      %v2374 = vpop.f32.mrb[0].mxu0
      %2375 = vmatprep.mubr.bf16.mxu0 0
      %2376 = vmatmul.mubr.bf16.gmra.mrb[0].mxu0 %v1641
      %v2377 = vpop.f32.mrb[0].mxu0
      %v2378 = vadd.f32 0.0, %v2377
      %v2379 = vpop.f32.mrb[0].mxu0
      %v2380 = vpop.f32.mrb[0].mxu0
      %v2381 = vadd.f32 0.0, %v2380
      %v2382 = vpop.f32.mrb[0].mxu0
      %2383 = vmatprep.mubr.bf16.mxu0 0
      %2384 = vmatmul.mubr.bf16.gmra.mrb[0].mxu0 %v1643
      %v2385 = vpop.f32.mrb[0].mxu0
      %v2386 = vadd.f32 0.0, %v2385
      %v2387 = vpop.f32.mrb[0].mxu0
      %v2388 = vpop.f32.mrb[0].mxu0
      %v2389 = vadd.f32 0.0, %v2388
      %v2390 = vpop.f32.mrb[0].mxu0
      %2391 = vmatprep.mubr.bf16.mxu0 0
      %2392 = vmatmul.mubr.bf16.gmra.mrb[0].mxu0 %v1645
      %v2393 = vpop.f32.mrb[0].mxu0
      %v2394 = vadd.f32 0.0, %v2393
      %v2395 = vpop.f32.mrb[0].mxu0
      %v2396 = vpop.f32.mrb[0].mxu0
      %v2397 = vadd.f32 0.0, %v2396
      %v2398 = vpop.f32.mrb[0].mxu0
      %2399 = vmatprep.mubr.bf16.mxu0 0
      %2400 = vmatmul.mubr.bf16.gmra.mrb[0].mxu0 %v1647
      %v2401 = vpop.f32.mrb[0].mxu0
      %v2402 = vadd.f32 0.0, %v2401
      %v2403 = vpop.f32.mrb[0].mxu0
      %v2404 = vpop.f32.mrb[0].mxu0
      %v2405 = vadd.f32 0.0, %v2404
      %v2406 = vpop.f32.mrb[0].mxu0
      %2407 = vmatprep.mubr.bf16.mxu0 0
      %2408 = vmatmul.mubr.bf16.gmra.mrb[0].mxu0 %v1649
      %v2409 = vpop.f32.mrb[0].mxu0
      %v2410 = vadd.f32 0.0, %v2409
      %v2411 = vpop.f32.mrb[0].mxu0
      %v2412 = vpop.f32.mrb[0].mxu0
      %v2413 = vadd.f32 0.0, %v2412
      %v2414 = vpop.f32.mrb[0].mxu0
      %2415 = vmatprep.mubr.bf16.mxu0 0
      %2416 = vmatmul.mubr.bf16.gmra.mrb[0].mxu0 %v1651
      %v2417 = vpop.f32.mrb[0].mxu0
      %v2418 = vadd.f32 0.0, %v2417
      %v2419 = vpop.f32.mrb[0].mxu0
      %v2420 = vpop.f32.mrb[0].mxu0
      %v2421 = vadd.f32 0.0, %v2420
      %v2422 = vpop.f32.mrb[0].mxu0
      %2423 = vmatprep.mubr.bf16.mxu0 0
      %2424 = vmatmul.mubr.bf16.gmra.mrb[0].mxu0 %v1653
      %v2425 = vpop.f32.mrb[0].mxu0
      %v2426 = vadd.f32 0.0, %v2425
      %v2427 = vpop.f32.mrb[0].mxu0
      %v2428 = vpop.f32.mrb[0].mxu0
      %v2429 = vadd.f32 0.0, %v2428
      %v2430 = vpop.f32.mrb[0].mxu0
      %2431 = vmatprep.mubr.bf16.mxu0 0
      %2432 = vmatmul.mubr.bf16.gmra.mrb[0].mxu0 %v1655
      %v2433 = vpop.f32.mrb[0].mxu0
      %v2434 = vadd.f32 0.0, %v2433
      %v2435 = vpop.f32.mrb[0].mxu0
      %v2436 = vpop.f32.mrb[0].mxu0
      %v2437 = vadd.f32 0.0, %v2436
      %v2438 = vpop.f32.mrb[0].mxu0
      %2439 = vmatprep.mubr.bf16.mxu0 0
      %2440 = vmatmul.mubr.bf16.gmra.mrb[0].mxu0 %v1657
      %v2441 = vpop.f32.mrb[0].mxu0
      %v2442 = vadd.f32 0.0, %v2441
      %v2443 = vpop.f32.mrb[0].mxu0
      %v2444 = vpop.f32.mrb[0].mxu0
      %v2445 = vadd.f32 0.0, %v2444
      %v2446 = vpop.f32.mrb[0].mxu0
      %2447 = vmatprep.mubr.bf16.mxu0 0
      %2448 = vmatmul.mubr.bf16.gmra.mrb[0].mxu0 %v1659
      %v2449 = vpop.f32.mrb[0].mxu0
      %v2450 = vadd.f32 0.0, %v2449
      %v2451 = vpop.f32.mrb[0].mxu0
      %v2452 = vpop.f32.mrb[0].mxu0
      %v2453 = vadd.f32 0.0, %v2452
      %v2454 = vpop.f32.mrb[0].mxu0
      %2455 = vmatprep.mubr.bf16.mxu0 0
      %2456 = vmatmul.mubr.bf16.gmra.mrb[0].mxu0 %v1661
      %v2457 = vpop.f32.mrb[0].mxu0
      %v2458 = vadd.f32 0.0, %v2457
      %v2459 = vpop.f32.mrb[0].mxu0
      %v2460 = vpop.f32.mrb[0].mxu0
      %v2461 = vadd.f32 0.0, %v2460
      %v2462 = vpop.f32.mrb[0].mxu0
      %2463 = vmatprep.mubr.bf16.mxu0 0
      %2464 = vmatmul.mubr.bf16.gmra.mrb[0].mxu0 %v1663
      %v2465 = vpop.f32.mrb[0].mxu0
      %v2466 = vadd.f32 0.0, %v2465
      %v2467 = vpop.f32.mrb[0].mxu0
      %v2468 = vpop.f32.mrb[0].mxu0
      %v2469 = vadd.f32 0.0, %v2468
      %v2470 = vpop.f32.mrb[0].mxu0
      %2471 = vmatprep.mubr.bf16.mxu0 0
      %2472 = vmatmul.mubr.bf16.gmra.mrb[0].mxu0 %v1665
      %v2473 = vpop.f32.mrb[0].mxu0
      %v2474 = vadd.f32 0.0, %v2473
      %v2475 = vpop.f32.mrb[0].mxu0
      %v2476 = vpop.f32.mrb[0].mxu0
      %v2477 = vadd.f32 0.0, %v2476
      %v2478 = vpop.f32.mrb[0].mxu0
      %2479 = vmatprep.mubr.bf16.mxu0 0
      %2480 = vmatmul.mubr.bf16.gmra.mrb[0].mxu0 %v1667
      %v2481 = vpop.f32.mrb[0].mxu0
      %v2482 = vadd.f32 0.0, %v2481
      %v2483 = vpop.f32.mrb[0].mxu0
      %v2484 = vpop.f32.mrb[0].mxu0
      %v2485 = vadd.f32 0.0, %v2484
      %v2486 = vpop.f32.mrb[0].mxu0
      %2487 = vmatprep.mubr.bf16.mxu0 0
      %2488 = vmatmul.mubr.bf16.gmra.mrb[0].mxu0 %v1669
      %v2489 = vpop.f32.mrb[0].mxu0
      %v2490 = vadd.f32 0.0, %v2489
      %v2491 = vpop.f32.mrb[0].mxu0
      %v2492 = vpop.f32.mrb[0].mxu0
      %v2493 = vadd.f32 0.0, %v2492
      %v2494 = vpop.f32.mrb[0].mxu0
      %2495 = vmatprep.mubr.bf16.mxu0 0
      %2496 = vmatmul.mubr.bf16.gmra.mrb[0].mxu0 %v1671
      %v2497 = vpop.f32.mrb[0].mxu0
      %v2498 = vadd.f32 0.0, %v2497
      %v2499 = vpop.f32.mrb[0].mxu0
      %v2500 = vpop.f32.mrb[0].mxu0
      %v2501 = vadd.f32 0.0, %v2500
      %v2502 = vpop.f32.mrb[0].mxu0
      %2503 = vmatprep.mubr.bf16.mxu0 0
      %2504 = vmatmul.mubr.bf16.gmra.mrb[0].mxu0 %v1673
      %v2505 = vpop.f32.mrb[0].mxu0
      %v2506 = vadd.f32 0.0, %v2505
      %v2507 = vpop.f32.mrb[0].mxu0
      %v2508 = vpop.f32.mrb[0].mxu0
      %v2509 = vadd.f32 0.0, %v2508
      %v2510 = vpop.f32.mrb[0].mxu0
      %2511 = vmatprep.mubr.bf16.mxu0 0
      %2512 = vmatmul.mubr.bf16.gmra.mrb[0].mxu0 %v1675
      %v2513 = vpop.f32.mrb[0].mxu0
      %v2514 = vadd.f32 0.0, %v2513
      %v2515 = vpop.f32.mrb[0].mxu0
      %v2516 = vpop.f32.mrb[0].mxu0
      %v2517 = vadd.f32 0.0, %v2516
      %v2518 = vpop.f32.mrb[0].mxu0
      %2519 = vmatprep.mubr.bf16.mxu0 0
      %2520 = vmatmul.mubr.bf16.gmra.mrb[0].mxu0 %v1677
      %v2521 = vpop.f32.mrb[0].mxu0
      %v2522 = vadd.f32 0.0, %v2521
      %v2523 = vpop.f32.mrb[0].mxu0
      %v2524 = vpop.f32.mrb[0].mxu0
      %v2525 = vadd.f32 0.0, %v2524
      %v2526 = vpop.f32.mrb[0].mxu0
      %2527 = vmatprep.mubr.bf16.mxu0 0
      %2528 = vmatmul.mubr.bf16.gmra.mrb[0].mxu0 %v1679
      %v2529 = vpop.f32.mrb[0].mxu0
      %v2530 = vadd.f32 0.0, %v2529
      %v2531 = vpop.f32.mrb[0].mxu0
      %v2532 = vpop.f32.mrb[0].mxu0
      %v2533 = vadd.f32 0.0, %v2532
      %v2534 = vpop.f32.mrb[0].mxu0
      %2535 = vmatprep.mubr.bf16.mxu0 0
      %2536 = vmatmul.mubr.bf16.gmra.mrb[0].mxu0 %v1681
      %v2537 = vpop.f32.mrb[0].mxu0
      %v2538 = vadd.f32 0.0, %v2537
      %v2539 = vpop.f32.mrb[0].mxu0
      %v2540 = vpop.f32.mrb[0].mxu0
      %v2541 = vadd.f32 0.0, %v2540
      %v2542 = vpop.f32.mrb[0].mxu0
      %2543 = vmatprep.mubr.bf16.mxu0 0
      %2544 = vmatmul.mubr.bf16.gmra.mrb[0].mxu0 %v1683
      %v2545 = vpop.f32.mrb[0].mxu0
      %v2546 = vadd.f32 0.0, %v2545
      %v2547 = vpop.f32.mrb[0].mxu0
      %v2548 = vpop.f32.mrb[0].mxu0
      %v2549 = vadd.f32 0.0, %v2548
      %v2550 = vpop.f32.mrb[0].mxu0
      %2551 = vmatprep.mubr.bf16.mxu0 0
      %2552 = vmatmul.mubr.bf16.gmra.mrb[0].mxu0 %v1685
      %v2553 = vpop.f32.mrb[0].mxu0
      %v2554 = vadd.f32 0.0, %v2553
      %v2555 = vpop.f32.mrb[0].mxu0
      %v2556 = vpop.f32.mrb[0].mxu0
      %v2557 = vadd.f32 0.0, %v2556
      %v2558 = vpop.f32.mrb[0].mxu0
      %2559 = vmatprep.mubr.bf16.mxu0 0
      %2560 = vmatmul.mubr.bf16.gmra.mrb[0].mxu0 %v1687
      %v2561 = vpop.f32.mrb[0].mxu0
      %v2562 = vadd.f32 0.0, %v2561
      %v2563 = vpop.f32.mrb[0].mxu0
      %v2564 = vpop.f32.mrb[0].mxu0
      %v2565 = vadd.f32 0.0, %v2564
      %v2566 = vpop.f32.mrb[0].mxu0
      %2567 = vmatprep.mubr.bf16.mxu0 0
      %2568 = vmatmul.mubr.bf16.gmra.mrb[0].mxu0 %v1689
      %v2569 = vpop.f32.mrb[0].mxu0
      %v2570 = vadd.f32 0.0, %v2569
      %v2571 = vpop.f32.mrb[0].mxu0
      %v2572 = vpop.f32.mrb[0].mxu0
      %v2573 = vadd.f32 0.0, %v2572
      %v2574 = vpop.f32.mrb[0].mxu0
      %2575 = vmatprep.mubr.bf16.mxu0 0
      %2576 = vmatmul.mubr.bf16.gmra.mrb[0].mxu0 %v1691
      %v2577 = vpop.f32.mrb[0].mxu0
      %v2578 = vadd.f32 0.0, %v2577
      %v2579 = vpop.f32.mrb[0].mxu0
      %v2580 = vpop.f32.mrb[0].mxu0
      %v2581 = vadd.f32 0.0, %v2580
      %v2582 = vpop.f32.mrb[0].mxu0
      %2583 = vmatprep.mubr.bf16.mxu0 0
      %2584 = vmatmul.mubr.bf16.gmra.mrb[0].mxu0 %v2304
      %v2585 = vpop.f32.mrb[0].mxu0
      %v2586 = vadd.f32 0.0, %v2585
      %v2587 = vpop.f32.mrb[0].mxu0
      %v2588 = vpop.f32.mrb[0].mxu0
      %v2589 = vadd.f32 0.0, %v2588
      %v2590 = vpop.f32.mrb[0].mxu0
      %2591 = vmatprep.mubr.bf16.mxu0 0
      %2592 = vmatmul.mubr.bf16.gmra.mrb[0].mxu0 %v2306
      %v2593 = vpop.f32.mrb[0].mxu0
      %v2594 = vadd.f32 0.0, %v2593
      %v2595 = vpop.f32.mrb[0].mxu0
      %v2596 = vpop.f32.mrb[0].mxu0
      %v2597 = vadd.f32 0.0, %v2596
      %v2598 = vpop.f32.mrb[0].mxu0
      %2599 = vdwg.mxu0
      %v2600 = vadd.f32 %v2037, %v2346
      %v2601 = vadd.f32 %v2040, %v2349
      %v2602 = vadd.f32 %v2045, %v2354
      %v2603 = vadd.f32 %v2048, %v2357
      %v2604 = vadd.f32 %v2053, %v2362
      %v2605 = vadd.f32 %v2056, %v2365
      %v2606 = vadd.f32 %v2061, %v2370
      %v2607 = vadd.f32 %v2064, %v2373
      %v2608 = vadd.f32 %v2069, %v2378
      %v2609 = vadd.f32 %v2072, %v2381
      %v2610 = vadd.f32 %v2077, %v2386
      %v2611 = vadd.f32 %v2080, %v2389
      %v2612 = vadd.f32 %v2085, %v2394
      %v2613 = vadd.f32 %v2088, %v2397
      %v2614 = vadd.f32 %v2093, %v2402
      %v2615 = vadd.f32 %v2096, %v2405
      %v2616 = vadd.f32 %v2101, %v2410
      %v2617 = vadd.f32 %v2104, %v2413
      %v2618 = vadd.f32 %v2109, %v2418
      %v2619 = vadd.f32 %v2112, %v2421
      %v2620 = vadd.f32 %v2117, %v2426
      %v2621 = vadd.f32 %v2120, %v2429
      %v2622 = vadd.f32 %v2125, %v2434
      %v2623 = vadd.f32 %v2128, %v2437
      %v2624 = vadd.f32 %v2133, %v2442
      %v2625 = vadd.f32 %v2136, %v2445
      %v2626 = vadd.f32 %v2141, %v2450
      %v2627 = vadd.f32 %v2144, %v2453
      %v2628 = vadd.f32 %v2149, %v2458
      %v2629 = vadd.f32 %v2152, %v2461
      %v2630 = vadd.f32 %v2157, %v2466
      %v2631 = vadd.f32 %v2160, %v2469
      %v2632 = vadd.f32 %v2165, %v2474
      %v2633 = vadd.f32 %v2168, %v2477
      %v2634 = vadd.f32 %v2173, %v2482
      %v2635 = vadd.f32 %v2176, %v2485
      %v2636 = vadd.f32 %v2181, %v2490
      %v2637 = vadd.f32 %v2184, %v2493
      %v2638 = vadd.f32 %v2189, %v2498
      %v2639 = vadd.f32 %v2192, %v2501
      %v2640 = vadd.f32 %v2197, %v2506
      %v2641 = vadd.f32 %v2200, %v2509
      %v2642 = vadd.f32 %v2205, %v2514
      %v2643 = vadd.f32 %v2208, %v2517
      %v2644 = vadd.f32 %v2213, %v2522
      %v2645 = vadd.f32 %v2216, %v2525
      %v2646 = vadd.f32 %v2221, %v2530
      %v2647 = vadd.f32 %v2224, %v2533
      %v2648 = vadd.f32 %v2229, %v2538
      %v2649 = vadd.f32 %v2232, %v2541
      %v2650 = vadd.f32 %v2237, %v2546
      %v2651 = vadd.f32 %v2240, %v2549
      %v2652 = vadd.f32 %v2245, %v2554
      %v2653 = vadd.f32 %v2248, %v2557
      %v2654 = vadd.f32 %v2253, %v2562
      %v2655 = vadd.f32 %v2256, %v2565
      %v2656 = vadd.f32 %v2261, %v2570
      %v2657 = vadd.f32 %v2264, %v2573
      %v2658 = vadd.f32 %v2269, %v2578
      %v2659 = vadd.f32 %v2272, %v2581
      %v2660 = vadd.f32 %v2277, %v2586
      %v2661 = vadd.f32 %v2280, %v2589
      %v2662 = vadd.f32 %v2285, %v2594
      %v2663 = vadd.f32 %v2288, %v2597
      %v2664 = vld [vmem:[%s497] sm:$0xf]
      %v2665 = vld [vmem:[%s497 + $0x4] sm:$0xf]
      %v2666 = vld [vmem:[%s497 + $0x8] sm:$0xf]
      %v2667 = vld [vmem:[%s497 + $0xc] sm:$0xf]
      %v2668 = vld [vmem:[%s497 + $0x10] sm:$0x1]
      %v2669 = vld [vmem:[%s497 + $0x14] sm:$0xf]
      %v2670 = vld [vmem:[%s497 + $0x18] sm:$0xf]
      %v2671 = vld [vmem:[%s497 + $0x1c] sm:$0xf]
      %v2672 = vld [vmem:[%s497 + $0x20] sm:$0xf]
      %v2673 = vld [vmem:[%s497 + $0x24] sm:$0x1]
      %v2674 = vld [vmem:[%s497 + $0x28] sm:$0xf]
      %v2675 = vld [vmem:[%s497 + $0x2c] sm:$0xf]
      %v2676 = vld [vmem:[%s497 + $0x30] sm:$0xf]
      %v2677 = vld [vmem:[%s497 + $0x34] sm:$0xf]
      %v2678 = vld [vmem:[%s497 + $0x38] sm:$0x1]
      %v2679 = vld [vmem:[%s497 + $0x3c] sm:$0xf]
      %v2680 = vld [vmem:[%s497 + $0x40] sm:$0xf]
      %v2681 = vld [vmem:[%s497 + $0x44] sm:$0xf]
      %v2682 = vld [vmem:[%s497 + $0x48] sm:$0xf]
      %v2683 = vld [vmem:[%s497 + $0x4c] sm:$0x1]
      %v2684 = vld [vmem:[%s497 + $0x50] sm:$0xf]
      %v2685 = vld [vmem:[%s497 + $0x54] sm:$0xf]
      %v2686 = vld [vmem:[%s497 + $0x58] sm:$0xf]
      %v2687 = vld [vmem:[%s497 + $0x5c] sm:$0xf]
      %v2688 = vld [vmem:[%s497 + $0x60] sm:$0x1]
      %v2689 = vld [vmem:[%s497 + $0x64] sm:$0xf]
      %v2690 = vld [vmem:[%s497 + $0x68] sm:$0xf]
      %v2691 = vld [vmem:[%s497 + $0x6c] sm:$0xf]
      %v2692 = vld [vmem:[%s497 + $0x70] sm:$0xf]
      %v2693 = vld [vmem:[%s497 + $0x74] sm:$0x1]
      %v2694 = vld [vmem:[%s497 + $0x78] sm:$0xf]
      %v2695 = vld [vmem:[%s497 + $0x7c] sm:$0xf]
      %v2696 = vld [vmem:[%s497 + $0x80] sm:$0xf]
      %v2697 = vld [vmem:[%s497 + $0x84] sm:$0xf]
      %v2698 = vld [vmem:[%s497 + $0x88] sm:$0x1]
      %v2699 = vld [vmem:[%s497 + $0x8c] sm:$0xf]
      %v2700 = vld [vmem:[%s497 + $0x90] sm:$0xf]
      %v2701 = vld [vmem:[%s497 + $0x94] sm:$0xf]
      %v2702 = vld [vmem:[%s497 + $0x98] sm:$0xf]
      %v2703 = vld [vmem:[%s497 + $0x9c] sm:$0x1]
      %v2704 = vld [vmem:[%s497 + $0xa0] sm:$0xf]
      %v2705 = vld [vmem:[%s497 + $0xa4] sm:$0xf]
      %v2706 = vld [vmem:[%s497 + $0xa8] sm:$0xf]
      %v2707 = vld [vmem:[%s497 + $0xac] sm:$0xf]
      %v2708 = vld [vmem:[%s497 + $0xb0] sm:$0x1]
      %v2709 = vld [vmem:[%s497 + $0xb4] sm:$0xf]
      %v2710 = vld [vmem:[%s497 + $0xb8] sm:$0xf]
      %v2711 = vld [vmem:[%s497 + $0xbc] sm:$0xf]
      %v2712 = vld [vmem:[%s497 + $0xc0] sm:$0xf]
      %v2713 = vld [vmem:[%s497 + $0xc4] sm:$0x1]
      %v2714 = vld [vmem:[%s497 + $0xc8] sm:$0xf]
      %v2715 = vld [vmem:[%s497 + $0xcc] sm:$0xf]
      %v2716 = vld [vmem:[%s497 + $0xd0] sm:$0xf]
      %v2717 = vld [vmem:[%s497 + $0xd4] sm:$0xf]
      %v2718 = vld [vmem:[%s497 + $0xd8] sm:$0x1]
      %v2719 = vld [vmem:[%s497 + $0xdc] sm:$0xf]
      %v2720 = vld [vmem:[%s497 + $0xe0] sm:$0xf]
      %v2721 = vld [vmem:[%s497 + $0xe4] sm:$0xf]
      %v2722 = vld [vmem:[%s497 + $0xe8] sm:$0xf]
      %v2723 = vld [vmem:[%s497 + $0xec] sm:$0x1]
      %v2724 = vld [vmem:[%s497 + $0xf0] sm:$0xf]
      %v2725 = vld [vmem:[%s497 + $0xf4] sm:$0xf]
      %v2726 = vld [vmem:[%s497 + $0xf8] sm:$0xf]
      %v2727 = vld [vmem:[%s497 + $0xfc] sm:$0xf]
      %v2728 = vld [vmem:[%s497 + $0x100] sm:$0x1]
      %v2729 = vld [vmem:[%s497 + $0x104] sm:$0xf]
      %v2730 = vld [vmem:[%s497 + $0x108] sm:$0xf]
      %v2731 = vld [vmem:[%s497 + $0x10c] sm:$0xf]
      %v2732 = vld [vmem:[%s497 + $0x110] sm:$0xf]
      %v2733 = vld [vmem:[%s497 + $0x114] sm:$0x1]
      %v2734 = vld [vmem:[%s497 + $0x118] sm:$0xf]
      %v2735 = vld [vmem:[%s497 + $0x11c] sm:$0xf]
      %v2736 = vld [vmem:[%s497 + $0x120] sm:$0xf]
      %v2737 = vld [vmem:[%s497 + $0x124] sm:$0xf]
      %v2738 = vld [vmem:[%s497 + $0x128] sm:$0x1]
      %v2739 = vld [vmem:[%s497 + $0x12c] sm:$0xf]
      %v2740 = vld [vmem:[%s497 + $0x130] sm:$0xf]
      %v2741 = vld [vmem:[%s497 + $0x134] sm:$0xf]
      %v2742 = vld [vmem:[%s497 + $0x138] sm:$0xf]
      %v2743 = vld [vmem:[%s497 + $0x13c] sm:$0x1]
      %v2744 = vld [vmem:[%s530] sm:$0xf]
      %v2745 = vld [vmem:[%s530 + $0x4] sm:$0xf]
      %v2746 = vld [vmem:[%s530 + $0x8] sm:$0xf]
      %v2747 = vld [vmem:[%s530 + $0xc] sm:$0xf]
      %v2748 = vld [vmem:[%s530 + $0x10] sm:$0x1]
      %v2749 = vld [vmem:[%s530 + $0x14] sm:$0xf]
      %v2750 = vld [vmem:[%s530 + $0x18] sm:$0xf]
      %v2751 = vld [vmem:[%s530 + $0x1c] sm:$0xf]
      %v2752 = vld [vmem:[%s530 + $0x20] sm:$0xf]
      %v2753 = vld [vmem:[%s530 + $0x24] sm:$0x1]
      %v2826 = vunpack.c.l.b16 %v2664
      %v2827 = vunpack.c.l.b16 %v2665
      %v2828 = vunpack.c.l.b16 %v2666
      %v2829 = vunpack.c.l.b16 %v2667
      %v2830 = vunpack.c.l.b16 %v2669
      %v2831 = vunpack.c.l.b16 %v2670
      %v2832 = vunpack.c.l.b16 %v2671
      %v2833 = vunpack.c.l.b16 %v2672
      %v2834 = vunpack.c.l.b16 %v2674
      %v2835 = vunpack.c.l.b16 %v2675
      %v2836 = vunpack.c.l.b16 %v2676
      %v2837 = vunpack.c.l.b16 %v2677
      %v2838 = vunpack.c.l.b16 %v2679
      %v2839 = vunpack.c.l.b16 %v2680
      %v2840 = vunpack.c.l.b16 %v2681
      %v2841 = vunpack.c.l.b16 %v2682
      %v2842 = vunpack.c.l.b16 %v2684
      %v2843 = vunpack.c.l.b16 %v2685
      %v2844 = vunpack.c.l.b16 %v2686
      %v2845 = vunpack.c.l.b16 %v2687
      %v2846 = vunpack.c.l.b16 %v2689
      %v2847 = vunpack.c.l.b16 %v2690
      %v2848 = vunpack.c.l.b16 %v2691
      %v2849 = vunpack.c.l.b16 %v2692
      %v2850 = vunpack.c.l.b16 %v2694
      %v2851 = vunpack.c.l.b16 %v2695
      %v2852 = vunpack.c.l.b16 %v2696
      %v2853 = vunpack.c.l.b16 %v2697
      %v2854 = vunpack.c.l.b16 %v2699
      %v2855 = vunpack.c.l.b16 %v2700
      %v2856 = vunpack.c.l.b16 %v2701
      %v2857 = vunpack.c.l.b16 %v2702
      %v2858 = vunpack.c.l.b16 %v2704
      %v2859 = vunpack.c.l.b16 %v2705
      %v2860 = vunpack.c.l.b16 %v2706
      %v2861 = vunpack.c.l.b16 %v2707
      %v2862 = vunpack.c.l.b16 %v2709
      %v2863 = vunpack.c.l.b16 %v2710
      %v2864 = vunpack.c.l.b16 %v2711
      %v2865 = vunpack.c.l.b16 %v2712
      %v2866 = vunpack.c.l.b16 %v2714
      %v2867 = vunpack.c.l.b16 %v2715
      %v2868 = vunpack.c.l.b16 %v2716
      %v2869 = vunpack.c.l.b16 %v2717
      %v2870 = vunpack.c.l.b16 %v2719
      %v2871 = vunpack.c.l.b16 %v2720
      %v2872 = vunpack.c.l.b16 %v2721
      %v2873 = vunpack.c.l.b16 %v2722
      %v2874 = vunpack.c.l.b16 %v2724
      %v2875 = vunpack.c.l.b16 %v2725
      %v2876 = vunpack.c.l.b16 %v2726
      %v2877 = vunpack.c.l.b16 %v2727
      %v2878 = vunpack.c.l.b16 %v2729
      %v2879 = vunpack.c.l.b16 %v2730
      %v2880 = vunpack.c.l.b16 %v2731
      %v2881 = vunpack.c.l.b16 %v2732
      %v2882 = vunpack.c.l.b16 %v2734
      %v2883 = vunpack.c.l.b16 %v2735
      %v2884 = vunpack.c.l.b16 %v2736
      %v2885 = vunpack.c.l.b16 %v2737
      %v2886 = vunpack.c.l.b16 %v2739
      %v2887 = vunpack.c.l.b16 %v2740
      %v2888 = vunpack.c.l.b16 %v2741
      %v2889 = vunpack.c.l.b16 %v2742
      %v2890 = vunpack.c.l.b16 %v2744
      %v2891 = vunpack.c.l.b16 %v2745
      %v2892 = vunpack.c.l.b16 %v2746
      %v2893 = vunpack.c.l.b16 %v2747
      %v2894 = vunpack.c.l.b16 %v2749
      %v2895 = vunpack.c.l.b16 %v2750
      %v2896 = vunpack.c.l.b16 %v2751
      %v2897 = vunpack.c.l.b16 %v2752
      %v2898 = vpack.c.b16 %v2827, %v2826
      %v2899 = vpack.c.b16 %v2829, %v2828
      %v2900 = vpack.c.b16 %v2831, %v2830
      %v2901 = vpack.c.b16 %v2833, %v2832
      %v2902 = vpack.c.b16 %v2835, %v2834
      %v2903 = vpack.c.b16 %v2837, %v2836
      %v2904 = vpack.c.b16 %v2839, %v2838
      %v2905 = vpack.c.b16 %v2841, %v2840
      %v2906 = vpack.c.b16 %v2843, %v2842
      %v2907 = vpack.c.b16 %v2845, %v2844
      %v2908 = vpack.c.b16 %v2847, %v2846
      %v2909 = vpack.c.b16 %v2849, %v2848
      %v2910 = vpack.c.b16 %v2851, %v2850
      %v2911 = vpack.c.b16 %v2853, %v2852
      %v2912 = vpack.c.b16 %v2855, %v2854
      %v2913 = vpack.c.b16 %v2857, %v2856
      %v2914 = vpack.c.b16 %v2859, %v2858
      %v2915 = vpack.c.b16 %v2861, %v2860
      %v2916 = vpack.c.b16 %v2863, %v2862
      %v2917 = vpack.c.b16 %v2865, %v2864
      %v2918 = vpack.c.b16 %v2867, %v2866
      %v2919 = vpack.c.b16 %v2869, %v2868
      %v2920 = vpack.c.b16 %v2871, %v2870
      %v2921 = vpack.c.b16 %v2873, %v2872
      %v2922 = vpack.c.b16 %v2875, %v2874
      %v2923 = vpack.c.b16 %v2877, %v2876
      %v2924 = vpack.c.b16 %v2879, %v2878
      %v2925 = vpack.c.b16 %v2881, %v2880
      %v2926 = vpack.c.b16 %v2883, %v2882
      %v2927 = vpack.c.b16 %v2885, %v2884
      %v2928 = vpack.c.b16 %v2887, %v2886
      %v2929 = vpack.c.b16 %v2889, %v2888
      %v2930 = vpack.c.b16 %v2891, %v2890
      %v2931 = vpack.c.b16 %v2893, %v2892
      %v2932 = vpack.c.b16 %v2895, %v2894
      %v2933 = vpack.c.b16 %v2897, %v2896
      %v2952 = vunpack.c.l.b16 %v2668
      %v2953 = vunpack.c.l.b16 %v2673
      %v2954 = vunpack.c.l.b16 %v2678
      %v2955 = vunpack.c.l.b16 %v2683
      %v2956 = vunpack.c.l.b16 %v2688
      %v2957 = vunpack.c.l.b16 %v2693
      %v2958 = vunpack.c.l.b16 %v2698
      %v2959 = vunpack.c.l.b16 %v2703
      %v2960 = vunpack.c.l.b16 %v2708
      %v2961 = vunpack.c.l.b16 %v2713
      %v2962 = vunpack.c.l.b16 %v2718
      %v2963 = vunpack.c.l.b16 %v2723
      %v2964 = vunpack.c.l.b16 %v2728
      %v2965 = vunpack.c.l.b16 %v2733
      %v2966 = vunpack.c.l.b16 %v2738
      %v2967 = vunpack.c.l.b16 %v2743
      %v2968 = vunpack.c.l.b16 %v2748
      %v2969 = vunpack.c.l.b16 %v2753
      %v2970 = vpack.c.b16 %v2952, %v2952
      %v2971 = vpack.c.b16 %v2953, %v2953
      %v2972 = vpack.c.b16 %v2954, %v2954
      %v2973 = vpack.c.b16 %v2955, %v2955
      %v2974 = vpack.c.b16 %v2956, %v2956
      %v2975 = vpack.c.b16 %v2957, %v2957
      %v2976 = vpack.c.b16 %v2958, %v2958
      %v2977 = vpack.c.b16 %v2959, %v2959
      %v2978 = vpack.c.b16 %v2960, %v2960
      %v2979 = vpack.c.b16 %v2961, %v2961
      %v2980 = vpack.c.b16 %v2962, %v2962
      %v2981 = vpack.c.b16 %v2963, %v2963
      %v2982 = vpack.c.b16 %v2964, %v2964
      %v2983 = vpack.c.b16 %v2965, %v2965
      %v2984 = vpack.c.b16 %v2966, %v2966
      %v2985 = vpack.c.b16 %v2967, %v2967
      %v2986 = vpack.c.b16 %v2968, %v2968
      %v2987 = vpack.c.b16 %v2969, %v2969
      %v2989 = vshrl.u32 %v2898, 16
      %v2991 = vshll.u32 %v2898, 16
      %v2993 = vrot.slane %v2991, 1
      %v2994 = vor.u32 %v2989, %v2993
      %v2996 = vshll.u32 %v2899, 16
      %v2998 = vrot.slane %v2996, 1
      %v2999 = vsel %vm870, %v2994, %v2998
      %v3000 = vshrl.u32 %v2899, 16
      %v3002 = vor.u32 %v3000, %v2998
      %v3004 = vshll.u32 %v2970, 16
      %v3006 = vrot.slane %v3004, 1
      %v3007 = vsel %vm870, %v3002, %v3006
      %v3009 = vshrl.u32 %v2900, 16
      %v3011 = vshll.u32 %v2900, 16
      %v3013 = vrot.slane %v3011, 1
      %v3014 = vor.u32 %v3009, %v3013
      %v3016 = vshll.u32 %v2901, 16
      %v3018 = vrot.slane %v3016, 1
      %v3019 = vsel %vm870, %v3014, %v3018
      %v3020 = vshrl.u32 %v2901, 16
      %v3022 = vor.u32 %v3020, %v3018
      %v3024 = vshll.u32 %v2971, 16
      %v3026 = vrot.slane %v3024, 1
      %v3027 = vsel %vm870, %v3022, %v3026
      %v3029 = vshrl.u32 %v2902, 16
      %v3031 = vshll.u32 %v2902, 16
      %v3033 = vrot.slane %v3031, 1
      %v3034 = vor.u32 %v3029, %v3033
      %v3036 = vshll.u32 %v2903, 16
      %v3038 = vrot.slane %v3036, 1
      %v3039 = vsel %vm870, %v3034, %v3038
      %v3040 = vshrl.u32 %v2903, 16
      %v3042 = vor.u32 %v3040, %v3038
      %v3044 = vshll.u32 %v2972, 16
      %v3046 = vrot.slane %v3044, 1
      %v3047 = vsel %vm870, %v3042, %v3046
      %v3049 = vshrl.u32 %v2904, 16
      %v3051 = vshll.u32 %v2904, 16
      %v3053 = vrot.slane %v3051, 1
      %v3054 = vor.u32 %v3049, %v3053
      %v3056 = vshll.u32 %v2905, 16
      %v3058 = vrot.slane %v3056, 1
      %v3059 = vsel %vm870, %v3054, %v3058
      %v3060 = vshrl.u32 %v2905, 16
      %v3062 = vor.u32 %v3060, %v3058
      %v3064 = vshll.u32 %v2973, 16
      %v3066 = vrot.slane %v3064, 1
      %v3067 = vsel %vm870, %v3062, %v3066
      %v3069 = vshrl.u32 %v2906, 16
      %v3071 = vshll.u32 %v2906, 16
      %v3073 = vrot.slane %v3071, 1
      %v3074 = vor.u32 %v3069, %v3073
      %v3076 = vshll.u32 %v2907, 16
      %v3078 = vrot.slane %v3076, 1
      %v3079 = vsel %vm870, %v3074, %v3078
      %v3080 = vshrl.u32 %v2907, 16
      %v3082 = vor.u32 %v3080, %v3078
      %v3084 = vshll.u32 %v2974, 16
      %v3086 = vrot.slane %v3084, 1
      %v3087 = vsel %vm870, %v3082, %v3086
      %v3089 = vshrl.u32 %v2908, 16
      %v3091 = vshll.u32 %v2908, 16
      %v3093 = vrot.slane %v3091, 1
      %v3094 = vor.u32 %v3089, %v3093
      %v3096 = vshll.u32 %v2909, 16
      %v3098 = vrot.slane %v3096, 1
      %v3099 = vsel %vm870, %v3094, %v3098
      %v3100 = vshrl.u32 %v2909, 16
      %v3102 = vor.u32 %v3100, %v3098
      %v3104 = vshll.u32 %v2975, 16
      %v3106 = vrot.slane %v3104, 1
      %v3107 = vsel %vm870, %v3102, %v3106
      %v3109 = vshrl.u32 %v2910, 16
      %v3111 = vshll.u32 %v2910, 16
      %v3113 = vrot.slane %v3111, 1
      %v3114 = vor.u32 %v3109, %v3113
      %v3116 = vshll.u32 %v2911, 16
      %v3118 = vrot.slane %v3116, 1
      %v3119 = vsel %vm870, %v3114, %v3118
      %v3120 = vshrl.u32 %v2911, 16
      %v3122 = vor.u32 %v3120, %v3118
      %v3124 = vshll.u32 %v2976, 16
      %v3126 = vrot.slane %v3124, 1
      %v3127 = vsel %vm870, %v3122, %v3126
      %v3129 = vshrl.u32 %v2912, 16
      %v3131 = vshll.u32 %v2912, 16
      %v3133 = vrot.slane %v3131, 1
      %v3134 = vor.u32 %v3129, %v3133
      %v3136 = vshll.u32 %v2913, 16
      %v3138 = vrot.slane %v3136, 1
      %v3139 = vsel %vm870, %v3134, %v3138
      %v3140 = vshrl.u32 %v2913, 16
      %v3142 = vor.u32 %v3140, %v3138
      %v3144 = vshll.u32 %v2977, 16
      %v3146 = vrot.slane %v3144, 1
      %v3147 = vsel %vm870, %v3142, %v3146
      %v3149 = vshrl.u32 %v2914, 16
      %v3151 = vshll.u32 %v2914, 16
      %v3153 = vrot.slane %v3151, 1
      %v3154 = vor.u32 %v3149, %v3153
      %v3156 = vshll.u32 %v2915, 16
      %v3158 = vrot.slane %v3156, 1
      %v3159 = vsel %vm870, %v3154, %v3158
      %v3160 = vshrl.u32 %v2915, 16
      %v3162 = vor.u32 %v3160, %v3158
      %v3164 = vshll.u32 %v2978, 16
      %v3166 = vrot.slane %v3164, 1
      %v3167 = vsel %vm870, %v3162, %v3166
      %v3169 = vshrl.u32 %v2916, 16
      %v3171 = vshll.u32 %v2916, 16
      %v3173 = vrot.slane %v3171, 1
      %v3174 = vor.u32 %v3169, %v3173
      %v3176 = vshll.u32 %v2917, 16
      %v3178 = vrot.slane %v3176, 1
      %v3179 = vsel %vm870, %v3174, %v3178
      %v3180 = vshrl.u32 %v2917, 16
      %v3182 = vor.u32 %v3180, %v3178
      %v3184 = vshll.u32 %v2979, 16
      %v3186 = vrot.slane %v3184, 1
      %v3187 = vsel %vm870, %v3182, %v3186
      %v3189 = vshrl.u32 %v2918, 16
      %v3191 = vshll.u32 %v2918, 16
      %v3193 = vrot.slane %v3191, 1
      %v3194 = vor.u32 %v3189, %v3193
      %v3196 = vshll.u32 %v2919, 16
      %v3198 = vrot.slane %v3196, 1
      %v3199 = vsel %vm870, %v3194, %v3198
      %v3200 = vshrl.u32 %v2919, 16
      %v3202 = vor.u32 %v3200, %v3198
      %v3204 = vshll.u32 %v2980, 16
      %v3206 = vrot.slane %v3204, 1
      %v3207 = vsel %vm870, %v3202, %v3206
      %v3209 = vshrl.u32 %v2920, 16
      %v3211 = vshll.u32 %v2920, 16
      %v3213 = vrot.slane %v3211, 1
      %v3214 = vor.u32 %v3209, %v3213
      %v3216 = vshll.u32 %v2921, 16
      %v3218 = vrot.slane %v3216, 1
      %v3219 = vsel %vm870, %v3214, %v3218
      %v3220 = vshrl.u32 %v2921, 16
      %v3222 = vor.u32 %v3220, %v3218
      %v3224 = vshll.u32 %v2981, 16
      %v3226 = vrot.slane %v3224, 1
      %v3227 = vsel %vm870, %v3222, %v3226
      %v3229 = vshrl.u32 %v2922, 16
      %v3231 = vshll.u32 %v2922, 16
      %v3233 = vrot.slane %v3231, 1
      %v3234 = vor.u32 %v3229, %v3233
      %v3236 = vshll.u32 %v2923, 16
      %v3238 = vrot.slane %v3236, 1
      %v3239 = vsel %vm870, %v3234, %v3238
      %v3240 = vshrl.u32 %v2923, 16
      %v3242 = vor.u32 %v3240, %v3238
      %v3244 = vshll.u32 %v2982, 16
      %v3246 = vrot.slane %v3244, 1
      %v3247 = vsel %vm870, %v3242, %v3246
      %v3249 = vshrl.u32 %v2924, 16
      %v3251 = vshll.u32 %v2924, 16
      %v3253 = vrot.slane %v3251, 1
      %v3254 = vor.u32 %v3249, %v3253
      %v3256 = vshll.u32 %v2925, 16
      %v3258 = vrot.slane %v3256, 1
      %v3259 = vsel %vm870, %v3254, %v3258
      %v3260 = vshrl.u32 %v2925, 16
      %v3262 = vor.u32 %v3260, %v3258
      %v3264 = vshll.u32 %v2983, 16
      %v3266 = vrot.slane %v3264, 1
      %v3267 = vsel %vm870, %v3262, %v3266
      %v3269 = vshrl.u32 %v2926, 16
      %v3271 = vshll.u32 %v2926, 16
      %v3273 = vrot.slane %v3271, 1
      %v3274 = vor.u32 %v3269, %v3273
      %v3276 = vshll.u32 %v2927, 16
      %v3278 = vrot.slane %v3276, 1
      %v3279 = vsel %vm870, %v3274, %v3278
      %v3280 = vshrl.u32 %v2927, 16
      %v3282 = vor.u32 %v3280, %v3278
      %v3284 = vshll.u32 %v2984, 16
      %v3286 = vrot.slane %v3284, 1
      %v3287 = vsel %vm870, %v3282, %v3286
      %v3289 = vshrl.u32 %v2928, 16
      %v3291 = vshll.u32 %v2928, 16
      %v3293 = vrot.slane %v3291, 1
      %v3294 = vor.u32 %v3289, %v3293
      %v3296 = vshll.u32 %v2929, 16
      %v3298 = vrot.slane %v3296, 1
      %v3299 = vsel %vm870, %v3294, %v3298
      %v3300 = vshrl.u32 %v2929, 16
      %v3302 = vor.u32 %v3300, %v3298
      %v3304 = vshll.u32 %v2985, 16
      %v3306 = vrot.slane %v3304, 1
      %v3307 = vsel %vm870, %v3302, %v3306
      %v3309 = vshrl.u32 %v2930, 16
      %v3311 = vshll.u32 %v2930, 16
      %v3313 = vrot.slane %v3311, 1
      %v3314 = vor.u32 %v3309, %v3313
      %v3316 = vshll.u32 %v2931, 16
      %v3318 = vrot.slane %v3316, 1
      %v3319 = vsel %vm870, %v3314, %v3318
      %v3320 = vshrl.u32 %v2931, 16
      %v3322 = vor.u32 %v3320, %v3318
      %v3324 = vshll.u32 %v2986, 16
      %v3326 = vrot.slane %v3324, 1
      %v3327 = vsel %vm870, %v3322, %v3326
      %v3329 = vshrl.u32 %v2932, 16
      %v3331 = vshll.u32 %v2932, 16
      %v3333 = vrot.slane %v3331, 1
      %v3334 = vor.u32 %v3329, %v3333
      %v3336 = vshll.u32 %v2933, 16
      %v3338 = vrot.slane %v3336, 1
      %v3339 = vsel %vm870, %v3334, %v3338
      %v3340 = vshrl.u32 %v2933, 16
      %v3342 = vor.u32 %v3340, %v3338
      %v3344 = vshll.u32 %v2987, 16
      %v3346 = vrot.slane %v3344, 1
      %v3347 = vsel %vm870, %v3342, %v3346
      %3348 = vrot.lane.b32.xlu0 %v2999, 8
      %v3349 = vpop.permute.xlu0 %3348
      %3350 = vrot.lane.b32.xlu0 %v3007, 8
      %v3351 = vpop.permute.xlu0 %3350
      %3352 = vrot.lane.b32.xlu0 %v3019, 8
      %v3353 = vpop.permute.xlu0 %3352
      %3354 = vrot.lane.b32.xlu0 %v3027, 8
      %v3355 = vpop.permute.xlu0 %3354
      %3356 = vrot.lane.b32.xlu0 %v3039, 8
      %v3357 = vpop.permute.xlu0 %3356
      %3358 = vrot.lane.b32.xlu0 %v3047, 8
      %v3359 = vpop.permute.xlu0 %3358
      %3360 = vrot.lane.b32.xlu0 %v3059, 8
      %v3361 = vpop.permute.xlu0 %3360
      %3362 = vrot.lane.b32.xlu0 %v3067, 8
      %v3363 = vpop.permute.xlu0 %3362
      %3364 = vrot.lane.b32.xlu0 %v3079, 8
      %v3365 = vpop.permute.xlu0 %3364
      %3366 = vrot.lane.b32.xlu0 %v3087, 8
      %v3367 = vpop.permute.xlu0 %3366
      %3368 = vrot.lane.b32.xlu0 %v3099, 8
      %v3369 = vpop.permute.xlu0 %3368
      %3370 = vrot.lane.b32.xlu0 %v3107, 8
      %v3371 = vpop.permute.xlu0 %3370
      %3372 = vrot.lane.b32.xlu0 %v3119, 8
      %v3373 = vpop.permute.xlu0 %3372
      %3374 = vrot.lane.b32.xlu0 %v3127, 8
      %v3375 = vpop.permute.xlu0 %3374
      %3376 = vrot.lane.b32.xlu0 %v3139, 8
      %v3377 = vpop.permute.xlu0 %3376
      %3378 = vrot.lane.b32.xlu0 %v3147, 8
      %v3379 = vpop.permute.xlu0 %3378
      %3380 = vrot.lane.b32.xlu0 %v3159, 8
      %v3381 = vpop.permute.xlu0 %3380
      %3382 = vrot.lane.b32.xlu0 %v3167, 8
      %v3383 = vpop.permute.xlu0 %3382
      %3384 = vrot.lane.b32.xlu0 %v3179, 8
      %v3385 = vpop.permute.xlu0 %3384
      %3386 = vrot.lane.b32.xlu0 %v3187, 8
      %v3387 = vpop.permute.xlu0 %3386
      %3388 = vrot.lane.b32.xlu0 %v3199, 8
      %v3389 = vpop.permute.xlu0 %3388
      %3390 = vrot.lane.b32.xlu0 %v3207, 8
      %v3391 = vpop.permute.xlu0 %3390
      %3392 = vrot.lane.b32.xlu0 %v3219, 8
      %v3393 = vpop.permute.xlu0 %3392
      %3394 = vrot.lane.b32.xlu0 %v3227, 8
      %v3395 = vpop.permute.xlu0 %3394
      %3396 = vrot.lane.b32.xlu0 %v3239, 8
      %v3397 = vpop.permute.xlu0 %3396
      %3398 = vrot.lane.b32.xlu0 %v3247, 8
      %v3399 = vpop.permute.xlu0 %3398
      %3400 = vrot.lane.b32.xlu0 %v3259, 8
      %v3401 = vpop.permute.xlu0 %3400
      %3402 = vrot.lane.b32.xlu0 %v3267, 8
      %v3403 = vpop.permute.xlu0 %3402
      %3404 = vrot.lane.b32.xlu0 %v3279, 8
      %v3405 = vpop.permute.xlu0 %3404
      %3406 = vrot.lane.b32.xlu0 %v3287, 8
      %v3407 = vpop.permute.xlu0 %3406
      %3408 = vrot.lane.b32.xlu0 %v3299, 8
      %v3409 = vpop.permute.xlu0 %3408
      %3410 = vrot.lane.b32.xlu0 %v3307, 8
      %v3411 = vpop.permute.xlu0 %3410
      %3412 = vrot.lane.b32.xlu0 %v3319, 8
      %v3413 = vpop.permute.xlu0 %3412
      %3414 = vrot.lane.b32.xlu0 %v3327, 8
      %v3415 = vpop.permute.xlu0 %3414
      %3416 = vrot.lane.b32.xlu0 %v3339, 8
      %v3417 = vpop.permute.xlu0 %3416
      %3418 = vrot.lane.b32.xlu0 %v3347, 8
      %v3419 = vpop.permute.xlu0 %3418
      %v3420 = vrot.slane %v2898, 1
      %v3421 = vrot.slane %v2899, 1
      %v3422 = vsel %vm1303, %v3420, %v3421
      %v3423 = vrot.slane %v2970, 1
      %v3424 = vsel %vm1303, %v3421, %v3423
      %v3425 = vrot.slane %v2900, 1
      %v3426 = vrot.slane %v2901, 1
      %v3427 = vsel %vm1303, %v3425, %v3426
      %v3428 = vrot.slane %v2971, 1
      %v3429 = vsel %vm1303, %v3426, %v3428
      %v3430 = vrot.slane %v2902, 1
      %v3431 = vrot.slane %v2903, 1
      %v3432 = vsel %vm1303, %v3430, %v3431
      %v3433 = vrot.slane %v2972, 1
      %v3434 = vsel %vm1303, %v3431, %v3433
      %v3435 = vrot.slane %v2904, 1
      %v3436 = vrot.slane %v2905, 1
      %v3437 = vsel %vm1303, %v3435, %v3436
      %v3438 = vrot.slane %v2973, 1
      %v3439 = vsel %vm1303, %v3436, %v3438
      %v3440 = vrot.slane %v2906, 1
      %v3441 = vrot.slane %v2907, 1
      %v3442 = vsel %vm1303, %v3440, %v3441
      %v3443 = vrot.slane %v2974, 1
      %v3444 = vsel %vm1303, %v3441, %v3443
      %v3445 = vrot.slane %v2908, 1
      %v3446 = vrot.slane %v2909, 1
      %v3447 = vsel %vm1303, %v3445, %v3446
      %v3448 = vrot.slane %v2975, 1
      %v3449 = vsel %vm1303, %v3446, %v3448
      %v3450 = vrot.slane %v2910, 1
      %v3451 = vrot.slane %v2911, 1
      %v3452 = vsel %vm1303, %v3450, %v3451
      %v3453 = vrot.slane %v2976, 1
      %v3454 = vsel %vm1303, %v3451, %v3453
      %v3455 = vrot.slane %v2912, 1
      %v3456 = vrot.slane %v2913, 1
      %v3457 = vsel %vm1303, %v3455, %v3456
      %v3458 = vrot.slane %v2977, 1
      %v3459 = vsel %vm1303, %v3456, %v3458
      %v3460 = vrot.slane %v2914, 1
      %v3461 = vrot.slane %v2915, 1
      %v3462 = vsel %vm1303, %v3460, %v3461
      %v3463 = vrot.slane %v2978, 1
      %v3464 = vsel %vm1303, %v3461, %v3463
      %v3465 = vrot.slane %v2916, 1
      %v3466 = vrot.slane %v2917, 1
      %v3467 = vsel %vm1303, %v3465, %v3466
      %v3468 = vrot.slane %v2979, 1
      %v3469 = vsel %vm1303, %v3466, %v3468
      %v3470 = vrot.slane %v2918, 1
      %v3471 = vrot.slane %v2919, 1
      %v3472 = vsel %vm1303, %v3470, %v3471
      %v3473 = vrot.slane %v2980, 1
      %v3474 = vsel %vm1303, %v3471, %v3473
      %v3475 = vrot.slane %v2920, 1
      %v3476 = vrot.slane %v2921, 1
      %v3477 = vsel %vm1303, %v3475, %v3476
      %v3478 = vrot.slane %v2981, 1
      %v3479 = vsel %vm1303, %v3476, %v3478
      %v3480 = vrot.slane %v2922, 1
      %v3481 = vrot.slane %v2923, 1
      %v3482 = vsel %vm1303, %v3480, %v3481
      %v3483 = vrot.slane %v2982, 1
      %v3484 = vsel %vm1303, %v3481, %v3483
      %v3485 = vrot.slane %v2924, 1
      %v3486 = vrot.slane %v2925, 1
      %v3487 = vsel %vm1303, %v3485, %v3486
      %v3488 = vrot.slane %v2983, 1
      %v3489 = vsel %vm1303, %v3486, %v3488
      %v3490 = vrot.slane %v2926, 1
      %v3491 = vrot.slane %v2927, 1
      %v3492 = vsel %vm1303, %v3490, %v3491
      %v3493 = vrot.slane %v2984, 1
      %v3494 = vsel %vm1303, %v3491, %v3493
      %v3495 = vrot.slane %v2928, 1
      %v3496 = vrot.slane %v2929, 1
      %v3497 = vsel %vm1303, %v3495, %v3496
      %v3498 = vrot.slane %v2985, 1
      %v3499 = vsel %vm1303, %v3496, %v3498
      %v3500 = vrot.slane %v2930, 1
      %v3501 = vrot.slane %v2931, 1
      %v3502 = vsel %vm1303, %v3500, %v3501
      %v3503 = vrot.slane %v2986, 1
      %v3504 = vsel %vm1303, %v3501, %v3503
      %v3505 = vrot.slane %v2932, 1
      %v3506 = vrot.slane %v2933, 1
      %v3507 = vsel %vm1303, %v3505, %v3506
      %v3508 = vrot.slane %v2987, 1
      %v3509 = vsel %vm1303, %v3506, %v3508
      %3510 = vrot.lane.b32.xlu0 %v3422, 16
      %v3511 = vpop.permute.xlu0 %3510
      %3512 = vrot.lane.b32.xlu0 %v3424, 16
      %v3513 = vpop.permute.xlu0 %3512
      %3514 = vrot.lane.b32.xlu0 %v3427, 16
      %v3515 = vpop.permute.xlu0 %3514
      %3516 = vrot.lane.b32.xlu0 %v3429, 16
      %v3517 = vpop.permute.xlu0 %3516
      %3518 = vrot.lane.b32.xlu0 %v3432, 16
      %v3519 = vpop.permute.xlu0 %3518
      %3520 = vrot.lane.b32.xlu0 %v3434, 16
      %v3521 = vpop.permute.xlu0 %3520
      %3522 = vrot.lane.b32.xlu0 %v3437, 16
      %v3523 = vpop.permute.xlu0 %3522
      %3524 = vrot.lane.b32.xlu0 %v3439, 16
      %v3525 = vpop.permute.xlu0 %3524
      %3526 = vrot.lane.b32.xlu0 %v3442, 16
      %v3527 = vpop.permute.xlu0 %3526
      %3528 = vrot.lane.b32.xlu0 %v3444, 16
      %v3529 = vpop.permute.xlu0 %3528
      %3530 = vrot.lane.b32.xlu0 %v3447, 16
      %v3531 = vpop.permute.xlu0 %3530
      %3532 = vrot.lane.b32.xlu0 %v3449, 16
      %v3533 = vpop.permute.xlu0 %3532
      %3534 = vrot.lane.b32.xlu0 %v3452, 16
      %v3535 = vpop.permute.xlu0 %3534
      %3536 = vrot.lane.b32.xlu0 %v3454, 16
      %v3537 = vpop.permute.xlu0 %3536
      %3538 = vrot.lane.b32.xlu0 %v3457, 16
      %v3539 = vpop.permute.xlu0 %3538
      %3540 = vrot.lane.b32.xlu0 %v3459, 16
      %v3541 = vpop.permute.xlu0 %3540
      %3542 = vrot.lane.b32.xlu0 %v3462, 16
      %v3543 = vpop.permute.xlu0 %3542
      %3544 = vrot.lane.b32.xlu0 %v3464, 16
      %v3545 = vpop.permute.xlu0 %3544
      %3546 = vrot.lane.b32.xlu0 %v3467, 16
      %v3547 = vpop.permute.xlu0 %3546
      %3548 = vrot.lane.b32.xlu0 %v3469, 16
      %v3549 = vpop.permute.xlu0 %3548
      %3550 = vrot.lane.b32.xlu0 %v3472, 16
      %v3551 = vpop.permute.xlu0 %3550
      %3552 = vrot.lane.b32.xlu0 %v3474, 16
      %v3553 = vpop.permute.xlu0 %3552
      %3554 = vrot.lane.b32.xlu0 %v3477, 16
      %v3555 = vpop.permute.xlu0 %3554
      %3556 = vrot.lane.b32.xlu0 %v3479, 16
      %v3557 = vpop.permute.xlu0 %3556
      %3558 = vrot.lane.b32.xlu0 %v3482, 16
      %v3559 = vpop.permute.xlu0 %3558
      %3560 = vrot.lane.b32.xlu0 %v3484, 16
      %v3561 = vpop.permute.xlu0 %3560
      %3562 = vrot.lane.b32.xlu0 %v3487, 16
      %v3563 = vpop.permute.xlu0 %3562
      %3564 = vrot.lane.b32.xlu0 %v3489, 16
      %v3565 = vpop.permute.xlu0 %3564
      %3566 = vrot.lane.b32.xlu0 %v3492, 16
      %v3567 = vpop.permute.xlu0 %3566
      %3568 = vrot.lane.b32.xlu0 %v3494, 16
      %v3569 = vpop.permute.xlu0 %3568
      %3570 = vrot.lane.b32.xlu0 %v3497, 16
      %v3571 = vpop.permute.xlu0 %3570
      %3572 = vrot.lane.b32.xlu0 %v3499, 16
      %v3573 = vpop.permute.xlu0 %3572
      %3574 = vrot.lane.b32.xlu0 %v3502, 16
      %v3575 = vpop.permute.xlu0 %3574
      %3576 = vrot.lane.b32.xlu0 %v3504, 16
      %v3577 = vpop.permute.xlu0 %3576
      %3578 = vrot.lane.b32.xlu0 %v3507, 16
      %v3579 = vpop.permute.xlu0 %3578
      %3580 = vrot.lane.b32.xlu0 %v3509, 16
      %v3581 = vpop.permute.xlu0 %3580
      %v3583 = vsel %vm1466, %v2898, %v3349
      %v3585 = vsel %vm1466, %v2899, %v3351
      %v3587 = vsel %vm1466, %v2900, %v3353
      %v3589 = vsel %vm1466, %v2901, %v3355
      %v3591 = vsel %vm1466, %v2902, %v3357
      %v3593 = vsel %vm1466, %v2903, %v3359
      %v3595 = vsel %vm1466, %v2904, %v3361
      %v3597 = vsel %vm1466, %v2905, %v3363
      %v3599 = vsel %vm1466, %v2906, %v3365
      %v3601 = vsel %vm1466, %v2907, %v3367
      %v3603 = vsel %vm1466, %v2908, %v3369
      %v3605 = vsel %vm1466, %v2909, %v3371
      %v3607 = vsel %vm1466, %v2910, %v3373
      %v3609 = vsel %vm1466, %v2911, %v3375
      %v3611 = vsel %vm1466, %v2912, %v3377
      %v3613 = vsel %vm1466, %v2913, %v3379
      %v3615 = vsel %vm1466, %v2914, %v3381
      %v3617 = vsel %vm1466, %v2915, %v3383
      %v3619 = vsel %vm1466, %v2916, %v3385
      %v3621 = vsel %vm1466, %v2917, %v3387
      %v3623 = vsel %vm1466, %v2918, %v3389
      %v3625 = vsel %vm1466, %v2919, %v3391
      %v3627 = vsel %vm1466, %v2920, %v3393
      %v3629 = vsel %vm1466, %v2921, %v3395
      %v3631 = vsel %vm1466, %v2922, %v3397
      %v3633 = vsel %vm1466, %v2923, %v3399
      %v3635 = vsel %vm1466, %v2924, %v3401
      %v3637 = vsel %vm1466, %v2925, %v3403
      %v3639 = vsel %vm1466, %v2926, %v3405
      %v3641 = vsel %vm1466, %v2927, %v3407
      %v3643 = vsel %vm1466, %v2928, %v3409
      %v3645 = vsel %vm1466, %v2929, %v3411
      %v3647 = vsel %vm1466, %v2930, %v3413
      %v3649 = vsel %vm1466, %v2931, %v3415
      %v3651 = vsel %vm1466, %v2932, %v3417
      %v3653 = vsel %vm1466, %v2933, %v3419
      %v3655 = vsel %vm1539, %v3583, %v3511
      %v3657 = vsel %vm1539, %v3585, %v3513
      %v3659 = vsel %vm1539, %v3587, %v3515
      %v3661 = vsel %vm1539, %v3589, %v3517
      %v3663 = vsel %vm1539, %v3591, %v3519
      %v3665 = vsel %vm1539, %v3593, %v3521
      %v3667 = vsel %vm1539, %v3595, %v3523
      %v3669 = vsel %vm1539, %v3597, %v3525
      %v3671 = vsel %vm1539, %v3599, %v3527
      %v3673 = vsel %vm1539, %v3601, %v3529
      %v3675 = vsel %vm1539, %v3603, %v3531
      %v3677 = vsel %vm1539, %v3605, %v3533
      %v3679 = vsel %vm1539, %v3607, %v3535
      %v3681 = vsel %vm1539, %v3609, %v3537
      %v3683 = vsel %vm1539, %v3611, %v3539
      %v3685 = vsel %vm1539, %v3613, %v3541
      %v3687 = vsel %vm1539, %v3615, %v3543
      %v3689 = vsel %vm1539, %v3617, %v3545
      %v3691 = vsel %vm1539, %v3619, %v3547
      %v3693 = vsel %vm1539, %v3621, %v3549
      %v3695 = vsel %vm1539, %v3623, %v3551
      %v3697 = vsel %vm1539, %v3625, %v3553
      %v3699 = vsel %vm1539, %v3627, %v3555
      %v3701 = vsel %vm1539, %v3629, %v3557
      %v3703 = vsel %vm1539, %v3631, %v3559
      %v3705 = vsel %vm1539, %v3633, %v3561
      %v3707 = vsel %vm1539, %v3635, %v3563
      %v3709 = vsel %vm1539, %v3637, %v3565
      %v3711 = vsel %vm1539, %v3639, %v3567
      %v3713 = vsel %vm1539, %v3641, %v3569
      %v3715 = vsel %vm1539, %v3643, %v3571
      %v3717 = vsel %vm1539, %v3645, %v3573
      %v3719 = vsel %vm1539, %v3647, %v3575
      %v3721 = vsel %vm1539, %v3649, %v3577
      %v3723 = vsel %vm1539, %v3651, %v3579
      %v3725 = vsel %vm1539, %v3653, %v3581
      %v3726 = vld [vmem:[%s5] sm:$0xf]
      %v3727 = vld [vmem:[%s5 + $0x4] sm:$0xf]
      %v3728 = vld [vmem:[%s5 + $0x8] sm:$0xf]
      %v3732 = vunpack.c.l.b16 %v3726
      %v3733 = vunpack.c.l.b16 %v3727
      %v3734 = vunpack.c.l.b16 %v3728
      %v3735 = vpack.c.b16 %v3733, %v3732
      %v3736 = vpack.c.b16 %v3734, %v3734
      %v3738 = vsel %vm1628, %v3655, 0
      %v3740 = vsel %vm1628, %v3657, 0
      %v3742 = vsel %vm1628, %v3659, 0
      %v3744 = vsel %vm1628, %v3661, 0
      %v3746 = vsel %vm1628, %v3663, 0
      %v3748 = vsel %vm1628, %v3665, 0
      %v3750 = vsel %vm1628, %v3667, 0
      %v3752 = vsel %vm1628, %v3669, 0
      %v3754 = vsel %vm1628, %v3671, 0
      %v3756 = vsel %vm1628, %v3673, 0
      %v3758 = vsel %vm1628, %v3675, 0
      %v3760 = vsel %vm1628, %v3677, 0
      %v3762 = vsel %vm1628, %v3679, 0
      %v3764 = vsel %vm1628, %v3681, 0
      %v3766 = vsel %vm1628, %v3683, 0
      %v3768 = vsel %vm1628, %v3685, 0
      %v3770 = vsel %vm1628, %v3687, 0
      %v3772 = vsel %vm1628, %v3689, 0
      %v3774 = vsel %vm1628, %v3691, 0
      %v3776 = vsel %vm1628, %v3693, 0
      %v3778 = vsel %vm1628, %v3695, 0
      %v3780 = vsel %vm1628, %v3697, 0
      %v3782 = vsel %vm1628, %v3699, 0
      %v3784 = vsel %vm1628, %v3701, 0
      %v3786 = vsel %vm1628, %v3703, 0
      %v3788 = vsel %vm1628, %v3705, 0
      %v3790 = vsel %vm1628, %v3707, 0
      %v3792 = vsel %vm1628, %v3709, 0
      %v3794 = vsel %vm1628, %v3711, 0
      %v3796 = vsel %vm1628, %v3713, 0
      %v3798 = vsel %vm1628, %v3715, 0
      %v3800 = vsel %vm1628, %v3717, 0
      %v3803 = vsel %vm1693, %v3736, 0
      %3805 = vmatprep.subr.bf16.mxu0 0
      %3806 = vmatpush1.bf16.msra.mxu0 %v3735
      %3807 = vmatprep.subr.bf16.mxu0 0
      %3808 = vmatpush1.bf16.msra.mxu0 %v3803
      %3809 = vmatprep.subr.bf16.mxu0 0
      %3810 = vmatpush1.bf16.msra.mxu0 0
      %3811 = vmatprep.subr.bf16.mxu0 0
      %3812 = vmatpush1.bf16.msra.mxu0 0
      %3813 = vmatprep.subr.bf16.mxu0 0
      %3814 = vmatpush1.bf16.msra.mxu0 0
      %3815 = vmatprep.subr.bf16.mxu0 0
      %3816 = vmatpush1.bf16.msra.mxu0 0
      %3817 = vmatprep.subr.bf16.mxu0 0
      %3818 = vmatpush1.bf16.msra.mxu0 0
      %3819 = vmatprep.subr.bf16.mxu0 0
      %3820 = vmatpush1.bf16.msra.mxu0 0
      %3821 = vmatprep.subr.bf16.mxu0 0
      %3822 = vmatpush1.bf16.msra.mxu0 0
      %3823 = vmatprep.subr.bf16.mxu0 0
      %3824 = vmatpush1.bf16.msra.mxu0 0
      %3825 = vmatprep.subr.bf16.mxu0 0
      %3826 = vmatpush1.bf16.msra.mxu0 0
      %3827 = vmatprep.subr.bf16.mxu0 0
      %3828 = vmatpush1.bf16.msra.mxu0 0
      %3829 = vmatprep.subr.bf16.mxu0 0
      %3830 = vmatpush1.bf16.msra.mxu0 0
      %3831 = vmatprep.subr.bf16.mxu0 0
      %3832 = vmatpush1.bf16.msra.mxu0 0
      %3833 = vmatprep.subr.bf16.mxu0 0
      %3834 = vmatpush1.bf16.msra.mxu0 0
      %3835 = vmatprep.subr.bf16.mxu0 0
      %3836 = vmatpush1.bf16.msra.mxu0 0
      %3837 = vmatprep.mubr.bf16.mxu0 0
      %3838 = vmatmul.mubr.bf16.gmra.mrb[0].mxu0 %v3738
      %v3839 = vpop.f32.mrb[0].mxu0
      %v3840 = vadd.f32 0.0, %v3839
      %v3841 = vpop.f32.mrb[0].mxu0
      %v3842 = vpop.f32.mrb[0].mxu0
      %v3843 = vadd.f32 0.0, %v3842
      %v3844 = vpop.f32.mrb[0].mxu0
      %3845 = vmatprep.mubr.bf16.mxu0 0
      %3846 = vmatmul.mubr.bf16.gmra.mrb[0].mxu0 %v3740
      %v3847 = vpop.f32.mrb[0].mxu0
      %v3848 = vadd.f32 0.0, %v3847
      %v3849 = vpop.f32.mrb[0].mxu0
      %v3850 = vpop.f32.mrb[0].mxu0
      %v3851 = vadd.f32 0.0, %v3850
      %v3852 = vpop.f32.mrb[0].mxu0
      %3853 = vmatprep.mubr.bf16.mxu0 0
      %3854 = vmatmul.mubr.bf16.gmra.mrb[0].mxu0 %v3742
      %v3855 = vpop.f32.mrb[0].mxu0
      %v3856 = vadd.f32 0.0, %v3855
      %v3857 = vpop.f32.mrb[0].mxu0
      %v3858 = vpop.f32.mrb[0].mxu0
      %v3859 = vadd.f32 0.0, %v3858
      %v3860 = vpop.f32.mrb[0].mxu0
      %3861 = vmatprep.mubr.bf16.mxu0 0
      %3862 = vmatmul.mubr.bf16.gmra.mrb[0].mxu0 %v3744
      %v3863 = vpop.f32.mrb[0].mxu0
      %v3864 = vadd.f32 0.0, %v3863
      %v3865 = vpop.f32.mrb[0].mxu0
      %v3866 = vpop.f32.mrb[0].mxu0
      %v3867 = vadd.f32 0.0, %v3866
      %v3868 = vpop.f32.mrb[0].mxu0
      %3869 = vmatprep.mubr.bf16.mxu0 0
      %3870 = vmatmul.mubr.bf16.gmra.mrb[0].mxu0 %v3746
      %v3871 = vpop.f32.mrb[0].mxu0
      %v3872 = vadd.f32 0.0, %v3871
      %v3873 = vpop.f32.mrb[0].mxu0
      %v3874 = vpop.f32.mrb[0].mxu0
      %v3875 = vadd.f32 0.0, %v3874
      %v3876 = vpop.f32.mrb[0].mxu0
      %3877 = vmatprep.mubr.bf16.mxu0 0
      %3878 = vmatmul.mubr.bf16.gmra.mrb[0].mxu0 %v3748
      %v3879 = vpop.f32.mrb[0].mxu0
      %v3880 = vadd.f32 0.0, %v3879
      %v3881 = vpop.f32.mrb[0].mxu0
      %v3882 = vpop.f32.mrb[0].mxu0
      %v3883 = vadd.f32 0.0, %v3882
      %v3884 = vpop.f32.mrb[0].mxu0
      %3885 = vmatprep.mubr.bf16.mxu0 0
      %3886 = vmatmul.mubr.bf16.gmra.mrb[0].mxu0 %v3750
      %v3887 = vpop.f32.mrb[0].mxu0
      %v3888 = vadd.f32 0.0, %v3887
      %v3889 = vpop.f32.mrb[0].mxu0
      %v3890 = vpop.f32.mrb[0].mxu0
      %v3891 = vadd.f32 0.0, %v3890
      %v3892 = vpop.f32.mrb[0].mxu0
      %3893 = vmatprep.mubr.bf16.mxu0 0
      %3894 = vmatmul.mubr.bf16.gmra.mrb[0].mxu0 %v3752
      %v3895 = vpop.f32.mrb[0].mxu0
      %v3896 = vadd.f32 0.0, %v3895
      %v3897 = vpop.f32.mrb[0].mxu0
      %v3898 = vpop.f32.mrb[0].mxu0
      %v3899 = vadd.f32 0.0, %v3898
      %v3900 = vpop.f32.mrb[0].mxu0
      %3901 = vmatprep.mubr.bf16.mxu0 0
      %3902 = vmatmul.mubr.bf16.gmra.mrb[0].mxu0 %v3754
      %v3903 = vpop.f32.mrb[0].mxu0
      %v3904 = vadd.f32 0.0, %v3903
      %v3905 = vpop.f32.mrb[0].mxu0
      %v3906 = vpop.f32.mrb[0].mxu0
      %v3907 = vadd.f32 0.0, %v3906
      %v3908 = vpop.f32.mrb[0].mxu0
      %3909 = vmatprep.mubr.bf16.mxu0 0
      %3910 = vmatmul.mubr.bf16.gmra.mrb[0].mxu0 %v3756
      %v3911 = vpop.f32.mrb[0].mxu0
      %v3912 = vadd.f32 0.0, %v3911
      %v3913 = vpop.f32.mrb[0].mxu0
      %v3914 = vpop.f32.mrb[0].mxu0
      %v3915 = vadd.f32 0.0, %v3914
      %v3916 = vpop.f32.mrb[0].mxu0
      %3917 = vmatprep.mubr.bf16.mxu0 0
      %3918 = vmatmul.mubr.bf16.gmra.mrb[0].mxu0 %v3758
      %v3919 = vpop.f32.mrb[0].mxu0
      %v3920 = vadd.f32 0.0, %v3919
      %v3921 = vpop.f32.mrb[0].mxu0
      %v3922 = vpop.f32.mrb[0].mxu0
      %v3923 = vadd.f32 0.0, %v3922
      %v3924 = vpop.f32.mrb[0].mxu0
      %3925 = vmatprep.mubr.bf16.mxu0 0
      %3926 = vmatmul.mubr.bf16.gmra.mrb[0].mxu0 %v3760
      %v3927 = vpop.f32.mrb[0].mxu0
      %v3928 = vadd.f32 0.0, %v3927
      %v3929 = vpop.f32.mrb[0].mxu0
      %v3930 = vpop.f32.mrb[0].mxu0
      %v3931 = vadd.f32 0.0, %v3930
      %v3932 = vpop.f32.mrb[0].mxu0
      %3933 = vmatprep.mubr.bf16.mxu0 0
      %3934 = vmatmul.mubr.bf16.gmra.mrb[0].mxu0 %v3762
      %v3935 = vpop.f32.mrb[0].mxu0
      %v3936 = vadd.f32 0.0, %v3935
      %v3937 = vpop.f32.mrb[0].mxu0
      %v3938 = vpop.f32.mrb[0].mxu0
      %v3939 = vadd.f32 0.0, %v3938
      %v3940 = vpop.f32.mrb[0].mxu0
      %3941 = vmatprep.mubr.bf16.mxu0 0
      %3942 = vmatmul.mubr.bf16.gmra.mrb[0].mxu0 %v3764
      %v3943 = vpop.f32.mrb[0].mxu0
      %v3944 = vadd.f32 0.0, %v3943
      %v3945 = vpop.f32.mrb[0].mxu0
      %v3946 = vpop.f32.mrb[0].mxu0
      %v3947 = vadd.f32 0.0, %v3946
      %v3948 = vpop.f32.mrb[0].mxu0
      %3949 = vmatprep.mubr.bf16.mxu0 0
      %3950 = vmatmul.mubr.bf16.gmra.mrb[0].mxu0 %v3766
      %v3951 = vpop.f32.mrb[0].mxu0
      %v3952 = vadd.f32 0.0, %v3951
      %v3953 = vpop.f32.mrb[0].mxu0
      %v3954 = vpop.f32.mrb[0].mxu0
      %v3955 = vadd.f32 0.0, %v3954
      %v3956 = vpop.f32.mrb[0].mxu0
      %3957 = vmatprep.mubr.bf16.mxu0 0
      %3958 = vmatmul.mubr.bf16.gmra.mrb[0].mxu0 %v3768
      %v3959 = vpop.f32.mrb[0].mxu0
      %v3960 = vadd.f32 0.0, %v3959
      %v3961 = vpop.f32.mrb[0].mxu0
      %v3962 = vpop.f32.mrb[0].mxu0
      %v3963 = vadd.f32 0.0, %v3962
      %v3964 = vpop.f32.mrb[0].mxu0
      %3965 = vmatprep.mubr.bf16.mxu0 0
      %3966 = vmatmul.mubr.bf16.gmra.mrb[0].mxu0 %v3770
      %v3967 = vpop.f32.mrb[0].mxu0
      %v3968 = vadd.f32 0.0, %v3967
      %v3969 = vpop.f32.mrb[0].mxu0
      %v3970 = vpop.f32.mrb[0].mxu0
      %v3971 = vadd.f32 0.0, %v3970
      %v3972 = vpop.f32.mrb[0].mxu0
      %3973 = vmatprep.mubr.bf16.mxu0 0
      %3974 = vmatmul.mubr.bf16.gmra.mrb[0].mxu0 %v3772
      %v3975 = vpop.f32.mrb[0].mxu0
      %v3976 = vadd.f32 0.0, %v3975
      %v3977 = vpop.f32.mrb[0].mxu0
      %v3978 = vpop.f32.mrb[0].mxu0
      %v3979 = vadd.f32 0.0, %v3978
      %v3980 = vpop.f32.mrb[0].mxu0
      %3981 = vmatprep.mubr.bf16.mxu0 0
      %3982 = vmatmul.mubr.bf16.gmra.mrb[0].mxu0 %v3774
      %v3983 = vpop.f32.mrb[0].mxu0
      %v3984 = vadd.f32 0.0, %v3983
      %v3985 = vpop.f32.mrb[0].mxu0
      %v3986 = vpop.f32.mrb[0].mxu0
      %v3987 = vadd.f32 0.0, %v3986
      %v3988 = vpop.f32.mrb[0].mxu0
      %3989 = vmatprep.mubr.bf16.mxu0 0
      %3990 = vmatmul.mubr.bf16.gmra.mrb[0].mxu0 %v3776
      %v3991 = vpop.f32.mrb[0].mxu0
      %v3992 = vadd.f32 0.0, %v3991
      %v3993 = vpop.f32.mrb[0].mxu0
      %v3994 = vpop.f32.mrb[0].mxu0
      %v3995 = vadd.f32 0.0, %v3994
      %v3996 = vpop.f32.mrb[0].mxu0
      %3997 = vmatprep.mubr.bf16.mxu0 0
      %3998 = vmatmul.mubr.bf16.gmra.mrb[0].mxu0 %v3778
      %v3999 = vpop.f32.mrb[0].mxu0
      %v4000 = vadd.f32 0.0, %v3999
      %v4001 = vpop.f32.mrb[0].mxu0
      %v4002 = vpop.f32.mrb[0].mxu0
      %v4003 = vadd.f32 0.0, %v4002
      %v4004 = vpop.f32.mrb[0].mxu0
      %4005 = vmatprep.mubr.bf16.mxu0 0
      %4006 = vmatmul.mubr.bf16.gmra.mrb[0].mxu0 %v3780
      %v4007 = vpop.f32.mrb[0].mxu0
      %v4008 = vadd.f32 0.0, %v4007
      %v4009 = vpop.f32.mrb[0].mxu0
      %v4010 = vpop.f32.mrb[0].mxu0
      %v4011 = vadd.f32 0.0, %v4010
      %v4012 = vpop.f32.mrb[0].mxu0
      %4013 = vmatprep.mubr.bf16.mxu0 0
      %4014 = vmatmul.mubr.bf16.gmra.mrb[0].mxu0 %v3782
      %v4015 = vpop.f32.mrb[0].mxu0
      %v4016 = vadd.f32 0.0, %v4015
      %v4017 = vpop.f32.mrb[0].mxu0
      %v4018 = vpop.f32.mrb[0].mxu0
      %v4019 = vadd.f32 0.0, %v4018
      %v4020 = vpop.f32.mrb[0].mxu0
      %4021 = vmatprep.mubr.bf16.mxu0 0
      %4022 = vmatmul.mubr.bf16.gmra.mrb[0].mxu0 %v3784
      %v4023 = vpop.f32.mrb[0].mxu0
      %v4024 = vadd.f32 0.0, %v4023
      %v4025 = vpop.f32.mrb[0].mxu0
      %v4026 = vpop.f32.mrb[0].mxu0
      %v4027 = vadd.f32 0.0, %v4026
      %v4028 = vpop.f32.mrb[0].mxu0
      %4029 = vmatprep.mubr.bf16.mxu0 0
      %4030 = vmatmul.mubr.bf16.gmra.mrb[0].mxu0 %v3786
      %v4031 = vpop.f32.mrb[0].mxu0
      %v4032 = vadd.f32 0.0, %v4031
      %v4033 = vpop.f32.mrb[0].mxu0
      %v4034 = vpop.f32.mrb[0].mxu0
      %v4035 = vadd.f32 0.0, %v4034
      %v4036 = vpop.f32.mrb[0].mxu0
      %4037 = vmatprep.mubr.bf16.mxu0 0
      %4038 = vmatmul.mubr.bf16.gmra.mrb[0].mxu0 %v3788
      %v4039 = vpop.f32.mrb[0].mxu0
      %v4040 = vadd.f32 0.0, %v4039
      %v4041 = vpop.f32.mrb[0].mxu0
      %v4042 = vpop.f32.mrb[0].mxu0
      %v4043 = vadd.f32 0.0, %v4042
      %v4044 = vpop.f32.mrb[0].mxu0
      %4045 = vmatprep.mubr.bf16.mxu0 0
      %4046 = vmatmul.mubr.bf16.gmra.mrb[0].mxu0 %v3790
      %v4047 = vpop.f32.mrb[0].mxu0
      %v4048 = vadd.f32 0.0, %v4047
      %v4049 = vpop.f32.mrb[0].mxu0
      %v4050 = vpop.f32.mrb[0].mxu0
      %v4051 = vadd.f32 0.0, %v4050
      %v4052 = vpop.f32.mrb[0].mxu0
      %4053 = vmatprep.mubr.bf16.mxu0 0
      %4054 = vmatmul.mubr.bf16.gmra.mrb[0].mxu0 %v3792
      %v4055 = vpop.f32.mrb[0].mxu0
      %v4056 = vadd.f32 0.0, %v4055
      %v4057 = vpop.f32.mrb[0].mxu0
      %v4058 = vpop.f32.mrb[0].mxu0
      %v4059 = vadd.f32 0.0, %v4058
      %v4060 = vpop.f32.mrb[0].mxu0
      %4061 = vmatprep.mubr.bf16.mxu0 0
      %4062 = vmatmul.mubr.bf16.gmra.mrb[0].mxu0 %v3794
      %v4063 = vpop.f32.mrb[0].mxu0
      %v4064 = vadd.f32 0.0, %v4063
      %v4065 = vpop.f32.mrb[0].mxu0
      %v4066 = vpop.f32.mrb[0].mxu0
      %v4067 = vadd.f32 0.0, %v4066
      %v4068 = vpop.f32.mrb[0].mxu0
      %4069 = vmatprep.mubr.bf16.mxu0 0
      %4070 = vmatmul.mubr.bf16.gmra.mrb[0].mxu0 %v3796
      %v4071 = vpop.f32.mrb[0].mxu0
      %v4072 = vadd.f32 0.0, %v4071
      %v4073 = vpop.f32.mrb[0].mxu0
      %v4074 = vpop.f32.mrb[0].mxu0
      %v4075 = vadd.f32 0.0, %v4074
      %v4076 = vpop.f32.mrb[0].mxu0
      %4077 = vmatprep.mubr.bf16.mxu0 0
      %4078 = vmatmul.mubr.bf16.gmra.mrb[0].mxu0 %v3798
      %v4079 = vpop.f32.mrb[0].mxu0
      %v4080 = vadd.f32 0.0, %v4079
      %v4081 = vpop.f32.mrb[0].mxu0
      %v4082 = vpop.f32.mrb[0].mxu0
      %v4083 = vadd.f32 0.0, %v4082
      %v4084 = vpop.f32.mrb[0].mxu0
      %4085 = vmatprep.mubr.bf16.mxu0 0
      %4086 = vmatmul.mubr.bf16.gmra.mrb[0].mxu0 %v3800
      %v4087 = vpop.f32.mrb[0].mxu0
      %v4088 = vadd.f32 0.0, %v4087
      %v4089 = vpop.f32.mrb[0].mxu0
      %v4090 = vpop.f32.mrb[0].mxu0
      %v4091 = vadd.f32 0.0, %v4090
      %v4092 = vpop.f32.mrb[0].mxu0
      %4093 = vdwg.mxu0
      %v4094 = vadd.f32 %v2600, %v3840
      %v4095 = vadd.f32 %v2601, %v3843
      %v4096 = vadd.f32 %v2602, %v3848
      %v4097 = vadd.f32 %v2603, %v3851
      %v4098 = vadd.f32 %v2604, %v3856
      %v4099 = vadd.f32 %v2605, %v3859
      %v4100 = vadd.f32 %v2606, %v3864
      %v4101 = vadd.f32 %v2607, %v3867
      %v4102 = vadd.f32 %v2608, %v3872
      %v4103 = vadd.f32 %v2609, %v3875
      %v4104 = vadd.f32 %v2610, %v3880
      %v4105 = vadd.f32 %v2611, %v3883
      %v4106 = vadd.f32 %v2612, %v3888
      %v4107 = vadd.f32 %v2613, %v3891
      %v4108 = vadd.f32 %v2614, %v3896
      %v4109 = vadd.f32 %v2615, %v3899
      %v4110 = vadd.f32 %v2616, %v3904
      %v4111 = vadd.f32 %v2617, %v3907
      %v4112 = vadd.f32 %v2618, %v3912
      %v4113 = vadd.f32 %v2619, %v3915
      %v4114 = vadd.f32 %v2620, %v3920
      %v4115 = vadd.f32 %v2621, %v3923
      %v4116 = vadd.f32 %v2622, %v3928
      %v4117 = vadd.f32 %v2623, %v3931
      %v4118 = vadd.f32 %v2624, %v3936
      %v4119 = vadd.f32 %v2625, %v3939
      %v4120 = vadd.f32 %v2626, %v3944
      %v4121 = vadd.f32 %v2627, %v3947
      %v4122 = vadd.f32 %v2628, %v3952
      %v4123 = vadd.f32 %v2629, %v3955
      %v4124 = vadd.f32 %v2630, %v3960
      %v4125 = vadd.f32 %v2631, %v3963
      %v4126 = vadd.f32 %v2632, %v3968
      %v4127 = vadd.f32 %v2633, %v3971
      %v4128 = vadd.f32 %v2634, %v3976
      %v4129 = vadd.f32 %v2635, %v3979
      %v4130 = vadd.f32 %v2636, %v3984
      %v4131 = vadd.f32 %v2637, %v3987
      %v4132 = vadd.f32 %v2638, %v3992
      %v4133 = vadd.f32 %v2639, %v3995
      %v4134 = vadd.f32 %v2640, %v4000
      %v4135 = vadd.f32 %v2641, %v4003
      %v4136 = vadd.f32 %v2642, %v4008
      %v4137 = vadd.f32 %v2643, %v4011
      %v4138 = vadd.f32 %v2644, %v4016
      %v4139 = vadd.f32 %v2645, %v4019
      %v4140 = vadd.f32 %v2646, %v4024
      %v4141 = vadd.f32 %v2647, %v4027
      %v4142 = vadd.f32 %v2648, %v4032
      %v4143 = vadd.f32 %v2649, %v4035
      %v4144 = vadd.f32 %v2650, %v4040
      %v4145 = vadd.f32 %v2651, %v4043
      %v4146 = vadd.f32 %v2652, %v4048
      %v4147 = vadd.f32 %v2653, %v4051
      %v4148 = vadd.f32 %v2654, %v4056
      %v4149 = vadd.f32 %v2655, %v4059
      %v4150 = vadd.f32 %v2656, %v4064
      %v4151 = vadd.f32 %v2657, %v4067
      %v4152 = vadd.f32 %v2658, %v4072
      %v4153 = vadd.f32 %v2659, %v4075
      %v4154 = vadd.f32 %v2660, %v4080
      %v4155 = vadd.f32 %v2661, %v4083
      %v4156 = vadd.f32 %v2662, %v4088
      %v4157 = vadd.f32 %v2663, %v4091
      %s4158 = scalar_lea.vmem %s5, 12
      %v4159 = vld [vmem:[%s4158] sm:$0xf]
      %v4160 = vld [vmem:[%s4158 + $0x4] sm:$0xf]
      %v4161 = vld [vmem:[%s4158 + $0x8] sm:$0xf]
      %v4165 = vunpack.c.l.b16 %v4159
      %v4166 = vunpack.c.l.b16 %v4160
      %v4167 = vunpack.c.l.b16 %v4161
      %v4168 = vpack.c.b16 %v4166, %v4165
      %v4169 = vpack.c.b16 %v4167, %v4167
      %v4171 = vsel %vm1628, %v3719, 0
      %v4173 = vsel %vm1628, %v3721, 0
      %v4176 = vsel %vm1693, %v4169, 0
      %4178 = vmatprep.subr.bf16.mxu0 0
      %4179 = vmatpush1.bf16.msra.mxu0 %v4168
      %4180 = vmatprep.subr.bf16.mxu0 0
      %4181 = vmatpush1.bf16.msra.mxu0 %v4176
      %4182 = vmatprep.subr.bf16.mxu0 0
      %4183 = vmatpush1.bf16.msra.mxu0 0
      %4184 = vmatprep.subr.bf16.mxu0 0
      %4185 = vmatpush1.bf16.msra.mxu0 0
      %4186 = vmatprep.subr.bf16.mxu0 0
      %4187 = vmatpush1.bf16.msra.mxu0 0
      %4188 = vmatprep.subr.bf16.mxu0 0
      %4189 = vmatpush1.bf16.msra.mxu0 0
      %4190 = vmatprep.subr.bf16.mxu0 0
      %4191 = vmatpush1.bf16.msra.mxu0 0
      %4192 = vmatprep.subr.bf16.mxu0 0
      %4193 = vmatpush1.bf16.msra.mxu0 0
      %4194 = vmatprep.subr.bf16.mxu0 0
      %4195 = vmatpush1.bf16.msra.mxu0 0
      %4196 = vmatprep.subr.bf16.mxu0 0
      %4197 = vmatpush1.bf16.msra.mxu0 0
      %4198 = vmatprep.subr.bf16.mxu0 0
      %4199 = vmatpush1.bf16.msra.mxu0 0
      %4200 = vmatprep.subr.bf16.mxu0 0
      %4201 = vmatpush1.bf16.msra.mxu0 0
      %4202 = vmatprep.subr.bf16.mxu0 0
      %4203 = vmatpush1.bf16.msra.mxu0 0
      %4204 = vmatprep.subr.bf16.mxu0 0
      %4205 = vmatpush1.bf16.msra.mxu0 0
      %4206 = vmatprep.subr.bf16.mxu0 0
      %4207 = vmatpush1.bf16.msra.mxu0 0
      %4208 = vmatprep.subr.bf16.mxu0 0
      %4209 = vmatpush1.bf16.msra.mxu0 0
      %4210 = vmatprep.mubr.bf16.mxu0 0
      %4211 = vmatmul.mubr.bf16.gmra.mrb[0].mxu0 %v3742
      %v4212 = vpop.f32.mrb[0].mxu0
      %v4213 = vadd.f32 0.0, %v4212
      %v4214 = vpop.f32.mrb[0].mxu0
      %v4215 = vpop.f32.mrb[0].mxu0
      %v4216 = vadd.f32 0.0, %v4215
      %v4217 = vpop.f32.mrb[0].mxu0
      %4218 = vmatprep.mubr.bf16.mxu0 0
      %4219 = vmatmul.mubr.bf16.gmra.mrb[0].mxu0 %v3744
      %v4220 = vpop.f32.mrb[0].mxu0
      %v4221 = vadd.f32 0.0, %v4220
      %v4222 = vpop.f32.mrb[0].mxu0
      %v4223 = vpop.f32.mrb[0].mxu0
      %v4224 = vadd.f32 0.0, %v4223
      %v4225 = vpop.f32.mrb[0].mxu0
      %4226 = vmatprep.mubr.bf16.mxu0 0
      %4227 = vmatmul.mubr.bf16.gmra.mrb[0].mxu0 %v3746
      %v4228 = vpop.f32.mrb[0].mxu0
      %v4229 = vadd.f32 0.0, %v4228
      %v4230 = vpop.f32.mrb[0].mxu0
      %v4231 = vpop.f32.mrb[0].mxu0
      %v4232 = vadd.f32 0.0, %v4231
      %v4233 = vpop.f32.mrb[0].mxu0
      %4234 = vmatprep.mubr.bf16.mxu0 0
      %4235 = vmatmul.mubr.bf16.gmra.mrb[0].mxu0 %v3748
      %v4236 = vpop.f32.mrb[0].mxu0
      %v4237 = vadd.f32 0.0, %v4236
      %v4238 = vpop.f32.mrb[0].mxu0
      %v4239 = vpop.f32.mrb[0].mxu0
      %v4240 = vadd.f32 0.0, %v4239
      %v4241 = vpop.f32.mrb[0].mxu0
      %4242 = vmatprep.mubr.bf16.mxu0 0
      %4243 = vmatmul.mubr.bf16.gmra.mrb[0].mxu0 %v3750
      %v4244 = vpop.f32.mrb[0].mxu0
      %v4245 = vadd.f32 0.0, %v4244
      %v4246 = vpop.f32.mrb[0].mxu0
      %v4247 = vpop.f32.mrb[0].mxu0
      %v4248 = vadd.f32 0.0, %v4247
      %v4249 = vpop.f32.mrb[0].mxu0
      %4250 = vmatprep.mubr.bf16.mxu0 0
      %4251 = vmatmul.mubr.bf16.gmra.mrb[0].mxu0 %v3752
      %v4252 = vpop.f32.mrb[0].mxu0
      %v4253 = vadd.f32 0.0, %v4252
      %v4254 = vpop.f32.mrb[0].mxu0
      %v4255 = vpop.f32.mrb[0].mxu0
      %v4256 = vadd.f32 0.0, %v4255
      %v4257 = vpop.f32.mrb[0].mxu0
      %4258 = vmatprep.mubr.bf16.mxu0 0
      %4259 = vmatmul.mubr.bf16.gmra.mrb[0].mxu0 %v3754
      %v4260 = vpop.f32.mrb[0].mxu0
      %v4261 = vadd.f32 0.0, %v4260
      %v4262 = vpop.f32.mrb[0].mxu0
      %v4263 = vpop.f32.mrb[0].mxu0
      %v4264 = vadd.f32 0.0, %v4263
      %v4265 = vpop.f32.mrb[0].mxu0
      %4266 = vmatprep.mubr.bf16.mxu0 0
      %4267 = vmatmul.mubr.bf16.gmra.mrb[0].mxu0 %v3756
      %v4268 = vpop.f32.mrb[0].mxu0
      %v4269 = vadd.f32 0.0, %v4268
      %v4270 = vpop.f32.mrb[0].mxu0
      %v4271 = vpop.f32.mrb[0].mxu0
      %v4272 = vadd.f32 0.0, %v4271
      %v4273 = vpop.f32.mrb[0].mxu0
      %4274 = vmatprep.mubr.bf16.mxu0 0
      %4275 = vmatmul.mubr.bf16.gmra.mrb[0].mxu0 %v3758
      %v4276 = vpop.f32.mrb[0].mxu0
      %v4277 = vadd.f32 0.0, %v4276
      %v4278 = vpop.f32.mrb[0].mxu0
      %v4279 = vpop.f32.mrb[0].mxu0
      %v4280 = vadd.f32 0.0, %v4279
      %v4281 = vpop.f32.mrb[0].mxu0
      %4282 = vmatprep.mubr.bf16.mxu0 0
      %4283 = vmatmul.mubr.bf16.gmra.mrb[0].mxu0 %v3760
      %v4284 = vpop.f32.mrb[0].mxu0
      %v4285 = vadd.f32 0.0, %v4284
      %v4286 = vpop.f32.mrb[0].mxu0
      %v4287 = vpop.f32.mrb[0].mxu0
      %v4288 = vadd.f32 0.0, %v4287
      %v4289 = vpop.f32.mrb[0].mxu0
      %4290 = vmatprep.mubr.bf16.mxu0 0
      %4291 = vmatmul.mubr.bf16.gmra.mrb[0].mxu0 %v3762
      %v4292 = vpop.f32.mrb[0].mxu0
      %v4293 = vadd.f32 0.0, %v4292
      %v4294 = vpop.f32.mrb[0].mxu0
      %v4295 = vpop.f32.mrb[0].mxu0
      %v4296 = vadd.f32 0.0, %v4295
      %v4297 = vpop.f32.mrb[0].mxu0
      %4298 = vmatprep.mubr.bf16.mxu0 0
      %4299 = vmatmul.mubr.bf16.gmra.mrb[0].mxu0 %v3764
      %v4300 = vpop.f32.mrb[0].mxu0
      %v4301 = vadd.f32 0.0, %v4300
      %v4302 = vpop.f32.mrb[0].mxu0
      %v4303 = vpop.f32.mrb[0].mxu0
      %v4304 = vadd.f32 0.0, %v4303
      %v4305 = vpop.f32.mrb[0].mxu0
      %4306 = vmatprep.mubr.bf16.mxu0 0
      %4307 = vmatmul.mubr.bf16.gmra.mrb[0].mxu0 %v3766
      %v4308 = vpop.f32.mrb[0].mxu0
      %v4309 = vadd.f32 0.0, %v4308
      %v4310 = vpop.f32.mrb[0].mxu0
      %v4311 = vpop.f32.mrb[0].mxu0
      %v4312 = vadd.f32 0.0, %v4311
      %v4313 = vpop.f32.mrb[0].mxu0
      %4314 = vmatprep.mubr.bf16.mxu0 0
      %4315 = vmatmul.mubr.bf16.gmra.mrb[0].mxu0 %v3768
      %v4316 = vpop.f32.mrb[0].mxu0
      %v4317 = vadd.f32 0.0, %v4316
      %v4318 = vpop.f32.mrb[0].mxu0
      %v4319 = vpop.f32.mrb[0].mxu0
      %v4320 = vadd.f32 0.0, %v4319
      %v4321 = vpop.f32.mrb[0].mxu0
      %4322 = vmatprep.mubr.bf16.mxu0 0
      %4323 = vmatmul.mubr.bf16.gmra.mrb[0].mxu0 %v3770
      %v4324 = vpop.f32.mrb[0].mxu0
      %v4325 = vadd.f32 0.0, %v4324
      %v4326 = vpop.f32.mrb[0].mxu0
      %v4327 = vpop.f32.mrb[0].mxu0
      %v4328 = vadd.f32 0.0, %v4327
      %v4329 = vpop.f32.mrb[0].mxu0
      %4330 = vmatprep.mubr.bf16.mxu0 0
      %4331 = vmatmul.mubr.bf16.gmra.mrb[0].mxu0 %v3772
      %v4332 = vpop.f32.mrb[0].mxu0
      %v4333 = vadd.f32 0.0, %v4332
      %v4334 = vpop.f32.mrb[0].mxu0
      %v4335 = vpop.f32.mrb[0].mxu0
      %v4336 = vadd.f32 0.0, %v4335
      %v4337 = vpop.f32.mrb[0].mxu0
      %4338 = vmatprep.mubr.bf16.mxu0 0
      %4339 = vmatmul.mubr.bf16.gmra.mrb[0].mxu0 %v3774
      %v4340 = vpop.f32.mrb[0].mxu0
      %v4341 = vadd.f32 0.0, %v4340
      %v4342 = vpop.f32.mrb[0].mxu0
      %v4343 = vpop.f32.mrb[0].mxu0
      %v4344 = vadd.f32 0.0, %v4343
      %v4345 = vpop.f32.mrb[0].mxu0
      %4346 = vmatprep.mubr.bf16.mxu0 0
      %4347 = vmatmul.mubr.bf16.gmra.mrb[0].mxu0 %v3776
      %v4348 = vpop.f32.mrb[0].mxu0
      %v4349 = vadd.f32 0.0, %v4348
      %v4350 = vpop.f32.mrb[0].mxu0
      %v4351 = vpop.f32.mrb[0].mxu0
      %v4352 = vadd.f32 0.0, %v4351
      %v4353 = vpop.f32.mrb[0].mxu0
      %4354 = vmatprep.mubr.bf16.mxu0 0
      %4355 = vmatmul.mubr.bf16.gmra.mrb[0].mxu0 %v3778
      %v4356 = vpop.f32.mrb[0].mxu0
      %v4357 = vadd.f32 0.0, %v4356
      %v4358 = vpop.f32.mrb[0].mxu0
      %v4359 = vpop.f32.mrb[0].mxu0
      %v4360 = vadd.f32 0.0, %v4359
      %v4361 = vpop.f32.mrb[0].mxu0
      %4362 = vmatprep.mubr.bf16.mxu0 0
      %4363 = vmatmul.mubr.bf16.gmra.mrb[0].mxu0 %v3780
      %v4364 = vpop.f32.mrb[0].mxu0
      %v4365 = vadd.f32 0.0, %v4364
      %v4366 = vpop.f32.mrb[0].mxu0
      %v4367 = vpop.f32.mrb[0].mxu0
      %v4368 = vadd.f32 0.0, %v4367
      %v4369 = vpop.f32.mrb[0].mxu0
      %4370 = vmatprep.mubr.bf16.mxu0 0
      %4371 = vmatmul.mubr.bf16.gmra.mrb[0].mxu0 %v3782
      %v4372 = vpop.f32.mrb[0].mxu0
      %v4373 = vadd.f32 0.0, %v4372
      %v4374 = vpop.f32.mrb[0].mxu0
      %v4375 = vpop.f32.mrb[0].mxu0
      %v4376 = vadd.f32 0.0, %v4375
      %v4377 = vpop.f32.mrb[0].mxu0
      %4378 = vmatprep.mubr.bf16.mxu0 0
      %4379 = vmatmul.mubr.bf16.gmra.mrb[0].mxu0 %v3784
      %v4380 = vpop.f32.mrb[0].mxu0
      %v4381 = vadd.f32 0.0, %v4380
      %v4382 = vpop.f32.mrb[0].mxu0
      %v4383 = vpop.f32.mrb[0].mxu0
      %v4384 = vadd.f32 0.0, %v4383
      %v4385 = vpop.f32.mrb[0].mxu0
      %4386 = vmatprep.mubr.bf16.mxu0 0
      %4387 = vmatmul.mubr.bf16.gmra.mrb[0].mxu0 %v3786
      %v4388 = vpop.f32.mrb[0].mxu0
      %v4389 = vadd.f32 0.0, %v4388
      %v4390 = vpop.f32.mrb[0].mxu0
      %v4391 = vpop.f32.mrb[0].mxu0
      %v4392 = vadd.f32 0.0, %v4391
      %v4393 = vpop.f32.mrb[0].mxu0
      %4394 = vmatprep.mubr.bf16.mxu0 0
      %4395 = vmatmul.mubr.bf16.gmra.mrb[0].mxu0 %v3788
      %v4396 = vpop.f32.mrb[0].mxu0
      %v4397 = vadd.f32 0.0, %v4396
      %v4398 = vpop.f32.mrb[0].mxu0
      %v4399 = vpop.f32.mrb[0].mxu0
      %v4400 = vadd.f32 0.0, %v4399
      %v4401 = vpop.f32.mrb[0].mxu0
      %4402 = vmatprep.mubr.bf16.mxu0 0
      %4403 = vmatmul.mubr.bf16.gmra.mrb[0].mxu0 %v3790
      %v4404 = vpop.f32.mrb[0].mxu0
      %v4405 = vadd.f32 0.0, %v4404
      %v4406 = vpop.f32.mrb[0].mxu0
      %v4407 = vpop.f32.mrb[0].mxu0
      %v4408 = vadd.f32 0.0, %v4407
      %v4409 = vpop.f32.mrb[0].mxu0
      %4410 = vmatprep.mubr.bf16.mxu0 0
      %4411 = vmatmul.mubr.bf16.gmra.mrb[0].mxu0 %v3792
      %v4412 = vpop.f32.mrb[0].mxu0
      %v4413 = vadd.f32 0.0, %v4412
      %v4414 = vpop.f32.mrb[0].mxu0
      %v4415 = vpop.f32.mrb[0].mxu0
      %v4416 = vadd.f32 0.0, %v4415
      %v4417 = vpop.f32.mrb[0].mxu0
      %4418 = vmatprep.mubr.bf16.mxu0 0
      %4419 = vmatmul.mubr.bf16.gmra.mrb[0].mxu0 %v3794
      %v4420 = vpop.f32.mrb[0].mxu0
      %v4421 = vadd.f32 0.0, %v4420
      %v4422 = vpop.f32.mrb[0].mxu0
      %v4423 = vpop.f32.mrb[0].mxu0
      %v4424 = vadd.f32 0.0, %v4423
      %v4425 = vpop.f32.mrb[0].mxu0
      %4426 = vmatprep.mubr.bf16.mxu0 0
      %4427 = vmatmul.mubr.bf16.gmra.mrb[0].mxu0 %v3796
      %v4428 = vpop.f32.mrb[0].mxu0
      %v4429 = vadd.f32 0.0, %v4428
      %v4430 = vpop.f32.mrb[0].mxu0
      %v4431 = vpop.f32.mrb[0].mxu0
      %v4432 = vadd.f32 0.0, %v4431
      %v4433 = vpop.f32.mrb[0].mxu0
      %4434 = vmatprep.mubr.bf16.mxu0 0
      %4435 = vmatmul.mubr.bf16.gmra.mrb[0].mxu0 %v3798
      %v4436 = vpop.f32.mrb[0].mxu0
      %v4437 = vadd.f32 0.0, %v4436
      %v4438 = vpop.f32.mrb[0].mxu0
      %v4439 = vpop.f32.mrb[0].mxu0
      %v4440 = vadd.f32 0.0, %v4439
      %v4441 = vpop.f32.mrb[0].mxu0
      %4442 = vmatprep.mubr.bf16.mxu0 0
      %4443 = vmatmul.mubr.bf16.gmra.mrb[0].mxu0 %v3800
      %v4444 = vpop.f32.mrb[0].mxu0
      %v4445 = vadd.f32 0.0, %v4444
      %v4446 = vpop.f32.mrb[0].mxu0
      %v4447 = vpop.f32.mrb[0].mxu0
      %v4448 = vadd.f32 0.0, %v4447
      %v4449 = vpop.f32.mrb[0].mxu0
      %4450 = vmatprep.mubr.bf16.mxu0 0
      %4451 = vmatmul.mubr.bf16.gmra.mrb[0].mxu0 %v4171
      %v4452 = vpop.f32.mrb[0].mxu0
      %v4453 = vadd.f32 0.0, %v4452
      %v4454 = vpop.f32.mrb[0].mxu0
      %v4455 = vpop.f32.mrb[0].mxu0
      %v4456 = vadd.f32 0.0, %v4455
      %v4457 = vpop.f32.mrb[0].mxu0
      %4458 = vmatprep.mubr.bf16.mxu0 0
      %4459 = vmatmul.mubr.bf16.gmra.mrb[0].mxu0 %v4173
      %v4460 = vpop.f32.mrb[0].mxu0
      %v4461 = vadd.f32 0.0, %v4460
      %v4462 = vpop.f32.mrb[0].mxu0
      %v4463 = vpop.f32.mrb[0].mxu0
      %v4464 = vadd.f32 0.0, %v4463
      %v4465 = vpop.f32.mrb[0].mxu0
      %4466 = vdwg.mxu0
      %v4467 = vadd.f32 %v4094, %v4213
      %v4468 = vadd.f32 %v4095, %v4216
      %v4469 = vadd.f32 %v4096, %v4221
      %v4470 = vadd.f32 %v4097, %v4224
      %v4471 = vadd.f32 %v4098, %v4229
      %v4472 = vadd.f32 %v4099, %v4232
      %v4473 = vadd.f32 %v4100, %v4237
      %v4474 = vadd.f32 %v4101, %v4240
      %v4475 = vadd.f32 %v4102, %v4245
      %v4476 = vadd.f32 %v4103, %v4248
      %v4477 = vadd.f32 %v4104, %v4253
      %v4478 = vadd.f32 %v4105, %v4256
      %v4479 = vadd.f32 %v4106, %v4261
      %v4480 = vadd.f32 %v4107, %v4264
      %v4481 = vadd.f32 %v4108, %v4269
      %v4482 = vadd.f32 %v4109, %v4272
      %v4483 = vadd.f32 %v4110, %v4277
      %v4484 = vadd.f32 %v4111, %v4280
      %v4485 = vadd.f32 %v4112, %v4285
      %v4486 = vadd.f32 %v4113, %v4288
      %v4487 = vadd.f32 %v4114, %v4293
      %v4488 = vadd.f32 %v4115, %v4296
      %v4489 = vadd.f32 %v4116, %v4301
      %v4490 = vadd.f32 %v4117, %v4304
      %v4491 = vadd.f32 %v4118, %v4309
      %v4492 = vadd.f32 %v4119, %v4312
      %v4493 = vadd.f32 %v4120, %v4317
      %v4494 = vadd.f32 %v4121, %v4320
      %v4495 = vadd.f32 %v4122, %v4325
      %v4496 = vadd.f32 %v4123, %v4328
      %v4497 = vadd.f32 %v4124, %v4333
      %v4498 = vadd.f32 %v4125, %v4336
      %v4499 = vadd.f32 %v4126, %v4341
      %v4500 = vadd.f32 %v4127, %v4344
      %v4501 = vadd.f32 %v4128, %v4349
      %v4502 = vadd.f32 %v4129, %v4352
      %v4503 = vadd.f32 %v4130, %v4357
      %v4504 = vadd.f32 %v4131, %v4360
      %v4505 = vadd.f32 %v4132, %v4365
      %v4506 = vadd.f32 %v4133, %v4368
      %v4507 = vadd.f32 %v4134, %v4373
      %v4508 = vadd.f32 %v4135, %v4376
      %v4509 = vadd.f32 %v4136, %v4381
      %v4510 = vadd.f32 %v4137, %v4384
      %v4511 = vadd.f32 %v4138, %v4389
      %v4512 = vadd.f32 %v4139, %v4392
      %v4513 = vadd.f32 %v4140, %v4397
      %v4514 = vadd.f32 %v4141, %v4400
      %v4515 = vadd.f32 %v4142, %v4405
      %v4516 = vadd.f32 %v4143, %v4408
      %v4517 = vadd.f32 %v4144, %v4413
      %v4518 = vadd.f32 %v4145, %v4416
      %v4519 = vadd.f32 %v4146, %v4421
      %v4520 = vadd.f32 %v4147, %v4424
      %v4521 = vadd.f32 %v4148, %v4429
      %v4522 = vadd.f32 %v4149, %v4432
      %v4523 = vadd.f32 %v4150, %v4437
      %v4524 = vadd.f32 %v4151, %v4440
      %v4525 = vadd.f32 %v4152, %v4445
      %v4526 = vadd.f32 %v4153, %v4448
      %v4527 = vadd.f32 %v4154, %v4453
      %v4528 = vadd.f32 %v4155, %v4456
      %v4529 = vadd.f32 %v4156, %v4461
      %v4530 = vadd.f32 %v4157, %v4464
      %s4531 = scalar_lea.vmem %s5, 24
      %v4532 = vld [vmem:[%s4531] sm:$0xf]
      %v4533 = vld [vmem:[%s4531 + $0x4] sm:$0xf]
      %v4534 = vld [vmem:[%s4531 + $0x8] sm:$0xf]
      %v4538 = vunpack.c.l.b16 %v4532
      %v4539 = vunpack.c.l.b16 %v4533
      %v4540 = vunpack.c.l.b16 %v4534
      %v4541 = vpack.c.b16 %v4539, %v4538
      %v4542 = vpack.c.b16 %v4540, %v4540
      %v4544 = vsel %vm1628, %v3723, 0
      %v4546 = vsel %vm1628, %v3725, 0
      %v4549 = vsel %vm1693, %v4542, 0
      %4551 = vmatprep.subr.bf16.mxu0 0
      %4552 = vmatpush1.bf16.msra.mxu0 %v4541
      %4553 = vmatprep.subr.bf16.mxu0 0
      %4554 = vmatpush1.bf16.msra.mxu0 %v4549
      %4555 = vmatprep.subr.bf16.mxu0 0
      %4556 = vmatpush1.bf16.msra.mxu0 0
      %4557 = vmatprep.subr.bf16.mxu0 0
      %4558 = vmatpush1.bf16.msra.mxu0 0
      %4559 = vmatprep.subr.bf16.mxu0 0
      %4560 = vmatpush1.bf16.msra.mxu0 0
      %4561 = vmatprep.subr.bf16.mxu0 0
      %4562 = vmatpush1.bf16.msra.mxu0 0
      %4563 = vmatprep.subr.bf16.mxu0 0
      %4564 = vmatpush1.bf16.msra.mxu0 0
      %4565 = vmatprep.subr.bf16.mxu0 0
      %4566 = vmatpush1.bf16.msra.mxu0 0
      %4567 = vmatprep.subr.bf16.mxu0 0
      %4568 = vmatpush1.bf16.msra.mxu0 0
      %4569 = vmatprep.subr.bf16.mxu0 0
      %4570 = vmatpush1.bf16.msra.mxu0 0
      %4571 = vmatprep.subr.bf16.mxu0 0
      %4572 = vmatpush1.bf16.msra.mxu0 0
      %4573 = vmatprep.subr.bf16.mxu0 0
      %4574 = vmatpush1.bf16.msra.mxu0 0
      %4575 = vmatprep.subr.bf16.mxu0 0
      %4576 = vmatpush1.bf16.msra.mxu0 0
      %4577 = vmatprep.subr.bf16.mxu0 0
      %4578 = vmatpush1.bf16.msra.mxu0 0
      %4579 = vmatprep.subr.bf16.mxu0 0
      %4580 = vmatpush1.bf16.msra.mxu0 0
      %4581 = vmatprep.subr.bf16.mxu0 0
      %4582 = vmatpush1.bf16.msra.mxu0 0
      %4583 = vmatprep.mubr.bf16.mxu0 0
      %4584 = vmatmul.mubr.bf16.gmra.mrb[0].mxu0 %v3746
      %v4585 = vpop.f32.mrb[0].mxu0
      %v4586 = vadd.f32 0.0, %v4585
      %v4587 = vpop.f32.mrb[0].mxu0
      %v4588 = vpop.f32.mrb[0].mxu0
      %v4589 = vadd.f32 0.0, %v4588
      %v4590 = vpop.f32.mrb[0].mxu0
      %4591 = vmatprep.mubr.bf16.mxu0 0
      %4592 = vmatmul.mubr.bf16.gmra.mrb[0].mxu0 %v3748
      %v4593 = vpop.f32.mrb[0].mxu0
      %v4594 = vadd.f32 0.0, %v4593
      %v4595 = vpop.f32.mrb[0].mxu0
      %v4596 = vpop.f32.mrb[0].mxu0
      %v4597 = vadd.f32 0.0, %v4596
      %v4598 = vpop.f32.mrb[0].mxu0
      %4599 = vmatprep.mubr.bf16.mxu0 0
      %4600 = vmatmul.mubr.bf16.gmra.mrb[0].mxu0 %v3750
      %v4601 = vpop.f32.mrb[0].mxu0
      %v4602 = vadd.f32 0.0, %v4601
      %v4603 = vpop.f32.mrb[0].mxu0
      %v4604 = vpop.f32.mrb[0].mxu0
      %v4605 = vadd.f32 0.0, %v4604
      %v4606 = vpop.f32.mrb[0].mxu0
      %4607 = vmatprep.mubr.bf16.mxu0 0
      %4608 = vmatmul.mubr.bf16.gmra.mrb[0].mxu0 %v3752
      %v4609 = vpop.f32.mrb[0].mxu0
      %v4610 = vadd.f32 0.0, %v4609
      %v4611 = vpop.f32.mrb[0].mxu0
      %v4612 = vpop.f32.mrb[0].mxu0
      %v4613 = vadd.f32 0.0, %v4612
      %v4614 = vpop.f32.mrb[0].mxu0
      %4615 = vmatprep.mubr.bf16.mxu0 0
      %4616 = vmatmul.mubr.bf16.gmra.mrb[0].mxu0 %v3754
      %v4617 = vpop.f32.mrb[0].mxu0
      %v4618 = vadd.f32 0.0, %v4617
      %v4619 = vpop.f32.mrb[0].mxu0
      %v4620 = vpop.f32.mrb[0].mxu0
      %v4621 = vadd.f32 0.0, %v4620
      %v4622 = vpop.f32.mrb[0].mxu0
      %4623 = vmatprep.mubr.bf16.mxu0 0
      %4624 = vmatmul.mubr.bf16.gmra.mrb[0].mxu0 %v3756
      %v4625 = vpop.f32.mrb[0].mxu0
      %v4626 = vadd.f32 0.0, %v4625
      %v4627 = vpop.f32.mrb[0].mxu0
      %v4628 = vpop.f32.mrb[0].mxu0
      %v4629 = vadd.f32 0.0, %v4628
      %v4630 = vpop.f32.mrb[0].mxu0
      %4631 = vmatprep.mubr.bf16.mxu0 0
      %4632 = vmatmul.mubr.bf16.gmra.mrb[0].mxu0 %v3758
      %v4633 = vpop.f32.mrb[0].mxu0
      %v4634 = vadd.f32 0.0, %v4633
      %v4635 = vpop.f32.mrb[0].mxu0
      %v4636 = vpop.f32.mrb[0].mxu0
      %v4637 = vadd.f32 0.0, %v4636
      %v4638 = vpop.f32.mrb[0].mxu0
      %4639 = vmatprep.mubr.bf16.mxu0 0
      %4640 = vmatmul.mubr.bf16.gmra.mrb[0].mxu0 %v3760
      %v4641 = vpop.f32.mrb[0].mxu0
      %v4642 = vadd.f32 0.0, %v4641
      %v4643 = vpop.f32.mrb[0].mxu0
      %v4644 = vpop.f32.mrb[0].mxu0
      %v4645 = vadd.f32 0.0, %v4644
      %v4646 = vpop.f32.mrb[0].mxu0
      %4647 = vmatprep.mubr.bf16.mxu0 0
      %4648 = vmatmul.mubr.bf16.gmra.mrb[0].mxu0 %v3762
      %v4649 = vpop.f32.mrb[0].mxu0
      %v4650 = vadd.f32 0.0, %v4649
      %v4651 = vpop.f32.mrb[0].mxu0
      %v4652 = vpop.f32.mrb[0].mxu0
      %v4653 = vadd.f32 0.0, %v4652
      %v4654 = vpop.f32.mrb[0].mxu0
      %4655 = vmatprep.mubr.bf16.mxu0 0
      %4656 = vmatmul.mubr.bf16.gmra.mrb[0].mxu0 %v3764
      %v4657 = vpop.f32.mrb[0].mxu0
      %v4658 = vadd.f32 0.0, %v4657
      %v4659 = vpop.f32.mrb[0].mxu0
      %v4660 = vpop.f32.mrb[0].mxu0
      %v4661 = vadd.f32 0.0, %v4660
      %v4662 = vpop.f32.mrb[0].mxu0
      %4663 = vmatprep.mubr.bf16.mxu0 0
      %4664 = vmatmul.mubr.bf16.gmra.mrb[0].mxu0 %v3766
      %v4665 = vpop.f32.mrb[0].mxu0
      %v4666 = vadd.f32 0.0, %v4665
      %v4667 = vpop.f32.mrb[0].mxu0
      %v4668 = vpop.f32.mrb[0].mxu0
      %v4669 = vadd.f32 0.0, %v4668
      %v4670 = vpop.f32.mrb[0].mxu0
      %4671 = vmatprep.mubr.bf16.mxu0 0
      %4672 = vmatmul.mubr.bf16.gmra.mrb[0].mxu0 %v3768
      %v4673 = vpop.f32.mrb[0].mxu0
      %v4674 = vadd.f32 0.0, %v4673
      %v4675 = vpop.f32.mrb[0].mxu0
      %v4676 = vpop.f32.mrb[0].mxu0
      %v4677 = vadd.f32 0.0, %v4676
      %v4678 = vpop.f32.mrb[0].mxu0
      %4679 = vmatprep.mubr.bf16.mxu0 0
      %4680 = vmatmul.mubr.bf16.gmra.mrb[0].mxu0 %v3770
      %v4681 = vpop.f32.mrb[0].mxu0
      %v4682 = vadd.f32 0.0, %v4681
      %v4683 = vpop.f32.mrb[0].mxu0
      %v4684 = vpop.f32.mrb[0].mxu0
      %v4685 = vadd.f32 0.0, %v4684
      %v4686 = vpop.f32.mrb[0].mxu0
      %4687 = vmatprep.mubr.bf16.mxu0 0
      %4688 = vmatmul.mubr.bf16.gmra.mrb[0].mxu0 %v3772
      %v4689 = vpop.f32.mrb[0].mxu0
      %v4690 = vadd.f32 0.0, %v4689
      %v4691 = vpop.f32.mrb[0].mxu0
      %v4692 = vpop.f32.mrb[0].mxu0
      %v4693 = vadd.f32 0.0, %v4692
      %v4694 = vpop.f32.mrb[0].mxu0
      %4695 = vmatprep.mubr.bf16.mxu0 0
      %4696 = vmatmul.mubr.bf16.gmra.mrb[0].mxu0 %v3774
      %v4697 = vpop.f32.mrb[0].mxu0
      %v4698 = vadd.f32 0.0, %v4697
      %v4699 = vpop.f32.mrb[0].mxu0
      %v4700 = vpop.f32.mrb[0].mxu0
      %v4701 = vadd.f32 0.0, %v4700
      %v4702 = vpop.f32.mrb[0].mxu0
      %4703 = vmatprep.mubr.bf16.mxu0 0
      %4704 = vmatmul.mubr.bf16.gmra.mrb[0].mxu0 %v3776
      %v4705 = vpop.f32.mrb[0].mxu0
      %v4706 = vadd.f32 0.0, %v4705
      %v4707 = vpop.f32.mrb[0].mxu0
      %v4708 = vpop.f32.mrb[0].mxu0
      %v4709 = vadd.f32 0.0, %v4708
      %v4710 = vpop.f32.mrb[0].mxu0
      %4711 = vmatprep.mubr.bf16.mxu0 0
      %4712 = vmatmul.mubr.bf16.gmra.mrb[0].mxu0 %v3778
      %v4713 = vpop.f32.mrb[0].mxu0
      %v4714 = vadd.f32 0.0, %v4713
      %v4715 = vpop.f32.mrb[0].mxu0
      %v4716 = vpop.f32.mrb[0].mxu0
      %v4717 = vadd.f32 0.0, %v4716
      %v4718 = vpop.f32.mrb[0].mxu0
      %4719 = vmatprep.mubr.bf16.mxu0 0
      %4720 = vmatmul.mubr.bf16.gmra.mrb[0].mxu0 %v3780
      %v4721 = vpop.f32.mrb[0].mxu0
      %v4722 = vadd.f32 0.0, %v4721
      %v4723 = vpop.f32.mrb[0].mxu0
      %v4724 = vpop.f32.mrb[0].mxu0
      %v4725 = vadd.f32 0.0, %v4724
      %v4726 = vpop.f32.mrb[0].mxu0
      %4727 = vmatprep.mubr.bf16.mxu0 0
      %4728 = vmatmul.mubr.bf16.gmra.mrb[0].mxu0 %v3782
      %v4729 = vpop.f32.mrb[0].mxu0
      %v4730 = vadd.f32 0.0, %v4729
      %v4731 = vpop.f32.mrb[0].mxu0
      %v4732 = vpop.f32.mrb[0].mxu0
      %v4733 = vadd.f32 0.0, %v4732
      %v4734 = vpop.f32.mrb[0].mxu0
      %4735 = vmatprep.mubr.bf16.mxu0 0
      %4736 = vmatmul.mubr.bf16.gmra.mrb[0].mxu0 %v3784
      %v4737 = vpop.f32.mrb[0].mxu0
      %v4738 = vadd.f32 0.0, %v4737
      %v4739 = vpop.f32.mrb[0].mxu0
      %v4740 = vpop.f32.mrb[0].mxu0
      %v4741 = vadd.f32 0.0, %v4740
      %v4742 = vpop.f32.mrb[0].mxu0
      %4743 = vmatprep.mubr.bf16.mxu0 0
      %4744 = vmatmul.mubr.bf16.gmra.mrb[0].mxu0 %v3786
      %v4745 = vpop.f32.mrb[0].mxu0
      %v4746 = vadd.f32 0.0, %v4745
      %v4747 = vpop.f32.mrb[0].mxu0
      %v4748 = vpop.f32.mrb[0].mxu0
      %v4749 = vadd.f32 0.0, %v4748
      %v4750 = vpop.f32.mrb[0].mxu0
      %4751 = vmatprep.mubr.bf16.mxu0 0
      %4752 = vmatmul.mubr.bf16.gmra.mrb[0].mxu0 %v3788
      %v4753 = vpop.f32.mrb[0].mxu0
      %v4754 = vadd.f32 0.0, %v4753
      %v4755 = vpop.f32.mrb[0].mxu0
      %v4756 = vpop.f32.mrb[0].mxu0
      %v4757 = vadd.f32 0.0, %v4756
      %v4758 = vpop.f32.mrb[0].mxu0
      %4759 = vmatprep.mubr.bf16.mxu0 0
      %4760 = vmatmul.mubr.bf16.gmra.mrb[0].mxu0 %v3790
      %v4761 = vpop.f32.mrb[0].mxu0
      %v4762 = vadd.f32 0.0, %v4761
      %v4763 = vpop.f32.mrb[0].mxu0
      %v4764 = vpop.f32.mrb[0].mxu0
      %v4765 = vadd.f32 0.0, %v4764
      %v4766 = vpop.f32.mrb[0].mxu0
      %4767 = vmatprep.mubr.bf16.mxu0 0
      %4768 = vmatmul.mubr.bf16.gmra.mrb[0].mxu0 %v3792
      %v4769 = vpop.f32.mrb[0].mxu0
      %v4770 = vadd.f32 0.0, %v4769
      %v4771 = vpop.f32.mrb[0].mxu0
      %v4772 = vpop.f32.mrb[0].mxu0
      %v4773 = vadd.f32 0.0, %v4772
      %v4774 = vpop.f32.mrb[0].mxu0
      %4775 = vmatprep.mubr.bf16.mxu0 0
      %4776 = vmatmul.mubr.bf16.gmra.mrb[0].mxu0 %v3794
      %v4777 = vpop.f32.mrb[0].mxu0
      %v4778 = vadd.f32 0.0, %v4777
      %v4779 = vpop.f32.mrb[0].mxu0
      %v4780 = vpop.f32.mrb[0].mxu0
      %v4781 = vadd.f32 0.0, %v4780
      %v4782 = vpop.f32.mrb[0].mxu0
      %4783 = vmatprep.mubr.bf16.mxu0 0
      %4784 = vmatmul.mubr.bf16.gmra.mrb[0].mxu0 %v3796
      %v4785 = vpop.f32.mrb[0].mxu0
      %v4786 = vadd.f32 0.0, %v4785
      %v4787 = vpop.f32.mrb[0].mxu0
      %v4788 = vpop.f32.mrb[0].mxu0
      %v4789 = vadd.f32 0.0, %v4788
      %v4790 = vpop.f32.mrb[0].mxu0
      %4791 = vmatprep.mubr.bf16.mxu0 0
      %4792 = vmatmul.mubr.bf16.gmra.mrb[0].mxu0 %v3798
      %v4793 = vpop.f32.mrb[0].mxu0
      %v4794 = vadd.f32 0.0, %v4793
      %v4795 = vpop.f32.mrb[0].mxu0
      %v4796 = vpop.f32.mrb[0].mxu0
      %v4797 = vadd.f32 0.0, %v4796
      %v4798 = vpop.f32.mrb[0].mxu0
      %4799 = vmatprep.mubr.bf16.mxu0 0
      %4800 = vmatmul.mubr.bf16.gmra.mrb[0].mxu0 %v3800
      %v4801 = vpop.f32.mrb[0].mxu0
      %v4802 = vadd.f32 0.0, %v4801
      %v4803 = vpop.f32.mrb[0].mxu0
      %v4804 = vpop.f32.mrb[0].mxu0
      %v4805 = vadd.f32 0.0, %v4804
      %v4806 = vpop.f32.mrb[0].mxu0
      %4807 = vmatprep.mubr.bf16.mxu0 0
      %4808 = vmatmul.mubr.bf16.gmra.mrb[0].mxu0 %v4171
      %v4809 = vpop.f32.mrb[0].mxu0
      %v4810 = vadd.f32 0.0, %v4809
      %v4811 = vpop.f32.mrb[0].mxu0
      %v4812 = vpop.f32.mrb[0].mxu0
      %v4813 = vadd.f32 0.0, %v4812
      %v4814 = vpop.f32.mrb[0].mxu0
      %4815 = vmatprep.mubr.bf16.mxu0 0
      %4816 = vmatmul.mubr.bf16.gmra.mrb[0].mxu0 %v4173
      %v4817 = vpop.f32.mrb[0].mxu0
      %v4818 = vadd.f32 0.0, %v4817
      %v4819 = vpop.f32.mrb[0].mxu0
      %v4820 = vpop.f32.mrb[0].mxu0
      %v4821 = vadd.f32 0.0, %v4820
      %v4822 = vpop.f32.mrb[0].mxu0
      %4823 = vmatprep.mubr.bf16.mxu0 0
      %4824 = vmatmul.mubr.bf16.gmra.mrb[0].mxu0 %v4544
      %v4825 = vpop.f32.mrb[0].mxu0
      %v4826 = vadd.f32 0.0, %v4825
      %v4827 = vpop.f32.mrb[0].mxu0
      %v4828 = vpop.f32.mrb[0].mxu0
      %v4829 = vadd.f32 0.0, %v4828
      %v4830 = vpop.f32.mrb[0].mxu0
      %4831 = vmatprep.mubr.bf16.mxu0 0
      %4832 = vmatmul.mubr.bf16.gmra.mrb[0].mxu0 %v4546
      %v4833 = vpop.f32.mrb[0].mxu0
      %v4834 = vadd.f32 0.0, %v4833
      %v4835 = vpop.f32.mrb[0].mxu0
      %v4836 = vpop.f32.mrb[0].mxu0
      %v4837 = vadd.f32 0.0, %v4836
      %v4838 = vpop.f32.mrb[0].mxu0
      %4839 = vdwg.mxu0
      %v4840 = vadd.f32 %v4467, %v4586
      %v4841 = vadd.f32 %v4468, %v4589
      %v4842 = vadd.f32 %v4469, %v4594
      %v4843 = vadd.f32 %v4470, %v4597
      %v4844 = vadd.f32 %v4471, %v4602
      %v4845 = vadd.f32 %v4472, %v4605
      %v4846 = vadd.f32 %v4473, %v4610
      %v4847 = vadd.f32 %v4474, %v4613
      %v4848 = vadd.f32 %v4475, %v4618
      %v4849 = vadd.f32 %v4476, %v4621
      %v4850 = vadd.f32 %v4477, %v4626
      %v4851 = vadd.f32 %v4478, %v4629
      %v4852 = vadd.f32 %v4479, %v4634
      %v4853 = vadd.f32 %v4480, %v4637
      %v4854 = vadd.f32 %v4481, %v4642
      %v4855 = vadd.f32 %v4482, %v4645
      %v4856 = vadd.f32 %v4483, %v4650
      %v4857 = vadd.f32 %v4484, %v4653
      %v4858 = vadd.f32 %v4485, %v4658
      %v4859 = vadd.f32 %v4486, %v4661
      %v4860 = vadd.f32 %v4487, %v4666
      %v4861 = vadd.f32 %v4488, %v4669
      %v4862 = vadd.f32 %v4489, %v4674
      %v4863 = vadd.f32 %v4490, %v4677
      %v4864 = vadd.f32 %v4491, %v4682
      %v4865 = vadd.f32 %v4492, %v4685
      %v4866 = vadd.f32 %v4493, %v4690
      %v4867 = vadd.f32 %v4494, %v4693
      %v4868 = vadd.f32 %v4495, %v4698
      %v4869 = vadd.f32 %v4496, %v4701
      %v4870 = vadd.f32 %v4497, %v4706
      %v4871 = vadd.f32 %v4498, %v4709
      %v4872 = vadd.f32 %v4499, %v4714
      %v4873 = vadd.f32 %v4500, %v4717
      %v4874 = vadd.f32 %v4501, %v4722
      %v4875 = vadd.f32 %v4502, %v4725
      %v4876 = vadd.f32 %v4503, %v4730
      %v4877 = vadd.f32 %v4504, %v4733
      %v4878 = vadd.f32 %v4505, %v4738
      %v4879 = vadd.f32 %v4506, %v4741
      %v4880 = vadd.f32 %v4507, %v4746
      %v4881 = vadd.f32 %v4508, %v4749
      %v4882 = vadd.f32 %v4509, %v4754
      %v4883 = vadd.f32 %v4510, %v4757
      %v4884 = vadd.f32 %v4511, %v4762
      %v4885 = vadd.f32 %v4512, %v4765
      %v4886 = vadd.f32 %v4513, %v4770
      %v4887 = vadd.f32 %v4514, %v4773
      %v4888 = vadd.f32 %v4515, %v4778
      %v4889 = vadd.f32 %v4516, %v4781
      %v4890 = vadd.f32 %v4517, %v4786
      %v4891 = vadd.f32 %v4518, %v4789
      %v4892 = vadd.f32 %v4519, %v4794
      %v4893 = vadd.f32 %v4520, %v4797
      %v4894 = vadd.f32 %v4521, %v4802
      %v4895 = vadd.f32 %v4522, %v4805
      %v4896 = vadd.f32 %v4523, %v4810
      %v4897 = vadd.f32 %v4524, %v4813
      %v4898 = vadd.f32 %v4525, %v4818
      %v4899 = vadd.f32 %v4526, %v4821
      %v4900 = vadd.f32 %v4527, %v4826
      %v4901 = vadd.f32 %v4528, %v4829
      %v4902 = vadd.f32 %v4529, %v4834
      %v4903 = vadd.f32 %v4530, %v4837
      %v4904 = vld [vmem:[%s6] sm:$0x1]
      %v4906 = vlaneseq
      %v4907 = vshrl.u32 %v4906, 7
      %v4908 = vsub.s32 0, %v4907
      %v4909 = vrot.slane %v4904, %v4908
      %v4911 = vmul.f32 %v4840, %v4909
      %v4912 = vmul.f32 %v4841, %v4909
      %v4913 = vmul.f32 %v4842, %v4909
      %v4914 = vmul.f32 %v4843, %v4909
      %v4915 = vmul.f32 %v4844, %v4909
      %v4916 = vmul.f32 %v4845, %v4909
      %v4917 = vmul.f32 %v4846, %v4909
      %v4918 = vmul.f32 %v4847, %v4909
      %v4919 = vmul.f32 %v4848, %v4909
      %v4920 = vmul.f32 %v4849, %v4909
      %v4921 = vmul.f32 %v4850, %v4909
      %v4922 = vmul.f32 %v4851, %v4909
      %v4923 = vmul.f32 %v4852, %v4909
      %v4924 = vmul.f32 %v4853, %v4909
      %v4925 = vmul.f32 %v4854, %v4909
      %v4926 = vmul.f32 %v4855, %v4909
      %v4927 = vmul.f32 %v4856, %v4909
      %v4928 = vmul.f32 %v4857, %v4909
      %v4929 = vmul.f32 %v4858, %v4909
      %v4930 = vmul.f32 %v4859, %v4909
      %v4931 = vmul.f32 %v4860, %v4909
      %v4932 = vmul.f32 %v4861, %v4909
      %v4933 = vmul.f32 %v4862, %v4909
      %v4934 = vmul.f32 %v4863, %v4909
      %v4935 = vmul.f32 %v4864, %v4909
      %v4936 = vmul.f32 %v4865, %v4909
      %v4937 = vmul.f32 %v4866, %v4909
      %v4938 = vmul.f32 %v4867, %v4909
      %v4939 = vmul.f32 %v4868, %v4909
      %v4940 = vmul.f32 %v4869, %v4909
      %v4941 = vmul.f32 %v4870, %v4909
      %v4942 = vmul.f32 %v4871, %v4909
      %v4943 = vmul.f32 %v4872, %v4909
      %v4944 = vmul.f32 %v4873, %v4909
      %v4945 = vmul.f32 %v4874, %v4909
      %v4946 = vmul.f32 %v4875, %v4909
      %v4947 = vmul.f32 %v4876, %v4909
      %v4948 = vmul.f32 %v4877, %v4909
      %v4949 = vmul.f32 %v4878, %v4909
      %v4950 = vmul.f32 %v4879, %v4909
      %v4951 = vmul.f32 %v4880, %v4909
      %v4952 = vmul.f32 %v4881, %v4909
      %v4953 = vmul.f32 %v4882, %v4909
      %v4954 = vmul.f32 %v4883, %v4909
      %v4955 = vmul.f32 %v4884, %v4909
      %v4956 = vmul.f32 %v4885, %v4909
      %v4957 = vmul.f32 %v4886, %v4909
      %v4958 = vmul.f32 %v4887, %v4909
      %v4959 = vmul.f32 %v4888, %v4909
      %v4960 = vmul.f32 %v4889, %v4909
      %v4961 = vmul.f32 %v4890, %v4909
      %v4962 = vmul.f32 %v4891, %v4909
      %v4963 = vmul.f32 %v4892, %v4909
      %v4964 = vmul.f32 %v4893, %v4909
      %v4965 = vmul.f32 %v4894, %v4909
      %v4966 = vmul.f32 %v4895, %v4909
      %v4967 = vmul.f32 %v4896, %v4909
      %v4968 = vmul.f32 %v4897, %v4909
      %v4969 = vmul.f32 %v4898, %v4909
      %v4970 = vmul.f32 %v4899, %v4909
      %v4971 = vmul.f32 %v4900, %v4909
      %v4972 = vmul.f32 %v4901, %v4909
      %v4973 = vmul.f32 %v4902, %v4909
      %v4974 = vmul.f32 %v4903, %v4909
      %v4975 = vld [vmem:[%s7] sm:$0x1]
      %v4977 = vlaneseq
      %v4978 = vshrl.u32 %v4977, 7
      %v4979 = vsub.s32 0, %v4978
      %v4980 = vrot.slane %v4975, %v4979
      %v4982 = vadd.f32 %v4911, %v4980
      %v4983 = vadd.f32 %v4912, %v4980
      %v4984 = vadd.f32 %v4913, %v4980
      %v4985 = vadd.f32 %v4914, %v4980
      %v4986 = vadd.f32 %v4915, %v4980
      %v4987 = vadd.f32 %v4916, %v4980
      %v4988 = vadd.f32 %v4917, %v4980
      %v4989 = vadd.f32 %v4918, %v4980
      %v4990 = vadd.f32 %v4919, %v4980
      %v4991 = vadd.f32 %v4920, %v4980
      %v4992 = vadd.f32 %v4921, %v4980
      %v4993 = vadd.f32 %v4922, %v4980
      %v4994 = vadd.f32 %v4923, %v4980
      %v4995 = vadd.f32 %v4924, %v4980
      %v4996 = vadd.f32 %v4925, %v4980
      %v4997 = vadd.f32 %v4926, %v4980
      %v4998 = vadd.f32 %v4927, %v4980
      %v4999 = vadd.f32 %v4928, %v4980
      %v5000 = vadd.f32 %v4929, %v4980
      %v5001 = vadd.f32 %v4930, %v4980
      %v5002 = vadd.f32 %v4931, %v4980
      %v5003 = vadd.f32 %v4932, %v4980
      %v5004 = vadd.f32 %v4933, %v4980
      %v5005 = vadd.f32 %v4934, %v4980
      %v5006 = vadd.f32 %v4935, %v4980
      %v5007 = vadd.f32 %v4936, %v4980
      %v5008 = vadd.f32 %v4937, %v4980
      %v5009 = vadd.f32 %v4938, %v4980
      %v5010 = vadd.f32 %v4939, %v4980
      %v5011 = vadd.f32 %v4940, %v4980
      %v5012 = vadd.f32 %v4941, %v4980
      %v5013 = vadd.f32 %v4942, %v4980
      %v5014 = vadd.f32 %v4943, %v4980
      %v5015 = vadd.f32 %v4944, %v4980
      %v5016 = vadd.f32 %v4945, %v4980
      %v5017 = vadd.f32 %v4946, %v4980
      %v5018 = vadd.f32 %v4947, %v4980
      %v5019 = vadd.f32 %v4948, %v4980
      %v5020 = vadd.f32 %v4949, %v4980
      %v5021 = vadd.f32 %v4950, %v4980
      %v5022 = vadd.f32 %v4951, %v4980
      %v5023 = vadd.f32 %v4952, %v4980
      %v5024 = vadd.f32 %v4953, %v4980
      %v5025 = vadd.f32 %v4954, %v4980
      %v5026 = vadd.f32 %v4955, %v4980
      %v5027 = vadd.f32 %v4956, %v4980
      %v5028 = vadd.f32 %v4957, %v4980
      %v5029 = vadd.f32 %v4958, %v4980
      %v5030 = vadd.f32 %v4959, %v4980
      %v5031 = vadd.f32 %v4960, %v4980
      %v5032 = vadd.f32 %v4961, %v4980
      %v5033 = vadd.f32 %v4962, %v4980
      %v5034 = vadd.f32 %v4963, %v4980
      %v5035 = vadd.f32 %v4964, %v4980
      %v5036 = vadd.f32 %v4965, %v4980
      %v5037 = vadd.f32 %v4966, %v4980
      %v5038 = vadd.f32 %v4967, %v4980
      %v5039 = vadd.f32 %v4968, %v4980
      %v5040 = vadd.f32 %v4969, %v4980
      %v5041 = vadd.f32 %v4970, %v4980
      %v5042 = vadd.f32 %v4971, %v4980
      %v5043 = vadd.f32 %v4972, %v4980
      %v5044 = vadd.f32 %v4973, %v4980
      %v5045 = vadd.f32 %v4974, %v4980
      %v5046 = vmax.f32 %v4982, 0.0
      %v5047 = vmax.f32 %v4983, 0.0
      %v5048 = vmax.f32 %v4984, 0.0
      %v5049 = vmax.f32 %v4985, 0.0
      %v5050 = vmax.f32 %v4986, 0.0
      %v5051 = vmax.f32 %v4987, 0.0
      %v5052 = vmax.f32 %v4988, 0.0
      %v5053 = vmax.f32 %v4989, 0.0
      %v5054 = vmax.f32 %v4990, 0.0
      %v5055 = vmax.f32 %v4991, 0.0
      %v5056 = vmax.f32 %v4992, 0.0
      %v5057 = vmax.f32 %v4993, 0.0
      %v5058 = vmax.f32 %v4994, 0.0
      %v5059 = vmax.f32 %v4995, 0.0
      %v5060 = vmax.f32 %v4996, 0.0
      %v5061 = vmax.f32 %v4997, 0.0
      %v5062 = vmax.f32 %v4998, 0.0
      %v5063 = vmax.f32 %v4999, 0.0
      %v5064 = vmax.f32 %v5000, 0.0
      %v5065 = vmax.f32 %v5001, 0.0
      %v5066 = vmax.f32 %v5002, 0.0
      %v5067 = vmax.f32 %v5003, 0.0
      %v5068 = vmax.f32 %v5004, 0.0
      %v5069 = vmax.f32 %v5005, 0.0
      %v5070 = vmax.f32 %v5006, 0.0
      %v5071 = vmax.f32 %v5007, 0.0
      %v5072 = vmax.f32 %v5008, 0.0
      %v5073 = vmax.f32 %v5009, 0.0
      %v5074 = vmax.f32 %v5010, 0.0
      %v5075 = vmax.f32 %v5011, 0.0
      %v5076 = vmax.f32 %v5012, 0.0
      %v5077 = vmax.f32 %v5013, 0.0
      %v5078 = vmax.f32 %v5014, 0.0
      %v5079 = vmax.f32 %v5015, 0.0
      %v5080 = vmax.f32 %v5016, 0.0
      %v5081 = vmax.f32 %v5017, 0.0
      %v5082 = vmax.f32 %v5018, 0.0
      %v5083 = vmax.f32 %v5019, 0.0
      %v5084 = vmax.f32 %v5020, 0.0
      %v5085 = vmax.f32 %v5021, 0.0
      %v5086 = vmax.f32 %v5022, 0.0
      %v5087 = vmax.f32 %v5023, 0.0
      %v5088 = vmax.f32 %v5024, 0.0
      %v5089 = vmax.f32 %v5025, 0.0
      %v5090 = vmax.f32 %v5026, 0.0
      %v5091 = vmax.f32 %v5027, 0.0
      %v5092 = vmax.f32 %v5028, 0.0
      %v5093 = vmax.f32 %v5029, 0.0
      %v5094 = vmax.f32 %v5030, 0.0
      %v5095 = vmax.f32 %v5031, 0.0
      %v5096 = vmax.f32 %v5032, 0.0
      %v5097 = vmax.f32 %v5033, 0.0
      %v5098 = vmax.f32 %v5034, 0.0
      %v5099 = vmax.f32 %v5035, 0.0
      %v5100 = vmax.f32 %v5036, 0.0
      %v5101 = vmax.f32 %v5037, 0.0
      %v5102 = vmax.f32 %v5038, 0.0
      %v5103 = vmax.f32 %v5039, 0.0
      %v5104 = vmax.f32 %v5040, 0.0
      %v5105 = vmax.f32 %v5041, 0.0
      %v5106 = vmax.f32 %v5042, 0.0
      %v5107 = vmax.f32 %v5043, 0.0
      %v5108 = vmax.f32 %v5044, 0.0
      %v5109 = vmax.f32 %v5045, 0.0
      %v5110 = vpack.c.bf16 %v5047, %v5046
      %v5111 = vpack.c.bf16 %v5049, %v5048
      %v5112 = vpack.c.bf16 %v5051, %v5050
      %v5113 = vpack.c.bf16 %v5053, %v5052
      %v5114 = vpack.c.bf16 %v5055, %v5054
      %v5115 = vpack.c.bf16 %v5057, %v5056
      %v5116 = vpack.c.bf16 %v5059, %v5058
      %v5117 = vpack.c.bf16 %v5061, %v5060
      %v5118 = vpack.c.bf16 %v5063, %v5062
      %v5119 = vpack.c.bf16 %v5065, %v5064
      %v5120 = vpack.c.bf16 %v5067, %v5066
      %v5121 = vpack.c.bf16 %v5069, %v5068
      %v5122 = vpack.c.bf16 %v5071, %v5070
      %v5123 = vpack.c.bf16 %v5073, %v5072
      %v5124 = vpack.c.bf16 %v5075, %v5074
      %v5125 = vpack.c.bf16 %v5077, %v5076
      %v5126 = vpack.c.bf16 %v5079, %v5078
      %v5127 = vpack.c.bf16 %v5081, %v5080
      %v5128 = vpack.c.bf16 %v5083, %v5082
      %v5129 = vpack.c.bf16 %v5085, %v5084
      %v5130 = vpack.c.bf16 %v5087, %v5086
      %v5131 = vpack.c.bf16 %v5089, %v5088
      %v5132 = vpack.c.bf16 %v5091, %v5090
      %v5133 = vpack.c.bf16 %v5093, %v5092
      %v5134 = vpack.c.bf16 %v5095, %v5094
      %v5135 = vpack.c.bf16 %v5097, %v5096
      %v5136 = vpack.c.bf16 %v5099, %v5098
      %v5137 = vpack.c.bf16 %v5101, %v5100
      %v5138 = vpack.c.bf16 %v5103, %v5102
      %v5139 = vpack.c.bf16 %v5105, %v5104
      %v5140 = vpack.c.bf16 %v5107, %v5106
      %v5141 = vpack.c.bf16 %v5109, %v5108
      %v5174 = vunpack.c.l.b16 %v5110
      %v5175 = vunpack.c.h.b16 %v5110
      %v5176 = vunpack.c.l.b16 %v5111
      %v5177 = vunpack.c.h.b16 %v5111
      %v5178 = vunpack.c.l.b16 %v5112
      %v5179 = vunpack.c.h.b16 %v5112
      %v5180 = vunpack.c.l.b16 %v5113
      %v5181 = vunpack.c.h.b16 %v5113
      %v5182 = vunpack.c.l.b16 %v5114
      %v5183 = vunpack.c.h.b16 %v5114
      %v5184 = vunpack.c.l.b16 %v5115
      %v5185 = vunpack.c.h.b16 %v5115
      %v5186 = vunpack.c.l.b16 %v5116
      %v5187 = vunpack.c.h.b16 %v5116
      %v5188 = vunpack.c.l.b16 %v5117
      %v5189 = vunpack.c.h.b16 %v5117
      %v5190 = vunpack.c.l.b16 %v5118
      %v5191 = vunpack.c.h.b16 %v5118
      %v5192 = vunpack.c.l.b16 %v5119
      %v5193 = vunpack.c.h.b16 %v5119
      %v5194 = vunpack.c.l.b16 %v5120
      %v5195 = vunpack.c.h.b16 %v5120
      %v5196 = vunpack.c.l.b16 %v5121
      %v5197 = vunpack.c.h.b16 %v5121
      %v5198 = vunpack.c.l.b16 %v5122
      %v5199 = vunpack.c.h.b16 %v5122
      %v5200 = vunpack.c.l.b16 %v5123
      %v5201 = vunpack.c.h.b16 %v5123
      %v5202 = vunpack.c.l.b16 %v5124
      %v5203 = vunpack.c.h.b16 %v5124
      %v5204 = vunpack.c.l.b16 %v5125
      %v5205 = vunpack.c.h.b16 %v5125
      %v5206 = vunpack.c.l.b16 %v5126
      %v5207 = vunpack.c.h.b16 %v5126
      %v5208 = vunpack.c.l.b16 %v5127
      %v5209 = vunpack.c.h.b16 %v5127
      %v5210 = vunpack.c.l.b16 %v5128
      %v5211 = vunpack.c.h.b16 %v5128
      %v5212 = vunpack.c.l.b16 %v5129
      %v5213 = vunpack.c.h.b16 %v5129
      %v5214 = vunpack.c.l.b16 %v5130
      %v5215 = vunpack.c.h.b16 %v5130
      %v5216 = vunpack.c.l.b16 %v5131
      %v5217 = vunpack.c.h.b16 %v5131
      %v5218 = vunpack.c.l.b16 %v5132
      %v5219 = vunpack.c.h.b16 %v5132
      %v5220 = vunpack.c.l.b16 %v5133
      %v5221 = vunpack.c.h.b16 %v5133
      %v5222 = vunpack.c.l.b16 %v5134
      %v5223 = vunpack.c.h.b16 %v5134
      %v5224 = vunpack.c.l.b16 %v5135
      %v5225 = vunpack.c.h.b16 %v5135
      %v5226 = vunpack.c.l.b16 %v5136
      %v5227 = vunpack.c.h.b16 %v5136
      %v5228 = vunpack.c.l.b16 %v5137
      %v5229 = vunpack.c.h.b16 %v5137
      %v5230 = vunpack.c.l.b16 %v5138
      %v5231 = vunpack.c.h.b16 %v5138
      %v5232 = vunpack.c.l.b16 %v5139
      %v5233 = vunpack.c.h.b16 %v5139
      %v5234 = vunpack.c.l.b16 %v5140
      %v5235 = vunpack.c.h.b16 %v5140
      %v5236 = vunpack.c.l.b16 %v5141
      %v5237 = vunpack.c.h.b16 %v5141
      %v5238 = vpack.c.b16 %v5174, %v5174
      %v5239 = vpack.c.b16 %v5175, %v5175
      %v5240 = vpack.c.b16 %v5176, %v5176
      %v5241 = vpack.c.b16 %v5177, %v5177
      %v5242 = vpack.c.b16 %v5178, %v5178
      %v5243 = vpack.c.b16 %v5179, %v5179
      %v5244 = vpack.c.b16 %v5180, %v5180
      %v5245 = vpack.c.b16 %v5181, %v5181
      %v5246 = vpack.c.b16 %v5182, %v5182
      %v5247 = vpack.c.b16 %v5183, %v5183
      %v5248 = vpack.c.b16 %v5184, %v5184
      %v5249 = vpack.c.b16 %v5185, %v5185
      %v5250 = vpack.c.b16 %v5186, %v5186
      %v5251 = vpack.c.b16 %v5187, %v5187
      %v5252 = vpack.c.b16 %v5188, %v5188
      %v5253 = vpack.c.b16 %v5189, %v5189
      %v5254 = vpack.c.b16 %v5190, %v5190
      %v5255 = vpack.c.b16 %v5191, %v5191
      %v5256 = vpack.c.b16 %v5192, %v5192
      %v5257 = vpack.c.b16 %v5193, %v5193
      %v5258 = vpack.c.b16 %v5194, %v5194
      %v5259 = vpack.c.b16 %v5195, %v5195
      %v5260 = vpack.c.b16 %v5196, %v5196
      %v5261 = vpack.c.b16 %v5197, %v5197
      %v5262 = vpack.c.b16 %v5198, %v5198
      %v5263 = vpack.c.b16 %v5199, %v5199
      %v5264 = vpack.c.b16 %v5200, %v5200
      %v5265 = vpack.c.b16 %v5201, %v5201
      %v5266 = vpack.c.b16 %v5202, %v5202
      %v5267 = vpack.c.b16 %v5203, %v5203
      %v5268 = vpack.c.b16 %v5204, %v5204
      %v5269 = vpack.c.b16 %v5205, %v5205
      %v5270 = vpack.c.b16 %v5206, %v5206
      %v5271 = vpack.c.b16 %v5207, %v5207
      %v5272 = vpack.c.b16 %v5208, %v5208
      %v5273 = vpack.c.b16 %v5209, %v5209
      %v5274 = vpack.c.b16 %v5210, %v5210
      %v5275 = vpack.c.b16 %v5211, %v5211
      %v5276 = vpack.c.b16 %v5212, %v5212
      %v5277 = vpack.c.b16 %v5213, %v5213
      %v5278 = vpack.c.b16 %v5214, %v5214
      %v5279 = vpack.c.b16 %v5215, %v5215
      %v5280 = vpack.c.b16 %v5216, %v5216
      %v5281 = vpack.c.b16 %v5217, %v5217
      %v5282 = vpack.c.b16 %v5218, %v5218
      %v5283 = vpack.c.b16 %v5219, %v5219
      %v5284 = vpack.c.b16 %v5220, %v5220
      %v5285 = vpack.c.b16 %v5221, %v5221
      %v5286 = vpack.c.b16 %v5222, %v5222
      %v5287 = vpack.c.b16 %v5223, %v5223
      %v5288 = vpack.c.b16 %v5224, %v5224
      %v5289 = vpack.c.b16 %v5225, %v5225
      %v5290 = vpack.c.b16 %v5226, %v5226
      %v5291 = vpack.c.b16 %v5227, %v5227
      %v5292 = vpack.c.b16 %v5228, %v5228
      %v5293 = vpack.c.b16 %v5229, %v5229
      %v5294 = vpack.c.b16 %v5230, %v5230
      %v5295 = vpack.c.b16 %v5231, %v5231
      %v5296 = vpack.c.b16 %v5232, %v5232
      %v5297 = vpack.c.b16 %v5233, %v5233
      %v5298 = vpack.c.b16 %v5234, %v5234
      %v5299 = vpack.c.b16 %v5235, %v5235
      %v5300 = vpack.c.b16 %v5236, %v5236
      %v5301 = vpack.c.b16 %v5237, %v5237
      %vm5366 = vcmask 60416
      %5367 = vst.msk [vmem:[%s543] sm:$0xf] %vm5366, %v5238
      %5368 = vst.msk [vmem:[%s543 + $0x4] sm:$0xf] %vm5366, %v5239
      %5369 = vst.msk [vmem:[%s543 + $0x8] sm:$0xf] %vm5366, %v5240
      %5370 = vst.msk [vmem:[%s543 + $0xc] sm:$0xf] %vm5366, %v5241
      %5371 = vst.msk [vmem:[%s543 + $0x10] sm:$0xf] %vm5366, %v5242
      %5372 = vst.msk [vmem:[%s543 + $0x14] sm:$0xf] %vm5366, %v5243
      %5373 = vst.msk [vmem:[%s543 + $0x18] sm:$0xf] %vm5366, %v5244
      %5374 = vst.msk [vmem:[%s543 + $0x1c] sm:$0xf] %vm5366, %v5245
      %5375 = vst.msk [vmem:[%s543 + $0x20] sm:$0xf] %vm5366, %v5246
      %5376 = vst.msk [vmem:[%s543 + $0x24] sm:$0xf] %vm5366, %v5247
      %5377 = vst.msk [vmem:[%s543 + $0x28] sm:$0xf] %vm5366, %v5248
      %5378 = vst.msk [vmem:[%s543 + $0x2c] sm:$0xf] %vm5366, %v5249
      %5379 = vst.msk [vmem:[%s543 + $0x30] sm:$0xf] %vm5366, %v5250
      %5380 = vst.msk [vmem:[%s543 + $0x34] sm:$0xf] %vm5366, %v5251
      %5381 = vst.msk [vmem:[%s543 + $0x38] sm:$0xf] %vm5366, %v5252
      %5382 = vst.msk [vmem:[%s543 + $0x3c] sm:$0xf] %vm5366, %v5253
      %5383 = vst.msk [vmem:[%s543 + $0x40] sm:$0xf] %vm5366, %v5254
      %5384 = vst.msk [vmem:[%s543 + $0x44] sm:$0xf] %vm5366, %v5255
      %5385 = vst.msk [vmem:[%s543 + $0x48] sm:$0xf] %vm5366, %v5256
      %5386 = vst.msk [vmem:[%s543 + $0x4c] sm:$0xf] %vm5366, %v5257
      %5387 = vst.msk [vmem:[%s543 + $0x50] sm:$0xf] %vm5366, %v5258
      %5388 = vst.msk [vmem:[%s543 + $0x54] sm:$0xf] %vm5366, %v5259
      %5389 = vst.msk [vmem:[%s543 + $0x58] sm:$0xf] %vm5366, %v5260
      %5390 = vst.msk [vmem:[%s543 + $0x5c] sm:$0xf] %vm5366, %v5261
      %5391 = vst.msk [vmem:[%s543 + $0x60] sm:$0xf] %vm5366, %v5262
      %5392 = vst.msk [vmem:[%s543 + $0x64] sm:$0xf] %vm5366, %v5263
      %5393 = vst.msk [vmem:[%s543 + $0x68] sm:$0xf] %vm5366, %v5264
      %5394 = vst.msk [vmem:[%s543 + $0x6c] sm:$0xf] %vm5366, %v5265
      %5395 = vst.msk [vmem:[%s543 + $0x70] sm:$0xf] %vm5366, %v5266
      %5396 = vst.msk [vmem:[%s543 + $0x74] sm:$0xf] %vm5366, %v5267
      %5397 = vst.msk [vmem:[%s543 + $0x78] sm:$0xf] %vm5366, %v5268
      %5398 = vst.msk [vmem:[%s543 + $0x7c] sm:$0xf] %vm5366, %v5269
      %5399 = vst.msk [vmem:[%s543 + $0x80] sm:$0xf] %vm5366, %v5270
      %5400 = vst.msk [vmem:[%s543 + $0x84] sm:$0xf] %vm5366, %v5271
      %5401 = vst.msk [vmem:[%s543 + $0x88] sm:$0xf] %vm5366, %v5272
      %5402 = vst.msk [vmem:[%s543 + $0x8c] sm:$0xf] %vm5366, %v5273
      %5403 = vst.msk [vmem:[%s543 + $0x90] sm:$0xf] %vm5366, %v5274
      %5404 = vst.msk [vmem:[%s543 + $0x94] sm:$0xf] %vm5366, %v5275
      %5405 = vst.msk [vmem:[%s543 + $0x98] sm:$0xf] %vm5366, %v5276
      %5406 = vst.msk [vmem:[%s543 + $0x9c] sm:$0xf] %vm5366, %v5277
      %5407 = vst.msk [vmem:[%s543 + $0xa0] sm:$0xf] %vm5366, %v5278
      %5408 = vst.msk [vmem:[%s543 + $0xa4] sm:$0xf] %vm5366, %v5279
      %5409 = vst.msk [vmem:[%s543 + $0xa8] sm:$0xf] %vm5366, %v5280
      %5410 = vst.msk [vmem:[%s543 + $0xac] sm:$0xf] %vm5366, %v5281
      %5411 = vst.msk [vmem:[%s543 + $0xb0] sm:$0xf] %vm5366, %v5282
      %5412 = vst.msk [vmem:[%s543 + $0xb4] sm:$0xf] %vm5366, %v5283
      %5413 = vst.msk [vmem:[%s543 + $0xb8] sm:$0xf] %vm5366, %v5284
      %5414 = vst.msk [vmem:[%s543 + $0xbc] sm:$0xf] %vm5366, %v5285
      %5415 = vst.msk [vmem:[%s543 + $0xc0] sm:$0xf] %vm5366, %v5286
      %5416 = vst.msk [vmem:[%s543 + $0xc4] sm:$0xf] %vm5366, %v5287
      %5417 = vst.msk [vmem:[%s543 + $0xc8] sm:$0xf] %vm5366, %v5288
      %5418 = vst.msk [vmem:[%s543 + $0xcc] sm:$0xf] %vm5366, %v5289
      %5419 = vst.msk [vmem:[%s543 + $0xd0] sm:$0xf] %vm5366, %v5290
      %5420 = vst.msk [vmem:[%s543 + $0xd4] sm:$0xf] %vm5366, %v5291
      %5421 = vst.msk [vmem:[%s543 + $0xd8] sm:$0xf] %vm5366, %v5292
      %5422 = vst.msk [vmem:[%s543 + $0xdc] sm:$0xf] %vm5366, %v5293
      %5423 = vst.msk [vmem:[%s543 + $0xe0] sm:$0xf] %vm5366, %v5294
      %5424 = vst.msk [vmem:[%s543 + $0xe4] sm:$0xf] %vm5366, %v5295
      %5425 = vst.msk [vmem:[%s543 + $0xe8] sm:$0xf] %vm5366, %v5296
      %5426 = vst.msk [vmem:[%s543 + $0xec] sm:$0xf] %vm5366, %v5297
      %5427 = vst.msk [vmem:[%s543 + $0xf0] sm:$0xf] %vm5366, %v5298
      %5428 = vst.msk [vmem:[%s543 + $0xf4] sm:$0xf] %vm5366, %v5299
      %5429 = vst.msk [vmem:[%s543 + $0xf8] sm:$0xf] %vm5366, %v5300
      %5430 = vst.msk [vmem:[%s543 + $0xfc] sm:$0xf] %vm5366, %v5301
      %s5431 = smul.u32 16, %s24
      %p5432 = scmp.lt.s32.totalorder %s23, 1
      %s5433 = scalar_select %p5432, %s23, 1
      %p5434 = scmp.lt.s32.totalorder %s5431, 31
      %s5435 = scalar_select %p5434, %s5431, 31
      %s5436 = smul.addr %s5435, 4
      %s5437 = smul.addr %s5433, 128
      %s5438 = sadd.s32 %s5436, %s5437
      %s5439 = smul.addr %s5438, 4
      %s5440 = scalar_lea.vmem %s8, %s5439
      // Predicated region
      $region53: #{double_upconv2d_forward.4} parent=51 // pred_check
        %p5441 = pneg %p255
      $region54: #{double_upconv2d_forward.4} parent=51 // pred_check_branch
        %5443 = sbr.rel (%p5441) target = $region56
      $region55: #{double_upconv2d_forward.4} parent=51 // pred_region
        %s5444 = smul.u32 16, %s24
      $region56: #{double_upconv2d_forward.4} parent=51 // pred_fallthru
        _
    $region52: #{double_upconv2d_forward.4} parent=5 // pred_fallthru
      _
    %p5445 = scmp.le.s32.totalorder 2, %s14
    // Predicated region
    $region57: #{double_upconv2d_forward.4} parent=5 // pred_check
      %p5446 = pneg %p5445
    $region58: #{double_upconv2d_forward.4} parent=5 // pred_check_branch
      %5448 = sbr.rel (%p5446) target = $region60
    $region59: #{double_upconv2d_forward.4} parent=5 // pred_region
      %s5449 = ssub.s32 %s14, 2
      // Predicated region
      $region61: #{double_upconv2d_forward.4} parent=59 // pred_check
        %p5450 = pneg %p261
      $region62: #{double_upconv2d_forward.4} parent=59 // pred_check_branch
        %5452 = sbr.rel (%p5450) target = $region64
      $region63: #{double_upconv2d_forward.4} parent=59 // pred_region
        %s5453 = smul.u32 16, %s26
        %p5454 = scmp.lt.s32.totalorder %s25, 1
        %s5455 = scalar_select %p5454, %s25, 1
        %p5456 = scmp.lt.s32.totalorder %s5453, 31
        %s5457 = scalar_select %p5456, %s5453, 31
        %s5458 = smul.addr %s5457, 4
        %s5459 = smul.addr %s5455, 128
        %s5460 = sadd.s32 %s5458, %s5459
        %s5461 = smul.addr %s5460, 4
        %s5462 = scalar_lea.vmem %s8, %s5461
      $region64: #{double_upconv2d_forward.4} parent=59 // pred_fallthru
        _
    $region60: #{double_upconv2d_forward.4} parent=5 // pred_fallthru
      _
  $region6: #{double_upconv2d_forward.4} parent=0 // loop_footer
    %s18 = sadd.s32 1, %s14
  $region7: #{double_upconv2d_forward.4} parent=0 // loop_footer_branch
    %13 = sbr.rel target = $region3
  $region8: #{double_upconv2d_forward.4} parent=0 // loop_exit
    _

</llo_original>
